<compile_context>
chip_gen: v7x
topology: tpu7x:2x2x1
jax: 0.10.0
libtpu: 0.0.40
codegen_flags: <defaults>
</compile_context>

<pallas_src>
import functools
import math

import jax
import jax.numpy as jnp
from jax.experimental import pallas as pl
from jax.experimental.pallas import tpu as pltpu

C_IN = 512
C_HID = 1024
LANE = 128


def _bio_cs_kernel(x_ref, wcat_ref, bcat_ref, w2_ref, b2_ref, o_ref):
    # x_ref: (512, tl) slab of one batch element; channels on sublanes,
    # sequence positions on lanes.
    x = x_ref[...]                                      # f32
    x_bf = x.astype(jnp.bfloat16)

    # Fused {conv1d(k=1), fc1}: (1536, 512)bf16 @ (512, tl)bf16 -> f32 accumulate.
    y = jnp.dot(wcat_ref[...], x_bf, preferred_element_type=jnp.float32)
    y = y + bcat_ref[...]                               # (1536, 1) bias broadcast over lanes
    conv = y[:C_IN, :]                                  # (512, tl)  conv1d branch
    # ReLU(fc1) produced directly in bf16 -> no (1024, tl) f32 slab stays live.
    h_bf = jnp.maximum(y[C_IN:, :], 0.0).astype(jnp.bfloat16)

    # fc2: (512, 1024)bf16 @ (1024, tl)bf16 -> f32.
    z = jnp.dot(w2_ref[...], h_bf, preferred_element_type=jnp.float32) + b2_ref[...]
    # sigmoid(z) == 0.5*(tanh(z/2)+1): single EUP transcendental, no f32 divide.
    g = 0.5 * (jnp.tanh(0.5 * z) + 1.0)

    # out = conv1d(x)*x + gate*x == (conv + gate) * x   (dropouts are identity in eval)
    o_ref[...] = ((conv + g) * x).astype(o_ref.dtype)


def _default_tl():
    """Per-generation lane tile: 1024 on v6e/v7x (32 MiB scoped VMEM), 512 elsewhere."""
    try:
        kind = jax.devices()[0].device_kind.lower()
    except Exception:  # pragma: no cover - defensive; fall back to the safe size
        return 512
    if "v6" in kind or "v7" in kind:
        return 1024
    return 512


def pack_params(wc, bc, w1, b1, w2, b2):
    """One-time weight packing (do at parameter-load time, NOT per forward).

    conv1d(k=1) and fc1 share the same input, so their weights are fused into a
    single (1536, 512) bf16 matrix; biases stay f32 as (out, 1) lane-broadcast
    columns.
    """
    wcat = jnp.concatenate([wc, w1], axis=0).astype(jnp.bfloat16)          # (1536, 512)
    bcat = jnp.concatenate([bc, b1], axis=0).reshape(-1, 1).astype(jnp.float32)  # (1536, 1)
    w2b = w2.astype(jnp.bfloat16)                                          # (512, 1024)
    b2c = b2.reshape(-1, 1).astype(jnp.float32)                            # (512, 1)
    return wcat, bcat, w2b, b2c


@functools.partial(jax.jit, static_argnames=("tl",))
def bio_cs_attention(x_ncl, wcat, bcat, w2b, b2c, *, tl=None):
    """Forward pass of BioCSAttentionModule.

    Args:
      x_ncl: (B, 512, L) float32, PyTorch NCL layout.
      wcat, bcat, w2b, b2c: packed parameters from pack_params().
      tl: lane tile (sequence positions per grid step); multiple of 128.
          None -> per-generation default (512 on v5e, 1024 on v6e/v7x).
    """
    B, C, L = x_ncl.shape
    assert C == C_IN
    if tl is None:
        tl = _default_tl()
    assert tl > 0 and tl % LANE == 0

    # Tile selection: never shrink the tile for awkward L; pad L UP instead.
    #   tl_eff = min(tl, round_up(L, 128))   (don't use a tile bigger than needed)
    #   L_pad  = round_up(L, tl_eff)
    # Padded columns are zero; since the output is (conv + gate) * x, padded
    # outputs are exactly zero and get sliced off below.
    L_128 = ((L + LANE - 1) // LANE) * LANE
    tl_eff = min(tl, L_128)
    L_pad = ((L + tl_eff - 1) // tl_eff) * tl_eff
    if L_pad != L:
        x_ncl = jnp.pad(x_ncl, ((0, 0), (0, 0), (0, L_pad - L)))

    grid = (B, L_pad // tl_eff)

    x_spec = pl.BlockSpec((None, C_IN, tl_eff), lambda b, j: (b, 0, j))
    const_spec = functools.partial(
        pl.BlockSpec,
        index_map=lambda b, j: (0, 0),
        pipeline_mode=pl.Buffered(1),        # constant blocks: no double buffering
    )

    flops = 2 * B * L_pad * (C_IN * C_IN + C_IN * C_HID + C_HID * C_IN)
    bytes_accessed = (2 * B * L_pad * C_IN * 4           # x in + out, f32
                      + (wcat.size + w2b.size) * 2       # bf16 weights
                      + (bcat.size + b2c.size) * 4)      # f32 biases

    out = pl.pallas_call(
        _bio_cs_kernel,
        out_shape=jax.ShapeDtypeStruct((B, C_IN, L_pad), x_ncl.dtype),
        grid_spec=pltpu.PrefetchScalarGridSpec(
            num_scalar_prefetch=0,
            grid=grid,
            in_specs=[
                x_spec,                                        # x (512, tl) tile
                const_spec(block_shape=(C_IN + C_HID, C_IN)),  # fused conv+fc1 weight
                const_spec(block_shape=(C_IN + C_HID, 1)),     # fused conv+fc1 bias
                const_spec(block_shape=(C_IN, C_HID)),         # fc2 weight
                const_spec(block_shape=(C_IN, 1)),             # fc2 bias
            ],
            out_specs=x_spec,
        ),
        compiler_params=pltpu.CompilerParams(
            # Both axes parallel: lets megacore / v7x shard B and L-tiles across TCs.
            dimension_semantics=("parallel", "parallel"),
        ),
        cost_estimate=pl.CostEstimate(
            flops=flops,
            transcendentals=B * L_pad * C_IN,                  # tanh-based sigmoid
            bytes_accessed=bytes_accessed,
        ),
    )(x_ncl, wcat, bcat, w2b, b2c)

    return out[:, :, :L] if L_pad != L else out


def _init_params(key):
    """PyTorch-style uniform(-1/sqrt(fan_in), 1/sqrt(fan_in)) init, (out, in) layout."""
    ks = jax.random.split(key, 6)

    def u(k, shape, fan_in):
        bound = 1.0 / math.sqrt(fan_in)
        return jax.random.uniform(k, shape, jnp.float32, -bound, bound)

    wc = u(ks[0], (C_IN, C_IN), C_IN)     # Conv1d(512,512,1) weight (out, in)
    bc = u(ks[1], (C_IN,), C_IN)
    w1 = u(ks[2], (C_HID, C_IN), C_IN)    # fc1 weight (out, in)
    b1 = u(ks[3], (C_HID,), C_IN)
    w2 = u(ks[4], (C_IN, C_HID), C_HID)   # fc2 weight (out, in)
    b2 = u(ks[5], (C_IN,), C_HID)
    return wc, bc, w1, b1, w2, b2


def _reference(x_ncl, wc, bc, w1, b1, w2, b2):
    """Pure-JAX f32 reference mirroring the PyTorch forward (eval mode)."""
    x_blc = jnp.transpose(x_ncl, (0, 2, 1))                  # (B, L, 512)
    conv = x_blc @ wc.T + bc                                 # conv1d k=1
    x_conv = jnp.transpose(conv, (0, 2, 1)) * x_ncl
    h = jax.nn.relu(x_blc @ w1.T + b1)                       # AdaptiveAvgPool1d(512) == identity
    g = jax.nn.sigmoid(h @ w2.T + b2)
    x_pool = jnp.transpose(g, (0, 2, 1)) * x_ncl
    return x_conv + x_pool


if __name__ == "__main__":
    key = jax.random.PRNGKey(0)
    k_x, k_p = jax.random.split(key)
    params = _init_params(k_p)
    packed = pack_params(*params)   # one-time packing, hoisted out of the forward

    # Small shapes:
    #   L=8   -> padding path, single 128-lane tile
    #   L=384 -> default-tile path
    #   L=320 with tl=256 -> pad-up-to-tile path (2 tiles of 256, no tile shrink)
    cases = [(2, 8, None), (2, 384, None), (1, 320, 256)]
    for (B, L, tl) in cases:
        kx = jax.random.fold_in(k_x, L)
        x = jax.random.normal(kx, (B, C_IN, L), jnp.float32)   # PyTorch NCL layout

        out = jax.block_until_ready(bio_cs_attention(x, *packed, tl=tl))
        ref = _reference(x, *params)

        assert out.shape == (B, C_IN, L)
        max_err = float(jnp.max(jnp.abs(out - ref)))
        # bf16 matmuls (f32 accumulation) -> slightly looser tolerance than pure f32.
        assert jnp.allclose(out, ref, atol=5e-2, rtol=5e-2), (
            f"mismatch vs reference (L={L}, max abs err={max_err})")

    print("KERNEL_OK")
</pallas_src>

<mosaic_0001>
module attributes {stable_mosaic.version = 11 : i64} {
  func.func @_bio_cs_kernel(%arg0: i32, %arg1: i32, %arg2: memref<1x512x128xf32, #tpu.memory_space<vmem>>, %arg3: memref<1536x512xbf16, #tpu.memory_space<vmem>>, %arg4: memref<1536x1xf32, #tpu.memory_space<vmem>>, %arg5: memref<512x1024xbf16, #tpu.memory_space<vmem>>, %arg6: memref<512x1xf32, #tpu.memory_space<vmem>>, %arg7: memref<1x512x128xf32, #tpu.memory_space<vmem>>) attributes {dimension_semantics = [#tpu.dimension_semantics<parallel>, #tpu.dimension_semantics<parallel>], iteration_bounds = array<i64: 2, 1>, scalar_prefetch = 0 : i64, scratch_operands = 0 : i64, tpu.core_type = #tpu.core_type<tc>, window_params = [{transform_indices = @transform_0, window_bounds = array<i64: 1, 512, 128>}, {pipeline_mode = #tpu.pipeline_mode<synchronous>, transform_indices = @transform_1, window_bounds = array<i64: 1536, 512>}, {pipeline_mode = #tpu.pipeline_mode<synchronous>, transform_indices = @transform_2, window_bounds = array<i64: 1536, 1>}, {pipeline_mode = #tpu.pipeline_mode<synchronous>, transform_indices = @transform_3, window_bounds = array<i64: 512, 1024>}, {pipeline_mode = #tpu.pipeline_mode<synchronous>, transform_indices = @transform_4, window_bounds = array<i64: 512, 1>}, {transform_indices = @transform_5, window_bounds = array<i64: 1, 512, 128>}]} {
    %c0 = arith.constant 0 : index
    %c0_0 = arith.constant 0 : index
    %c0_1 = arith.constant 0 : index
    %0 = vector.load %arg2[%c0, %c0_0, %c0_1] : memref<1x512x128xf32, #tpu.memory_space<vmem>>, vector<1x512x128xf32>
    %1 = vector.shape_cast %0 : vector<1x512x128xf32> to vector<512x128xf32>
    %2 = arith.truncf %1 : vector<512x128xf32> to vector<512x128xbf16>
    %c0_2 = arith.constant 0 : index
    %c0_3 = arith.constant 0 : index
    %3 = vector.load %arg3[%c0_2, %c0_3] : memref<1536x512xbf16, #tpu.memory_space<vmem>>, vector<1536x512xbf16>
    %cst = arith.constant dense<0.000000e+00> : vector<1536x128xf32>
    %4 = tpu.matmul %3, %2, %cst {dimension_numbers = #tpu.dot_dimension_numbers<[1], [0], [0], [1], [0, 0, 1, 1], [], []>} : vector<1536x512xbf16>, vector<512x128xbf16>, vector<1536x128xf32> -> vector<1536x128xf32>
    %c0_4 = arith.constant 0 : index
    %c0_5 = arith.constant 0 : index
    %5 = vector.load %arg4[%c0_4, %c0_5] : memref<1536x1xf32, #tpu.memory_space<vmem>>, vector<1536x1xf32>
    %6 = vector.broadcast %5 : vector<1536x1xf32> to vector<1536x128xf32>
    %7 = arith.addf %4, %6 : vector<1536x128xf32>
    %8 = vector.extract_strided_slice %7 {offsets = [0, 0], sizes = [512, 128], strides = [1, 1]} : vector<1536x128xf32> to vector<512x128xf32>
    %9 = vector.extract_strided_slice %7 {offsets = [512, 0], sizes = [1024, 128], strides = [1, 1]} : vector<1536x128xf32> to vector<1024x128xf32>
    %cst_6 = arith.constant 0.000000e+00 : f32
    %10 = vector.broadcast %cst_6 : f32 to vector<1024x128xf32>
    %11 = arith.maximumf %9, %10 : vector<1024x128xf32>
    %12 = arith.truncf %11 : vector<1024x128xf32> to vector<1024x128xbf16>
    %c0_7 = arith.constant 0 : index
    %c0_8 = arith.constant 0 : index
    %13 = vector.load %arg5[%c0_7, %c0_8] : memref<512x1024xbf16, #tpu.memory_space<vmem>>, vector<512x1024xbf16>
    %cst_9 = arith.constant dense<0.000000e+00> : vector<512x128xf32>
    %14 = tpu.matmul %13, %12, %cst_9 {dimension_numbers = #tpu.dot_dimension_numbers<[1], [0], [0], [1], [0, 0, 1, 1], [], []>} : vector<512x1024xbf16>, vector<1024x128xbf16>, vector<512x128xf32> -> vector<512x128xf32>
    %c0_10 = arith.constant 0 : index
    %c0_11 = arith.constant 0 : index
    %15 = vector.load %arg6[%c0_10, %c0_11] : memref<512x1xf32, #tpu.memory_space<vmem>>, vector<512x1xf32>
    %16 = vector.broadcast %15 : vector<512x1xf32> to vector<512x128xf32>
    %17 = arith.addf %14, %16 : vector<512x128xf32>
    %cst_12 = arith.constant 5.000000e-01 : f32
    %18 = vector.broadcast %cst_12 : f32 to vector<512x128xf32>
    %19 = arith.mulf %18, %17 : vector<512x128xf32>
    %20 = math.tanh %19 : vector<512x128xf32>
    %cst_13 = arith.constant 1.000000e+00 : f32
    %21 = vector.broadcast %cst_13 : f32 to vector<512x128xf32>
    %22 = arith.addf %20, %21 : vector<512x128xf32>
    %cst_14 = arith.constant 5.000000e-01 : f32
    %23 = vector.broadcast %cst_14 : f32 to vector<512x128xf32>
    %24 = arith.mulf %23, %22 : vector<512x128xf32>
    %25 = arith.addf %8, %24 : vector<512x128xf32>
    %26 = arith.mulf %25, %1 : vector<512x128xf32>
    %c0_15 = arith.constant 0 : index
    %c0_16 = arith.constant 0 : index
    %c0_17 = arith.constant 0 : index
    %27 = vector.load %arg7[%c0_15, %c0_16, %c0_17] : memref<1x512x128xf32, #tpu.memory_space<vmem>>, vector<1x512x128xf32>
    %28 = vector.shape_cast %27 : vector<1x512x128xf32> to vector<512x128xf32>
    %29 = vector.shape_cast %26 : vector<512x128xf32> to vector<1x512x128xf32>
    tpu.vector_store %arg7[%c0_15, %c0_16, %c0_17], %29 {strides = array<i32>} : memref<1x512x128xf32, #tpu.memory_space<vmem>>, vector<1x512x128xf32>,
    return
  }
  func.func @transform_0(%arg0: i32, %arg1: i32) -> (i32, i32, i32) {
    %c0_i32 = arith.constant 0 : i32
    %c0_i32_0 = arith.constant 0 : i32
    return %arg0, %c0_i32, %arg1 : i32, i32, i32
  }
  func.func @transform_1(%arg0: i32, %arg1: i32) -> (i32, i32) {
    %c0_i32 = arith.constant 0 : i32
    %c0_i32_0 = arith.constant 0 : i32
    %c0_i32_1 = arith.constant 0 : i32
    return %c0_i32, %c0_i32_0 : i32, i32
  }
  func.func @transform_2(%arg0: i32, %arg1: i32) -> (i32, i32) {
    %c0_i32 = arith.constant 0 : i32
    %c0_i32_0 = arith.constant 0 : i32
    %c0_i32_1 = arith.constant 0 : i32
    return %c0_i32, %c0_i32_0 : i32, i32
  }
  func.func @transform_3(%arg0: i32, %arg1: i32) -> (i32, i32) {
    %c0_i32 = arith.constant 0 : i32
    %c0_i32_0 = arith.constant 0 : i32
    %c0_i32_1 = arith.constant 0 : i32
    return %c0_i32, %c0_i32_0 : i32, i32
  }
  func.func @transform_4(%arg0: i32, %arg1: i32) -> (i32, i32) {
    %c0_i32 = arith.constant 0 : i32
    %c0_i32_0 = arith.constant 0 : i32
    %c0_i32_1 = arith.constant 0 : i32
    return %c0_i32, %c0_i32_0 : i32, i32
  }
  func.func @transform_5(%arg0: i32, %arg1: i32) -> (i32, i32, i32) {
    %c0_i32 = arith.constant 0 : i32
    %c0_i32_0 = arith.constant 0 : i32
    return %arg0, %c0_i32, %arg1 : i32, i32, i32
  }
}

</mosaic_0001>

<llo_original>
// kernel: bio_cs_attention.1
$region0: #{bio_cs_attention.1}
  #allocation0 [shape = 'u32[]', space=smem, size = 0x4, offset = 0x4, fixed_abs, tag = 'smem constant byte address 0x4 - core index']
  #allocation1 [shape = 'u32[144,128]{1,0:T(1,128)}', space=vmem, size = 0x12000, scoped, tag = 'internal scratch']
  %s0 = inlined_call_operand.vmem [shape: f32[2,512,128], index: 0, kind: input, shape index: {}]
  %s1 = inlined_call_operand.vmem [shape: bf16[1536,512], index: 1, kind: input, shape index: {}]
  %s2 = inlined_call_operand.vmem [shape: f32[1536,1], index: 2, kind: input, shape index: {}]
  %s3 = inlined_call_operand.vmem [shape: bf16[512,1024], index: 3, kind: input, shape index: {}]
  %s4 = inlined_call_operand.vmem [shape: f32[512,1], index: 4, kind: input, shape index: {}]
  %s5 = inlined_call_operand.vmem [shape: f32[2,512,128], index: 5, kind: output, shape index: {}]
  %s6 = sld [smem:[#allocation0]]
  $region53: #{bio_cs_attention.1} parent=0
    _
  %s8 = ssub.s32 1, %s6
  %s9 = scalar_select 0, %s8, %s6
  loop: start=0, step=1, limit=4
  $region2: #{bio_cs_attention.1} parent=0 // loop_pre_header
    _
  $region3: #{bio_cs_attention.1} parent=0 // loop_header
    %s11 = sphi 0, %s15
    %p12 = scmp.ge.s32.totalorder %s11, 4
    %s18 = sphi 0, %s30
    %s19 = sphi 0, %s26
    %s20 = sphi 0, %s18
    %s21 = sphi 0, %s19
    %s22 = sphi 0, %s20
    %s23 = sphi 0, %s21
    %s35 = sphi 0, %s37
    %s38 = sphi 0, %s35
    %s39 = sphi 0, %s38
    %s55 = sphi 0, %s39
    %s59 = sphi 0, %s59
    %s61 = sphi 0, %s59
    %s62 = sphi 0, %s61
    %s76 = sphi 0, %s62
    %s80 = sphi 0, %s80
    %s82 = sphi 0, %s80
    %s83 = sphi 0, %s82
    %s97 = sphi 0, %s83
    %s101 = sphi 0, %s101
    %s103 = sphi 0, %s101
    %s104 = sphi 0, %s103
    %s118 = sphi 0, %s104
    %s122 = sphi 0, %s122
    %s124 = sphi 0, %s122
    %s125 = sphi 0, %s124
    %s139 = sphi 0, %s125
    %s147 = sphi 0, %s149
    %s150 = sphi 0, %s147
    %s151 = sphi 0, %s150
    %s167 = sphi 0, %s151
  $region4: #{bio_cs_attention.1} parent=0 // loop_header_branch
    %14 = sbr.rel (%p12) target = $region8
  $region5: #{bio_cs_attention.1} parent=0 // loop_body
    %s16 = ssub.s32 %s11, 1
    %s17 = ssub.s32 %s11, 2
    %s24 = sadd.s32 1, %s19
    %p25 = scmp.ge.s32.totalorder %s24, 1
    %s26 = scalar_select %p25, 0, %s24
    %s27 = sadd.s32 1, %s18
    %s28 = scalar_select %p25, %s27, %s18
    %p29 = scmp.ge.s32.totalorder %s28, 2
    %s30 = scalar_select %p29, 0, %s28
    %s31 = ssub.s32 %s18, %s30
    %s32 = ssub.s32 %s19, %s26
    %s33 = sor.u32 %s31, %s32
    %p34 = scmp.eq.s32.totalorder %s33, 0
    %s36 = sadd.s32 %s35, 1
    %s37 = scalar_select %p34, %s35, %s36
    %p40 = pneg %p34
    %p41 = scmp.eq.s32.totalorder %s11, 1
    %p42 = por %p40, %p41
    %p43 = scmp.ne.s32.totalorder %s35, %s38
    %p44 = scmp.eq.s32.totalorder %s11, 0
    %p45 = por %p43, %p44
    %p46 = scmp.ne.s32.totalorder %s35, %s38
    %p47 = scmp.eq.s32.totalorder %s16, 1
    %p48 = por %p46, %p47
    %p49 = scmp.ne.s32.totalorder %s38, %s39
    %p50 = scmp.eq.s32.totalorder %s16, 0
    %p51 = por %p49, %p50
    %p52 = scmp.ne.s32.totalorder %s38, %s39
    %p53 = scmp.eq.s32.totalorder %s17, 1
    %p54 = por %p52, %p53
    %p56 = scmp.ne.s32.totalorder %s39, %s55
    %p57 = scmp.eq.s32.totalorder %s17, 0
    %p58 = por %p56, %p57
    %s60 = sadd.s32 %s59, 1
    %p63 = scmp.eq.s32.totalorder %s11, 1
    %p64 = scmp.ne.s32.totalorder %s59, %s61
    %p65 = scmp.eq.s32.totalorder %s11, 0
    %p66 = por %p64, %p65
    %p67 = scmp.ne.s32.totalorder %s59, %s61
    %p68 = scmp.eq.s32.totalorder %s16, 1
    %p69 = por %p67, %p68
    %p70 = scmp.ne.s32.totalorder %s61, %s62
    %p71 = scmp.eq.s32.totalorder %s16, 0
    %p72 = por %p70, %p71
    %p73 = scmp.ne.s32.totalorder %s61, %s62
    %p74 = scmp.eq.s32.totalorder %s17, 1
    %p75 = por %p73, %p74
    %p77 = scmp.ne.s32.totalorder %s62, %s76
    %p78 = scmp.eq.s32.totalorder %s17, 0
    %p79 = por %p77, %p78
    %s81 = sadd.s32 %s80, 1
    %p84 = scmp.eq.s32.totalorder %s11, 1
    %p85 = scmp.ne.s32.totalorder %s80, %s82
    %p86 = scmp.eq.s32.totalorder %s11, 0
    %p87 = por %p85, %p86
    %p88 = scmp.ne.s32.totalorder %s80, %s82
    %p89 = scmp.eq.s32.totalorder %s16, 1
    %p90 = por %p88, %p89
    %p91 = scmp.ne.s32.totalorder %s82, %s83
    %p92 = scmp.eq.s32.totalorder %s16, 0
    %p93 = por %p91, %p92
    %p94 = scmp.ne.s32.totalorder %s82, %s83
    %p95 = scmp.eq.s32.totalorder %s17, 1
    %p96 = por %p94, %p95
    %p98 = scmp.ne.s32.totalorder %s83, %s97
    %p99 = scmp.eq.s32.totalorder %s17, 0
    %p100 = por %p98, %p99
    %s102 = sadd.s32 %s101, 1
    %p105 = scmp.eq.s32.totalorder %s11, 1
    %p106 = scmp.ne.s32.totalorder %s101, %s103
    %p107 = scmp.eq.s32.totalorder %s11, 0
    %p108 = por %p106, %p107
    %p109 = scmp.ne.s32.totalorder %s101, %s103
    %p110 = scmp.eq.s32.totalorder %s16, 1
    %p111 = por %p109, %p110
    %p112 = scmp.ne.s32.totalorder %s103, %s104
    %p113 = scmp.eq.s32.totalorder %s16, 0
    %p114 = por %p112, %p113
    %p115 = scmp.ne.s32.totalorder %s103, %s104
    %p116 = scmp.eq.s32.totalorder %s17, 1
    %p117 = por %p115, %p116
    %p119 = scmp.ne.s32.totalorder %s104, %s118
    %p120 = scmp.eq.s32.totalorder %s17, 0
    %p121 = por %p119, %p120
    %s123 = sadd.s32 %s122, 1
    %p126 = scmp.eq.s32.totalorder %s11, 1
    %p127 = scmp.ne.s32.totalorder %s122, %s124
    %p128 = scmp.eq.s32.totalorder %s11, 0
    %p129 = por %p127, %p128
    %p130 = scmp.ne.s32.totalorder %s122, %s124
    %p131 = scmp.eq.s32.totalorder %s16, 1
    %p132 = por %p130, %p131
    %p133 = scmp.ne.s32.totalorder %s124, %s125
    %p134 = scmp.eq.s32.totalorder %s16, 0
    %p135 = por %p133, %p134
    %p136 = scmp.ne.s32.totalorder %s124, %s125
    %p137 = scmp.eq.s32.totalorder %s17, 1
    %p138 = por %p136, %p137
    %p140 = scmp.ne.s32.totalorder %s125, %s139
    %p141 = scmp.eq.s32.totalorder %s17, 0
    %p142 = por %p140, %p141
    %s143 = ssub.s32 %s18, %s30
    %s144 = ssub.s32 %s19, %s26
    %s145 = sor.u32 %s143, %s144
    %p146 = scmp.eq.s32.totalorder %s145, 0
    %s148 = sadd.s32 %s147, 1
    %s149 = scalar_select %p146, %s147, %s148
    %p152 = pneg %p146
    %p153 = scmp.eq.s32.totalorder %s11, 1
    %p154 = por %p152, %p153
    %p155 = scmp.ne.s32.totalorder %s147, %s150
    %p156 = scmp.eq.s32.totalorder %s11, 0
    %p157 = por %p155, %p156
    %p158 = scmp.ne.s32.totalorder %s147, %s150
    %p159 = scmp.eq.s32.totalorder %s16, 1
    %p160 = por %p158, %p159
    %p161 = scmp.ne.s32.totalorder %s150, %s151
    %p162 = scmp.eq.s32.totalorder %s16, 0
    %p163 = por %p161, %p162
    %p164 = scmp.ne.s32.totalorder %s150, %s151
    %p165 = scmp.eq.s32.totalorder %s17, 1
    %p166 = por %p164, %p165
    %p168 = scmp.ne.s32.totalorder %s151, %s167
    %p169 = scmp.eq.s32.totalorder %s17, 0
    %p170 = por %p168, %p169
    %p171 = scmp.le.s32.totalorder 1, %s11
    %p172 = scmp.lt.s32.totalorder %s11, 3
    %p173 = pnand %p171, %p172
    %p174 = pneg %p173
    // Predicated region
    $region9: #{bio_cs_attention.1} parent=5 // pred_check
      _
    $region10: #{bio_cs_attention.1} parent=5 // pred_check_branch
      %176 = sbr.rel (%p173) target = $region12
    $region11: #{bio_cs_attention.1} parent=5 // pred_region
      %s177 = ssub.s32 %s11, 1
      // Predicated region
      $region13: #{bio_cs_attention.1} parent=11 // pred_check
        %p178 = pneg %p72
      $region14: #{bio_cs_attention.1} parent=11 // pred_check_branch
        %180 = sbr.rel (%p178) target = $region16
      $region15: #{bio_cs_attention.1} parent=11 // pred_region
        _
      $region16: #{bio_cs_attention.1} parent=11 // pred_fallthru
        _
      // Predicated region
      $region17: #{bio_cs_attention.1} parent=11 // pred_check
        %p181 = pneg %p93
      $region18: #{bio_cs_attention.1} parent=11 // pred_check_branch
        %183 = sbr.rel (%p181) target = $region20
      $region19: #{bio_cs_attention.1} parent=11 // pred_region
        _
      $region20: #{bio_cs_attention.1} parent=11 // pred_fallthru
        _
      // Predicated region
      $region21: #{bio_cs_attention.1} parent=11 // pred_check
        %p184 = pneg %p114
      $region22: #{bio_cs_attention.1} parent=11 // pred_check_branch
        %186 = sbr.rel (%p184) target = $region24
      $region23: #{bio_cs_attention.1} parent=11 // pred_region
        _
      $region24: #{bio_cs_attention.1} parent=11 // pred_fallthru
        _
      // Predicated region
      $region25: #{bio_cs_attention.1} parent=11 // pred_check
        %p187 = pneg %p135
      $region26: #{bio_cs_attention.1} parent=11 // pred_check_branch
        %189 = sbr.rel (%p187) target = $region28
      $region27: #{bio_cs_attention.1} parent=11 // pred_region
        _
      $region28: #{bio_cs_attention.1} parent=11 // pred_fallthru
        _
    $region12: #{bio_cs_attention.1} parent=5 // pred_fallthru
      _
    %p190 = scmp.lt.s32.totalorder %s11, 2
    // Predicated region
    $region29: #{bio_cs_attention.1} parent=5 // pred_check
      %p191 = pneg %p190
    $region30: #{bio_cs_attention.1} parent=5 // pred_check_branch
      %193 = sbr.rel (%p191) target = $region32
    $region31: #{bio_cs_attention.1} parent=5 // pred_region
      // Predicated region
      $region33: #{bio_cs_attention.1} parent=31 // pred_check
        %p194 = pneg %p45
      $region34: #{bio_cs_attention.1} parent=31 // pred_check_branch
        %196 = sbr.rel (%p194) target = $region36
      $region35: #{bio_cs_attention.1} parent=31 // pred_region
        %p197 = scmp.lt.s32.totalorder %s18, 1
        %s198 = scalar_select %p197, %s18, 1
        %p199 = scmp.lt.s32.totalorder %s19, 0
        %s200 = scalar_select %p199, %s19, 0
        %s201 = smul.addr %s198, 64
        %s202 = sadd.s32 %s200, %s201
        %s203 = smul.addr %s202, 8
        %s204 = scalar_lea.vmem %s0, %s203
      $region36: #{bio_cs_attention.1} parent=31 // pred_fallthru
        _
    $region32: #{bio_cs_attention.1} parent=5 // pred_fallthru
      _
    %p205 = scmp.le.s32.totalorder 1, %s11
    %p206 = scmp.lt.s32.totalorder %s11, 3
    %p207 = pnand %p205, %p206
    %p208 = pneg %p207
    // Predicated region
    $region37: #{bio_cs_attention.1} parent=5 // pred_check
      _
    $region38: #{bio_cs_attention.1} parent=5 // pred_check_branch
      %210 = sbr.rel (%p207) target = $region40
    $region39: #{bio_cs_attention.1} parent=5 // pred_region
      %s211 = ssub.s32 %s11, 1
      %p212 = scmp.lt.s32.totalorder %s20, 1
      %s213 = scalar_select %p212, %s20, 1
      %p214 = scmp.lt.s32.totalorder %s21, 0
      %s215 = scalar_select %p214, %s21, 0
      %s216 = smul.addr %s213, 64
      %s217 = sadd.s32 %s215, %s216
      %s218 = smul.addr %s217, 8
      %s219 = scalar_lea.vmem %s0, %s218
      %p220 = pneg %p51
      %p221 = pneg %p48
      %p222 = pneg %p72
      %p223 = pneg %p69
      %p224 = pneg %p93
      %p225 = pneg %p90
      %p226 = pneg %p114
      %p227 = pneg %p111
      %p228 = pneg %p135
      %p229 = pneg %p132
      %p230 = pneg %p163
      %p231 = pneg %p160
      %p232 = scmp.lt.s32.totalorder %s20, 1
      %s233 = scalar_select %p232, %s20, 1
      %p234 = scmp.lt.s32.totalorder %s21, 0
      %s235 = scalar_select %p234, %s21, 0
      %s236 = smul.addr %s233, 64
      %s237 = sadd.s32 %s235, %s236
      %s238 = smul.addr %s237, 8
      %s239 = scalar_lea.vmem %s5, %s238
      %p240 = scmp.lt.s32.totalorder %s20, 1
      %s241 = scalar_select %p240, %s20, 1
      %p242 = scmp.lt.s32.totalorder %s21, 0
      %s243 = scalar_select %p242, %s21, 0
      %s244 = smul.addr %s241, 64
      %s245 = sadd.s32 %s243, %s244
      %s246 = smul.addr %s245, 8
      %s247 = scalar_lea.vmem %s0, %s246
      %p248 = scmp.lt.s32.totalorder %s20, 1
      %s249 = scalar_select %p248, %s20, 1
      %p250 = scmp.lt.s32.totalorder %s21, 0
      %s251 = scalar_select %p250, %s21, 0
      %s252 = smul.addr %s249, 64
      %s253 = sadd.s32 %s251, %s252
      %s254 = smul.addr %s253, 8
      %s255 = scalar_lea.vmem %s5, %s254
      %v257 = vld [vmem:[%s247] sm:$0xff]
      %v258 = vld [vmem:[%s247 + $0x8] sm:$0xff]
      %v259 = vld [vmem:[%s247 + $0x10] sm:$0xff]
      %v260 = vld [vmem:[%s247 + $0x18] sm:$0xff]
      %v261 = vld [vmem:[%s247 + $0x20] sm:$0xff]
      %v262 = vld [vmem:[%s247 + $0x28] sm:$0xff]
      %v263 = vld [vmem:[%s247 + $0x30] sm:$0xff]
      %v264 = vld [vmem:[%s247 + $0x38] sm:$0xff]
      %v265 = vld [vmem:[%s247 + $0x40] sm:$0xff]
      %v266 = vld [vmem:[%s247 + $0x48] sm:$0xff]
      %v267 = vld [vmem:[%s247 + $0x50] sm:$0xff]
      %v268 = vld [vmem:[%s247 + $0x58] sm:$0xff]
      %v269 = vld [vmem:[%s247 + $0x60] sm:$0xff]
      %v270 = vld [vmem:[%s247 + $0x68] sm:$0xff]
      %v271 = vld [vmem:[%s247 + $0x70] sm:$0xff]
      %v272 = vld [vmem:[%s247 + $0x78] sm:$0xff]
      %v273 = vld [vmem:[%s247 + $0x80] sm:$0xff]
      %v274 = vld [vmem:[%s247 + $0x88] sm:$0xff]
      %v275 = vld [vmem:[%s247 + $0x90] sm:$0xff]
      %v276 = vld [vmem:[%s247 + $0x98] sm:$0xff]
      %v277 = vld [vmem:[%s247 + $0xa0] sm:$0xff]
      %v278 = vld [vmem:[%s247 + $0xa8] sm:$0xff]
      %v279 = vld [vmem:[%s247 + $0xb0] sm:$0xff]
      %v280 = vld [vmem:[%s247 + $0xb8] sm:$0xff]
      %v281 = vld [vmem:[%s247 + $0xc0] sm:$0xff]
      %v282 = vld [vmem:[%s247 + $0xc8] sm:$0xff]
      %v283 = vld [vmem:[%s247 + $0xd0] sm:$0xff]
      %v284 = vld [vmem:[%s247 + $0xd8] sm:$0xff]
      %v285 = vld [vmem:[%s247 + $0xe0] sm:$0xff]
      %v286 = vld [vmem:[%s247 + $0xe8] sm:$0xff]
      %v287 = vld [vmem:[%s247 + $0xf0] sm:$0xff]
      %v288 = vld [vmem:[%s247 + $0xf8] sm:$0xff]
      %v289 = vld [vmem:[%s247 + $0x100] sm:$0xff]
      %v290 = vld [vmem:[%s247 + $0x108] sm:$0xff]
      %v291 = vld [vmem:[%s247 + $0x110] sm:$0xff]
      %v292 = vld [vmem:[%s247 + $0x118] sm:$0xff]
      %v293 = vld [vmem:[%s247 + $0x120] sm:$0xff]
      %v294 = vld [vmem:[%s247 + $0x128] sm:$0xff]
      %v295 = vld [vmem:[%s247 + $0x130] sm:$0xff]
      %v296 = vld [vmem:[%s247 + $0x138] sm:$0xff]
      %v297 = vld [vmem:[%s247 + $0x140] sm:$0xff]
      %v298 = vld [vmem:[%s247 + $0x148] sm:$0xff]
      %v299 = vld [vmem:[%s247 + $0x150] sm:$0xff]
      %v300 = vld [vmem:[%s247 + $0x158] sm:$0xff]
      %v301 = vld [vmem:[%s247 + $0x160] sm:$0xff]
      %v302 = vld [vmem:[%s247 + $0x168] sm:$0xff]
      %v303 = vld [vmem:[%s247 + $0x170] sm:$0xff]
      %v304 = vld [vmem:[%s247 + $0x178] sm:$0xff]
      %v305 = vld [vmem:[%s247 + $0x180] sm:$0xff]
      %v306 = vld [vmem:[%s247 + $0x188] sm:$0xff]
      %v307 = vld [vmem:[%s247 + $0x190] sm:$0xff]
      %v308 = vld [vmem:[%s247 + $0x198] sm:$0xff]
      %v309 = vld [vmem:[%s247 + $0x1a0] sm:$0xff]
      %v310 = vld [vmem:[%s247 + $0x1a8] sm:$0xff]
      %v311 = vld [vmem:[%s247 + $0x1b0] sm:$0xff]
      %v312 = vld [vmem:[%s247 + $0x1b8] sm:$0xff]
      %v313 = vld [vmem:[%s247 + $0x1c0] sm:$0xff]
      %v314 = vld [vmem:[%s247 + $0x1c8] sm:$0xff]
      %v315 = vld [vmem:[%s247 + $0x1d0] sm:$0xff]
      %v316 = vld [vmem:[%s247 + $0x1d8] sm:$0xff]
      %v317 = vld [vmem:[%s247 + $0x1e0] sm:$0xff]
      %v318 = vld [vmem:[%s247 + $0x1e8] sm:$0xff]
      %v319 = vld [vmem:[%s247 + $0x1f0] sm:$0xff]
      %v320 = vld [vmem:[%s247 + $0x1f8] sm:$0xff]
      %v321 = vpack.c.bf16 %v258, %v257
      %v322 = vpack.c.bf16 %v260, %v259
      %v323 = vpack.c.bf16 %v262, %v261
      %v324 = vpack.c.bf16 %v264, %v263
      %v325 = vpack.c.bf16 %v266, %v265
      %v326 = vpack.c.bf16 %v268, %v267
      %v327 = vpack.c.bf16 %v270, %v269
      %v328 = vpack.c.bf16 %v272, %v271
      %v329 = vpack.c.bf16 %v274, %v273
      %v330 = vpack.c.bf16 %v276, %v275
      %v331 = vpack.c.bf16 %v278, %v277
      %v332 = vpack.c.bf16 %v280, %v279
      %v333 = vpack.c.bf16 %v282, %v281
      %v334 = vpack.c.bf16 %v284, %v283
      %v335 = vpack.c.bf16 %v286, %v285
      %v336 = vpack.c.bf16 %v288, %v287
      %v337 = vpack.c.bf16 %v290, %v289
      %v338 = vpack.c.bf16 %v292, %v291
      %v339 = vpack.c.bf16 %v294, %v293
      %v340 = vpack.c.bf16 %v296, %v295
      %v341 = vpack.c.bf16 %v298, %v297
      %v342 = vpack.c.bf16 %v300, %v299
      %v343 = vpack.c.bf16 %v302, %v301
      %v344 = vpack.c.bf16 %v304, %v303
      %v345 = vpack.c.bf16 %v306, %v305
      %v346 = vpack.c.bf16 %v308, %v307
      %v347 = vpack.c.bf16 %v310, %v309
      %v348 = vpack.c.bf16 %v312, %v311
      %v349 = vpack.c.bf16 %v314, %v313
      %v350 = vpack.c.bf16 %v316, %v315
      %v351 = vpack.c.bf16 %v318, %v317
      %v352 = vpack.c.bf16 %v320, %v319
      %v353 = vld [vmem:[%s1] sm:$0xff]
      %v354 = vld [vmem:[%s1 + $0x8] sm:$0xff]
      %v355 = vld [vmem:[%s1 + $0x10] sm:$0xff]
      %v356 = vld [vmem:[%s1 + $0x18] sm:$0xff]
      %v357 = vld [vmem:[%s1 + $0x20] sm:$0xff]
      %v358 = vld [vmem:[%s1 + $0x28] sm:$0xff]
      %v359 = vld [vmem:[%s1 + $0x30] sm:$0xff]
      %v360 = vld [vmem:[%s1 + $0x38] sm:$0xff]
      %v361 = vld [vmem:[%s1 + $0x40] sm:$0xff]
      %v362 = vld [vmem:[%s1 + $0x48] sm:$0xff]
      %v363 = vld [vmem:[%s1 + $0x50] sm:$0xff]
      %v364 = vld [vmem:[%s1 + $0x58] sm:$0xff]
      %v365 = vld [vmem:[%s1 + $0x60] sm:$0xff]
      %v366 = vld [vmem:[%s1 + $0x68] sm:$0xff]
      %v367 = vld [vmem:[%s1 + $0x70] sm:$0xff]
      %v368 = vld [vmem:[%s1 + $0x78] sm:$0xff]
      %v369 = vld [vmem:[%s1 + $0x80] sm:$0xff]
      %v370 = vld [vmem:[%s1 + $0x88] sm:$0xff]
      %v371 = vld [vmem:[%s1 + $0x90] sm:$0xff]
      %v372 = vld [vmem:[%s1 + $0x98] sm:$0xff]
      %v373 = vld [vmem:[%s1 + $0xa0] sm:$0xff]
      %v374 = vld [vmem:[%s1 + $0xa8] sm:$0xff]
      %v375 = vld [vmem:[%s1 + $0xb0] sm:$0xff]
      %v376 = vld [vmem:[%s1 + $0xb8] sm:$0xff]
      %v377 = vld [vmem:[%s1 + $0xc0] sm:$0xff]
      %v378 = vld [vmem:[%s1 + $0xc8] sm:$0xff]
      %v379 = vld [vmem:[%s1 + $0xd0] sm:$0xff]
      %v380 = vld [vmem:[%s1 + $0xd8] sm:$0xff]
      %v381 = vld [vmem:[%s1 + $0xe0] sm:$0xff]
      %v382 = vld [vmem:[%s1 + $0xe8] sm:$0xff]
      %v383 = vld [vmem:[%s1 + $0xf0] sm:$0xff]
      %v384 = vld [vmem:[%s1 + $0xf8] sm:$0xff]
      %v385 = vld [vmem:[%s1 + $0x100] sm:$0xff]
      %v386 = vld [vmem:[%s1 + $0x108] sm:$0xff]
      %v387 = vld [vmem:[%s1 + $0x110] sm:$0xff]
      %v388 = vld [vmem:[%s1 + $0x118] sm:$0xff]
      %v389 = vld [vmem:[%s1 + $0x120] sm:$0xff]
      %v390 = vld [vmem:[%s1 + $0x128] sm:$0xff]
      %v391 = vld [vmem:[%s1 + $0x130] sm:$0xff]
      %v392 = vld [vmem:[%s1 + $0x138] sm:$0xff]
      %v393 = vld [vmem:[%s1 + $0x140] sm:$0xff]
      %v394 = vld [vmem:[%s1 + $0x148] sm:$0xff]
      %v395 = vld [vmem:[%s1 + $0x150] sm:$0xff]
      %v396 = vld [vmem:[%s1 + $0x158] sm:$0xff]
      %v397 = vld [vmem:[%s1 + $0x160] sm:$0xff]
      %v398 = vld [vmem:[%s1 + $0x168] sm:$0xff]
      %v399 = vld [vmem:[%s1 + $0x170] sm:$0xff]
      %v400 = vld [vmem:[%s1 + $0x178] sm:$0xff]
      %v401 = vld [vmem:[%s1 + $0x180] sm:$0xff]
      %v402 = vld [vmem:[%s1 + $0x188] sm:$0xff]
      %v403 = vld [vmem:[%s1 + $0x190] sm:$0xff]
      %v404 = vld [vmem:[%s1 + $0x198] sm:$0xff]
      %v405 = vld [vmem:[%s1 + $0x1a0] sm:$0xff]
      %v406 = vld [vmem:[%s1 + $0x1a8] sm:$0xff]
      %v407 = vld [vmem:[%s1 + $0x1b0] sm:$0xff]
      %v408 = vld [vmem:[%s1 + $0x1b8] sm:$0xff]
      %v409 = vld [vmem:[%s1 + $0x1c0] sm:$0xff]
      %v410 = vld [vmem:[%s1 + $0x1c8] sm:$0xff]
      %v411 = vld [vmem:[%s1 + $0x1d0] sm:$0xff]
      %v412 = vld [vmem:[%s1 + $0x1d8] sm:$0xff]
      %v413 = vld [vmem:[%s1 + $0x1e0] sm:$0xff]
      %v414 = vld [vmem:[%s1 + $0x1e8] sm:$0xff]
      %v415 = vld [vmem:[%s1 + $0x1f0] sm:$0xff]
      %v416 = vld [vmem:[%s1 + $0x1f8] sm:$0xff]
      %v417 = vld [vmem:[%s1 + $0x200] sm:$0xff]
      %v418 = vld [vmem:[%s1 + $0x208] sm:$0xff]
      %v419 = vld [vmem:[%s1 + $0x210] sm:$0xff]
      %v420 = vld [vmem:[%s1 + $0x218] sm:$0xff]
      %v421 = vld [vmem:[%s1 + $0x220] sm:$0xff]
      %v422 = vld [vmem:[%s1 + $0x228] sm:$0xff]
      %v423 = vld [vmem:[%s1 + $0x230] sm:$0xff]
      %v424 = vld [vmem:[%s1 + $0x238] sm:$0xff]
      %v425 = vld [vmem:[%s1 + $0x240] sm:$0xff]
      %v426 = vld [vmem:[%s1 + $0x248] sm:$0xff]
      %v427 = vld [vmem:[%s1 + $0x250] sm:$0xff]
      %v428 = vld [vmem:[%s1 + $0x258] sm:$0xff]
      %v429 = vld [vmem:[%s1 + $0x260] sm:$0xff]
      %v430 = vld [vmem:[%s1 + $0x268] sm:$0xff]
      %v431 = vld [vmem:[%s1 + $0x270] sm:$0xff]
      %v432 = vld [vmem:[%s1 + $0x278] sm:$0xff]
      %v433 = vld [vmem:[%s1 + $0x280] sm:$0xff]
      %v434 = vld [vmem:[%s1 + $0x288] sm:$0xff]
      %v435 = vld [vmem:[%s1 + $0x290] sm:$0xff]
      %v436 = vld [vmem:[%s1 + $0x298] sm:$0xff]
      %v437 = vld [vmem:[%s1 + $0x2a0] sm:$0xff]
      %v438 = vld [vmem:[%s1 + $0x2a8] sm:$0xff]
      %v439 = vld [vmem:[%s1 + $0x2b0] sm:$0xff]
      %v440 = vld [vmem:[%s1 + $0x2b8] sm:$0xff]
      %v441 = vld [vmem:[%s1 + $0x2c0] sm:$0xff]
      %v442 = vld [vmem:[%s1 + $0x2c8] sm:$0xff]
      %v443 = vld [vmem:[%s1 + $0x2d0] sm:$0xff]
      %v444 = vld [vmem:[%s1 + $0x2d8] sm:$0xff]
      %v445 = vld [vmem:[%s1 + $0x2e0] sm:$0xff]
      %v446 = vld [vmem:[%s1 + $0x2e8] sm:$0xff]
      %v447 = vld [vmem:[%s1 + $0x2f0] sm:$0xff]
      %v448 = vld [vmem:[%s1 + $0x2f8] sm:$0xff]
      %v449 = vld [vmem:[%s1 + $0x300] sm:$0xff]
      %v450 = vld [vmem:[%s1 + $0x308] sm:$0xff]
      %v451 = vld [vmem:[%s1 + $0x310] sm:$0xff]
      %v452 = vld [vmem:[%s1 + $0x318] sm:$0xff]
      %v453 = vld [vmem:[%s1 + $0x320] sm:$0xff]
      %v454 = vld [vmem:[%s1 + $0x328] sm:$0xff]
      %v455 = vld [vmem:[%s1 + $0x330] sm:$0xff]
      %v456 = vld [vmem:[%s1 + $0x338] sm:$0xff]
      %v457 = vld [vmem:[%s1 + $0x340] sm:$0xff]
      %v458 = vld [vmem:[%s1 + $0x348] sm:$0xff]
      %v459 = vld [vmem:[%s1 + $0x350] sm:$0xff]
      %v460 = vld [vmem:[%s1 + $0x358] sm:$0xff]
      %v461 = vld [vmem:[%s1 + $0x360] sm:$0xff]
      %v462 = vld [vmem:[%s1 + $0x368] sm:$0xff]
      %v463 = vld [vmem:[%s1 + $0x370] sm:$0xff]
      %v464 = vld [vmem:[%s1 + $0x378] sm:$0xff]
      %v465 = vld [vmem:[%s1 + $0x380] sm:$0xff]
      %v466 = vld [vmem:[%s1 + $0x388] sm:$0xff]
      %v467 = vld [vmem:[%s1 + $0x390] sm:$0xff]
      %v468 = vld [vmem:[%s1 + $0x398] sm:$0xff]
      %v469 = vld [vmem:[%s1 + $0x3a0] sm:$0xff]
      %v470 = vld [vmem:[%s1 + $0x3a8] sm:$0xff]
      %v471 = vld [vmem:[%s1 + $0x3b0] sm:$0xff]
      %v472 = vld [vmem:[%s1 + $0x3b8] sm:$0xff]
      %v473 = vld [vmem:[%s1 + $0x3c0] sm:$0xff]
      %v474 = vld [vmem:[%s1 + $0x3c8] sm:$0xff]
      %v475 = vld [vmem:[%s1 + $0x3d0] sm:$0xff]
      %v476 = vld [vmem:[%s1 + $0x3d8] sm:$0xff]
      %v477 = vld [vmem:[%s1 + $0x3e0] sm:$0xff]
      %v478 = vld [vmem:[%s1 + $0x3e8] sm:$0xff]
      %v479 = vld [vmem:[%s1 + $0x3f0] sm:$0xff]
      %v480 = vld [vmem:[%s1 + $0x3f8] sm:$0xff]
      %v481 = vld [vmem:[%s1 + $0x400] sm:$0xff]
      %v482 = vld [vmem:[%s1 + $0x408] sm:$0xff]
      %v483 = vld [vmem:[%s1 + $0x410] sm:$0xff]
      %v484 = vld [vmem:[%s1 + $0x418] sm:$0xff]
      %v485 = vld [vmem:[%s1 + $0x420] sm:$0xff]
      %v486 = vld [vmem:[%s1 + $0x428] sm:$0xff]
      %v487 = vld [vmem:[%s1 + $0x430] sm:$0xff]
      %v488 = vld [vmem:[%s1 + $0x438] sm:$0xff]
      %v489 = vld [vmem:[%s1 + $0x440] sm:$0xff]
      %v490 = vld [vmem:[%s1 + $0x448] sm:$0xff]
      %v491 = vld [vmem:[%s1 + $0x450] sm:$0xff]
      %v492 = vld [vmem:[%s1 + $0x458] sm:$0xff]
      %v493 = vld [vmem:[%s1 + $0x460] sm:$0xff]
      %v494 = vld [vmem:[%s1 + $0x468] sm:$0xff]
      %v495 = vld [vmem:[%s1 + $0x470] sm:$0xff]
      %v496 = vld [vmem:[%s1 + $0x478] sm:$0xff]
      %v497 = vld [vmem:[%s1 + $0x480] sm:$0xff]
      %v498 = vld [vmem:[%s1 + $0x488] sm:$0xff]
      %v499 = vld [vmem:[%s1 + $0x490] sm:$0xff]
      %v500 = vld [vmem:[%s1 + $0x498] sm:$0xff]
      %v501 = vld [vmem:[%s1 + $0x4a0] sm:$0xff]
      %v502 = vld [vmem:[%s1 + $0x4a8] sm:$0xff]
      %v503 = vld [vmem:[%s1 + $0x4b0] sm:$0xff]
      %v504 = vld [vmem:[%s1 + $0x4b8] sm:$0xff]
      %v505 = vld [vmem:[%s1 + $0x4c0] sm:$0xff]
      %v506 = vld [vmem:[%s1 + $0x4c8] sm:$0xff]
      %v507 = vld [vmem:[%s1 + $0x4d0] sm:$0xff]
      %v508 = vld [vmem:[%s1 + $0x4d8] sm:$0xff]
      %v509 = vld [vmem:[%s1 + $0x4e0] sm:$0xff]
      %v510 = vld [vmem:[%s1 + $0x4e8] sm:$0xff]
      %v511 = vld [vmem:[%s1 + $0x4f0] sm:$0xff]
      %v512 = vld [vmem:[%s1 + $0x4f8] sm:$0xff]
      %v513 = vld [vmem:[%s1 + $0x500] sm:$0xff]
      %v514 = vld [vmem:[%s1 + $0x508] sm:$0xff]
      %v515 = vld [vmem:[%s1 + $0x510] sm:$0xff]
      %v516 = vld [vmem:[%s1 + $0x518] sm:$0xff]
      %v517 = vld [vmem:[%s1 + $0x520] sm:$0xff]
      %v518 = vld [vmem:[%s1 + $0x528] sm:$0xff]
      %v519 = vld [vmem:[%s1 + $0x530] sm:$0xff]
      %v520 = vld [vmem:[%s1 + $0x538] sm:$0xff]
      %v521 = vld [vmem:[%s1 + $0x540] sm:$0xff]
      %v522 = vld [vmem:[%s1 + $0x548] sm:$0xff]
      %v523 = vld [vmem:[%s1 + $0x550] sm:$0xff]
      %v524 = vld [vmem:[%s1 + $0x558] sm:$0xff]
      %v525 = vld [vmem:[%s1 + $0x560] sm:$0xff]
      %v526 = vld [vmem:[%s1 + $0x568] sm:$0xff]
      %v527 = vld [vmem:[%s1 + $0x570] sm:$0xff]
      %v528 = vld [vmem:[%s1 + $0x578] sm:$0xff]
      %v529 = vld [vmem:[%s1 + $0x580] sm:$0xff]
      %v530 = vld [vmem:[%s1 + $0x588] sm:$0xff]
      %v531 = vld [vmem:[%s1 + $0x590] sm:$0xff]
      %v532 = vld [vmem:[%s1 + $0x598] sm:$0xff]
      %v533 = vld [vmem:[%s1 + $0x5a0] sm:$0xff]
      %v534 = vld [vmem:[%s1 + $0x5a8] sm:$0xff]
      %v535 = vld [vmem:[%s1 + $0x5b0] sm:$0xff]
      %v536 = vld [vmem:[%s1 + $0x5b8] sm:$0xff]
      %v537 = vld [vmem:[%s1 + $0x5c0] sm:$0xff]
      %v538 = vld [vmem:[%s1 + $0x5c8] sm:$0xff]
      %v539 = vld [vmem:[%s1 + $0x5d0] sm:$0xff]
      %v540 = vld [vmem:[%s1 + $0x5d8] sm:$0xff]
      %v541 = vld [vmem:[%s1 + $0x5e0] sm:$0xff]
      %v542 = vld [vmem:[%s1 + $0x5e8] sm:$0xff]
      %v543 = vld [vmem:[%s1 + $0x5f0] sm:$0xff]
      %v544 = vld [vmem:[%s1 + $0x5f8] sm:$0xff]
      %v545 = vld [vmem:[%s1 + $0x600] sm:$0xff]
      %v546 = vld [vmem:[%s1 + $0x608] sm:$0xff]
      %v547 = vld [vmem:[%s1 + $0x610] sm:$0xff]
      %v548 = vld [vmem:[%s1 + $0x618] sm:$0xff]
      %v549 = vld [vmem:[%s1 + $0x620] sm:$0xff]
      %v550 = vld [vmem:[%s1 + $0x628] sm:$0xff]
      %v551 = vld [vmem:[%s1 + $0x630] sm:$0xff]
      %v552 = vld [vmem:[%s1 + $0x638] sm:$0xff]
      %v553 = vld [vmem:[%s1 + $0x640] sm:$0xff]
      %v554 = vld [vmem:[%s1 + $0x648] sm:$0xff]
      %v555 = vld [vmem:[%s1 + $0x650] sm:$0xff]
      %v556 = vld [vmem:[%s1 + $0x658] sm:$0xff]
      %v557 = vld [vmem:[%s1 + $0x660] sm:$0xff]
      %v558 = vld [vmem:[%s1 + $0x668] sm:$0xff]
      %v559 = vld [vmem:[%s1 + $0x670] sm:$0xff]
      %v560 = vld [vmem:[%s1 + $0x678] sm:$0xff]
      %v561 = vld [vmem:[%s1 + $0x680] sm:$0xff]
      %v562 = vld [vmem:[%s1 + $0x688] sm:$0xff]
      %v563 = vld [vmem:[%s1 + $0x690] sm:$0xff]
      %v564 = vld [vmem:[%s1 + $0x698] sm:$0xff]
      %v565 = vld [vmem:[%s1 + $0x6a0] sm:$0xff]
      %v566 = vld [vmem:[%s1 + $0x6a8] sm:$0xff]
      %v567 = vld [vmem:[%s1 + $0x6b0] sm:$0xff]
      %v568 = vld [vmem:[%s1 + $0x6b8] sm:$0xff]
      %v569 = vld [vmem:[%s1 + $0x6c0] sm:$0xff]
      %v570 = vld [vmem:[%s1 + $0x6c8] sm:$0xff]
      %v571 = vld [vmem:[%s1 + $0x6d0] sm:$0xff]
      %v572 = vld [vmem:[%s1 + $0x6d8] sm:$0xff]
      %v573 = vld [vmem:[%s1 + $0x6e0] sm:$0xff]
      %v574 = vld [vmem:[%s1 + $0x6e8] sm:$0xff]
      %v575 = vld [vmem:[%s1 + $0x6f0] sm:$0xff]
      %v576 = vld [vmem:[%s1 + $0x6f8] sm:$0xff]
      %v577 = vld [vmem:[%s1 + $0x700] sm:$0xff]
      %v578 = vld [vmem:[%s1 + $0x708] sm:$0xff]
      %v579 = vld [vmem:[%s1 + $0x710] sm:$0xff]
      %v580 = vld [vmem:[%s1 + $0x718] sm:$0xff]
      %v581 = vld [vmem:[%s1 + $0x720] sm:$0xff]
      %v582 = vld [vmem:[%s1 + $0x728] sm:$0xff]
      %v583 = vld [vmem:[%s1 + $0x730] sm:$0xff]
      %v584 = vld [vmem:[%s1 + $0x738] sm:$0xff]
      %v585 = vld [vmem:[%s1 + $0x740] sm:$0xff]
      %v586 = vld [vmem:[%s1 + $0x748] sm:$0xff]
      %v587 = vld [vmem:[%s1 + $0x750] sm:$0xff]
      %v588 = vld [vmem:[%s1 + $0x758] sm:$0xff]
      %v589 = vld [vmem:[%s1 + $0x760] sm:$0xff]
      %v590 = vld [vmem:[%s1 + $0x768] sm:$0xff]
      %v591 = vld [vmem:[%s1 + $0x770] sm:$0xff]
      %v592 = vld [vmem:[%s1 + $0x778] sm:$0xff]
      %v593 = vld [vmem:[%s1 + $0x780] sm:$0xff]
      %v594 = vld [vmem:[%s1 + $0x788] sm:$0xff]
      %v595 = vld [vmem:[%s1 + $0x790] sm:$0xff]
      %v596 = vld [vmem:[%s1 + $0x798] sm:$0xff]
      %v597 = vld [vmem:[%s1 + $0x7a0] sm:$0xff]
      %v598 = vld [vmem:[%s1 + $0x7a8] sm:$0xff]
      %v599 = vld [vmem:[%s1 + $0x7b0] sm:$0xff]
      %v600 = vld [vmem:[%s1 + $0x7b8] sm:$0xff]
      %v601 = vld [vmem:[%s1 + $0x7c0] sm:$0xff]
      %v602 = vld [vmem:[%s1 + $0x7c8] sm:$0xff]
      %v603 = vld [vmem:[%s1 + $0x7d0] sm:$0xff]
      %v604 = vld [vmem:[%s1 + $0x7d8] sm:$0xff]
      %v605 = vld [vmem:[%s1 + $0x7e0] sm:$0xff]
      %v606 = vld [vmem:[%s1 + $0x7e8] sm:$0xff]
      %v607 = vld [vmem:[%s1 + $0x7f0] sm:$0xff]
      %v608 = vld [vmem:[%s1 + $0x7f8] sm:$0xff]
      %v609 = vld [vmem:[%s1 + $0x800] sm:$0xff]
      %v610 = vld [vmem:[%s1 + $0x808] sm:$0xff]
      %v611 = vld [vmem:[%s1 + $0x810] sm:$0xff]
      %v612 = vld [vmem:[%s1 + $0x818] sm:$0xff]
      %v613 = vld [vmem:[%s1 + $0x820] sm:$0xff]
      %v614 = vld [vmem:[%s1 + $0x828] sm:$0xff]
      %v615 = vld [vmem:[%s1 + $0x830] sm:$0xff]
      %v616 = vld [vmem:[%s1 + $0x838] sm:$0xff]
      %v617 = vld [vmem:[%s1 + $0x840] sm:$0xff]
      %v618 = vld [vmem:[%s1 + $0x848] sm:$0xff]
      %v619 = vld [vmem:[%s1 + $0x850] sm:$0xff]
      %v620 = vld [vmem:[%s1 + $0x858] sm:$0xff]
      %v621 = vld [vmem:[%s1 + $0x860] sm:$0xff]
      %v622 = vld [vmem:[%s1 + $0x868] sm:$0xff]
      %v623 = vld [vmem:[%s1 + $0x870] sm:$0xff]
      %v624 = vld [vmem:[%s1 + $0x878] sm:$0xff]
      %v625 = vld [vmem:[%s1 + $0x880] sm:$0xff]
      %v626 = vld [vmem:[%s1 + $0x888] sm:$0xff]
      %v627 = vld [vmem:[%s1 + $0x890] sm:$0xff]
      %v628 = vld [vmem:[%s1 + $0x898] sm:$0xff]
      %v629 = vld [vmem:[%s1 + $0x8a0] sm:$0xff]
      %v630 = vld [vmem:[%s1 + $0x8a8] sm:$0xff]
      %v631 = vld [vmem:[%s1 + $0x8b0] sm:$0xff]
      %v632 = vld [vmem:[%s1 + $0x8b8] sm:$0xff]
      %v633 = vld [vmem:[%s1 + $0x8c0] sm:$0xff]
      %v634 = vld [vmem:[%s1 + $0x8c8] sm:$0xff]
      %v635 = vld [vmem:[%s1 + $0x8d0] sm:$0xff]
      %v636 = vld [vmem:[%s1 + $0x8d8] sm:$0xff]
      %v637 = vld [vmem:[%s1 + $0x8e0] sm:$0xff]
      %v638 = vld [vmem:[%s1 + $0x8e8] sm:$0xff]
      %v639 = vld [vmem:[%s1 + $0x8f0] sm:$0xff]
      %v640 = vld [vmem:[%s1 + $0x8f8] sm:$0xff]
      %v641 = vld [vmem:[%s1 + $0x900] sm:$0xff]
      %v642 = vld [vmem:[%s1 + $0x908] sm:$0xff]
      %v643 = vld [vmem:[%s1 + $0x910] sm:$0xff]
      %v644 = vld [vmem:[%s1 + $0x918] sm:$0xff]
      %v645 = vld [vmem:[%s1 + $0x920] sm:$0xff]
      %v646 = vld [vmem:[%s1 + $0x928] sm:$0xff]
      %v647 = vld [vmem:[%s1 + $0x930] sm:$0xff]
      %v648 = vld [vmem:[%s1 + $0x938] sm:$0xff]
      %v649 = vld [vmem:[%s1 + $0x940] sm:$0xff]
      %v650 = vld [vmem:[%s1 + $0x948] sm:$0xff]
      %v651 = vld [vmem:[%s1 + $0x950] sm:$0xff]
      %v652 = vld [vmem:[%s1 + $0x958] sm:$0xff]
      %v653 = vld [vmem:[%s1 + $0x960] sm:$0xff]
      %v654 = vld [vmem:[%s1 + $0x968] sm:$0xff]
      %v655 = vld [vmem:[%s1 + $0x970] sm:$0xff]
      %v656 = vld [vmem:[%s1 + $0x978] sm:$0xff]
      %v657 = vld [vmem:[%s1 + $0x980] sm:$0xff]
      %v658 = vld [vmem:[%s1 + $0x988] sm:$0xff]
      %v659 = vld [vmem:[%s1 + $0x990] sm:$0xff]
      %v660 = vld [vmem:[%s1 + $0x998] sm:$0xff]
      %v661 = vld [vmem:[%s1 + $0x9a0] sm:$0xff]
      %v662 = vld [vmem:[%s1 + $0x9a8] sm:$0xff]
      %v663 = vld [vmem:[%s1 + $0x9b0] sm:$0xff]
      %v664 = vld [vmem:[%s1 + $0x9b8] sm:$0xff]
      %v665 = vld [vmem:[%s1 + $0x9c0] sm:$0xff]
      %v666 = vld [vmem:[%s1 + $0x9c8] sm:$0xff]
      %v667 = vld [vmem:[%s1 + $0x9d0] sm:$0xff]
      %v668 = vld [vmem:[%s1 + $0x9d8] sm:$0xff]
      %v669 = vld [vmem:[%s1 + $0x9e0] sm:$0xff]
      %v670 = vld [vmem:[%s1 + $0x9e8] sm:$0xff]
      %v671 = vld [vmem:[%s1 + $0x9f0] sm:$0xff]
      %v672 = vld [vmem:[%s1 + $0x9f8] sm:$0xff]
      %v673 = vld [vmem:[%s1 + $0xa00] sm:$0xff]
      %v674 = vld [vmem:[%s1 + $0xa08] sm:$0xff]
      %v675 = vld [vmem:[%s1 + $0xa10] sm:$0xff]
      %v676 = vld [vmem:[%s1 + $0xa18] sm:$0xff]
      %v677 = vld [vmem:[%s1 + $0xa20] sm:$0xff]
      %v678 = vld [vmem:[%s1 + $0xa28] sm:$0xff]
      %v679 = vld [vmem:[%s1 + $0xa30] sm:$0xff]
      %v680 = vld [vmem:[%s1 + $0xa38] sm:$0xff]
      %v681 = vld [vmem:[%s1 + $0xa40] sm:$0xff]
      %v682 = vld [vmem:[%s1 + $0xa48] sm:$0xff]
      %v683 = vld [vmem:[%s1 + $0xa50] sm:$0xff]
      %v684 = vld [vmem:[%s1 + $0xa58] sm:$0xff]
      %v685 = vld [vmem:[%s1 + $0xa60] sm:$0xff]
      %v686 = vld [vmem:[%s1 + $0xa68] sm:$0xff]
      %v687 = vld [vmem:[%s1 + $0xa70] sm:$0xff]
      %v688 = vld [vmem:[%s1 + $0xa78] sm:$0xff]
      %v689 = vld [vmem:[%s1 + $0xa80] sm:$0xff]
      %v690 = vld [vmem:[%s1 + $0xa88] sm:$0xff]
      %v691 = vld [vmem:[%s1 + $0xa90] sm:$0xff]
      %v692 = vld [vmem:[%s1 + $0xa98] sm:$0xff]
      %v693 = vld [vmem:[%s1 + $0xaa0] sm:$0xff]
      %v694 = vld [vmem:[%s1 + $0xaa8] sm:$0xff]
      %v695 = vld [vmem:[%s1 + $0xab0] sm:$0xff]
      %v696 = vld [vmem:[%s1 + $0xab8] sm:$0xff]
      %v697 = vld [vmem:[%s1 + $0xac0] sm:$0xff]
      %v698 = vld [vmem:[%s1 + $0xac8] sm:$0xff]
      %v699 = vld [vmem:[%s1 + $0xad0] sm:$0xff]
      %v700 = vld [vmem:[%s1 + $0xad8] sm:$0xff]
      %v701 = vld [vmem:[%s1 + $0xae0] sm:$0xff]
      %v702 = vld [vmem:[%s1 + $0xae8] sm:$0xff]
      %v703 = vld [vmem:[%s1 + $0xaf0] sm:$0xff]
      %v704 = vld [vmem:[%s1 + $0xaf8] sm:$0xff]
      %v705 = vld [vmem:[%s1 + $0xb00] sm:$0xff]
      %v706 = vld [vmem:[%s1 + $0xb08] sm:$0xff]
      %v707 = vld [vmem:[%s1 + $0xb10] sm:$0xff]
      %v708 = vld [vmem:[%s1 + $0xb18] sm:$0xff]
      %v709 = vld [vmem:[%s1 + $0xb20] sm:$0xff]
      %v710 = vld [vmem:[%s1 + $0xb28] sm:$0xff]
      %v711 = vld [vmem:[%s1 + $0xb30] sm:$0xff]
      %v712 = vld [vmem:[%s1 + $0xb38] sm:$0xff]
      %v713 = vld [vmem:[%s1 + $0xb40] sm:$0xff]
      %v714 = vld [vmem:[%s1 + $0xb48] sm:$0xff]
      %v715 = vld [vmem:[%s1 + $0xb50] sm:$0xff]
      %v716 = vld [vmem:[%s1 + $0xb58] sm:$0xff]
      %v717 = vld [vmem:[%s1 + $0xb60] sm:$0xff]
      %v718 = vld [vmem:[%s1 + $0xb68] sm:$0xff]
      %v719 = vld [vmem:[%s1 + $0xb70] sm:$0xff]
      %v720 = vld [vmem:[%s1 + $0xb78] sm:$0xff]
      %v721 = vld [vmem:[%s1 + $0xb80] sm:$0xff]
      %v722 = vld [vmem:[%s1 + $0xb88] sm:$0xff]
      %v723 = vld [vmem:[%s1 + $0xb90] sm:$0xff]
      %v724 = vld [vmem:[%s1 + $0xb98] sm:$0xff]
      %v725 = vld [vmem:[%s1 + $0xba0] sm:$0xff]
      %v726 = vld [vmem:[%s1 + $0xba8] sm:$0xff]
      %v727 = vld [vmem:[%s1 + $0xbb0] sm:$0xff]
      %v728 = vld [vmem:[%s1 + $0xbb8] sm:$0xff]
      %v729 = vld [vmem:[%s1 + $0xbc0] sm:$0xff]
      %v730 = vld [vmem:[%s1 + $0xbc8] sm:$0xff]
      %v731 = vld [vmem:[%s1 + $0xbd0] sm:$0xff]
      %v732 = vld [vmem:[%s1 + $0xbd8] sm:$0xff]
      %v733 = vld [vmem:[%s1 + $0xbe0] sm:$0xff]
      %v734 = vld [vmem:[%s1 + $0xbe8] sm:$0xff]
      %v735 = vld [vmem:[%s1 + $0xbf0] sm:$0xff]
      %v736 = vld [vmem:[%s1 + $0xbf8] sm:$0xff]
      %v737 = vld [vmem:[%s2] sm:$0xff]
      %v738 = vld [vmem:[%s2 + $0x8] sm:$0xff]
      %v739 = vld [vmem:[%s2 + $0x10] sm:$0xff]
      %v740 = vld [vmem:[%s2 + $0x18] sm:$0xff]
      %v741 = vld [vmem:[%s2 + $0x20] sm:$0xff]
      %v742 = vld [vmem:[%s2 + $0x28] sm:$0xff]
      %v743 = vld [vmem:[%s2 + $0x30] sm:$0xff]
      %v744 = vld [vmem:[%s2 + $0x38] sm:$0xff]
      %v745 = vld [vmem:[%s2 + $0x40] sm:$0xff]
      %v746 = vld [vmem:[%s2 + $0x48] sm:$0xff]
      %v747 = vld [vmem:[%s2 + $0x50] sm:$0xff]
      %v748 = vld [vmem:[%s2 + $0x58] sm:$0xff]
      %v749 = vld [vmem:[%s2 + $0x60] sm:$0xff]
      %v750 = vld [vmem:[%s2 + $0x68] sm:$0xff]
      %v751 = vld [vmem:[%s2 + $0x70] sm:$0xff]
      %v752 = vld [vmem:[%s2 + $0x78] sm:$0xff]
      %v753 = vld [vmem:[%s2 + $0x80] sm:$0xff]
      %v754 = vld [vmem:[%s2 + $0x88] sm:$0xff]
      %v755 = vld [vmem:[%s2 + $0x90] sm:$0xff]
      %v756 = vld [vmem:[%s2 + $0x98] sm:$0xff]
      %v757 = vld [vmem:[%s2 + $0xa0] sm:$0xff]
      %v758 = vld [vmem:[%s2 + $0xa8] sm:$0xff]
      %v759 = vld [vmem:[%s2 + $0xb0] sm:$0xff]
      %v760 = vld [vmem:[%s2 + $0xb8] sm:$0xff]
      %v761 = vld [vmem:[%s2 + $0xc0] sm:$0xff]
      %v762 = vld [vmem:[%s2 + $0xc8] sm:$0xff]
      %v763 = vld [vmem:[%s2 + $0xd0] sm:$0xff]
      %v764 = vld [vmem:[%s2 + $0xd8] sm:$0xff]
      %v765 = vld [vmem:[%s2 + $0xe0] sm:$0xff]
      %v766 = vld [vmem:[%s2 + $0xe8] sm:$0xff]
      %v767 = vld [vmem:[%s2 + $0xf0] sm:$0xff]
      %v768 = vld [vmem:[%s2 + $0xf8] sm:$0xff]
      %v769 = vld [vmem:[%s2 + $0x100] sm:$0xff]
      %v770 = vld [vmem:[%s2 + $0x108] sm:$0xff]
      %v771 = vld [vmem:[%s2 + $0x110] sm:$0xff]
      %v772 = vld [vmem:[%s2 + $0x118] sm:$0xff]
      %v773 = vld [vmem:[%s2 + $0x120] sm:$0xff]
      %v774 = vld [vmem:[%s2 + $0x128] sm:$0xff]
      %v775 = vld [vmem:[%s2 + $0x130] sm:$0xff]
      %v776 = vld [vmem:[%s2 + $0x138] sm:$0xff]
      %v777 = vld [vmem:[%s2 + $0x140] sm:$0xff]
      %v778 = vld [vmem:[%s2 + $0x148] sm:$0xff]
      %v779 = vld [vmem:[%s2 + $0x150] sm:$0xff]
      %v780 = vld [vmem:[%s2 + $0x158] sm:$0xff]
      %v781 = vld [vmem:[%s2 + $0x160] sm:$0xff]
      %v782 = vld [vmem:[%s2 + $0x168] sm:$0xff]
      %v783 = vld [vmem:[%s2 + $0x170] sm:$0xff]
      %v784 = vld [vmem:[%s2 + $0x178] sm:$0xff]
      %v785 = vld [vmem:[%s2 + $0x180] sm:$0xff]
      %v786 = vld [vmem:[%s2 + $0x188] sm:$0xff]
      %v787 = vld [vmem:[%s2 + $0x190] sm:$0xff]
      %v788 = vld [vmem:[%s2 + $0x198] sm:$0xff]
      %v789 = vld [vmem:[%s2 + $0x1a0] sm:$0xff]
      %v790 = vld [vmem:[%s2 + $0x1a8] sm:$0xff]
      %v791 = vld [vmem:[%s2 + $0x1b0] sm:$0xff]
      %v792 = vld [vmem:[%s2 + $0x1b8] sm:$0xff]
      %v793 = vld [vmem:[%s2 + $0x1c0] sm:$0xff]
      %v794 = vld [vmem:[%s2 + $0x1c8] sm:$0xff]
      %v795 = vld [vmem:[%s2 + $0x1d0] sm:$0xff]
      %v796 = vld [vmem:[%s2 + $0x1d8] sm:$0xff]
      %v797 = vld [vmem:[%s2 + $0x1e0] sm:$0xff]
      %v798 = vld [vmem:[%s2 + $0x1e8] sm:$0xff]
      %v799 = vld [vmem:[%s2 + $0x1f0] sm:$0xff]
      %v800 = vld [vmem:[%s2 + $0x1f8] sm:$0xff]
      %v801 = vld [vmem:[%s2 + $0x200] sm:$0xff]
      %v802 = vld [vmem:[%s2 + $0x208] sm:$0xff]
      %v803 = vld [vmem:[%s2 + $0x210] sm:$0xff]
      %v804 = vld [vmem:[%s2 + $0x218] sm:$0xff]
      %v805 = vld [vmem:[%s2 + $0x220] sm:$0xff]
      %v806 = vld [vmem:[%s2 + $0x228] sm:$0xff]
      %v807 = vld [vmem:[%s2 + $0x230] sm:$0xff]
      %v808 = vld [vmem:[%s2 + $0x238] sm:$0xff]
      %v809 = vld [vmem:[%s2 + $0x240] sm:$0xff]
      %v810 = vld [vmem:[%s2 + $0x248] sm:$0xff]
      %v811 = vld [vmem:[%s2 + $0x250] sm:$0xff]
      %v812 = vld [vmem:[%s2 + $0x258] sm:$0xff]
      %v813 = vld [vmem:[%s2 + $0x260] sm:$0xff]
      %v814 = vld [vmem:[%s2 + $0x268] sm:$0xff]
      %v815 = vld [vmem:[%s2 + $0x270] sm:$0xff]
      %v816 = vld [vmem:[%s2 + $0x278] sm:$0xff]
      %v817 = vld [vmem:[%s2 + $0x280] sm:$0xff]
      %v818 = vld [vmem:[%s2 + $0x288] sm:$0xff]
      %v819 = vld [vmem:[%s2 + $0x290] sm:$0xff]
      %v820 = vld [vmem:[%s2 + $0x298] sm:$0xff]
      %v821 = vld [vmem:[%s2 + $0x2a0] sm:$0xff]
      %v822 = vld [vmem:[%s2 + $0x2a8] sm:$0xff]
      %v823 = vld [vmem:[%s2 + $0x2b0] sm:$0xff]
      %v824 = vld [vmem:[%s2 + $0x2b8] sm:$0xff]
      %v825 = vld [vmem:[%s2 + $0x2c0] sm:$0xff]
      %v826 = vld [vmem:[%s2 + $0x2c8] sm:$0xff]
      %v827 = vld [vmem:[%s2 + $0x2d0] sm:$0xff]
      %v828 = vld [vmem:[%s2 + $0x2d8] sm:$0xff]
      %v829 = vld [vmem:[%s2 + $0x2e0] sm:$0xff]
      %v830 = vld [vmem:[%s2 + $0x2e8] sm:$0xff]
      %v831 = vld [vmem:[%s2 + $0x2f0] sm:$0xff]
      %v832 = vld [vmem:[%s2 + $0x2f8] sm:$0xff]
      %v833 = vld [vmem:[%s2 + $0x300] sm:$0xff]
      %v834 = vld [vmem:[%s2 + $0x308] sm:$0xff]
      %v835 = vld [vmem:[%s2 + $0x310] sm:$0xff]
      %v836 = vld [vmem:[%s2 + $0x318] sm:$0xff]
      %v837 = vld [vmem:[%s2 + $0x320] sm:$0xff]
      %v838 = vld [vmem:[%s2 + $0x328] sm:$0xff]
      %v839 = vld [vmem:[%s2 + $0x330] sm:$0xff]
      %v840 = vld [vmem:[%s2 + $0x338] sm:$0xff]
      %v841 = vld [vmem:[%s2 + $0x340] sm:$0xff]
      %v842 = vld [vmem:[%s2 + $0x348] sm:$0xff]
      %v843 = vld [vmem:[%s2 + $0x350] sm:$0xff]
      %v844 = vld [vmem:[%s2 + $0x358] sm:$0xff]
      %v845 = vld [vmem:[%s2 + $0x360] sm:$0xff]
      %v846 = vld [vmem:[%s2 + $0x368] sm:$0xff]
      %v847 = vld [vmem:[%s2 + $0x370] sm:$0xff]
      %v848 = vld [vmem:[%s2 + $0x378] sm:$0xff]
      %v849 = vld [vmem:[%s2 + $0x380] sm:$0xff]
      %v850 = vld [vmem:[%s2 + $0x388] sm:$0xff]
      %v851 = vld [vmem:[%s2 + $0x390] sm:$0xff]
      %v852 = vld [vmem:[%s2 + $0x398] sm:$0xff]
      %v853 = vld [vmem:[%s2 + $0x3a0] sm:$0xff]
      %v854 = vld [vmem:[%s2 + $0x3a8] sm:$0xff]
      %v855 = vld [vmem:[%s2 + $0x3b0] sm:$0xff]
      %v856 = vld [vmem:[%s2 + $0x3b8] sm:$0xff]
      %v857 = vld [vmem:[%s2 + $0x3c0] sm:$0xff]
      %v858 = vld [vmem:[%s2 + $0x3c8] sm:$0xff]
      %v859 = vld [vmem:[%s2 + $0x3d0] sm:$0xff]
      %v860 = vld [vmem:[%s2 + $0x3d8] sm:$0xff]
      %v861 = vld [vmem:[%s2 + $0x3e0] sm:$0xff]
      %v862 = vld [vmem:[%s2 + $0x3e8] sm:$0xff]
      %v863 = vld [vmem:[%s2 + $0x3f0] sm:$0xff]
      %v864 = vld [vmem:[%s2 + $0x3f8] sm:$0xff]
      %v865 = vld [vmem:[%s2 + $0x400] sm:$0xff]
      %v866 = vld [vmem:[%s2 + $0x408] sm:$0xff]
      %v867 = vld [vmem:[%s2 + $0x410] sm:$0xff]
      %v868 = vld [vmem:[%s2 + $0x418] sm:$0xff]
      %v869 = vld [vmem:[%s2 + $0x420] sm:$0xff]
      %v870 = vld [vmem:[%s2 + $0x428] sm:$0xff]
      %v871 = vld [vmem:[%s2 + $0x430] sm:$0xff]
      %v872 = vld [vmem:[%s2 + $0x438] sm:$0xff]
      %v873 = vld [vmem:[%s2 + $0x440] sm:$0xff]
      %v874 = vld [vmem:[%s2 + $0x448] sm:$0xff]
      %v875 = vld [vmem:[%s2 + $0x450] sm:$0xff]
      %v876 = vld [vmem:[%s2 + $0x458] sm:$0xff]
      %v877 = vld [vmem:[%s2 + $0x460] sm:$0xff]
      %v878 = vld [vmem:[%s2 + $0x468] sm:$0xff]
      %v879 = vld [vmem:[%s2 + $0x470] sm:$0xff]
      %v880 = vld [vmem:[%s2 + $0x478] sm:$0xff]
      %v881 = vld [vmem:[%s2 + $0x480] sm:$0xff]
      %v882 = vld [vmem:[%s2 + $0x488] sm:$0xff]
      %v883 = vld [vmem:[%s2 + $0x490] sm:$0xff]
      %v884 = vld [vmem:[%s2 + $0x498] sm:$0xff]
      %v885 = vld [vmem:[%s2 + $0x4a0] sm:$0xff]
      %v886 = vld [vmem:[%s2 + $0x4a8] sm:$0xff]
      %v887 = vld [vmem:[%s2 + $0x4b0] sm:$0xff]
      %v888 = vld [vmem:[%s2 + $0x4b8] sm:$0xff]
      %v889 = vld [vmem:[%s2 + $0x4c0] sm:$0xff]
      %v890 = vld [vmem:[%s2 + $0x4c8] sm:$0xff]
      %v891 = vld [vmem:[%s2 + $0x4d0] sm:$0xff]
      %v892 = vld [vmem:[%s2 + $0x4d8] sm:$0xff]
      %v893 = vld [vmem:[%s2 + $0x4e0] sm:$0xff]
      %v894 = vld [vmem:[%s2 + $0x4e8] sm:$0xff]
      %v895 = vld [vmem:[%s2 + $0x4f0] sm:$0xff]
      %v896 = vld [vmem:[%s2 + $0x4f8] sm:$0xff]
      %v897 = vld [vmem:[%s2 + $0x500] sm:$0xff]
      %v898 = vld [vmem:[%s2 + $0x508] sm:$0xff]
      %v899 = vld [vmem:[%s2 + $0x510] sm:$0xff]
      %v900 = vld [vmem:[%s2 + $0x518] sm:$0xff]
      %v901 = vld [vmem:[%s2 + $0x520] sm:$0xff]
      %v902 = vld [vmem:[%s2 + $0x528] sm:$0xff]
      %v903 = vld [vmem:[%s2 + $0x530] sm:$0xff]
      %v904 = vld [vmem:[%s2 + $0x538] sm:$0xff]
      %v905 = vld [vmem:[%s2 + $0x540] sm:$0xff]
      %v906 = vld [vmem:[%s2 + $0x548] sm:$0xff]
      %v907 = vld [vmem:[%s2 + $0x550] sm:$0xff]
      %v908 = vld [vmem:[%s2 + $0x558] sm:$0xff]
      %v909 = vld [vmem:[%s2 + $0x560] sm:$0xff]
      %v910 = vld [vmem:[%s2 + $0x568] sm:$0xff]
      %v911 = vld [vmem:[%s2 + $0x570] sm:$0xff]
      %v912 = vld [vmem:[%s2 + $0x578] sm:$0xff]
      %v913 = vld [vmem:[%s2 + $0x580] sm:$0xff]
      %v914 = vld [vmem:[%s2 + $0x588] sm:$0xff]
      %v915 = vld [vmem:[%s2 + $0x590] sm:$0xff]
      %v916 = vld [vmem:[%s2 + $0x598] sm:$0xff]
      %v917 = vld [vmem:[%s2 + $0x5a0] sm:$0xff]
      %v918 = vld [vmem:[%s2 + $0x5a8] sm:$0xff]
      %v919 = vld [vmem:[%s2 + $0x5b0] sm:$0xff]
      %v920 = vld [vmem:[%s2 + $0x5b8] sm:$0xff]
      %v921 = vld [vmem:[%s2 + $0x5c0] sm:$0xff]
      %v922 = vld [vmem:[%s2 + $0x5c8] sm:$0xff]
      %v923 = vld [vmem:[%s2 + $0x5d0] sm:$0xff]
      %v924 = vld [vmem:[%s2 + $0x5d8] sm:$0xff]
      %v925 = vld [vmem:[%s2 + $0x5e0] sm:$0xff]
      %v926 = vld [vmem:[%s2 + $0x5e8] sm:$0xff]
      %v927 = vld [vmem:[%s2 + $0x5f0] sm:$0xff]
      %v928 = vld [vmem:[%s2 + $0x5f8] sm:$0xff]
      %930 = vset.pattern.permute.xlu0 0
      %931 = vperm.xlu0 %930, %v737
      %v932 = vpop.permute.xlu0 %931
      %935 = vset.pattern.permute.xlu0 0
      %936 = vperm.xlu0 %935, %v738
      %v937 = vpop.permute.xlu0 %936
      %940 = vset.pattern.permute.xlu0 0
      %941 = vperm.xlu0 %940, %v739
      %v942 = vpop.permute.xlu0 %941
      %945 = vset.pattern.permute.xlu0 0
      %946 = vperm.xlu0 %945, %v740
      %v947 = vpop.permute.xlu0 %946
      %950 = vset.pattern.permute.xlu0 0
      %951 = vperm.xlu0 %950, %v741
      %v952 = vpop.permute.xlu0 %951
      %955 = vset.pattern.permute.xlu0 0
      %956 = vperm.xlu0 %955, %v742
      %v957 = vpop.permute.xlu0 %956
      %960 = vset.pattern.permute.xlu0 0
      %961 = vperm.xlu0 %960, %v743
      %v962 = vpop.permute.xlu0 %961
      %965 = vset.pattern.permute.xlu0 0
      %966 = vperm.xlu0 %965, %v744
      %v967 = vpop.permute.xlu0 %966
      %970 = vset.pattern.permute.xlu0 0
      %971 = vperm.xlu0 %970, %v745
      %v972 = vpop.permute.xlu0 %971
      %975 = vset.pattern.permute.xlu0 0
      %976 = vperm.xlu0 %975, %v746
      %v977 = vpop.permute.xlu0 %976
      %980 = vset.pattern.permute.xlu0 0
      %981 = vperm.xlu0 %980, %v747
      %v982 = vpop.permute.xlu0 %981
      %985 = vset.pattern.permute.xlu0 0
      %986 = vperm.xlu0 %985, %v748
      %v987 = vpop.permute.xlu0 %986
      %990 = vset.pattern.permute.xlu0 0
      %991 = vperm.xlu0 %990, %v749
      %v992 = vpop.permute.xlu0 %991
      %995 = vset.pattern.permute.xlu0 0
      %996 = vperm.xlu0 %995, %v750
      %v997 = vpop.permute.xlu0 %996
      %1000 = vset.pattern.permute.xlu0 0
      %1001 = vperm.xlu0 %1000, %v751
      %v1002 = vpop.permute.xlu0 %1001
      %1005 = vset.pattern.permute.xlu0 0
      %1006 = vperm.xlu0 %1005, %v752
      %v1007 = vpop.permute.xlu0 %1006
      %1010 = vset.pattern.permute.xlu0 0
      %1011 = vperm.xlu0 %1010, %v753
      %v1012 = vpop.permute.xlu0 %1011
      %1015 = vset.pattern.permute.xlu0 0
      %1016 = vperm.xlu0 %1015, %v754
      %v1017 = vpop.permute.xlu0 %1016
      %1020 = vset.pattern.permute.xlu0 0
      %1021 = vperm.xlu0 %1020, %v755
      %v1022 = vpop.permute.xlu0 %1021
      %1025 = vset.pattern.permute.xlu0 0
      %1026 = vperm.xlu0 %1025, %v756
      %v1027 = vpop.permute.xlu0 %1026
      %1030 = vset.pattern.permute.xlu0 0
      %1031 = vperm.xlu0 %1030, %v757
      %v1032 = vpop.permute.xlu0 %1031
      %1035 = vset.pattern.permute.xlu0 0
      %1036 = vperm.xlu0 %1035, %v758
      %v1037 = vpop.permute.xlu0 %1036
      %1040 = vset.pattern.permute.xlu0 0
      %1041 = vperm.xlu0 %1040, %v759
      %v1042 = vpop.permute.xlu0 %1041
      %1045 = vset.pattern.permute.xlu0 0
      %1046 = vperm.xlu0 %1045, %v760
      %v1047 = vpop.permute.xlu0 %1046
      %1050 = vset.pattern.permute.xlu0 0
      %1051 = vperm.xlu0 %1050, %v761
      %v1052 = vpop.permute.xlu0 %1051
      %1055 = vset.pattern.permute.xlu0 0
      %1056 = vperm.xlu0 %1055, %v762
      %v1057 = vpop.permute.xlu0 %1056
      %1060 = vset.pattern.permute.xlu0 0
      %1061 = vperm.xlu0 %1060, %v763
      %v1062 = vpop.permute.xlu0 %1061
      %1065 = vset.pattern.permute.xlu0 0
      %1066 = vperm.xlu0 %1065, %v764
      %v1067 = vpop.permute.xlu0 %1066
      %1070 = vset.pattern.permute.xlu0 0
      %1071 = vperm.xlu0 %1070, %v765
      %v1072 = vpop.permute.xlu0 %1071
      %1075 = vset.pattern.permute.xlu0 0
      %1076 = vperm.xlu0 %1075, %v766
      %v1077 = vpop.permute.xlu0 %1076
      %1080 = vset.pattern.permute.xlu0 0
      %1081 = vperm.xlu0 %1080, %v767
      %v1082 = vpop.permute.xlu0 %1081
      %1085 = vset.pattern.permute.xlu0 0
      %1086 = vperm.xlu0 %1085, %v768
      %v1087 = vpop.permute.xlu0 %1086
      %1090 = vset.pattern.permute.xlu0 0
      %1091 = vperm.xlu0 %1090, %v769
      %v1092 = vpop.permute.xlu0 %1091
      %1095 = vset.pattern.permute.xlu0 0
      %1096 = vperm.xlu0 %1095, %v770
      %v1097 = vpop.permute.xlu0 %1096
      %1100 = vset.pattern.permute.xlu0 0
      %1101 = vperm.xlu0 %1100, %v771
      %v1102 = vpop.permute.xlu0 %1101
      %1105 = vset.pattern.permute.xlu0 0
      %1106 = vperm.xlu0 %1105, %v772
      %v1107 = vpop.permute.xlu0 %1106
      %1110 = vset.pattern.permute.xlu0 0
      %1111 = vperm.xlu0 %1110, %v773
      %v1112 = vpop.permute.xlu0 %1111
      %1115 = vset.pattern.permute.xlu0 0
      %1116 = vperm.xlu0 %1115, %v774
      %v1117 = vpop.permute.xlu0 %1116
      %1120 = vset.pattern.permute.xlu0 0
      %1121 = vperm.xlu0 %1120, %v775
      %v1122 = vpop.permute.xlu0 %1121
      %1125 = vset.pattern.permute.xlu0 0
      %1126 = vperm.xlu0 %1125, %v776
      %v1127 = vpop.permute.xlu0 %1126
      %1130 = vset.pattern.permute.xlu0 0
      %1131 = vperm.xlu0 %1130, %v777
      %v1132 = vpop.permute.xlu0 %1131
      %1135 = vset.pattern.permute.xlu0 0
      %1136 = vperm.xlu0 %1135, %v778
      %v1137 = vpop.permute.xlu0 %1136
      %1140 = vset.pattern.permute.xlu0 0
      %1141 = vperm.xlu0 %1140, %v779
      %v1142 = vpop.permute.xlu0 %1141
      %1145 = vset.pattern.permute.xlu0 0
      %1146 = vperm.xlu0 %1145, %v780
      %v1147 = vpop.permute.xlu0 %1146
      %1150 = vset.pattern.permute.xlu0 0
      %1151 = vperm.xlu0 %1150, %v781
      %v1152 = vpop.permute.xlu0 %1151
      %1155 = vset.pattern.permute.xlu0 0
      %1156 = vperm.xlu0 %1155, %v782
      %v1157 = vpop.permute.xlu0 %1156
      %1160 = vset.pattern.permute.xlu0 0
      %1161 = vperm.xlu0 %1160, %v783
      %v1162 = vpop.permute.xlu0 %1161
      %1165 = vset.pattern.permute.xlu0 0
      %1166 = vperm.xlu0 %1165, %v784
      %v1167 = vpop.permute.xlu0 %1166
      %1170 = vset.pattern.permute.xlu0 0
      %1171 = vperm.xlu0 %1170, %v785
      %v1172 = vpop.permute.xlu0 %1171
      %1175 = vset.pattern.permute.xlu0 0
      %1176 = vperm.xlu0 %1175, %v786
      %v1177 = vpop.permute.xlu0 %1176
      %1180 = vset.pattern.permute.xlu0 0
      %1181 = vperm.xlu0 %1180, %v787
      %v1182 = vpop.permute.xlu0 %1181
      %1185 = vset.pattern.permute.xlu0 0
      %1186 = vperm.xlu0 %1185, %v788
      %v1187 = vpop.permute.xlu0 %1186
      %1190 = vset.pattern.permute.xlu0 0
      %1191 = vperm.xlu0 %1190, %v789
      %v1192 = vpop.permute.xlu0 %1191
      %1195 = vset.pattern.permute.xlu0 0
      %1196 = vperm.xlu0 %1195, %v790
      %v1197 = vpop.permute.xlu0 %1196
      %1200 = vset.pattern.permute.xlu0 0
      %1201 = vperm.xlu0 %1200, %v791
      %v1202 = vpop.permute.xlu0 %1201
      %1205 = vset.pattern.permute.xlu0 0
      %1206 = vperm.xlu0 %1205, %v792
      %v1207 = vpop.permute.xlu0 %1206
      %1210 = vset.pattern.permute.xlu0 0
      %1211 = vperm.xlu0 %1210, %v793
      %v1212 = vpop.permute.xlu0 %1211
      %1215 = vset.pattern.permute.xlu0 0
      %1216 = vperm.xlu0 %1215, %v794
      %v1217 = vpop.permute.xlu0 %1216
      %1220 = vset.pattern.permute.xlu0 0
      %1221 = vperm.xlu0 %1220, %v795
      %v1222 = vpop.permute.xlu0 %1221
      %1225 = vset.pattern.permute.xlu0 0
      %1226 = vperm.xlu0 %1225, %v796
      %v1227 = vpop.permute.xlu0 %1226
      %1230 = vset.pattern.permute.xlu0 0
      %1231 = vperm.xlu0 %1230, %v797
      %v1232 = vpop.permute.xlu0 %1231
      %1235 = vset.pattern.permute.xlu0 0
      %1236 = vperm.xlu0 %1235, %v798
      %v1237 = vpop.permute.xlu0 %1236
      %1240 = vset.pattern.permute.xlu0 0
      %1241 = vperm.xlu0 %1240, %v799
      %v1242 = vpop.permute.xlu0 %1241
      %1245 = vset.pattern.permute.xlu0 0
      %1246 = vperm.xlu0 %1245, %v800
      %v1247 = vpop.permute.xlu0 %1246
      %1250 = vset.pattern.permute.xlu0 0
      %1251 = vperm.xlu0 %1250, %v801
      %v1252 = vpop.permute.xlu0 %1251
      %1255 = vset.pattern.permute.xlu0 0
      %1256 = vperm.xlu0 %1255, %v802
      %v1257 = vpop.permute.xlu0 %1256
      %1260 = vset.pattern.permute.xlu0 0
      %1261 = vperm.xlu0 %1260, %v803
      %v1262 = vpop.permute.xlu0 %1261
      %1265 = vset.pattern.permute.xlu0 0
      %1266 = vperm.xlu0 %1265, %v804
      %v1267 = vpop.permute.xlu0 %1266
      %1270 = vset.pattern.permute.xlu0 0
      %1271 = vperm.xlu0 %1270, %v805
      %v1272 = vpop.permute.xlu0 %1271
      %1275 = vset.pattern.permute.xlu0 0
      %1276 = vperm.xlu0 %1275, %v806
      %v1277 = vpop.permute.xlu0 %1276
      %1280 = vset.pattern.permute.xlu0 0
      %1281 = vperm.xlu0 %1280, %v807
      %v1282 = vpop.permute.xlu0 %1281
      %1285 = vset.pattern.permute.xlu0 0
      %1286 = vperm.xlu0 %1285, %v808
      %v1287 = vpop.permute.xlu0 %1286
      %1290 = vset.pattern.permute.xlu0 0
      %1291 = vperm.xlu0 %1290, %v809
      %v1292 = vpop.permute.xlu0 %1291
      %1295 = vset.pattern.permute.xlu0 0
      %1296 = vperm.xlu0 %1295, %v810
      %v1297 = vpop.permute.xlu0 %1296
      %1300 = vset.pattern.permute.xlu0 0
      %1301 = vperm.xlu0 %1300, %v811
      %v1302 = vpop.permute.xlu0 %1301
      %1305 = vset.pattern.permute.xlu0 0
      %1306 = vperm.xlu0 %1305, %v812
      %v1307 = vpop.permute.xlu0 %1306
      %1310 = vset.pattern.permute.xlu0 0
      %1311 = vperm.xlu0 %1310, %v813
      %v1312 = vpop.permute.xlu0 %1311
      %1315 = vset.pattern.permute.xlu0 0
      %1316 = vperm.xlu0 %1315, %v814
      %v1317 = vpop.permute.xlu0 %1316
      %1320 = vset.pattern.permute.xlu0 0
      %1321 = vperm.xlu0 %1320, %v815
      %v1322 = vpop.permute.xlu0 %1321
      %1325 = vset.pattern.permute.xlu0 0
      %1326 = vperm.xlu0 %1325, %v816
      %v1327 = vpop.permute.xlu0 %1326
      %1330 = vset.pattern.permute.xlu0 0
      %1331 = vperm.xlu0 %1330, %v817
      %v1332 = vpop.permute.xlu0 %1331
      %1335 = vset.pattern.permute.xlu0 0
      %1336 = vperm.xlu0 %1335, %v818
      %v1337 = vpop.permute.xlu0 %1336
      %1340 = vset.pattern.permute.xlu0 0
      %1341 = vperm.xlu0 %1340, %v819
      %v1342 = vpop.permute.xlu0 %1341
      %1345 = vset.pattern.permute.xlu0 0
      %1346 = vperm.xlu0 %1345, %v820
      %v1347 = vpop.permute.xlu0 %1346
      %1350 = vset.pattern.permute.xlu0 0
      %1351 = vperm.xlu0 %1350, %v821
      %v1352 = vpop.permute.xlu0 %1351
      %1355 = vset.pattern.permute.xlu0 0
      %1356 = vperm.xlu0 %1355, %v822
      %v1357 = vpop.permute.xlu0 %1356
      %1360 = vset.pattern.permute.xlu0 0
      %1361 = vperm.xlu0 %1360, %v823
      %v1362 = vpop.permute.xlu0 %1361
      %1365 = vset.pattern.permute.xlu0 0
      %1366 = vperm.xlu0 %1365, %v824
      %v1367 = vpop.permute.xlu0 %1366
      %1370 = vset.pattern.permute.xlu0 0
      %1371 = vperm.xlu0 %1370, %v825
      %v1372 = vpop.permute.xlu0 %1371
      %1375 = vset.pattern.permute.xlu0 0
      %1376 = vperm.xlu0 %1375, %v826
      %v1377 = vpop.permute.xlu0 %1376
      %1380 = vset.pattern.permute.xlu0 0
      %1381 = vperm.xlu0 %1380, %v827
      %v1382 = vpop.permute.xlu0 %1381
      %1385 = vset.pattern.permute.xlu0 0
      %1386 = vperm.xlu0 %1385, %v828
      %v1387 = vpop.permute.xlu0 %1386
      %1390 = vset.pattern.permute.xlu0 0
      %1391 = vperm.xlu0 %1390, %v829
      %v1392 = vpop.permute.xlu0 %1391
      %1395 = vset.pattern.permute.xlu0 0
      %1396 = vperm.xlu0 %1395, %v830
      %v1397 = vpop.permute.xlu0 %1396
      %1400 = vset.pattern.permute.xlu0 0
      %1401 = vperm.xlu0 %1400, %v831
      %v1402 = vpop.permute.xlu0 %1401
      %1405 = vset.pattern.permute.xlu0 0
      %1406 = vperm.xlu0 %1405, %v832
      %v1407 = vpop.permute.xlu0 %1406
      %1410 = vset.pattern.permute.xlu0 0
      %1411 = vperm.xlu0 %1410, %v833
      %v1412 = vpop.permute.xlu0 %1411
      %1415 = vset.pattern.permute.xlu0 0
      %1416 = vperm.xlu0 %1415, %v834
      %v1417 = vpop.permute.xlu0 %1416
      %1420 = vset.pattern.permute.xlu0 0
      %1421 = vperm.xlu0 %1420, %v835
      %v1422 = vpop.permute.xlu0 %1421
      %1425 = vset.pattern.permute.xlu0 0
      %1426 = vperm.xlu0 %1425, %v836
      %v1427 = vpop.permute.xlu0 %1426
      %1430 = vset.pattern.permute.xlu0 0
      %1431 = vperm.xlu0 %1430, %v837
      %v1432 = vpop.permute.xlu0 %1431
      %1435 = vset.pattern.permute.xlu0 0
      %1436 = vperm.xlu0 %1435, %v838
      %v1437 = vpop.permute.xlu0 %1436
      %1440 = vset.pattern.permute.xlu0 0
      %1441 = vperm.xlu0 %1440, %v839
      %v1442 = vpop.permute.xlu0 %1441
      %1445 = vset.pattern.permute.xlu0 0
      %1446 = vperm.xlu0 %1445, %v840
      %v1447 = vpop.permute.xlu0 %1446
      %1450 = vset.pattern.permute.xlu0 0
      %1451 = vperm.xlu0 %1450, %v841
      %v1452 = vpop.permute.xlu0 %1451
      %1455 = vset.pattern.permute.xlu0 0
      %1456 = vperm.xlu0 %1455, %v842
      %v1457 = vpop.permute.xlu0 %1456
      %1460 = vset.pattern.permute.xlu0 0
      %1461 = vperm.xlu0 %1460, %v843
      %v1462 = vpop.permute.xlu0 %1461
      %1465 = vset.pattern.permute.xlu0 0
      %1466 = vperm.xlu0 %1465, %v844
      %v1467 = vpop.permute.xlu0 %1466
      %1470 = vset.pattern.permute.xlu0 0
      %1471 = vperm.xlu0 %1470, %v845
      %v1472 = vpop.permute.xlu0 %1471
      %1475 = vset.pattern.permute.xlu0 0
      %1476 = vperm.xlu0 %1475, %v846
      %v1477 = vpop.permute.xlu0 %1476
      %1480 = vset.pattern.permute.xlu0 0
      %1481 = vperm.xlu0 %1480, %v847
      %v1482 = vpop.permute.xlu0 %1481
      %1485 = vset.pattern.permute.xlu0 0
      %1486 = vperm.xlu0 %1485, %v848
      %v1487 = vpop.permute.xlu0 %1486
      %1490 = vset.pattern.permute.xlu0 0
      %1491 = vperm.xlu0 %1490, %v849
      %v1492 = vpop.permute.xlu0 %1491
      %1495 = vset.pattern.permute.xlu0 0
      %1496 = vperm.xlu0 %1495, %v850
      %v1497 = vpop.permute.xlu0 %1496
      %1500 = vset.pattern.permute.xlu0 0
      %1501 = vperm.xlu0 %1500, %v851
      %v1502 = vpop.permute.xlu0 %1501
      %1505 = vset.pattern.permute.xlu0 0
      %1506 = vperm.xlu0 %1505, %v852
      %v1507 = vpop.permute.xlu0 %1506
      %1510 = vset.pattern.permute.xlu0 0
      %1511 = vperm.xlu0 %1510, %v853
      %v1512 = vpop.permute.xlu0 %1511
      %1515 = vset.pattern.permute.xlu0 0
      %1516 = vperm.xlu0 %1515, %v854
      %v1517 = vpop.permute.xlu0 %1516
      %1520 = vset.pattern.permute.xlu0 0
      %1521 = vperm.xlu0 %1520, %v855
      %v1522 = vpop.permute.xlu0 %1521
      %1525 = vset.pattern.permute.xlu0 0
      %1526 = vperm.xlu0 %1525, %v856
      %v1527 = vpop.permute.xlu0 %1526
      %1530 = vset.pattern.permute.xlu0 0
      %1531 = vperm.xlu0 %1530, %v857
      %v1532 = vpop.permute.xlu0 %1531
      %1535 = vset.pattern.permute.xlu0 0
      %1536 = vperm.xlu0 %1535, %v858
      %v1537 = vpop.permute.xlu0 %1536
      %1540 = vset.pattern.permute.xlu0 0
      %1541 = vperm.xlu0 %1540, %v859
      %v1542 = vpop.permute.xlu0 %1541
      %1545 = vset.pattern.permute.xlu0 0
      %1546 = vperm.xlu0 %1545, %v860
      %v1547 = vpop.permute.xlu0 %1546
      %1550 = vset.pattern.permute.xlu0 0
      %1551 = vperm.xlu0 %1550, %v861
      %v1552 = vpop.permute.xlu0 %1551
      %1555 = vset.pattern.permute.xlu0 0
      %1556 = vperm.xlu0 %1555, %v862
      %v1557 = vpop.permute.xlu0 %1556
      %1560 = vset.pattern.permute.xlu0 0
      %1561 = vperm.xlu0 %1560, %v863
      %v1562 = vpop.permute.xlu0 %1561
      %1565 = vset.pattern.permute.xlu0 0
      %1566 = vperm.xlu0 %1565, %v864
      %v1567 = vpop.permute.xlu0 %1566
      %1570 = vset.pattern.permute.xlu0 0
      %1571 = vperm.xlu0 %1570, %v865
      %v1572 = vpop.permute.xlu0 %1571
      %1575 = vset.pattern.permute.xlu0 0
      %1576 = vperm.xlu0 %1575, %v866
      %v1577 = vpop.permute.xlu0 %1576
      %1580 = vset.pattern.permute.xlu0 0
      %1581 = vperm.xlu0 %1580, %v867
      %v1582 = vpop.permute.xlu0 %1581
      %1585 = vset.pattern.permute.xlu0 0
      %1586 = vperm.xlu0 %1585, %v868
      %v1587 = vpop.permute.xlu0 %1586
      %1590 = vset.pattern.permute.xlu0 0
      %1591 = vperm.xlu0 %1590, %v869
      %v1592 = vpop.permute.xlu0 %1591
      %1595 = vset.pattern.permute.xlu0 0
      %1596 = vperm.xlu0 %1595, %v870
      %v1597 = vpop.permute.xlu0 %1596
      %1600 = vset.pattern.permute.xlu0 0
      %1601 = vperm.xlu0 %1600, %v871
      %v1602 = vpop.permute.xlu0 %1601
      %1605 = vset.pattern.permute.xlu0 0
      %1606 = vperm.xlu0 %1605, %v872
      %v1607 = vpop.permute.xlu0 %1606
      %1610 = vset.pattern.permute.xlu0 0
      %1611 = vperm.xlu0 %1610, %v873
      %v1612 = vpop.permute.xlu0 %1611
      %1615 = vset.pattern.permute.xlu0 0
      %1616 = vperm.xlu0 %1615, %v874
      %v1617 = vpop.permute.xlu0 %1616
      %1620 = vset.pattern.permute.xlu0 0
      %1621 = vperm.xlu0 %1620, %v875
      %v1622 = vpop.permute.xlu0 %1621
      %1625 = vset.pattern.permute.xlu0 0
      %1626 = vperm.xlu0 %1625, %v876
      %v1627 = vpop.permute.xlu0 %1626
      %1630 = vset.pattern.permute.xlu0 0
      %1631 = vperm.xlu0 %1630, %v877
      %v1632 = vpop.permute.xlu0 %1631
      %1635 = vset.pattern.permute.xlu0 0
      %1636 = vperm.xlu0 %1635, %v878
      %v1637 = vpop.permute.xlu0 %1636
      %1640 = vset.pattern.permute.xlu0 0
      %1641 = vperm.xlu0 %1640, %v879
      %v1642 = vpop.permute.xlu0 %1641
      %1645 = vset.pattern.permute.xlu0 0
      %1646 = vperm.xlu0 %1645, %v880
      %v1647 = vpop.permute.xlu0 %1646
      %1650 = vset.pattern.permute.xlu0 0
      %1651 = vperm.xlu0 %1650, %v881
      %v1652 = vpop.permute.xlu0 %1651
      %1655 = vset.pattern.permute.xlu0 0
      %1656 = vperm.xlu0 %1655, %v882
      %v1657 = vpop.permute.xlu0 %1656
      %1660 = vset.pattern.permute.xlu0 0
      %1661 = vperm.xlu0 %1660, %v883
      %v1662 = vpop.permute.xlu0 %1661
      %1665 = vset.pattern.permute.xlu0 0
      %1666 = vperm.xlu0 %1665, %v884
      %v1667 = vpop.permute.xlu0 %1666
      %1670 = vset.pattern.permute.xlu0 0
      %1671 = vperm.xlu0 %1670, %v885
      %v1672 = vpop.permute.xlu0 %1671
      %1675 = vset.pattern.permute.xlu0 0
      %1676 = vperm.xlu0 %1675, %v886
      %v1677 = vpop.permute.xlu0 %1676
      %1680 = vset.pattern.permute.xlu0 0
      %1681 = vperm.xlu0 %1680, %v887
      %v1682 = vpop.permute.xlu0 %1681
      %1685 = vset.pattern.permute.xlu0 0
      %1686 = vperm.xlu0 %1685, %v888
      %v1687 = vpop.permute.xlu0 %1686
      %1690 = vset.pattern.permute.xlu0 0
      %1691 = vperm.xlu0 %1690, %v889
      %v1692 = vpop.permute.xlu0 %1691
      %1695 = vset.pattern.permute.xlu0 0
      %1696 = vperm.xlu0 %1695, %v890
      %v1697 = vpop.permute.xlu0 %1696
      %1700 = vset.pattern.permute.xlu0 0
      %1701 = vperm.xlu0 %1700, %v891
      %v1702 = vpop.permute.xlu0 %1701
      %1705 = vset.pattern.permute.xlu0 0
      %1706 = vperm.xlu0 %1705, %v892
      %v1707 = vpop.permute.xlu0 %1706
      %1710 = vset.pattern.permute.xlu0 0
      %1711 = vperm.xlu0 %1710, %v893
      %v1712 = vpop.permute.xlu0 %1711
      %1715 = vset.pattern.permute.xlu0 0
      %1716 = vperm.xlu0 %1715, %v894
      %v1717 = vpop.permute.xlu0 %1716
      %1720 = vset.pattern.permute.xlu0 0
      %1721 = vperm.xlu0 %1720, %v895
      %v1722 = vpop.permute.xlu0 %1721
      %1725 = vset.pattern.permute.xlu0 0
      %1726 = vperm.xlu0 %1725, %v896
      %v1727 = vpop.permute.xlu0 %1726
      %1730 = vset.pattern.permute.xlu0 0
      %1731 = vperm.xlu0 %1730, %v897
      %v1732 = vpop.permute.xlu0 %1731
      %1735 = vset.pattern.permute.xlu0 0
      %1736 = vperm.xlu0 %1735, %v898
      %v1737 = vpop.permute.xlu0 %1736
      %1740 = vset.pattern.permute.xlu0 0
      %1741 = vperm.xlu0 %1740, %v899
      %v1742 = vpop.permute.xlu0 %1741
      %1745 = vset.pattern.permute.xlu0 0
      %1746 = vperm.xlu0 %1745, %v900
      %v1747 = vpop.permute.xlu0 %1746
      %1750 = vset.pattern.permute.xlu0 0
      %1751 = vperm.xlu0 %1750, %v901
      %v1752 = vpop.permute.xlu0 %1751
      %1755 = vset.pattern.permute.xlu0 0
      %1756 = vperm.xlu0 %1755, %v902
      %v1757 = vpop.permute.xlu0 %1756
      %1760 = vset.pattern.permute.xlu0 0
      %1761 = vperm.xlu0 %1760, %v903
      %v1762 = vpop.permute.xlu0 %1761
      %1765 = vset.pattern.permute.xlu0 0
      %1766 = vperm.xlu0 %1765, %v904
      %v1767 = vpop.permute.xlu0 %1766
      %1770 = vset.pattern.permute.xlu0 0
      %1771 = vperm.xlu0 %1770, %v905
      %v1772 = vpop.permute.xlu0 %1771
      %1775 = vset.pattern.permute.xlu0 0
      %1776 = vperm.xlu0 %1775, %v906
      %v1777 = vpop.permute.xlu0 %1776
      %1780 = vset.pattern.permute.xlu0 0
      %1781 = vperm.xlu0 %1780, %v907
      %v1782 = vpop.permute.xlu0 %1781
      %1785 = vset.pattern.permute.xlu0 0
      %1786 = vperm.xlu0 %1785, %v908
      %v1787 = vpop.permute.xlu0 %1786
      %1790 = vset.pattern.permute.xlu0 0
      %1791 = vperm.xlu0 %1790, %v909
      %v1792 = vpop.permute.xlu0 %1791
      %1795 = vset.pattern.permute.xlu0 0
      %1796 = vperm.xlu0 %1795, %v910
      %v1797 = vpop.permute.xlu0 %1796
      %1800 = vset.pattern.permute.xlu0 0
      %1801 = vperm.xlu0 %1800, %v911
      %v1802 = vpop.permute.xlu0 %1801
      %1805 = vset.pattern.permute.xlu0 0
      %1806 = vperm.xlu0 %1805, %v912
      %v1807 = vpop.permute.xlu0 %1806
      %1810 = vset.pattern.permute.xlu0 0
      %1811 = vperm.xlu0 %1810, %v913
      %v1812 = vpop.permute.xlu0 %1811
      %1815 = vset.pattern.permute.xlu0 0
      %1816 = vperm.xlu0 %1815, %v914
      %v1817 = vpop.permute.xlu0 %1816
      %1820 = vset.pattern.permute.xlu0 0
      %1821 = vperm.xlu0 %1820, %v915
      %v1822 = vpop.permute.xlu0 %1821
      %1825 = vset.pattern.permute.xlu0 0
      %1826 = vperm.xlu0 %1825, %v916
      %v1827 = vpop.permute.xlu0 %1826
      %1830 = vset.pattern.permute.xlu0 0
      %1831 = vperm.xlu0 %1830, %v917
      %v1832 = vpop.permute.xlu0 %1831
      %1835 = vset.pattern.permute.xlu0 0
      %1836 = vperm.xlu0 %1835, %v918
      %v1837 = vpop.permute.xlu0 %1836
      %1840 = vset.pattern.permute.xlu0 0
      %1841 = vperm.xlu0 %1840, %v919
      %v1842 = vpop.permute.xlu0 %1841
      %1845 = vset.pattern.permute.xlu0 0
      %1846 = vperm.xlu0 %1845, %v920
      %v1847 = vpop.permute.xlu0 %1846
      %1850 = vset.pattern.permute.xlu0 0
      %1851 = vperm.xlu0 %1850, %v921
      %v1852 = vpop.permute.xlu0 %1851
      %1855 = vset.pattern.permute.xlu0 0
      %1856 = vperm.xlu0 %1855, %v922
      %v1857 = vpop.permute.xlu0 %1856
      %1860 = vset.pattern.permute.xlu0 0
      %1861 = vperm.xlu0 %1860, %v923
      %v1862 = vpop.permute.xlu0 %1861
      %1865 = vset.pattern.permute.xlu0 0
      %1866 = vperm.xlu0 %1865, %v924
      %v1867 = vpop.permute.xlu0 %1866
      %1870 = vset.pattern.permute.xlu0 0
      %1871 = vperm.xlu0 %1870, %v925
      %v1872 = vpop.permute.xlu0 %1871
      %1875 = vset.pattern.permute.xlu0 0
      %1876 = vperm.xlu0 %1875, %v926
      %v1877 = vpop.permute.xlu0 %1876
      %1880 = vset.pattern.permute.xlu0 0
      %1881 = vperm.xlu0 %1880, %v927
      %v1882 = vpop.permute.xlu0 %1881
      %1885 = vset.pattern.permute.xlu0 0
      %1886 = vperm.xlu0 %1885, %v928
      %v1887 = vpop.permute.xlu0 %1886
      %v2273 = vunpack.c.l.b16 %v353
      %v2274 = vunpack.c.h.b16 %v353
      %v2275 = vunpack.c.l.b16 %v354
      %v2276 = vunpack.c.h.b16 %v354
      %v2277 = vunpack.c.l.b16 %v355
      %v2278 = vunpack.c.h.b16 %v355
      %v2279 = vunpack.c.l.b16 %v356
      %v2280 = vunpack.c.h.b16 %v356
      %v2281 = vunpack.c.l.b16 %v357
      %v2282 = vunpack.c.h.b16 %v357
      %v2283 = vunpack.c.l.b16 %v358
      %v2284 = vunpack.c.h.b16 %v358
      %v2285 = vunpack.c.l.b16 %v359
      %v2286 = vunpack.c.h.b16 %v359
      %v2287 = vunpack.c.l.b16 %v360
      %v2288 = vunpack.c.h.b16 %v360
      %v2289 = vunpack.c.l.b16 %v361
      %v2290 = vunpack.c.h.b16 %v361
      %v2291 = vunpack.c.l.b16 %v362
      %v2292 = vunpack.c.h.b16 %v362
      %v2293 = vunpack.c.l.b16 %v363
      %v2294 = vunpack.c.h.b16 %v363
      %v2295 = vunpack.c.l.b16 %v364
      %v2296 = vunpack.c.h.b16 %v364
      %v2297 = vunpack.c.l.b16 %v365
      %v2298 = vunpack.c.h.b16 %v365
      %v2299 = vunpack.c.l.b16 %v366
      %v2300 = vunpack.c.h.b16 %v366
      %v2301 = vunpack.c.l.b16 %v367
      %v2302 = vunpack.c.h.b16 %v367
      %v2303 = vunpack.c.l.b16 %v368
      %v2304 = vunpack.c.h.b16 %v368
      %v2305 = vunpack.c.l.b16 %v369
      %v2306 = vunpack.c.h.b16 %v369
      %v2307 = vunpack.c.l.b16 %v370
      %v2308 = vunpack.c.h.b16 %v370
      %v2309 = vunpack.c.l.b16 %v371
      %v2310 = vunpack.c.h.b16 %v371
      %v2311 = vunpack.c.l.b16 %v372
      %v2312 = vunpack.c.h.b16 %v372
      %v2313 = vunpack.c.l.b16 %v373
      %v2314 = vunpack.c.h.b16 %v373
      %v2315 = vunpack.c.l.b16 %v374
      %v2316 = vunpack.c.h.b16 %v374
      %v2317 = vunpack.c.l.b16 %v375
      %v2318 = vunpack.c.h.b16 %v375
      %v2319 = vunpack.c.l.b16 %v376
      %v2320 = vunpack.c.h.b16 %v376
      %v2321 = vunpack.c.l.b16 %v377
      %v2322 = vunpack.c.h.b16 %v377
      %v2323 = vunpack.c.l.b16 %v378
      %v2324 = vunpack.c.h.b16 %v378
      %v2325 = vunpack.c.l.b16 %v379
      %v2326 = vunpack.c.h.b16 %v379
      %v2327 = vunpack.c.l.b16 %v380
      %v2328 = vunpack.c.h.b16 %v380
      %v2329 = vunpack.c.l.b16 %v381
      %v2330 = vunpack.c.h.b16 %v381
      %v2331 = vunpack.c.l.b16 %v382
      %v2332 = vunpack.c.h.b16 %v382
      %v2333 = vunpack.c.l.b16 %v383
      %v2334 = vunpack.c.h.b16 %v383
      %v2335 = vunpack.c.l.b16 %v384
      %v2336 = vunpack.c.h.b16 %v384
      %v2337 = vunpack.c.l.b16 %v385
      %v2338 = vunpack.c.h.b16 %v385
      %v2339 = vunpack.c.l.b16 %v386
      %v2340 = vunpack.c.h.b16 %v386
      %v2341 = vunpack.c.l.b16 %v387
      %v2342 = vunpack.c.h.b16 %v387
      %v2343 = vunpack.c.l.b16 %v388
      %v2344 = vunpack.c.h.b16 %v388
      %v2345 = vunpack.c.l.b16 %v389
      %v2346 = vunpack.c.h.b16 %v389
      %v2347 = vunpack.c.l.b16 %v390
      %v2348 = vunpack.c.h.b16 %v390
      %v2349 = vunpack.c.l.b16 %v391
      %v2350 = vunpack.c.h.b16 %v391
      %v2351 = vunpack.c.l.b16 %v392
      %v2352 = vunpack.c.h.b16 %v392
      %v2353 = vunpack.c.l.b16 %v393
      %v2354 = vunpack.c.h.b16 %v393
      %v2355 = vunpack.c.l.b16 %v394
      %v2356 = vunpack.c.h.b16 %v394
      %v2357 = vunpack.c.l.b16 %v395
      %v2358 = vunpack.c.h.b16 %v395
      %v2359 = vunpack.c.l.b16 %v396
      %v2360 = vunpack.c.h.b16 %v396
      %v2361 = vunpack.c.l.b16 %v397
      %v2362 = vunpack.c.h.b16 %v397
      %v2363 = vunpack.c.l.b16 %v398
      %v2364 = vunpack.c.h.b16 %v398
      %v2365 = vunpack.c.l.b16 %v399
      %v2366 = vunpack.c.h.b16 %v399
      %v2367 = vunpack.c.l.b16 %v400
      %v2368 = vunpack.c.h.b16 %v400
      %v2369 = vunpack.c.l.b16 %v401
      %v2370 = vunpack.c.h.b16 %v401
      %v2371 = vunpack.c.l.b16 %v402
      %v2372 = vunpack.c.h.b16 %v402
      %v2373 = vunpack.c.l.b16 %v403
      %v2374 = vunpack.c.h.b16 %v403
      %v2375 = vunpack.c.l.b16 %v404
      %v2376 = vunpack.c.h.b16 %v404
      %v2377 = vunpack.c.l.b16 %v405
      %v2378 = vunpack.c.h.b16 %v405
      %v2379 = vunpack.c.l.b16 %v406
      %v2380 = vunpack.c.h.b16 %v406
      %v2381 = vunpack.c.l.b16 %v407
      %v2382 = vunpack.c.h.b16 %v407
      %v2383 = vunpack.c.l.b16 %v408
      %v2384 = vunpack.c.h.b16 %v408
      %v2385 = vunpack.c.l.b16 %v409
      %v2386 = vunpack.c.h.b16 %v409
      %v2387 = vunpack.c.l.b16 %v410
      %v2388 = vunpack.c.h.b16 %v410
      %v2389 = vunpack.c.l.b16 %v411
      %v2390 = vunpack.c.h.b16 %v411
      %v2391 = vunpack.c.l.b16 %v412
      %v2392 = vunpack.c.h.b16 %v412
      %v2393 = vunpack.c.l.b16 %v413
      %v2394 = vunpack.c.h.b16 %v413
      %v2395 = vunpack.c.l.b16 %v414
      %v2396 = vunpack.c.h.b16 %v414
      %v2397 = vunpack.c.l.b16 %v415
      %v2398 = vunpack.c.h.b16 %v415
      %v2399 = vunpack.c.l.b16 %v416
      %v2400 = vunpack.c.h.b16 %v416
      %v2401 = vunpack.c.l.b16 %v417
      %v2402 = vunpack.c.h.b16 %v417
      %v2403 = vunpack.c.l.b16 %v418
      %v2404 = vunpack.c.h.b16 %v418
      %v2405 = vunpack.c.l.b16 %v419
      %v2406 = vunpack.c.h.b16 %v419
      %v2407 = vunpack.c.l.b16 %v420
      %v2408 = vunpack.c.h.b16 %v420
      %v2409 = vunpack.c.l.b16 %v421
      %v2410 = vunpack.c.h.b16 %v421
      %v2411 = vunpack.c.l.b16 %v422
      %v2412 = vunpack.c.h.b16 %v422
      %v2413 = vunpack.c.l.b16 %v423
      %v2414 = vunpack.c.h.b16 %v423
      %v2415 = vunpack.c.l.b16 %v424
      %v2416 = vunpack.c.h.b16 %v424
      %v2417 = vunpack.c.l.b16 %v425
      %v2418 = vunpack.c.h.b16 %v425
      %v2419 = vunpack.c.l.b16 %v426
      %v2420 = vunpack.c.h.b16 %v426
      %v2421 = vunpack.c.l.b16 %v427
      %v2422 = vunpack.c.h.b16 %v427
      %v2423 = vunpack.c.l.b16 %v428
      %v2424 = vunpack.c.h.b16 %v428
      %v2425 = vunpack.c.l.b16 %v429
      %v2426 = vunpack.c.h.b16 %v429
      %v2427 = vunpack.c.l.b16 %v430
      %v2428 = vunpack.c.h.b16 %v430
      %v2429 = vunpack.c.l.b16 %v431
      %v2430 = vunpack.c.h.b16 %v431
      %v2431 = vunpack.c.l.b16 %v432
      %v2432 = vunpack.c.h.b16 %v432
      %v2433 = vunpack.c.l.b16 %v433
      %v2434 = vunpack.c.h.b16 %v433
      %v2435 = vunpack.c.l.b16 %v434
      %v2436 = vunpack.c.h.b16 %v434
      %v2437 = vunpack.c.l.b16 %v435
      %v2438 = vunpack.c.h.b16 %v435
      %v2439 = vunpack.c.l.b16 %v436
      %v2440 = vunpack.c.h.b16 %v436
      %v2441 = vunpack.c.l.b16 %v437
      %v2442 = vunpack.c.h.b16 %v437
      %v2443 = vunpack.c.l.b16 %v438
      %v2444 = vunpack.c.h.b16 %v438
      %v2445 = vunpack.c.l.b16 %v439
      %v2446 = vunpack.c.h.b16 %v439
      %v2447 = vunpack.c.l.b16 %v440
      %v2448 = vunpack.c.h.b16 %v440
      %v2449 = vunpack.c.l.b16 %v441
      %v2450 = vunpack.c.h.b16 %v441
      %v2451 = vunpack.c.l.b16 %v442
      %v2452 = vunpack.c.h.b16 %v442
      %v2453 = vunpack.c.l.b16 %v443
      %v2454 = vunpack.c.h.b16 %v443
      %v2455 = vunpack.c.l.b16 %v444
      %v2456 = vunpack.c.h.b16 %v444
      %v2457 = vunpack.c.l.b16 %v445
      %v2458 = vunpack.c.h.b16 %v445
      %v2459 = vunpack.c.l.b16 %v446
      %v2460 = vunpack.c.h.b16 %v446
      %v2461 = vunpack.c.l.b16 %v447
      %v2462 = vunpack.c.h.b16 %v447
      %v2463 = vunpack.c.l.b16 %v448
      %v2464 = vunpack.c.h.b16 %v448
      %v2465 = vunpack.c.l.b16 %v449
      %v2466 = vunpack.c.h.b16 %v449
      %v2467 = vunpack.c.l.b16 %v450
      %v2468 = vunpack.c.h.b16 %v450
      %v2469 = vunpack.c.l.b16 %v451
      %v2470 = vunpack.c.h.b16 %v451
      %v2471 = vunpack.c.l.b16 %v452
      %v2472 = vunpack.c.h.b16 %v452
      %v2473 = vunpack.c.l.b16 %v453
      %v2474 = vunpack.c.h.b16 %v453
      %v2475 = vunpack.c.l.b16 %v454
      %v2476 = vunpack.c.h.b16 %v454
      %v2477 = vunpack.c.l.b16 %v455
      %v2478 = vunpack.c.h.b16 %v455
      %v2479 = vunpack.c.l.b16 %v456
      %v2480 = vunpack.c.h.b16 %v456
      %v2481 = vunpack.c.l.b16 %v457
      %v2482 = vunpack.c.h.b16 %v457
      %v2483 = vunpack.c.l.b16 %v458
      %v2484 = vunpack.c.h.b16 %v458
      %v2485 = vunpack.c.l.b16 %v459
      %v2486 = vunpack.c.h.b16 %v459
      %v2487 = vunpack.c.l.b16 %v460
      %v2488 = vunpack.c.h.b16 %v460
      %v2489 = vunpack.c.l.b16 %v461
      %v2490 = vunpack.c.h.b16 %v461
      %v2491 = vunpack.c.l.b16 %v462
      %v2492 = vunpack.c.h.b16 %v462
      %v2493 = vunpack.c.l.b16 %v463
      %v2494 = vunpack.c.h.b16 %v463
      %v2495 = vunpack.c.l.b16 %v464
      %v2496 = vunpack.c.h.b16 %v464
      %v2497 = vunpack.c.l.b16 %v465
      %v2498 = vunpack.c.h.b16 %v465
      %v2499 = vunpack.c.l.b16 %v466
      %v2500 = vunpack.c.h.b16 %v466
      %v2501 = vunpack.c.l.b16 %v467
      %v2502 = vunpack.c.h.b16 %v467
      %v2503 = vunpack.c.l.b16 %v468
      %v2504 = vunpack.c.h.b16 %v468
      %v2505 = vunpack.c.l.b16 %v469
      %v2506 = vunpack.c.h.b16 %v469
      %v2507 = vunpack.c.l.b16 %v470
      %v2508 = vunpack.c.h.b16 %v470
      %v2509 = vunpack.c.l.b16 %v471
      %v2510 = vunpack.c.h.b16 %v471
      %v2511 = vunpack.c.l.b16 %v472
      %v2512 = vunpack.c.h.b16 %v472
      %v2513 = vunpack.c.l.b16 %v473
      %v2514 = vunpack.c.h.b16 %v473
      %v2515 = vunpack.c.l.b16 %v474
      %v2516 = vunpack.c.h.b16 %v474
      %v2517 = vunpack.c.l.b16 %v475
      %v2518 = vunpack.c.h.b16 %v475
      %v2519 = vunpack.c.l.b16 %v476
      %v2520 = vunpack.c.h.b16 %v476
      %v2521 = vunpack.c.l.b16 %v477
      %v2522 = vunpack.c.h.b16 %v477
      %v2523 = vunpack.c.l.b16 %v478
      %v2524 = vunpack.c.h.b16 %v478
      %v2525 = vunpack.c.l.b16 %v479
      %v2526 = vunpack.c.h.b16 %v479
      %v2527 = vunpack.c.l.b16 %v480
      %v2528 = vunpack.c.h.b16 %v480
      %v2529 = vunpack.c.l.b16 %v481
      %v2530 = vunpack.c.h.b16 %v481
      %v2531 = vunpack.c.l.b16 %v482
      %v2532 = vunpack.c.h.b16 %v482
      %v2533 = vunpack.c.l.b16 %v483
      %v2534 = vunpack.c.h.b16 %v483
      %v2535 = vunpack.c.l.b16 %v484
      %v2536 = vunpack.c.h.b16 %v484
      %v2537 = vunpack.c.l.b16 %v485
      %v2538 = vunpack.c.h.b16 %v485
      %v2539 = vunpack.c.l.b16 %v486
      %v2540 = vunpack.c.h.b16 %v486
      %v2541 = vunpack.c.l.b16 %v487
      %v2542 = vunpack.c.h.b16 %v487
      %v2543 = vunpack.c.l.b16 %v488
      %v2544 = vunpack.c.h.b16 %v488
      %v2545 = vunpack.c.l.b16 %v489
      %v2546 = vunpack.c.h.b16 %v489
      %v2547 = vunpack.c.l.b16 %v490
      %v2548 = vunpack.c.h.b16 %v490
      %v2549 = vunpack.c.l.b16 %v491
      %v2550 = vunpack.c.h.b16 %v491
      %v2551 = vunpack.c.l.b16 %v492
      %v2552 = vunpack.c.h.b16 %v492
      %v2553 = vunpack.c.l.b16 %v493
      %v2554 = vunpack.c.h.b16 %v493
      %v2555 = vunpack.c.l.b16 %v494
      %v2556 = vunpack.c.h.b16 %v494
      %v2557 = vunpack.c.l.b16 %v495
      %v2558 = vunpack.c.h.b16 %v495
      %v2559 = vunpack.c.l.b16 %v496
      %v2560 = vunpack.c.h.b16 %v496
      %v2561 = vunpack.c.l.b16 %v497
      %v2562 = vunpack.c.h.b16 %v497
      %v2563 = vunpack.c.l.b16 %v498
      %v2564 = vunpack.c.h.b16 %v498
      %v2565 = vunpack.c.l.b16 %v499
      %v2566 = vunpack.c.h.b16 %v499
      %v2567 = vunpack.c.l.b16 %v500
      %v2568 = vunpack.c.h.b16 %v500
      %v2569 = vunpack.c.l.b16 %v501
      %v2570 = vunpack.c.h.b16 %v501
      %v2571 = vunpack.c.l.b16 %v502
      %v2572 = vunpack.c.h.b16 %v502
      %v2573 = vunpack.c.l.b16 %v503
      %v2574 = vunpack.c.h.b16 %v503
      %v2575 = vunpack.c.l.b16 %v504
      %v2576 = vunpack.c.h.b16 %v504
      %v2577 = vunpack.c.l.b16 %v505
      %v2578 = vunpack.c.h.b16 %v505
      %v2579 = vunpack.c.l.b16 %v506
      %v2580 = vunpack.c.h.b16 %v506
      %v2581 = vunpack.c.l.b16 %v507
      %v2582 = vunpack.c.h.b16 %v507
      %v2583 = vunpack.c.l.b16 %v508
      %v2584 = vunpack.c.h.b16 %v508
      %v2585 = vunpack.c.l.b16 %v509
      %v2586 = vunpack.c.h.b16 %v509
      %v2587 = vunpack.c.l.b16 %v510
      %v2588 = vunpack.c.h.b16 %v510
      %v2589 = vunpack.c.l.b16 %v511
      %v2590 = vunpack.c.h.b16 %v511
      %v2591 = vunpack.c.l.b16 %v512
      %v2592 = vunpack.c.h.b16 %v512
      %v2593 = vunpack.c.l.b16 %v513
      %v2594 = vunpack.c.h.b16 %v513
      %v2595 = vunpack.c.l.b16 %v514
      %v2596 = vunpack.c.h.b16 %v514
      %v2597 = vunpack.c.l.b16 %v515
      %v2598 = vunpack.c.h.b16 %v515
      %v2599 = vunpack.c.l.b16 %v516
      %v2600 = vunpack.c.h.b16 %v516
      %v2601 = vunpack.c.l.b16 %v517
      %v2602 = vunpack.c.h.b16 %v517
      %v2603 = vunpack.c.l.b16 %v518
      %v2604 = vunpack.c.h.b16 %v518
      %v2605 = vunpack.c.l.b16 %v519
      %v2606 = vunpack.c.h.b16 %v519
      %v2607 = vunpack.c.l.b16 %v520
      %v2608 = vunpack.c.h.b16 %v520
      %v2609 = vunpack.c.l.b16 %v521
      %v2610 = vunpack.c.h.b16 %v521
      %v2611 = vunpack.c.l.b16 %v522
      %v2612 = vunpack.c.h.b16 %v522
      %v2613 = vunpack.c.l.b16 %v523
      %v2614 = vunpack.c.h.b16 %v523
      %v2615 = vunpack.c.l.b16 %v524
      %v2616 = vunpack.c.h.b16 %v524
      %v2617 = vunpack.c.l.b16 %v525
      %v2618 = vunpack.c.h.b16 %v525
      %v2619 = vunpack.c.l.b16 %v526
      %v2620 = vunpack.c.h.b16 %v526
      %v2621 = vunpack.c.l.b16 %v527
      %v2622 = vunpack.c.h.b16 %v527
      %v2623 = vunpack.c.l.b16 %v528
      %v2624 = vunpack.c.h.b16 %v528
      %v2625 = vunpack.c.l.b16 %v529
      %v2626 = vunpack.c.h.b16 %v529
      %v2627 = vunpack.c.l.b16 %v530
      %v2628 = vunpack.c.h.b16 %v530
      %v2629 = vunpack.c.l.b16 %v531
      %v2630 = vunpack.c.h.b16 %v531
      %v2631 = vunpack.c.l.b16 %v532
      %v2632 = vunpack.c.h.b16 %v532
      %v2633 = vunpack.c.l.b16 %v533
      %v2634 = vunpack.c.h.b16 %v533
      %v2635 = vunpack.c.l.b16 %v534
      %v2636 = vunpack.c.h.b16 %v534
      %v2637 = vunpack.c.l.b16 %v535
      %v2638 = vunpack.c.h.b16 %v535
      %v2639 = vunpack.c.l.b16 %v536
      %v2640 = vunpack.c.h.b16 %v536
      %v2641 = vunpack.c.l.b16 %v537
      %v2642 = vunpack.c.h.b16 %v537
      %v2643 = vunpack.c.l.b16 %v538
      %v2644 = vunpack.c.h.b16 %v538
      %v2645 = vunpack.c.l.b16 %v539
      %v2646 = vunpack.c.h.b16 %v539
      %v2647 = vunpack.c.l.b16 %v540
      %v2648 = vunpack.c.h.b16 %v540
      %v2649 = vunpack.c.l.b16 %v541
      %v2650 = vunpack.c.h.b16 %v541
      %v2651 = vunpack.c.l.b16 %v542
      %v2652 = vunpack.c.h.b16 %v542
      %v2653 = vunpack.c.l.b16 %v543
      %v2654 = vunpack.c.h.b16 %v543
      %v2655 = vunpack.c.l.b16 %v544
      %v2656 = vunpack.c.h.b16 %v544
      %v2657 = vunpack.c.l.b16 %v545
      %v2658 = vunpack.c.h.b16 %v545
      %v2659 = vunpack.c.l.b16 %v546
      %v2660 = vunpack.c.h.b16 %v546
      %v2661 = vunpack.c.l.b16 %v547
      %v2662 = vunpack.c.h.b16 %v547
      %v2663 = vunpack.c.l.b16 %v548
      %v2664 = vunpack.c.h.b16 %v548
      %v2665 = vunpack.c.l.b16 %v549
      %v2666 = vunpack.c.h.b16 %v549
      %v2667 = vunpack.c.l.b16 %v550
      %v2668 = vunpack.c.h.b16 %v550
      %v2669 = vunpack.c.l.b16 %v551
      %v2670 = vunpack.c.h.b16 %v551
      %v2671 = vunpack.c.l.b16 %v552
      %v2672 = vunpack.c.h.b16 %v552
      %v2673 = vunpack.c.l.b16 %v553
      %v2674 = vunpack.c.h.b16 %v553
      %v2675 = vunpack.c.l.b16 %v554
      %v2676 = vunpack.c.h.b16 %v554
      %v2677 = vunpack.c.l.b16 %v555
      %v2678 = vunpack.c.h.b16 %v555
      %v2679 = vunpack.c.l.b16 %v556
      %v2680 = vunpack.c.h.b16 %v556
      %v2681 = vunpack.c.l.b16 %v557
      %v2682 = vunpack.c.h.b16 %v557
      %v2683 = vunpack.c.l.b16 %v558
      %v2684 = vunpack.c.h.b16 %v558
      %v2685 = vunpack.c.l.b16 %v559
      %v2686 = vunpack.c.h.b16 %v559
      %v2687 = vunpack.c.l.b16 %v560
      %v2688 = vunpack.c.h.b16 %v560
      %v2689 = vunpack.c.l.b16 %v561
      %v2690 = vunpack.c.h.b16 %v561
      %v2691 = vunpack.c.l.b16 %v562
      %v2692 = vunpack.c.h.b16 %v562
      %v2693 = vunpack.c.l.b16 %v563
      %v2694 = vunpack.c.h.b16 %v563
      %v2695 = vunpack.c.l.b16 %v564
      %v2696 = vunpack.c.h.b16 %v564
      %v2697 = vunpack.c.l.b16 %v565
      %v2698 = vunpack.c.h.b16 %v565
      %v2699 = vunpack.c.l.b16 %v566
      %v2700 = vunpack.c.h.b16 %v566
      %v2701 = vunpack.c.l.b16 %v567
      %v2702 = vunpack.c.h.b16 %v567
      %v2703 = vunpack.c.l.b16 %v568
      %v2704 = vunpack.c.h.b16 %v568
      %v2705 = vunpack.c.l.b16 %v569
      %v2706 = vunpack.c.h.b16 %v569
      %v2707 = vunpack.c.l.b16 %v570
      %v2708 = vunpack.c.h.b16 %v570
      %v2709 = vunpack.c.l.b16 %v571
      %v2710 = vunpack.c.h.b16 %v571
      %v2711 = vunpack.c.l.b16 %v572
      %v2712 = vunpack.c.h.b16 %v572
      %v2713 = vunpack.c.l.b16 %v573
      %v2714 = vunpack.c.h.b16 %v573
      %v2715 = vunpack.c.l.b16 %v574
      %v2716 = vunpack.c.h.b16 %v574
      %v2717 = vunpack.c.l.b16 %v575
      %v2718 = vunpack.c.h.b16 %v575
      %v2719 = vunpack.c.l.b16 %v576
      %v2720 = vunpack.c.h.b16 %v576
      %v2721 = vunpack.c.l.b16 %v577
      %v2722 = vunpack.c.h.b16 %v577
      %v2723 = vunpack.c.l.b16 %v578
      %v2724 = vunpack.c.h.b16 %v578
      %v2725 = vunpack.c.l.b16 %v579
      %v2726 = vunpack.c.h.b16 %v579
      %v2727 = vunpack.c.l.b16 %v580
      %v2728 = vunpack.c.h.b16 %v580
      %v2729 = vunpack.c.l.b16 %v581
      %v2730 = vunpack.c.h.b16 %v581
      %v2731 = vunpack.c.l.b16 %v582
      %v2732 = vunpack.c.h.b16 %v582
      %v2733 = vunpack.c.l.b16 %v583
      %v2734 = vunpack.c.h.b16 %v583
      %v2735 = vunpack.c.l.b16 %v584
      %v2736 = vunpack.c.h.b16 %v584
      %v2737 = vunpack.c.l.b16 %v585
      %v2738 = vunpack.c.h.b16 %v585
      %v2739 = vunpack.c.l.b16 %v586
      %v2740 = vunpack.c.h.b16 %v586
      %v2741 = vunpack.c.l.b16 %v587
      %v2742 = vunpack.c.h.b16 %v587
      %v2743 = vunpack.c.l.b16 %v588
      %v2744 = vunpack.c.h.b16 %v588
      %v2745 = vunpack.c.l.b16 %v589
      %v2746 = vunpack.c.h.b16 %v589
      %v2747 = vunpack.c.l.b16 %v590
      %v2748 = vunpack.c.h.b16 %v590
      %v2749 = vunpack.c.l.b16 %v591
      %v2750 = vunpack.c.h.b16 %v591
      %v2751 = vunpack.c.l.b16 %v592
      %v2752 = vunpack.c.h.b16 %v592
      %v2753 = vunpack.c.l.b16 %v593
      %v2754 = vunpack.c.h.b16 %v593
      %v2755 = vunpack.c.l.b16 %v594
      %v2756 = vunpack.c.h.b16 %v594
      %v2757 = vunpack.c.l.b16 %v595
      %v2758 = vunpack.c.h.b16 %v595
      %v2759 = vunpack.c.l.b16 %v596
      %v2760 = vunpack.c.h.b16 %v596
      %v2761 = vunpack.c.l.b16 %v597
      %v2762 = vunpack.c.h.b16 %v597
      %v2763 = vunpack.c.l.b16 %v598
      %v2764 = vunpack.c.h.b16 %v598
      %v2765 = vunpack.c.l.b16 %v599
      %v2766 = vunpack.c.h.b16 %v599
      %v2767 = vunpack.c.l.b16 %v600
      %v2768 = vunpack.c.h.b16 %v600
      %v2769 = vunpack.c.l.b16 %v601
      %v2770 = vunpack.c.h.b16 %v601
      %v2771 = vunpack.c.l.b16 %v602
      %v2772 = vunpack.c.h.b16 %v602
      %v2773 = vunpack.c.l.b16 %v603
      %v2774 = vunpack.c.h.b16 %v603
      %v2775 = vunpack.c.l.b16 %v604
      %v2776 = vunpack.c.h.b16 %v604
      %v2777 = vunpack.c.l.b16 %v605
      %v2778 = vunpack.c.h.b16 %v605
      %v2779 = vunpack.c.l.b16 %v606
      %v2780 = vunpack.c.h.b16 %v606
      %v2781 = vunpack.c.l.b16 %v607
      %v2782 = vunpack.c.h.b16 %v607
      %v2783 = vunpack.c.l.b16 %v608
      %v2784 = vunpack.c.h.b16 %v608
      %v2785 = vunpack.c.l.b16 %v609
      %v2786 = vunpack.c.h.b16 %v609
      %v2787 = vunpack.c.l.b16 %v610
      %v2788 = vunpack.c.h.b16 %v610
      %v2789 = vunpack.c.l.b16 %v611
      %v2790 = vunpack.c.h.b16 %v611
      %v2791 = vunpack.c.l.b16 %v612
      %v2792 = vunpack.c.h.b16 %v612
      %v2793 = vunpack.c.l.b16 %v613
      %v2794 = vunpack.c.h.b16 %v613
      %v2795 = vunpack.c.l.b16 %v614
      %v2796 = vunpack.c.h.b16 %v614
      %v2797 = vunpack.c.l.b16 %v615
      %v2798 = vunpack.c.h.b16 %v615
      %v2799 = vunpack.c.l.b16 %v616
      %v2800 = vunpack.c.h.b16 %v616
      %v2801 = vunpack.c.l.b16 %v617
      %v2802 = vunpack.c.h.b16 %v617
      %v2803 = vunpack.c.l.b16 %v618
      %v2804 = vunpack.c.h.b16 %v618
      %v2805 = vunpack.c.l.b16 %v619
      %v2806 = vunpack.c.h.b16 %v619
      %v2807 = vunpack.c.l.b16 %v620
      %v2808 = vunpack.c.h.b16 %v620
      %v2809 = vunpack.c.l.b16 %v621
      %v2810 = vunpack.c.h.b16 %v621
      %v2811 = vunpack.c.l.b16 %v622
      %v2812 = vunpack.c.h.b16 %v622
      %v2813 = vunpack.c.l.b16 %v623
      %v2814 = vunpack.c.h.b16 %v623
      %v2815 = vunpack.c.l.b16 %v624
      %v2816 = vunpack.c.h.b16 %v624
      %v2817 = vunpack.c.l.b16 %v625
      %v2818 = vunpack.c.h.b16 %v625
      %v2819 = vunpack.c.l.b16 %v626
      %v2820 = vunpack.c.h.b16 %v626
      %v2821 = vunpack.c.l.b16 %v627
      %v2822 = vunpack.c.h.b16 %v627
      %v2823 = vunpack.c.l.b16 %v628
      %v2824 = vunpack.c.h.b16 %v628
      %v2825 = vunpack.c.l.b16 %v629
      %v2826 = vunpack.c.h.b16 %v629
      %v2827 = vunpack.c.l.b16 %v630
      %v2828 = vunpack.c.h.b16 %v630
      %v2829 = vunpack.c.l.b16 %v631
      %v2830 = vunpack.c.h.b16 %v631
      %v2831 = vunpack.c.l.b16 %v632
      %v2832 = vunpack.c.h.b16 %v632
      %v2833 = vunpack.c.l.b16 %v633
      %v2834 = vunpack.c.h.b16 %v633
      %v2835 = vunpack.c.l.b16 %v634
      %v2836 = vunpack.c.h.b16 %v634
      %v2837 = vunpack.c.l.b16 %v635
      %v2838 = vunpack.c.h.b16 %v635
      %v2839 = vunpack.c.l.b16 %v636
      %v2840 = vunpack.c.h.b16 %v636
      %v2841 = vunpack.c.l.b16 %v637
      %v2842 = vunpack.c.h.b16 %v637
      %v2843 = vunpack.c.l.b16 %v638
      %v2844 = vunpack.c.h.b16 %v638
      %v2845 = vunpack.c.l.b16 %v639
      %v2846 = vunpack.c.h.b16 %v639
      %v2847 = vunpack.c.l.b16 %v640
      %v2848 = vunpack.c.h.b16 %v640
      %v2849 = vunpack.c.l.b16 %v641
      %v2850 = vunpack.c.h.b16 %v641
      %v2851 = vunpack.c.l.b16 %v642
      %v2852 = vunpack.c.h.b16 %v642
      %v2853 = vunpack.c.l.b16 %v643
      %v2854 = vunpack.c.h.b16 %v643
      %v2855 = vunpack.c.l.b16 %v644
      %v2856 = vunpack.c.h.b16 %v644
      %v2857 = vunpack.c.l.b16 %v645
      %v2858 = vunpack.c.h.b16 %v645
      %v2859 = vunpack.c.l.b16 %v646
      %v2860 = vunpack.c.h.b16 %v646
      %v2861 = vunpack.c.l.b16 %v647
      %v2862 = vunpack.c.h.b16 %v647
      %v2863 = vunpack.c.l.b16 %v648
      %v2864 = vunpack.c.h.b16 %v648
      %v2865 = vunpack.c.l.b16 %v649
      %v2866 = vunpack.c.h.b16 %v649
      %v2867 = vunpack.c.l.b16 %v650
      %v2868 = vunpack.c.h.b16 %v650
      %v2869 = vunpack.c.l.b16 %v651
      %v2870 = vunpack.c.h.b16 %v651
      %v2871 = vunpack.c.l.b16 %v652
      %v2872 = vunpack.c.h.b16 %v652
      %v2873 = vunpack.c.l.b16 %v653
      %v2874 = vunpack.c.h.b16 %v653
      %v2875 = vunpack.c.l.b16 %v654
      %v2876 = vunpack.c.h.b16 %v654
      %v2877 = vunpack.c.l.b16 %v655
      %v2878 = vunpack.c.h.b16 %v655
      %v2879 = vunpack.c.l.b16 %v656
      %v2880 = vunpack.c.h.b16 %v656
      %v2881 = vunpack.c.l.b16 %v657
      %v2882 = vunpack.c.h.b16 %v657
      %v2883 = vunpack.c.l.b16 %v658
      %v2884 = vunpack.c.h.b16 %v658
      %v2885 = vunpack.c.l.b16 %v659
      %v2886 = vunpack.c.h.b16 %v659
      %v2887 = vunpack.c.l.b16 %v660
      %v2888 = vunpack.c.h.b16 %v660
      %v2889 = vunpack.c.l.b16 %v661
      %v2890 = vunpack.c.h.b16 %v661
      %v2891 = vunpack.c.l.b16 %v662
      %v2892 = vunpack.c.h.b16 %v662
      %v2893 = vunpack.c.l.b16 %v663
      %v2894 = vunpack.c.h.b16 %v663
      %v2895 = vunpack.c.l.b16 %v664
      %v2896 = vunpack.c.h.b16 %v664
      %v2897 = vunpack.c.l.b16 %v665
      %v2898 = vunpack.c.h.b16 %v665
      %v2899 = vunpack.c.l.b16 %v666
      %v2900 = vunpack.c.h.b16 %v666
      %v2901 = vunpack.c.l.b16 %v667
      %v2902 = vunpack.c.h.b16 %v667
      %v2903 = vunpack.c.l.b16 %v668
      %v2904 = vunpack.c.h.b16 %v668
      %v2905 = vunpack.c.l.b16 %v669
      %v2906 = vunpack.c.h.b16 %v669
      %v2907 = vunpack.c.l.b16 %v670
      %v2908 = vunpack.c.h.b16 %v670
      %v2909 = vunpack.c.l.b16 %v671
      %v2910 = vunpack.c.h.b16 %v671
      %v2911 = vunpack.c.l.b16 %v672
      %v2912 = vunpack.c.h.b16 %v672
      %v2913 = vunpack.c.l.b16 %v673
      %v2914 = vunpack.c.h.b16 %v673
      %v2915 = vunpack.c.l.b16 %v674
      %v2916 = vunpack.c.h.b16 %v674
      %v2917 = vunpack.c.l.b16 %v675
      %v2918 = vunpack.c.h.b16 %v675
      %v2919 = vunpack.c.l.b16 %v676
      %v2920 = vunpack.c.h.b16 %v676
      %v2921 = vunpack.c.l.b16 %v677
      %v2922 = vunpack.c.h.b16 %v677
      %v2923 = vunpack.c.l.b16 %v678
      %v2924 = vunpack.c.h.b16 %v678
      %v2925 = vunpack.c.l.b16 %v679
      %v2926 = vunpack.c.h.b16 %v679
      %v2927 = vunpack.c.l.b16 %v680
      %v2928 = vunpack.c.h.b16 %v680
      %v2929 = vunpack.c.l.b16 %v681
      %v2930 = vunpack.c.h.b16 %v681
      %v2931 = vunpack.c.l.b16 %v682
      %v2932 = vunpack.c.h.b16 %v682
      %v2933 = vunpack.c.l.b16 %v683
      %v2934 = vunpack.c.h.b16 %v683
      %v2935 = vunpack.c.l.b16 %v684
      %v2936 = vunpack.c.h.b16 %v684
      %v2937 = vunpack.c.l.b16 %v685
      %v2938 = vunpack.c.h.b16 %v685
      %v2939 = vunpack.c.l.b16 %v686
      %v2940 = vunpack.c.h.b16 %v686
      %v2941 = vunpack.c.l.b16 %v687
      %v2942 = vunpack.c.h.b16 %v687
      %v2943 = vunpack.c.l.b16 %v688
      %v2944 = vunpack.c.h.b16 %v688
      %v2945 = vunpack.c.l.b16 %v689
      %v2946 = vunpack.c.h.b16 %v689
      %v2947 = vunpack.c.l.b16 %v690
      %v2948 = vunpack.c.h.b16 %v690
      %v2949 = vunpack.c.l.b16 %v691
      %v2950 = vunpack.c.h.b16 %v691
      %v2951 = vunpack.c.l.b16 %v692
      %v2952 = vunpack.c.h.b16 %v692
      %v2953 = vunpack.c.l.b16 %v693
      %v2954 = vunpack.c.h.b16 %v693
      %v2955 = vunpack.c.l.b16 %v694
      %v2956 = vunpack.c.h.b16 %v694
      %v2957 = vunpack.c.l.b16 %v695
      %v2958 = vunpack.c.h.b16 %v695
      %v2959 = vunpack.c.l.b16 %v696
      %v2960 = vunpack.c.h.b16 %v696
      %v2961 = vunpack.c.l.b16 %v697
      %v2962 = vunpack.c.h.b16 %v697
      %v2963 = vunpack.c.l.b16 %v698
      %v2964 = vunpack.c.h.b16 %v698
      %v2965 = vunpack.c.l.b16 %v699
      %v2966 = vunpack.c.h.b16 %v699
      %v2967 = vunpack.c.l.b16 %v700
      %v2968 = vunpack.c.h.b16 %v700
      %v2969 = vunpack.c.l.b16 %v701
      %v2970 = vunpack.c.h.b16 %v701
      %v2971 = vunpack.c.l.b16 %v702
      %v2972 = vunpack.c.h.b16 %v702
      %v2973 = vunpack.c.l.b16 %v703
      %v2974 = vunpack.c.h.b16 %v703
      %v2975 = vunpack.c.l.b16 %v704
      %v2976 = vunpack.c.h.b16 %v704
      %v2977 = vunpack.c.l.b16 %v705
      %v2978 = vunpack.c.h.b16 %v705
      %v2979 = vunpack.c.l.b16 %v706
      %v2980 = vunpack.c.h.b16 %v706
      %v2981 = vunpack.c.l.b16 %v707
      %v2982 = vunpack.c.h.b16 %v707
      %v2983 = vunpack.c.l.b16 %v708
      %v2984 = vunpack.c.h.b16 %v708
      %v2985 = vunpack.c.l.b16 %v709
      %v2986 = vunpack.c.h.b16 %v709
      %v2987 = vunpack.c.l.b16 %v710
      %v2988 = vunpack.c.h.b16 %v710
      %v2989 = vunpack.c.l.b16 %v711
      %v2990 = vunpack.c.h.b16 %v711
      %v2991 = vunpack.c.l.b16 %v712
      %v2992 = vunpack.c.h.b16 %v712
      %v2993 = vunpack.c.l.b16 %v713
      %v2994 = vunpack.c.h.b16 %v713
      %v2995 = vunpack.c.l.b16 %v714
      %v2996 = vunpack.c.h.b16 %v714
      %v2997 = vunpack.c.l.b16 %v715
      %v2998 = vunpack.c.h.b16 %v715
      %v2999 = vunpack.c.l.b16 %v716
      %v3000 = vunpack.c.h.b16 %v716
      %v3001 = vunpack.c.l.b16 %v717
      %v3002 = vunpack.c.h.b16 %v717
      %v3003 = vunpack.c.l.b16 %v718
      %v3004 = vunpack.c.h.b16 %v718
      %v3005 = vunpack.c.l.b16 %v719
      %v3006 = vunpack.c.h.b16 %v719
      %v3007 = vunpack.c.l.b16 %v720
      %v3008 = vunpack.c.h.b16 %v720
      %v3009 = vunpack.c.l.b16 %v721
      %v3010 = vunpack.c.h.b16 %v721
      %v3011 = vunpack.c.l.b16 %v722
      %v3012 = vunpack.c.h.b16 %v722
      %v3013 = vunpack.c.l.b16 %v723
      %v3014 = vunpack.c.h.b16 %v723
      %v3015 = vunpack.c.l.b16 %v724
      %v3016 = vunpack.c.h.b16 %v724
      %v3017 = vunpack.c.l.b16 %v725
      %v3018 = vunpack.c.h.b16 %v725
      %v3019 = vunpack.c.l.b16 %v726
      %v3020 = vunpack.c.h.b16 %v726
      %v3021 = vunpack.c.l.b16 %v727
      %v3022 = vunpack.c.h.b16 %v727
      %v3023 = vunpack.c.l.b16 %v728
      %v3024 = vunpack.c.h.b16 %v728
      %v3025 = vunpack.c.l.b16 %v729
      %v3026 = vunpack.c.h.b16 %v729
      %v3027 = vunpack.c.l.b16 %v730
      %v3028 = vunpack.c.h.b16 %v730
      %v3029 = vunpack.c.l.b16 %v731
      %v3030 = vunpack.c.h.b16 %v731
      %v3031 = vunpack.c.l.b16 %v732
      %v3032 = vunpack.c.h.b16 %v732
      %v3033 = vunpack.c.l.b16 %v733
      %v3034 = vunpack.c.h.b16 %v733
      %v3035 = vunpack.c.l.b16 %v734
      %v3036 = vunpack.c.h.b16 %v734
      %v3037 = vunpack.c.l.b16 %v735
      %v3038 = vunpack.c.h.b16 %v735
      %v3039 = vunpack.c.l.b16 %v736
      %v3040 = vunpack.c.h.b16 %v736
      %v3041 = vpack.c.b16 %v2277, %v2273
      %v3042 = vpack.c.b16 %v2278, %v2274
      %v3043 = vpack.c.b16 %v2279, %v2275
      %v3044 = vpack.c.b16 %v2280, %v2276
      %v3045 = vpack.c.b16 %v2285, %v2281
      %v3046 = vpack.c.b16 %v2286, %v2282
      %v3047 = vpack.c.b16 %v2287, %v2283
      %v3048 = vpack.c.b16 %v2288, %v2284
      %v3049 = vpack.c.b16 %v2293, %v2289
      %v3050 = vpack.c.b16 %v2294, %v2290
      %v3051 = vpack.c.b16 %v2295, %v2291
      %v3052 = vpack.c.b16 %v2296, %v2292
      %v3053 = vpack.c.b16 %v2301, %v2297
      %v3054 = vpack.c.b16 %v2302, %v2298
      %v3055 = vpack.c.b16 %v2303, %v2299
      %v3056 = vpack.c.b16 %v2304, %v2300
      %v3057 = vpack.c.b16 %v2309, %v2305
      %v3058 = vpack.c.b16 %v2310, %v2306
      %v3059 = vpack.c.b16 %v2311, %v2307
      %v3060 = vpack.c.b16 %v2312, %v2308
      %v3061 = vpack.c.b16 %v2317, %v2313
      %v3062 = vpack.c.b16 %v2318, %v2314
      %v3063 = vpack.c.b16 %v2319, %v2315
      %v3064 = vpack.c.b16 %v2320, %v2316
      %v3065 = vpack.c.b16 %v2325, %v2321
      %v3066 = vpack.c.b16 %v2326, %v2322
      %v3067 = vpack.c.b16 %v2327, %v2323
      %v3068 = vpack.c.b16 %v2328, %v2324
      %v3069 = vpack.c.b16 %v2333, %v2329
      %v3070 = vpack.c.b16 %v2334, %v2330
      %v3071 = vpack.c.b16 %v2335, %v2331
      %v3072 = vpack.c.b16 %v2336, %v2332
      %v3073 = vpack.c.b16 %v2341, %v2337
      %v3074 = vpack.c.b16 %v2342, %v2338
      %v3075 = vpack.c.b16 %v2343, %v2339
      %v3076 = vpack.c.b16 %v2344, %v2340
      %v3077 = vpack.c.b16 %v2349, %v2345
      %v3078 = vpack.c.b16 %v2350, %v2346
      %v3079 = vpack.c.b16 %v2351, %v2347
      %v3080 = vpack.c.b16 %v2352, %v2348
      %v3081 = vpack.c.b16 %v2357, %v2353
      %v3082 = vpack.c.b16 %v2358, %v2354
      %v3083 = vpack.c.b16 %v2359, %v2355
      %v3084 = vpack.c.b16 %v2360, %v2356
      %v3085 = vpack.c.b16 %v2365, %v2361
      %v3086 = vpack.c.b16 %v2366, %v2362
      %v3087 = vpack.c.b16 %v2367, %v2363
      %v3088 = vpack.c.b16 %v2368, %v2364
      %v3089 = vpack.c.b16 %v2373, %v2369
      %v3090 = vpack.c.b16 %v2374, %v2370
      %v3091 = vpack.c.b16 %v2375, %v2371
      %v3092 = vpack.c.b16 %v2376, %v2372
      %v3093 = vpack.c.b16 %v2381, %v2377
      %v3094 = vpack.c.b16 %v2382, %v2378
      %v3095 = vpack.c.b16 %v2383, %v2379
      %v3096 = vpack.c.b16 %v2384, %v2380
      %v3097 = vpack.c.b16 %v2389, %v2385
      %v3098 = vpack.c.b16 %v2390, %v2386
      %v3099 = vpack.c.b16 %v2391, %v2387
      %v3100 = vpack.c.b16 %v2392, %v2388
      %v3101 = vpack.c.b16 %v2397, %v2393
      %v3102 = vpack.c.b16 %v2398, %v2394
      %v3103 = vpack.c.b16 %v2399, %v2395
      %v3104 = vpack.c.b16 %v2400, %v2396
      %v3105 = vpack.c.b16 %v2405, %v2401
      %v3106 = vpack.c.b16 %v2406, %v2402
      %v3107 = vpack.c.b16 %v2407, %v2403
      %v3108 = vpack.c.b16 %v2408, %v2404
      %v3109 = vpack.c.b16 %v2413, %v2409
      %v3110 = vpack.c.b16 %v2414, %v2410
      %v3111 = vpack.c.b16 %v2415, %v2411
      %v3112 = vpack.c.b16 %v2416, %v2412
      %v3113 = vpack.c.b16 %v2421, %v2417
      %v3114 = vpack.c.b16 %v2422, %v2418
      %v3115 = vpack.c.b16 %v2423, %v2419
      %v3116 = vpack.c.b16 %v2424, %v2420
      %v3117 = vpack.c.b16 %v2429, %v2425
      %v3118 = vpack.c.b16 %v2430, %v2426
      %v3119 = vpack.c.b16 %v2431, %v2427
      %v3120 = vpack.c.b16 %v2432, %v2428
      %v3121 = vpack.c.b16 %v2437, %v2433
      %v3122 = vpack.c.b16 %v2438, %v2434
      %v3123 = vpack.c.b16 %v2439, %v2435
      %v3124 = vpack.c.b16 %v2440, %v2436
      %v3125 = vpack.c.b16 %v2445, %v2441
      %v3126 = vpack.c.b16 %v2446, %v2442
      %v3127 = vpack.c.b16 %v2447, %v2443
      %v3128 = vpack.c.b16 %v2448, %v2444
      %v3129 = vpack.c.b16 %v2453, %v2449
      %v3130 = vpack.c.b16 %v2454, %v2450
      %v3131 = vpack.c.b16 %v2455, %v2451
      %v3132 = vpack.c.b16 %v2456, %v2452
      %v3133 = vpack.c.b16 %v2461, %v2457
      %v3134 = vpack.c.b16 %v2462, %v2458
      %v3135 = vpack.c.b16 %v2463, %v2459
      %v3136 = vpack.c.b16 %v2464, %v2460
      %v3137 = vpack.c.b16 %v2469, %v2465
      %v3138 = vpack.c.b16 %v2470, %v2466
      %v3139 = vpack.c.b16 %v2471, %v2467
      %v3140 = vpack.c.b16 %v2472, %v2468
      %v3141 = vpack.c.b16 %v2477, %v2473
      %v3142 = vpack.c.b16 %v2478, %v2474
      %v3143 = vpack.c.b16 %v2479, %v2475
      %v3144 = vpack.c.b16 %v2480, %v2476
      %v3145 = vpack.c.b16 %v2485, %v2481
      %v3146 = vpack.c.b16 %v2486, %v2482
      %v3147 = vpack.c.b16 %v2487, %v2483
      %v3148 = vpack.c.b16 %v2488, %v2484
      %v3149 = vpack.c.b16 %v2493, %v2489
      %v3150 = vpack.c.b16 %v2494, %v2490
      %v3151 = vpack.c.b16 %v2495, %v2491
      %v3152 = vpack.c.b16 %v2496, %v2492
      %v3153 = vpack.c.b16 %v2501, %v2497
      %v3154 = vpack.c.b16 %v2502, %v2498
      %v3155 = vpack.c.b16 %v2503, %v2499
      %v3156 = vpack.c.b16 %v2504, %v2500
      %v3157 = vpack.c.b16 %v2509, %v2505
      %v3158 = vpack.c.b16 %v2510, %v2506
      %v3159 = vpack.c.b16 %v2511, %v2507
      %v3160 = vpack.c.b16 %v2512, %v2508
      %v3161 = vpack.c.b16 %v2517, %v2513
      %v3162 = vpack.c.b16 %v2518, %v2514
      %v3163 = vpack.c.b16 %v2519, %v2515
      %v3164 = vpack.c.b16 %v2520, %v2516
      %v3165 = vpack.c.b16 %v2525, %v2521
      %v3166 = vpack.c.b16 %v2526, %v2522
      %v3167 = vpack.c.b16 %v2527, %v2523
      %v3168 = vpack.c.b16 %v2528, %v2524
      %v3169 = vpack.c.b16 %v2533, %v2529
      %v3170 = vpack.c.b16 %v2534, %v2530
      %v3171 = vpack.c.b16 %v2535, %v2531
      %v3172 = vpack.c.b16 %v2536, %v2532
      %v3173 = vpack.c.b16 %v2541, %v2537
      %v3174 = vpack.c.b16 %v2542, %v2538
      %v3175 = vpack.c.b16 %v2543, %v2539
      %v3176 = vpack.c.b16 %v2544, %v2540
      %v3177 = vpack.c.b16 %v2549, %v2545
      %v3178 = vpack.c.b16 %v2550, %v2546
      %v3179 = vpack.c.b16 %v2551, %v2547
      %v3180 = vpack.c.b16 %v2552, %v2548
      %v3181 = vpack.c.b16 %v2557, %v2553
      %v3182 = vpack.c.b16 %v2558, %v2554
      %v3183 = vpack.c.b16 %v2559, %v2555
      %v3184 = vpack.c.b16 %v2560, %v2556
      %v3185 = vpack.c.b16 %v2565, %v2561
      %v3186 = vpack.c.b16 %v2566, %v2562
      %v3187 = vpack.c.b16 %v2567, %v2563
      %v3188 = vpack.c.b16 %v2568, %v2564
      %v3189 = vpack.c.b16 %v2573, %v2569
      %v3190 = vpack.c.b16 %v2574, %v2570
      %v3191 = vpack.c.b16 %v2575, %v2571
      %v3192 = vpack.c.b16 %v2576, %v2572
      %v3193 = vpack.c.b16 %v2581, %v2577
      %v3194 = vpack.c.b16 %v2582, %v2578
      %v3195 = vpack.c.b16 %v2583, %v2579
      %v3196 = vpack.c.b16 %v2584, %v2580
      %v3197 = vpack.c.b16 %v2589, %v2585
      %v3198 = vpack.c.b16 %v2590, %v2586
      %v3199 = vpack.c.b16 %v2591, %v2587
      %v3200 = vpack.c.b16 %v2592, %v2588
      %v3201 = vpack.c.b16 %v2597, %v2593
      %v3202 = vpack.c.b16 %v2598, %v2594
      %v3203 = vpack.c.b16 %v2599, %v2595
      %v3204 = vpack.c.b16 %v2600, %v2596
      %v3205 = vpack.c.b16 %v2605, %v2601
      %v3206 = vpack.c.b16 %v2606, %v2602
      %v3207 = vpack.c.b16 %v2607, %v2603
      %v3208 = vpack.c.b16 %v2608, %v2604
      %v3209 = vpack.c.b16 %v2613, %v2609
      %v3210 = vpack.c.b16 %v2614, %v2610
      %v3211 = vpack.c.b16 %v2615, %v2611
      %v3212 = vpack.c.b16 %v2616, %v2612
      %v3213 = vpack.c.b16 %v2621, %v2617
      %v3214 = vpack.c.b16 %v2622, %v2618
      %v3215 = vpack.c.b16 %v2623, %v2619
      %v3216 = vpack.c.b16 %v2624, %v2620
      %v3217 = vpack.c.b16 %v2629, %v2625
      %v3218 = vpack.c.b16 %v2630, %v2626
      %v3219 = vpack.c.b16 %v2631, %v2627
      %v3220 = vpack.c.b16 %v2632, %v2628
      %v3221 = vpack.c.b16 %v2637, %v2633
      %v3222 = vpack.c.b16 %v2638, %v2634
      %v3223 = vpack.c.b16 %v2639, %v2635
      %v3224 = vpack.c.b16 %v2640, %v2636
      %v3225 = vpack.c.b16 %v2645, %v2641
      %v3226 = vpack.c.b16 %v2646, %v2642
      %v3227 = vpack.c.b16 %v2647, %v2643
      %v3228 = vpack.c.b16 %v2648, %v2644
      %v3229 = vpack.c.b16 %v2653, %v2649
      %v3230 = vpack.c.b16 %v2654, %v2650
      %v3231 = vpack.c.b16 %v2655, %v2651
      %v3232 = vpack.c.b16 %v2656, %v2652
      %v3233 = vpack.c.b16 %v2661, %v2657
      %v3234 = vpack.c.b16 %v2662, %v2658
      %v3235 = vpack.c.b16 %v2663, %v2659
      %v3236 = vpack.c.b16 %v2664, %v2660
      %v3237 = vpack.c.b16 %v2669, %v2665
      %v3238 = vpack.c.b16 %v2670, %v2666
      %v3239 = vpack.c.b16 %v2671, %v2667
      %v3240 = vpack.c.b16 %v2672, %v2668
      %v3241 = vpack.c.b16 %v2677, %v2673
      %v3242 = vpack.c.b16 %v2678, %v2674
      %v3243 = vpack.c.b16 %v2679, %v2675
      %v3244 = vpack.c.b16 %v2680, %v2676
      %v3245 = vpack.c.b16 %v2685, %v2681
      %v3246 = vpack.c.b16 %v2686, %v2682
      %v3247 = vpack.c.b16 %v2687, %v2683
      %v3248 = vpack.c.b16 %v2688, %v2684
      %v3249 = vpack.c.b16 %v2693, %v2689
      %v3250 = vpack.c.b16 %v2694, %v2690
      %v3251 = vpack.c.b16 %v2695, %v2691
      %v3252 = vpack.c.b16 %v2696, %v2692
      %v3253 = vpack.c.b16 %v2701, %v2697
      %v3254 = vpack.c.b16 %v2702, %v2698
      %v3255 = vpack.c.b16 %v2703, %v2699
      %v3256 = vpack.c.b16 %v2704, %v2700
      %v3257 = vpack.c.b16 %v2709, %v2705
      %v3258 = vpack.c.b16 %v2710, %v2706
      %v3259 = vpack.c.b16 %v2711, %v2707
      %v3260 = vpack.c.b16 %v2712, %v2708
      %v3261 = vpack.c.b16 %v2717, %v2713
      %v3262 = vpack.c.b16 %v2718, %v2714
      %v3263 = vpack.c.b16 %v2719, %v2715
      %v3264 = vpack.c.b16 %v2720, %v2716
      %v3265 = vpack.c.b16 %v2725, %v2721
      %v3266 = vpack.c.b16 %v2726, %v2722
      %v3267 = vpack.c.b16 %v2727, %v2723
      %v3268 = vpack.c.b16 %v2728, %v2724
      %v3269 = vpack.c.b16 %v2733, %v2729
      %v3270 = vpack.c.b16 %v2734, %v2730
      %v3271 = vpack.c.b16 %v2735, %v2731
      %v3272 = vpack.c.b16 %v2736, %v2732
      %v3273 = vpack.c.b16 %v2741, %v2737
      %v3274 = vpack.c.b16 %v2742, %v2738
      %v3275 = vpack.c.b16 %v2743, %v2739
      %v3276 = vpack.c.b16 %v2744, %v2740
      %v3277 = vpack.c.b16 %v2749, %v2745
      %v3278 = vpack.c.b16 %v2750, %v2746
      %v3279 = vpack.c.b16 %v2751, %v2747
      %v3280 = vpack.c.b16 %v2752, %v2748
      %v3281 = vpack.c.b16 %v2757, %v2753
      %v3282 = vpack.c.b16 %v2758, %v2754
      %v3283 = vpack.c.b16 %v2759, %v2755
      %v3284 = vpack.c.b16 %v2760, %v2756
      %v3285 = vpack.c.b16 %v2765, %v2761
      %v3286 = vpack.c.b16 %v2766, %v2762
      %v3287 = vpack.c.b16 %v2767, %v2763
      %v3288 = vpack.c.b16 %v2768, %v2764
      %v3289 = vpack.c.b16 %v2773, %v2769
      %v3290 = vpack.c.b16 %v2774, %v2770
      %v3291 = vpack.c.b16 %v2775, %v2771
      %v3292 = vpack.c.b16 %v2776, %v2772
      %v3293 = vpack.c.b16 %v2781, %v2777
      %v3294 = vpack.c.b16 %v2782, %v2778
      %v3295 = vpack.c.b16 %v2783, %v2779
      %v3296 = vpack.c.b16 %v2784, %v2780
      %v3297 = vpack.c.b16 %v2789, %v2785
      %v3298 = vpack.c.b16 %v2790, %v2786
      %v3299 = vpack.c.b16 %v2791, %v2787
      %v3300 = vpack.c.b16 %v2792, %v2788
      %v3301 = vpack.c.b16 %v2797, %v2793
      %v3302 = vpack.c.b16 %v2798, %v2794
      %v3303 = vpack.c.b16 %v2799, %v2795
      %v3304 = vpack.c.b16 %v2800, %v2796
      %v3305 = vpack.c.b16 %v2805, %v2801
      %v3306 = vpack.c.b16 %v2806, %v2802
      %v3307 = vpack.c.b16 %v2807, %v2803
      %v3308 = vpack.c.b16 %v2808, %v2804
      %v3309 = vpack.c.b16 %v2813, %v2809
      %v3310 = vpack.c.b16 %v2814, %v2810
      %v3311 = vpack.c.b16 %v2815, %v2811
      %v3312 = vpack.c.b16 %v2816, %v2812
      %v3313 = vpack.c.b16 %v2821, %v2817
      %v3314 = vpack.c.b16 %v2822, %v2818
      %v3315 = vpack.c.b16 %v2823, %v2819
      %v3316 = vpack.c.b16 %v2824, %v2820
      %v3317 = vpack.c.b16 %v2829, %v2825
      %v3318 = vpack.c.b16 %v2830, %v2826
      %v3319 = vpack.c.b16 %v2831, %v2827
      %v3320 = vpack.c.b16 %v2832, %v2828
      %v3321 = vpack.c.b16 %v2837, %v2833
      %v3322 = vpack.c.b16 %v2838, %v2834
      %v3323 = vpack.c.b16 %v2839, %v2835
      %v3324 = vpack.c.b16 %v2840, %v2836
      %v3325 = vpack.c.b16 %v2845, %v2841
      %v3326 = vpack.c.b16 %v2846, %v2842
      %v3327 = vpack.c.b16 %v2847, %v2843
      %v3328 = vpack.c.b16 %v2848, %v2844
      %v3329 = vpack.c.b16 %v2853, %v2849
      %v3330 = vpack.c.b16 %v2854, %v2850
      %v3331 = vpack.c.b16 %v2855, %v2851
      %v3332 = vpack.c.b16 %v2856, %v2852
      %v3333 = vpack.c.b16 %v2861, %v2857
      %v3334 = vpack.c.b16 %v2862, %v2858
      %v3335 = vpack.c.b16 %v2863, %v2859
      %v3336 = vpack.c.b16 %v2864, %v2860
      %v3337 = vpack.c.b16 %v2869, %v2865
      %v3338 = vpack.c.b16 %v2870, %v2866
      %v3339 = vpack.c.b16 %v2871, %v2867
      %v3340 = vpack.c.b16 %v2872, %v2868
      %v3341 = vpack.c.b16 %v2877, %v2873
      %v3342 = vpack.c.b16 %v2878, %v2874
      %v3343 = vpack.c.b16 %v2879, %v2875
      %v3344 = vpack.c.b16 %v2880, %v2876
      %v3345 = vpack.c.b16 %v2885, %v2881
      %v3346 = vpack.c.b16 %v2886, %v2882
      %v3347 = vpack.c.b16 %v2887, %v2883
      %v3348 = vpack.c.b16 %v2888, %v2884
      %v3349 = vpack.c.b16 %v2893, %v2889
      %v3350 = vpack.c.b16 %v2894, %v2890
      %v3351 = vpack.c.b16 %v2895, %v2891
      %v3352 = vpack.c.b16 %v2896, %v2892
      %v3353 = vpack.c.b16 %v2901, %v2897
      %v3354 = vpack.c.b16 %v2902, %v2898
      %v3355 = vpack.c.b16 %v2903, %v2899
      %v3356 = vpack.c.b16 %v2904, %v2900
      %v3357 = vpack.c.b16 %v2909, %v2905
      %v3358 = vpack.c.b16 %v2910, %v2906
      %v3359 = vpack.c.b16 %v2911, %v2907
      %v3360 = vpack.c.b16 %v2912, %v2908
      %v3361 = vpack.c.b16 %v2917, %v2913
      %v3362 = vpack.c.b16 %v2918, %v2914
      %v3363 = vpack.c.b16 %v2919, %v2915
      %v3364 = vpack.c.b16 %v2920, %v2916
      %v3365 = vpack.c.b16 %v2925, %v2921
      %v3366 = vpack.c.b16 %v2926, %v2922
      %v3367 = vpack.c.b16 %v2927, %v2923
      %v3368 = vpack.c.b16 %v2928, %v2924
      %v3369 = vpack.c.b16 %v2933, %v2929
      %v3370 = vpack.c.b16 %v2934, %v2930
      %v3371 = vpack.c.b16 %v2935, %v2931
      %v3372 = vpack.c.b16 %v2936, %v2932
      %v3373 = vpack.c.b16 %v2941, %v2937
      %v3374 = vpack.c.b16 %v2942, %v2938
      %v3375 = vpack.c.b16 %v2943, %v2939
      %v3376 = vpack.c.b16 %v2944, %v2940
      %v3377 = vpack.c.b16 %v2949, %v2945
      %v3378 = vpack.c.b16 %v2950, %v2946
      %v3379 = vpack.c.b16 %v2951, %v2947
      %v3380 = vpack.c.b16 %v2952, %v2948
      %v3381 = vpack.c.b16 %v2957, %v2953
      %v3382 = vpack.c.b16 %v2958, %v2954
      %v3383 = vpack.c.b16 %v2959, %v2955
      %v3384 = vpack.c.b16 %v2960, %v2956
      %v3385 = vpack.c.b16 %v2965, %v2961
      %v3386 = vpack.c.b16 %v2966, %v2962
      %v3387 = vpack.c.b16 %v2967, %v2963
      %v3388 = vpack.c.b16 %v2968, %v2964
      %v3389 = vpack.c.b16 %v2973, %v2969
      %v3390 = vpack.c.b16 %v2974, %v2970
      %v3391 = vpack.c.b16 %v2975, %v2971
      %v3392 = vpack.c.b16 %v2976, %v2972
      %v3393 = vpack.c.b16 %v2981, %v2977
      %v3394 = vpack.c.b16 %v2982, %v2978
      %v3395 = vpack.c.b16 %v2983, %v2979
      %v3396 = vpack.c.b16 %v2984, %v2980
      %v3397 = vpack.c.b16 %v2989, %v2985
      %v3398 = vpack.c.b16 %v2990, %v2986
      %v3399 = vpack.c.b16 %v2991, %v2987
      %v3400 = vpack.c.b16 %v2992, %v2988
      %v3401 = vpack.c.b16 %v2997, %v2993
      %v3402 = vpack.c.b16 %v2998, %v2994
      %v3403 = vpack.c.b16 %v2999, %v2995
      %v3404 = vpack.c.b16 %v3000, %v2996
      %v3405 = vpack.c.b16 %v3005, %v3001
      %v3406 = vpack.c.b16 %v3006, %v3002
      %v3407 = vpack.c.b16 %v3007, %v3003
      %v3408 = vpack.c.b16 %v3008, %v3004
      %v3409 = vpack.c.b16 %v3013, %v3009
      %v3410 = vpack.c.b16 %v3014, %v3010
      %v3411 = vpack.c.b16 %v3015, %v3011
      %v3412 = vpack.c.b16 %v3016, %v3012
      %v3413 = vpack.c.b16 %v3021, %v3017
      %v3414 = vpack.c.b16 %v3022, %v3018
      %v3415 = vpack.c.b16 %v3023, %v3019
      %v3416 = vpack.c.b16 %v3024, %v3020
      %v3417 = vpack.c.b16 %v3029, %v3025
      %v3418 = vpack.c.b16 %v3030, %v3026
      %v3419 = vpack.c.b16 %v3031, %v3027
      %v3420 = vpack.c.b16 %v3032, %v3028
      %v3421 = vpack.c.b16 %v3037, %v3033
      %v3422 = vpack.c.b16 %v3038, %v3034
      %v3423 = vpack.c.b16 %v3039, %v3035
      %v3424 = vpack.c.b16 %v3040, %v3036
      %3809 = vmatprep.subr.bf16.mxu0 0
      %3810 = vmatpush1.bf16.msra.mxu0 %v321
      %3811 = vmatprep.subr.bf16.mxu0 0
      %3812 = vmatpush1.bf16.msra.mxu0 %v322
      %3813 = vmatprep.subr.bf16.mxu0 0
      %3814 = vmatpush1.bf16.msra.mxu0 %v323
      %3815 = vmatprep.subr.bf16.mxu0 0
      %3816 = vmatpush1.bf16.msra.mxu0 %v324
      %3817 = vmatprep.subr.bf16.mxu0 0
      %3818 = vmatpush1.bf16.msra.mxu0 %v325
      %3819 = vmatprep.subr.bf16.mxu0 0
      %3820 = vmatpush1.bf16.msra.mxu0 %v326
      %3821 = vmatprep.subr.bf16.mxu0 0
      %3822 = vmatpush1.bf16.msra.mxu0 %v327
      %3823 = vmatprep.subr.bf16.mxu0 0
      %3824 = vmatpush1.bf16.msra.mxu0 %v328
      %3825 = vmatprep.subr.bf16.mxu0 0
      %3826 = vmatpush1.bf16.msra.mxu0 %v329
      %3827 = vmatprep.subr.bf16.mxu0 0
      %3828 = vmatpush1.bf16.msra.mxu0 %v330
      %3829 = vmatprep.subr.bf16.mxu0 0
      %3830 = vmatpush1.bf16.msra.mxu0 %v331
      %3831 = vmatprep.subr.bf16.mxu0 0
      %3832 = vmatpush1.bf16.msra.mxu0 %v332
      %3833 = vmatprep.subr.bf16.mxu0 0
      %3834 = vmatpush1.bf16.msra.mxu0 %v333
      %3835 = vmatprep.subr.bf16.mxu0 0
      %3836 = vmatpush1.bf16.msra.mxu0 %v334
      %3837 = vmatprep.subr.bf16.mxu0 0
      %3838 = vmatpush1.bf16.msra.mxu0 %v335
      %3839 = vmatprep.subr.bf16.mxu0 0
      %3840 = vmatpush1.bf16.msra.mxu0 %v336
      %3841 = vmatprep.mubr.bf16.mxu0 %v3042
      %3842 = vmatmul.mubr.bf16.gmra.mrb[0].mxu0 %v3041
      %v3843 = vpop.f32.mrb[0].mxu0
      %v3844 = vadd.f32 %v932, %v3843
      %v3845 = vpop.f32.mrb[0].mxu0
      %v3846 = vpop.f32.mrb[0].mxu0
      %v3847 = vadd.f32 %v937, %v3846
      %v3848 = vpop.f32.mrb[0].mxu0
      %3849 = vmatprep.mubr.bf16.mxu0 %v3046
      %3850 = vmatmul.mubr.bf16.gmra.mrb[0].mxu0 %v3045
      %v3851 = vpop.f32.mrb[0].mxu0
      %v3852 = vadd.f32 %v942, %v3851
      %v3853 = vpop.f32.mrb[0].mxu0
      %v3854 = vpop.f32.mrb[0].mxu0
      %v3855 = vadd.f32 %v947, %v3854
      %v3856 = vpop.f32.mrb[0].mxu0
      %3857 = vmatprep.mubr.bf16.mxu0 %v3050
      %3858 = vmatmul.mubr.bf16.gmra.mrb[0].mxu0 %v3049
      %v3859 = vpop.f32.mrb[0].mxu0
      %v3860 = vadd.f32 %v952, %v3859
      %v3861 = vpop.f32.mrb[0].mxu0
      %v3862 = vpop.f32.mrb[0].mxu0
      %v3863 = vadd.f32 %v957, %v3862
      %v3864 = vpop.f32.mrb[0].mxu0
      %3865 = vmatprep.mubr.bf16.mxu0 %v3054
      %3866 = vmatmul.mubr.bf16.gmra.mrb[0].mxu0 %v3053
      %v3867 = vpop.f32.mrb[0].mxu0
      %v3868 = vadd.f32 %v962, %v3867
      %v3869 = vpop.f32.mrb[0].mxu0
      %v3870 = vpop.f32.mrb[0].mxu0
      %v3871 = vadd.f32 %v967, %v3870
      %v3872 = vpop.f32.mrb[0].mxu0
      %3873 = vmatprep.mubr.bf16.mxu0 %v3058
      %3874 = vmatmul.mubr.bf16.gmra.mrb[0].mxu0 %v3057
      %v3875 = vpop.f32.mrb[0].mxu0
      %v3876 = vadd.f32 %v972, %v3875
      %v3877 = vpop.f32.mrb[0].mxu0
      %v3878 = vpop.f32.mrb[0].mxu0
      %v3879 = vadd.f32 %v977, %v3878
      %v3880 = vpop.f32.mrb[0].mxu0
      %3881 = vmatprep.mubr.bf16.mxu0 %v3062
      %3882 = vmatmul.mubr.bf16.gmra.mrb[0].mxu0 %v3061
      %v3883 = vpop.f32.mrb[0].mxu0
      %v3884 = vadd.f32 %v982, %v3883
      %v3885 = vpop.f32.mrb[0].mxu0
      %v3886 = vpop.f32.mrb[0].mxu0
      %v3887 = vadd.f32 %v987, %v3886
      %v3888 = vpop.f32.mrb[0].mxu0
      %3889 = vmatprep.mubr.bf16.mxu0 %v3066
      %3890 = vmatmul.mubr.bf16.gmra.mrb[0].mxu0 %v3065
      %v3891 = vpop.f32.mrb[0].mxu0
      %v3892 = vadd.f32 %v992, %v3891
      %v3893 = vpop.f32.mrb[0].mxu0
      %v3894 = vpop.f32.mrb[0].mxu0
      %v3895 = vadd.f32 %v997, %v3894
      %v3896 = vpop.f32.mrb[0].mxu0
      %3897 = vmatprep.mubr.bf16.mxu0 %v3070
      %3898 = vmatmul.mubr.bf16.gmra.mrb[0].mxu0 %v3069
      %v3899 = vpop.f32.mrb[0].mxu0
      %v3900 = vadd.f32 %v1002, %v3899
      %v3901 = vpop.f32.mrb[0].mxu0
      %v3902 = vpop.f32.mrb[0].mxu0
      %v3903 = vadd.f32 %v1007, %v3902
      %v3904 = vpop.f32.mrb[0].mxu0
      %3905 = vmatprep.mubr.bf16.mxu0 %v3074
      %3906 = vmatmul.mubr.bf16.gmra.mrb[0].mxu0 %v3073
      %v3907 = vpop.f32.mrb[0].mxu0
      %v3908 = vadd.f32 %v1012, %v3907
      %v3909 = vpop.f32.mrb[0].mxu0
      %v3910 = vpop.f32.mrb[0].mxu0
      %v3911 = vadd.f32 %v1017, %v3910
      %v3912 = vpop.f32.mrb[0].mxu0
      %3913 = vmatprep.mubr.bf16.mxu0 %v3078
      %3914 = vmatmul.mubr.bf16.gmra.mrb[0].mxu0 %v3077
      %v3915 = vpop.f32.mrb[0].mxu0
      %v3916 = vadd.f32 %v1022, %v3915
      %v3917 = vpop.f32.mrb[0].mxu0
      %v3918 = vpop.f32.mrb[0].mxu0
      %v3919 = vadd.f32 %v1027, %v3918
      %v3920 = vpop.f32.mrb[0].mxu0
      %3921 = vmatprep.mubr.bf16.mxu0 %v3082
      %3922 = vmatmul.mubr.bf16.gmra.mrb[0].mxu0 %v3081
      %v3923 = vpop.f32.mrb[0].mxu0
      %v3924 = vadd.f32 %v1032, %v3923
      %v3925 = vpop.f32.mrb[0].mxu0
      %v3926 = vpop.f32.mrb[0].mxu0
      %v3927 = vadd.f32 %v1037, %v3926
      %v3928 = vpop.f32.mrb[0].mxu0
      %3929 = vmatprep.mubr.bf16.mxu0 %v3086
      %3930 = vmatmul.mubr.bf16.gmra.mrb[0].mxu0 %v3085
      %v3931 = vpop.f32.mrb[0].mxu0
      %v3932 = vadd.f32 %v1042, %v3931
      %v3933 = vpop.f32.mrb[0].mxu0
      %v3934 = vpop.f32.mrb[0].mxu0
      %v3935 = vadd.f32 %v1047, %v3934
      %v3936 = vpop.f32.mrb[0].mxu0
      %3937 = vmatprep.mubr.bf16.mxu0 %v3090
      %3938 = vmatmul.mubr.bf16.gmra.mrb[0].mxu0 %v3089
      %v3939 = vpop.f32.mrb[0].mxu0
      %v3940 = vadd.f32 %v1052, %v3939
      %v3941 = vpop.f32.mrb[0].mxu0
      %v3942 = vpop.f32.mrb[0].mxu0
      %v3943 = vadd.f32 %v1057, %v3942
      %v3944 = vpop.f32.mrb[0].mxu0
      %3945 = vmatprep.mubr.bf16.mxu0 %v3094
      %3946 = vmatmul.mubr.bf16.gmra.mrb[0].mxu0 %v3093
      %v3947 = vpop.f32.mrb[0].mxu0
      %v3948 = vadd.f32 %v1062, %v3947
      %v3949 = vpop.f32.mrb[0].mxu0
      %v3950 = vpop.f32.mrb[0].mxu0
      %v3951 = vadd.f32 %v1067, %v3950
      %v3952 = vpop.f32.mrb[0].mxu0
      %3953 = vmatprep.mubr.bf16.mxu0 %v3098
      %3954 = vmatmul.mubr.bf16.gmra.mrb[0].mxu0 %v3097
      %v3955 = vpop.f32.mrb[0].mxu0
      %v3956 = vadd.f32 %v1072, %v3955
      %v3957 = vpop.f32.mrb[0].mxu0
      %v3958 = vpop.f32.mrb[0].mxu0
      %v3959 = vadd.f32 %v1077, %v3958
      %v3960 = vpop.f32.mrb[0].mxu0
      %3961 = vmatprep.mubr.bf16.mxu0 %v3102
      %3962 = vmatmul.mubr.bf16.gmra.mrb[0].mxu0 %v3101
      %v3963 = vpop.f32.mrb[0].mxu0
      %v3964 = vadd.f32 %v1082, %v3963
      %v3965 = vpop.f32.mrb[0].mxu0
      %v3966 = vpop.f32.mrb[0].mxu0
      %v3967 = vadd.f32 %v1087, %v3966
      %v3968 = vpop.f32.mrb[0].mxu0
      %3969 = vmatprep.mubr.bf16.mxu0 %v3106
      %3970 = vmatmul.mubr.bf16.gmra.mrb[0].mxu0 %v3105
      %v3971 = vpop.f32.mrb[0].mxu0
      %v3972 = vadd.f32 %v1092, %v3971
      %v3973 = vpop.f32.mrb[0].mxu0
      %v3974 = vpop.f32.mrb[0].mxu0
      %v3975 = vadd.f32 %v1097, %v3974
      %v3976 = vpop.f32.mrb[0].mxu0
      %3977 = vmatprep.mubr.bf16.mxu0 %v3110
      %3978 = vmatmul.mubr.bf16.gmra.mrb[0].mxu0 %v3109
      %v3979 = vpop.f32.mrb[0].mxu0
      %v3980 = vadd.f32 %v1102, %v3979
      %v3981 = vpop.f32.mrb[0].mxu0
      %v3982 = vpop.f32.mrb[0].mxu0
      %v3983 = vadd.f32 %v1107, %v3982
      %v3984 = vpop.f32.mrb[0].mxu0
      %3985 = vmatprep.mubr.bf16.mxu0 %v3114
      %3986 = vmatmul.mubr.bf16.gmra.mrb[0].mxu0 %v3113
      %v3987 = vpop.f32.mrb[0].mxu0
      %v3988 = vadd.f32 %v1112, %v3987
      %v3989 = vpop.f32.mrb[0].mxu0
      %v3990 = vpop.f32.mrb[0].mxu0
      %v3991 = vadd.f32 %v1117, %v3990
      %v3992 = vpop.f32.mrb[0].mxu0
      %3993 = vmatprep.mubr.bf16.mxu0 %v3118
      %3994 = vmatmul.mubr.bf16.gmra.mrb[0].mxu0 %v3117
      %v3995 = vpop.f32.mrb[0].mxu0
      %v3996 = vadd.f32 %v1122, %v3995
      %v3997 = vpop.f32.mrb[0].mxu0
      %v3998 = vpop.f32.mrb[0].mxu0
      %v3999 = vadd.f32 %v1127, %v3998
      %v4000 = vpop.f32.mrb[0].mxu0
      %4001 = vmatprep.mubr.bf16.mxu0 %v3122
      %4002 = vmatmul.mubr.bf16.gmra.mrb[0].mxu0 %v3121
      %v4003 = vpop.f32.mrb[0].mxu0
      %v4004 = vadd.f32 %v1132, %v4003
      %v4005 = vpop.f32.mrb[0].mxu0
      %v4006 = vpop.f32.mrb[0].mxu0
      %v4007 = vadd.f32 %v1137, %v4006
      %v4008 = vpop.f32.mrb[0].mxu0
      %4009 = vmatprep.mubr.bf16.mxu0 %v3126
      %4010 = vmatmul.mubr.bf16.gmra.mrb[0].mxu0 %v3125
      %v4011 = vpop.f32.mrb[0].mxu0
      %v4012 = vadd.f32 %v1142, %v4011
      %v4013 = vpop.f32.mrb[0].mxu0
      %v4014 = vpop.f32.mrb[0].mxu0
      %v4015 = vadd.f32 %v1147, %v4014
      %v4016 = vpop.f32.mrb[0].mxu0
      %4017 = vmatprep.mubr.bf16.mxu0 %v3130
      %4018 = vmatmul.mubr.bf16.gmra.mrb[0].mxu0 %v3129
      %v4019 = vpop.f32.mrb[0].mxu0
      %v4020 = vadd.f32 %v1152, %v4019
      %v4021 = vpop.f32.mrb[0].mxu0
      %v4022 = vpop.f32.mrb[0].mxu0
      %v4023 = vadd.f32 %v1157, %v4022
      %v4024 = vpop.f32.mrb[0].mxu0
      %4025 = vmatprep.mubr.bf16.mxu0 %v3134
      %4026 = vmatmul.mubr.bf16.gmra.mrb[0].mxu0 %v3133
      %v4027 = vpop.f32.mrb[0].mxu0
      %v4028 = vadd.f32 %v1162, %v4027
      %v4029 = vpop.f32.mrb[0].mxu0
      %v4030 = vpop.f32.mrb[0].mxu0
      %v4031 = vadd.f32 %v1167, %v4030
      %v4032 = vpop.f32.mrb[0].mxu0
      %4033 = vmatprep.mubr.bf16.mxu0 %v3138
      %4034 = vmatmul.mubr.bf16.gmra.mrb[0].mxu0 %v3137
      %v4035 = vpop.f32.mrb[0].mxu0
      %v4036 = vadd.f32 %v1172, %v4035
      %v4037 = vpop.f32.mrb[0].mxu0
      %v4038 = vpop.f32.mrb[0].mxu0
      %v4039 = vadd.f32 %v1177, %v4038
      %v4040 = vpop.f32.mrb[0].mxu0
      %4041 = vmatprep.mubr.bf16.mxu0 %v3142
      %4042 = vmatmul.mubr.bf16.gmra.mrb[0].mxu0 %v3141
      %v4043 = vpop.f32.mrb[0].mxu0
      %v4044 = vadd.f32 %v1182, %v4043
      %v4045 = vpop.f32.mrb[0].mxu0
      %v4046 = vpop.f32.mrb[0].mxu0
      %v4047 = vadd.f32 %v1187, %v4046
      %v4048 = vpop.f32.mrb[0].mxu0
      %4049 = vmatprep.mubr.bf16.mxu0 %v3146
      %4050 = vmatmul.mubr.bf16.gmra.mrb[0].mxu0 %v3145
      %v4051 = vpop.f32.mrb[0].mxu0
      %v4052 = vadd.f32 %v1192, %v4051
      %v4053 = vpop.f32.mrb[0].mxu0
      %v4054 = vpop.f32.mrb[0].mxu0
      %v4055 = vadd.f32 %v1197, %v4054
      %v4056 = vpop.f32.mrb[0].mxu0
      %4057 = vmatprep.mubr.bf16.mxu0 %v3150
      %4058 = vmatmul.mubr.bf16.gmra.mrb[0].mxu0 %v3149
      %v4059 = vpop.f32.mrb[0].mxu0
      %v4060 = vadd.f32 %v1202, %v4059
      %v4061 = vpop.f32.mrb[0].mxu0
      %v4062 = vpop.f32.mrb[0].mxu0
      %v4063 = vadd.f32 %v1207, %v4062
      %v4064 = vpop.f32.mrb[0].mxu0
      %4065 = vmatprep.mubr.bf16.mxu0 %v3154
      %4066 = vmatmul.mubr.bf16.gmra.mrb[0].mxu0 %v3153
      %v4067 = vpop.f32.mrb[0].mxu0
      %v4068 = vadd.f32 %v1212, %v4067
      %v4069 = vpop.f32.mrb[0].mxu0
      %v4070 = vpop.f32.mrb[0].mxu0
      %v4071 = vadd.f32 %v1217, %v4070
      %v4072 = vpop.f32.mrb[0].mxu0
      %4073 = vmatprep.mubr.bf16.mxu0 %v3158
      %4074 = vmatmul.mubr.bf16.gmra.mrb[0].mxu0 %v3157
      %v4075 = vpop.f32.mrb[0].mxu0
      %v4076 = vadd.f32 %v1222, %v4075
      %v4077 = vpop.f32.mrb[0].mxu0
      %v4078 = vpop.f32.mrb[0].mxu0
      %v4079 = vadd.f32 %v1227, %v4078
      %v4080 = vpop.f32.mrb[0].mxu0
      %4081 = vmatprep.mubr.bf16.mxu0 %v3162
      %4082 = vmatmul.mubr.bf16.gmra.mrb[0].mxu0 %v3161
      %v4083 = vpop.f32.mrb[0].mxu0
      %v4084 = vadd.f32 %v1232, %v4083
      %v4085 = vpop.f32.mrb[0].mxu0
      %v4086 = vpop.f32.mrb[0].mxu0
      %v4087 = vadd.f32 %v1237, %v4086
      %v4088 = vpop.f32.mrb[0].mxu0
      %4089 = vmatprep.mubr.bf16.mxu0 %v3166
      %4090 = vmatmul.mubr.bf16.gmra.mrb[0].mxu0 %v3165
      %v4091 = vpop.f32.mrb[0].mxu0
      %v4092 = vadd.f32 %v1242, %v4091
      %v4093 = vpop.f32.mrb[0].mxu0
      %v4094 = vpop.f32.mrb[0].mxu0
      %v4095 = vadd.f32 %v1247, %v4094
      %v4096 = vpop.f32.mrb[0].mxu0
      %4097 = vmatprep.mubr.bf16.mxu0 %v3170
      %4098 = vmatmul.mubr.bf16.gmra.mrb[0].mxu0 %v3169
      %v4099 = vpop.f32.mrb[0].mxu0
      %v4100 = vadd.f32 %v1252, %v4099
      %v4101 = vpop.f32.mrb[0].mxu0
      %v4102 = vpop.f32.mrb[0].mxu0
      %v4103 = vadd.f32 %v1257, %v4102
      %v4104 = vpop.f32.mrb[0].mxu0
      %4105 = vmatprep.mubr.bf16.mxu0 %v3174
      %4106 = vmatmul.mubr.bf16.gmra.mrb[0].mxu0 %v3173
      %v4107 = vpop.f32.mrb[0].mxu0
      %v4108 = vadd.f32 %v1262, %v4107
      %v4109 = vpop.f32.mrb[0].mxu0
      %v4110 = vpop.f32.mrb[0].mxu0
      %v4111 = vadd.f32 %v1267, %v4110
      %v4112 = vpop.f32.mrb[0].mxu0
      %4113 = vmatprep.mubr.bf16.mxu0 %v3178
      %4114 = vmatmul.mubr.bf16.gmra.mrb[0].mxu0 %v3177
      %v4115 = vpop.f32.mrb[0].mxu0
      %v4116 = vadd.f32 %v1272, %v4115
      %v4117 = vpop.f32.mrb[0].mxu0
      %v4118 = vpop.f32.mrb[0].mxu0
      %v4119 = vadd.f32 %v1277, %v4118
      %v4120 = vpop.f32.mrb[0].mxu0
      %4121 = vmatprep.mubr.bf16.mxu0 %v3182
      %4122 = vmatmul.mubr.bf16.gmra.mrb[0].mxu0 %v3181
      %v4123 = vpop.f32.mrb[0].mxu0
      %v4124 = vadd.f32 %v1282, %v4123
      %v4125 = vpop.f32.mrb[0].mxu0
      %v4126 = vpop.f32.mrb[0].mxu0
      %v4127 = vadd.f32 %v1287, %v4126
      %v4128 = vpop.f32.mrb[0].mxu0
      %4129 = vmatprep.mubr.bf16.mxu0 %v3186
      %4130 = vmatmul.mubr.bf16.gmra.mrb[0].mxu0 %v3185
      %v4131 = vpop.f32.mrb[0].mxu0
      %v4132 = vadd.f32 %v1292, %v4131
      %v4133 = vpop.f32.mrb[0].mxu0
      %v4134 = vpop.f32.mrb[0].mxu0
      %v4135 = vadd.f32 %v1297, %v4134
      %v4136 = vpop.f32.mrb[0].mxu0
      %4137 = vmatprep.mubr.bf16.mxu0 %v3190
      %4138 = vmatmul.mubr.bf16.gmra.mrb[0].mxu0 %v3189
      %v4139 = vpop.f32.mrb[0].mxu0
      %v4140 = vadd.f32 %v1302, %v4139
      %v4141 = vpop.f32.mrb[0].mxu0
      %v4142 = vpop.f32.mrb[0].mxu0
      %v4143 = vadd.f32 %v1307, %v4142
      %v4144 = vpop.f32.mrb[0].mxu0
      %4145 = vmatprep.mubr.bf16.mxu0 %v3194
      %4146 = vmatmul.mubr.bf16.gmra.mrb[0].mxu0 %v3193
      %v4147 = vpop.f32.mrb[0].mxu0
      %v4148 = vadd.f32 %v1312, %v4147
      %v4149 = vpop.f32.mrb[0].mxu0
      %v4150 = vpop.f32.mrb[0].mxu0
      %v4151 = vadd.f32 %v1317, %v4150
      %v4152 = vpop.f32.mrb[0].mxu0
      %4153 = vmatprep.mubr.bf16.mxu0 %v3198
      %4154 = vmatmul.mubr.bf16.gmra.mrb[0].mxu0 %v3197
      %v4155 = vpop.f32.mrb[0].mxu0
      %v4156 = vadd.f32 %v1322, %v4155
      %v4157 = vpop.f32.mrb[0].mxu0
      %v4158 = vpop.f32.mrb[0].mxu0
      %v4159 = vadd.f32 %v1327, %v4158
      %v4160 = vpop.f32.mrb[0].mxu0
      %4161 = vmatprep.mubr.bf16.mxu0 %v3202
      %4162 = vmatmul.mubr.bf16.gmra.mrb[0].mxu0 %v3201
      %v4163 = vpop.f32.mrb[0].mxu0
      %v4164 = vadd.f32 %v1332, %v4163
      %v4165 = vpop.f32.mrb[0].mxu0
      %v4166 = vpop.f32.mrb[0].mxu0
      %v4167 = vadd.f32 %v1337, %v4166
      %v4168 = vpop.f32.mrb[0].mxu0
      %4169 = vmatprep.mubr.bf16.mxu0 %v3206
      %4170 = vmatmul.mubr.bf16.gmra.mrb[0].mxu0 %v3205
      %v4171 = vpop.f32.mrb[0].mxu0
      %v4172 = vadd.f32 %v1342, %v4171
      %v4173 = vpop.f32.mrb[0].mxu0
      %v4174 = vpop.f32.mrb[0].mxu0
      %v4175 = vadd.f32 %v1347, %v4174
      %v4176 = vpop.f32.mrb[0].mxu0
      %4177 = vmatprep.mubr.bf16.mxu0 %v3210
      %4178 = vmatmul.mubr.bf16.gmra.mrb[0].mxu0 %v3209
      %v4179 = vpop.f32.mrb[0].mxu0
      %v4180 = vadd.f32 %v1352, %v4179
      %v4181 = vpop.f32.mrb[0].mxu0
      %v4182 = vpop.f32.mrb[0].mxu0
      %v4183 = vadd.f32 %v1357, %v4182
      %v4184 = vpop.f32.mrb[0].mxu0
      %4185 = vmatprep.mubr.bf16.mxu0 %v3214
      %4186 = vmatmul.mubr.bf16.gmra.mrb[0].mxu0 %v3213
      %v4187 = vpop.f32.mrb[0].mxu0
      %v4188 = vadd.f32 %v1362, %v4187
      %v4189 = vpop.f32.mrb[0].mxu0
      %v4190 = vpop.f32.mrb[0].mxu0
      %v4191 = vadd.f32 %v1367, %v4190
      %v4192 = vpop.f32.mrb[0].mxu0
      %4193 = vmatprep.mubr.bf16.mxu0 %v3218
      %4194 = vmatmul.mubr.bf16.gmra.mrb[0].mxu0 %v3217
      %v4195 = vpop.f32.mrb[0].mxu0
      %v4196 = vadd.f32 %v1372, %v4195
      %v4197 = vpop.f32.mrb[0].mxu0
      %v4198 = vpop.f32.mrb[0].mxu0
      %v4199 = vadd.f32 %v1377, %v4198
      %v4200 = vpop.f32.mrb[0].mxu0
      %4201 = vmatprep.mubr.bf16.mxu0 %v3222
      %4202 = vmatmul.mubr.bf16.gmra.mrb[0].mxu0 %v3221
      %v4203 = vpop.f32.mrb[0].mxu0
      %v4204 = vadd.f32 %v1382, %v4203
      %v4205 = vpop.f32.mrb[0].mxu0
      %v4206 = vpop.f32.mrb[0].mxu0
      %v4207 = vadd.f32 %v1387, %v4206
      %v4208 = vpop.f32.mrb[0].mxu0
      %4209 = vmatprep.mubr.bf16.mxu0 %v3226
      %4210 = vmatmul.mubr.bf16.gmra.mrb[0].mxu0 %v3225
      %v4211 = vpop.f32.mrb[0].mxu0
      %v4212 = vadd.f32 %v1392, %v4211
      %v4213 = vpop.f32.mrb[0].mxu0
      %v4214 = vpop.f32.mrb[0].mxu0
      %v4215 = vadd.f32 %v1397, %v4214
      %v4216 = vpop.f32.mrb[0].mxu0
      %4217 = vmatprep.mubr.bf16.mxu0 %v3230
      %4218 = vmatmul.mubr.bf16.gmra.mrb[0].mxu0 %v3229
      %v4219 = vpop.f32.mrb[0].mxu0
      %v4220 = vadd.f32 %v1402, %v4219
      %v4221 = vpop.f32.mrb[0].mxu0
      %v4222 = vpop.f32.mrb[0].mxu0
      %v4223 = vadd.f32 %v1407, %v4222
      %v4224 = vpop.f32.mrb[0].mxu0
      %4225 = vmatprep.mubr.bf16.mxu0 %v3234
      %4226 = vmatmul.mubr.bf16.gmra.mrb[0].mxu0 %v3233
      %v4227 = vpop.f32.mrb[0].mxu0
      %v4228 = vadd.f32 %v1412, %v4227
      %v4229 = vpop.f32.mrb[0].mxu0
      %v4230 = vpop.f32.mrb[0].mxu0
      %v4231 = vadd.f32 %v1417, %v4230
      %v4232 = vpop.f32.mrb[0].mxu0
      %4233 = vmatprep.mubr.bf16.mxu0 %v3238
      %4234 = vmatmul.mubr.bf16.gmra.mrb[0].mxu0 %v3237
      %v4235 = vpop.f32.mrb[0].mxu0
      %v4236 = vadd.f32 %v1422, %v4235
      %v4237 = vpop.f32.mrb[0].mxu0
      %v4238 = vpop.f32.mrb[0].mxu0
      %v4239 = vadd.f32 %v1427, %v4238
      %v4240 = vpop.f32.mrb[0].mxu0
      %4241 = vmatprep.mubr.bf16.mxu0 %v3242
      %4242 = vmatmul.mubr.bf16.gmra.mrb[0].mxu0 %v3241
      %v4243 = vpop.f32.mrb[0].mxu0
      %v4244 = vadd.f32 %v1432, %v4243
      %v4245 = vpop.f32.mrb[0].mxu0
      %v4246 = vpop.f32.mrb[0].mxu0
      %v4247 = vadd.f32 %v1437, %v4246
      %v4248 = vpop.f32.mrb[0].mxu0
      %4249 = vmatprep.mubr.bf16.mxu0 %v3246
      %4250 = vmatmul.mubr.bf16.gmra.mrb[0].mxu0 %v3245
      %v4251 = vpop.f32.mrb[0].mxu0
      %v4252 = vadd.f32 %v1442, %v4251
      %v4253 = vpop.f32.mrb[0].mxu0
      %v4254 = vpop.f32.mrb[0].mxu0
      %v4255 = vadd.f32 %v1447, %v4254
      %v4256 = vpop.f32.mrb[0].mxu0
      %4257 = vmatprep.mubr.bf16.mxu0 %v3250
      %4258 = vmatmul.mubr.bf16.gmra.mrb[0].mxu0 %v3249
      %v4259 = vpop.f32.mrb[0].mxu0
      %v4260 = vadd.f32 %v1452, %v4259
      %v4261 = vpop.f32.mrb[0].mxu0
      %v4262 = vpop.f32.mrb[0].mxu0
      %v4263 = vadd.f32 %v1457, %v4262
      %v4264 = vpop.f32.mrb[0].mxu0
      %4265 = vmatprep.mubr.bf16.mxu0 %v3254
      %4266 = vmatmul.mubr.bf16.gmra.mrb[0].mxu0 %v3253
      %v4267 = vpop.f32.mrb[0].mxu0
      %v4268 = vadd.f32 %v1462, %v4267
      %v4269 = vpop.f32.mrb[0].mxu0
      %v4270 = vpop.f32.mrb[0].mxu0
      %v4271 = vadd.f32 %v1467, %v4270
      %v4272 = vpop.f32.mrb[0].mxu0
      %4273 = vmatprep.mubr.bf16.mxu0 %v3258
      %4274 = vmatmul.mubr.bf16.gmra.mrb[0].mxu0 %v3257
      %v4275 = vpop.f32.mrb[0].mxu0
      %v4276 = vadd.f32 %v1472, %v4275
      %v4277 = vpop.f32.mrb[0].mxu0
      %v4278 = vpop.f32.mrb[0].mxu0
      %v4279 = vadd.f32 %v1477, %v4278
      %v4280 = vpop.f32.mrb[0].mxu0
      %4281 = vmatprep.mubr.bf16.mxu0 %v3262
      %4282 = vmatmul.mubr.bf16.gmra.mrb[0].mxu0 %v3261
      %v4283 = vpop.f32.mrb[0].mxu0
      %v4284 = vadd.f32 %v1482, %v4283
      %v4285 = vpop.f32.mrb[0].mxu0
      %v4286 = vpop.f32.mrb[0].mxu0
      %v4287 = vadd.f32 %v1487, %v4286
      %v4288 = vpop.f32.mrb[0].mxu0
      %4289 = vmatprep.mubr.bf16.mxu0 %v3266
      %4290 = vmatmul.mubr.bf16.gmra.mrb[0].mxu0 %v3265
      %v4291 = vpop.f32.mrb[0].mxu0
      %v4292 = vadd.f32 %v1492, %v4291
      %v4293 = vpop.f32.mrb[0].mxu0
      %v4294 = vpop.f32.mrb[0].mxu0
      %v4295 = vadd.f32 %v1497, %v4294
      %v4296 = vpop.f32.mrb[0].mxu0
      %4297 = vmatprep.mubr.bf16.mxu0 %v3270
      %4298 = vmatmul.mubr.bf16.gmra.mrb[0].mxu0 %v3269
      %v4299 = vpop.f32.mrb[0].mxu0
      %v4300 = vadd.f32 %v1502, %v4299
      %v4301 = vpop.f32.mrb[0].mxu0
      %v4302 = vpop.f32.mrb[0].mxu0
      %v4303 = vadd.f32 %v1507, %v4302
      %v4304 = vpop.f32.mrb[0].mxu0
      %4305 = vmatprep.mubr.bf16.mxu0 %v3274
      %4306 = vmatmul.mubr.bf16.gmra.mrb[0].mxu0 %v3273
      %v4307 = vpop.f32.mrb[0].mxu0
      %v4308 = vadd.f32 %v1512, %v4307
      %v4309 = vpop.f32.mrb[0].mxu0
      %v4310 = vpop.f32.mrb[0].mxu0
      %v4311 = vadd.f32 %v1517, %v4310
      %v4312 = vpop.f32.mrb[0].mxu0
      %4313 = vmatprep.mubr.bf16.mxu0 %v3278
      %4314 = vmatmul.mubr.bf16.gmra.mrb[0].mxu0 %v3277
      %v4315 = vpop.f32.mrb[0].mxu0
      %v4316 = vadd.f32 %v1522, %v4315
      %v4317 = vpop.f32.mrb[0].mxu0
      %v4318 = vpop.f32.mrb[0].mxu0
      %v4319 = vadd.f32 %v1527, %v4318
      %v4320 = vpop.f32.mrb[0].mxu0
      %4321 = vmatprep.mubr.bf16.mxu0 %v3282
      %4322 = vmatmul.mubr.bf16.gmra.mrb[0].mxu0 %v3281
      %v4323 = vpop.f32.mrb[0].mxu0
      %v4324 = vadd.f32 %v1532, %v4323
      %v4325 = vpop.f32.mrb[0].mxu0
      %v4326 = vpop.f32.mrb[0].mxu0
      %v4327 = vadd.f32 %v1537, %v4326
      %v4328 = vpop.f32.mrb[0].mxu0
      %4329 = vmatprep.mubr.bf16.mxu0 %v3286
      %4330 = vmatmul.mubr.bf16.gmra.mrb[0].mxu0 %v3285
      %v4331 = vpop.f32.mrb[0].mxu0
      %v4332 = vadd.f32 %v1542, %v4331
      %v4333 = vpop.f32.mrb[0].mxu0
      %v4334 = vpop.f32.mrb[0].mxu0
      %v4335 = vadd.f32 %v1547, %v4334
      %v4336 = vpop.f32.mrb[0].mxu0
      %4337 = vmatprep.mubr.bf16.mxu0 %v3290
      %4338 = vmatmul.mubr.bf16.gmra.mrb[0].mxu0 %v3289
      %v4339 = vpop.f32.mrb[0].mxu0
      %v4340 = vadd.f32 %v1552, %v4339
      %v4341 = vpop.f32.mrb[0].mxu0
      %v4342 = vpop.f32.mrb[0].mxu0
      %v4343 = vadd.f32 %v1557, %v4342
      %v4344 = vpop.f32.mrb[0].mxu0
      %4345 = vmatprep.mubr.bf16.mxu0 %v3294
      %4346 = vmatmul.mubr.bf16.gmra.mrb[0].mxu0 %v3293
      %v4347 = vpop.f32.mrb[0].mxu0
      %v4348 = vadd.f32 %v1562, %v4347
      %v4349 = vpop.f32.mrb[0].mxu0
      %v4350 = vpop.f32.mrb[0].mxu0
      %v4351 = vadd.f32 %v1567, %v4350
      %v4352 = vpop.f32.mrb[0].mxu0
      %4353 = vmatprep.mubr.bf16.mxu0 %v3298
      %4354 = vmatmul.mubr.bf16.gmra.mrb[0].mxu0 %v3297
      %v4355 = vpop.f32.mrb[0].mxu0
      %v4356 = vadd.f32 %v1572, %v4355
      %v4357 = vpop.f32.mrb[0].mxu0
      %v4358 = vpop.f32.mrb[0].mxu0
      %v4359 = vadd.f32 %v1577, %v4358
      %v4360 = vpop.f32.mrb[0].mxu0
      %4361 = vmatprep.mubr.bf16.mxu0 %v3302
      %4362 = vmatmul.mubr.bf16.gmra.mrb[0].mxu0 %v3301
      %v4363 = vpop.f32.mrb[0].mxu0
      %v4364 = vadd.f32 %v1582, %v4363
      %v4365 = vpop.f32.mrb[0].mxu0
      %v4366 = vpop.f32.mrb[0].mxu0
      %v4367 = vadd.f32 %v1587, %v4366
      %v4368 = vpop.f32.mrb[0].mxu0
      %4369 = vmatprep.mubr.bf16.mxu0 %v3306
      %4370 = vmatmul.mubr.bf16.gmra.mrb[0].mxu0 %v3305
      %v4371 = vpop.f32.mrb[0].mxu0
      %v4372 = vadd.f32 %v1592, %v4371
      %v4373 = vpop.f32.mrb[0].mxu0
      %v4374 = vpop.f32.mrb[0].mxu0
      %v4375 = vadd.f32 %v1597, %v4374
      %v4376 = vpop.f32.mrb[0].mxu0
      %4377 = vmatprep.mubr.bf16.mxu0 %v3310
      %4378 = vmatmul.mubr.bf16.gmra.mrb[0].mxu0 %v3309
      %v4379 = vpop.f32.mrb[0].mxu0
      %v4380 = vadd.f32 %v1602, %v4379
      %v4381 = vpop.f32.mrb[0].mxu0
      %v4382 = vpop.f32.mrb[0].mxu0
      %v4383 = vadd.f32 %v1607, %v4382
      %v4384 = vpop.f32.mrb[0].mxu0
      %4385 = vmatprep.mubr.bf16.mxu0 %v3314
      %4386 = vmatmul.mubr.bf16.gmra.mrb[0].mxu0 %v3313
      %v4387 = vpop.f32.mrb[0].mxu0
      %v4388 = vadd.f32 %v1612, %v4387
      %v4389 = vpop.f32.mrb[0].mxu0
      %v4390 = vpop.f32.mrb[0].mxu0
      %v4391 = vadd.f32 %v1617, %v4390
      %v4392 = vpop.f32.mrb[0].mxu0
      %4393 = vmatprep.mubr.bf16.mxu0 %v3318
      %4394 = vmatmul.mubr.bf16.gmra.mrb[0].mxu0 %v3317
      %v4395 = vpop.f32.mrb[0].mxu0
      %v4396 = vadd.f32 %v1622, %v4395
      %v4397 = vpop.f32.mrb[0].mxu0
      %v4398 = vpop.f32.mrb[0].mxu0
      %v4399 = vadd.f32 %v1627, %v4398
      %v4400 = vpop.f32.mrb[0].mxu0
      %4401 = vmatprep.mubr.bf16.mxu0 %v3322
      %4402 = vmatmul.mubr.bf16.gmra.mrb[0].mxu0 %v3321
      %v4403 = vpop.f32.mrb[0].mxu0
      %v4404 = vadd.f32 %v1632, %v4403
      %v4405 = vpop.f32.mrb[0].mxu0
      %v4406 = vpop.f32.mrb[0].mxu0
      %v4407 = vadd.f32 %v1637, %v4406
      %v4408 = vpop.f32.mrb[0].mxu0
      %4409 = vmatprep.mubr.bf16.mxu0 %v3326
      %4410 = vmatmul.mubr.bf16.gmra.mrb[0].mxu0 %v3325
      %v4411 = vpop.f32.mrb[0].mxu0
      %v4412 = vadd.f32 %v1642, %v4411
      %v4413 = vpop.f32.mrb[0].mxu0
      %v4414 = vpop.f32.mrb[0].mxu0
      %v4415 = vadd.f32 %v1647, %v4414
      %v4416 = vpop.f32.mrb[0].mxu0
      %4417 = vmatprep.mubr.bf16.mxu0 %v3330
      %4418 = vmatmul.mubr.bf16.gmra.mrb[0].mxu0 %v3329
      %v4419 = vpop.f32.mrb[0].mxu0
      %v4420 = vadd.f32 %v1652, %v4419
      %v4421 = vpop.f32.mrb[0].mxu0
      %v4422 = vpop.f32.mrb[0].mxu0
      %v4423 = vadd.f32 %v1657, %v4422
      %v4424 = vpop.f32.mrb[0].mxu0
      %4425 = vmatprep.mubr.bf16.mxu0 %v3334
      %4426 = vmatmul.mubr.bf16.gmra.mrb[0].mxu0 %v3333
      %v4427 = vpop.f32.mrb[0].mxu0
      %v4428 = vadd.f32 %v1662, %v4427
      %v4429 = vpop.f32.mrb[0].mxu0
      %v4430 = vpop.f32.mrb[0].mxu0
      %v4431 = vadd.f32 %v1667, %v4430
      %v4432 = vpop.f32.mrb[0].mxu0
      %4433 = vmatprep.mubr.bf16.mxu0 %v3338
      %4434 = vmatmul.mubr.bf16.gmra.mrb[0].mxu0 %v3337
      %v4435 = vpop.f32.mrb[0].mxu0
      %v4436 = vadd.f32 %v1672, %v4435
      %v4437 = vpop.f32.mrb[0].mxu0
      %v4438 = vpop.f32.mrb[0].mxu0
      %v4439 = vadd.f32 %v1677, %v4438
      %v4440 = vpop.f32.mrb[0].mxu0
      %4441 = vmatprep.mubr.bf16.mxu0 %v3342
      %4442 = vmatmul.mubr.bf16.gmra.mrb[0].mxu0 %v3341
      %v4443 = vpop.f32.mrb[0].mxu0
      %v4444 = vadd.f32 %v1682, %v4443
      %v4445 = vpop.f32.mrb[0].mxu0
      %v4446 = vpop.f32.mrb[0].mxu0
      %v4447 = vadd.f32 %v1687, %v4446
      %v4448 = vpop.f32.mrb[0].mxu0
      %4449 = vmatprep.mubr.bf16.mxu0 %v3346
      %4450 = vmatmul.mubr.bf16.gmra.mrb[0].mxu0 %v3345
      %v4451 = vpop.f32.mrb[0].mxu0
      %v4452 = vadd.f32 %v1692, %v4451
      %v4453 = vpop.f32.mrb[0].mxu0
      %v4454 = vpop.f32.mrb[0].mxu0
      %v4455 = vadd.f32 %v1697, %v4454
      %v4456 = vpop.f32.mrb[0].mxu0
      %4457 = vmatprep.mubr.bf16.mxu0 %v3350
      %4458 = vmatmul.mubr.bf16.gmra.mrb[0].mxu0 %v3349
      %v4459 = vpop.f32.mrb[0].mxu0
      %v4460 = vadd.f32 %v1702, %v4459
      %v4461 = vpop.f32.mrb[0].mxu0
      %v4462 = vpop.f32.mrb[0].mxu0
      %v4463 = vadd.f32 %v1707, %v4462
      %v4464 = vpop.f32.mrb[0].mxu0
      %4465 = vmatprep.mubr.bf16.mxu0 %v3354
      %4466 = vmatmul.mubr.bf16.gmra.mrb[0].mxu0 %v3353
      %v4467 = vpop.f32.mrb[0].mxu0
      %v4468 = vadd.f32 %v1712, %v4467
      %v4469 = vpop.f32.mrb[0].mxu0
      %v4470 = vpop.f32.mrb[0].mxu0
      %v4471 = vadd.f32 %v1717, %v4470
      %v4472 = vpop.f32.mrb[0].mxu0
      %4473 = vmatprep.mubr.bf16.mxu0 %v3358
      %4474 = vmatmul.mubr.bf16.gmra.mrb[0].mxu0 %v3357
      %v4475 = vpop.f32.mrb[0].mxu0
      %v4476 = vadd.f32 %v1722, %v4475
      %v4477 = vpop.f32.mrb[0].mxu0
      %v4478 = vpop.f32.mrb[0].mxu0
      %v4479 = vadd.f32 %v1727, %v4478
      %v4480 = vpop.f32.mrb[0].mxu0
      %4481 = vmatprep.mubr.bf16.mxu0 %v3362
      %4482 = vmatmul.mubr.bf16.gmra.mrb[0].mxu0 %v3361
      %v4483 = vpop.f32.mrb[0].mxu0
      %v4484 = vadd.f32 %v1732, %v4483
      %v4485 = vpop.f32.mrb[0].mxu0
      %v4486 = vpop.f32.mrb[0].mxu0
      %v4487 = vadd.f32 %v1737, %v4486
      %v4488 = vpop.f32.mrb[0].mxu0
      %4489 = vmatprep.mubr.bf16.mxu0 %v3366
      %4490 = vmatmul.mubr.bf16.gmra.mrb[0].mxu0 %v3365
      %v4491 = vpop.f32.mrb[0].mxu0
      %v4492 = vadd.f32 %v1742, %v4491
      %v4493 = vpop.f32.mrb[0].mxu0
      %v4494 = vpop.f32.mrb[0].mxu0
      %v4495 = vadd.f32 %v1747, %v4494
      %v4496 = vpop.f32.mrb[0].mxu0
      %4497 = vmatprep.mubr.bf16.mxu0 %v3370
      %4498 = vmatmul.mubr.bf16.gmra.mrb[0].mxu0 %v3369
      %v4499 = vpop.f32.mrb[0].mxu0
      %v4500 = vadd.f32 %v1752, %v4499
      %v4501 = vpop.f32.mrb[0].mxu0
      %v4502 = vpop.f32.mrb[0].mxu0
      %v4503 = vadd.f32 %v1757, %v4502
      %v4504 = vpop.f32.mrb[0].mxu0
      %4505 = vmatprep.mubr.bf16.mxu0 %v3374
      %4506 = vmatmul.mubr.bf16.gmra.mrb[0].mxu0 %v3373
      %v4507 = vpop.f32.mrb[0].mxu0
      %v4508 = vadd.f32 %v1762, %v4507
      %v4509 = vpop.f32.mrb[0].mxu0
      %v4510 = vpop.f32.mrb[0].mxu0
      %v4511 = vadd.f32 %v1767, %v4510
      %v4512 = vpop.f32.mrb[0].mxu0
      %4513 = vmatprep.mubr.bf16.mxu0 %v3378
      %4514 = vmatmul.mubr.bf16.gmra.mrb[0].mxu0 %v3377
      %v4515 = vpop.f32.mrb[0].mxu0
      %v4516 = vadd.f32 %v1772, %v4515
      %v4517 = vpop.f32.mrb[0].mxu0
      %v4518 = vpop.f32.mrb[0].mxu0
      %v4519 = vadd.f32 %v1777, %v4518
      %v4520 = vpop.f32.mrb[0].mxu0
      %4521 = vmatprep.mubr.bf16.mxu0 %v3382
      %4522 = vmatmul.mubr.bf16.gmra.mrb[0].mxu0 %v3381
      %v4523 = vpop.f32.mrb[0].mxu0
      %v4524 = vadd.f32 %v1782, %v4523
      %v4525 = vpop.f32.mrb[0].mxu0
      %v4526 = vpop.f32.mrb[0].mxu0
      %v4527 = vadd.f32 %v1787, %v4526
      %v4528 = vpop.f32.mrb[0].mxu0
      %4529 = vmatprep.mubr.bf16.mxu0 %v3386
      %4530 = vmatmul.mubr.bf16.gmra.mrb[0].mxu0 %v3385
      %v4531 = vpop.f32.mrb[0].mxu0
      %v4532 = vadd.f32 %v1792, %v4531
      %v4533 = vpop.f32.mrb[0].mxu0
      %v4534 = vpop.f32.mrb[0].mxu0
      %v4535 = vadd.f32 %v1797, %v4534
      %v4536 = vpop.f32.mrb[0].mxu0
      %4537 = vmatprep.mubr.bf16.mxu0 %v3390
      %4538 = vmatmul.mubr.bf16.gmra.mrb[0].mxu0 %v3389
      %v4539 = vpop.f32.mrb[0].mxu0
      %v4540 = vadd.f32 %v1802, %v4539
      %v4541 = vpop.f32.mrb[0].mxu0
      %v4542 = vpop.f32.mrb[0].mxu0
      %v4543 = vadd.f32 %v1807, %v4542
      %v4544 = vpop.f32.mrb[0].mxu0
      %4545 = vmatprep.mubr.bf16.mxu0 %v3394
      %4546 = vmatmul.mubr.bf16.gmra.mrb[0].mxu0 %v3393
      %v4547 = vpop.f32.mrb[0].mxu0
      %v4548 = vadd.f32 %v1812, %v4547
      %v4549 = vpop.f32.mrb[0].mxu0
      %v4550 = vpop.f32.mrb[0].mxu0
      %v4551 = vadd.f32 %v1817, %v4550
      %v4552 = vpop.f32.mrb[0].mxu0
      %4553 = vmatprep.mubr.bf16.mxu0 %v3398
      %4554 = vmatmul.mubr.bf16.gmra.mrb[0].mxu0 %v3397
      %v4555 = vpop.f32.mrb[0].mxu0
      %v4556 = vadd.f32 %v1822, %v4555
      %v4557 = vpop.f32.mrb[0].mxu0
      %v4558 = vpop.f32.mrb[0].mxu0
      %v4559 = vadd.f32 %v1827, %v4558
      %v4560 = vpop.f32.mrb[0].mxu0
      %4561 = vmatprep.mubr.bf16.mxu0 %v3402
      %4562 = vmatmul.mubr.bf16.gmra.mrb[0].mxu0 %v3401
      %v4563 = vpop.f32.mrb[0].mxu0
      %v4564 = vadd.f32 %v1832, %v4563
      %v4565 = vpop.f32.mrb[0].mxu0
      %v4566 = vpop.f32.mrb[0].mxu0
      %v4567 = vadd.f32 %v1837, %v4566
      %v4568 = vpop.f32.mrb[0].mxu0
      %4569 = vmatprep.mubr.bf16.mxu0 %v3406
      %4570 = vmatmul.mubr.bf16.gmra.mrb[0].mxu0 %v3405
      %v4571 = vpop.f32.mrb[0].mxu0
      %v4572 = vadd.f32 %v1842, %v4571
      %v4573 = vpop.f32.mrb[0].mxu0
      %v4574 = vpop.f32.mrb[0].mxu0
      %v4575 = vadd.f32 %v1847, %v4574
      %v4576 = vpop.f32.mrb[0].mxu0
      %4577 = vmatprep.mubr.bf16.mxu0 %v3410
      %4578 = vmatmul.mubr.bf16.gmra.mrb[0].mxu0 %v3409
      %v4579 = vpop.f32.mrb[0].mxu0
      %v4580 = vadd.f32 %v1852, %v4579
      %v4581 = vpop.f32.mrb[0].mxu0
      %v4582 = vpop.f32.mrb[0].mxu0
      %v4583 = vadd.f32 %v1857, %v4582
      %v4584 = vpop.f32.mrb[0].mxu0
      %4585 = vmatprep.mubr.bf16.mxu0 %v3414
      %4586 = vmatmul.mubr.bf16.gmra.mrb[0].mxu0 %v3413
      %v4587 = vpop.f32.mrb[0].mxu0
      %v4588 = vadd.f32 %v1862, %v4587
      %v4589 = vpop.f32.mrb[0].mxu0
      %v4590 = vpop.f32.mrb[0].mxu0
      %v4591 = vadd.f32 %v1867, %v4590
      %v4592 = vpop.f32.mrb[0].mxu0
      %4593 = vmatprep.mubr.bf16.mxu0 %v3418
      %4594 = vmatmul.mubr.bf16.gmra.mrb[0].mxu0 %v3417
      %v4595 = vpop.f32.mrb[0].mxu0
      %v4596 = vadd.f32 %v1872, %v4595
      %v4597 = vpop.f32.mrb[0].mxu0
      %v4598 = vpop.f32.mrb[0].mxu0
      %v4599 = vadd.f32 %v1877, %v4598
      %v4600 = vpop.f32.mrb[0].mxu0
      %4601 = vmatprep.mubr.bf16.mxu0 %v3422
      %4602 = vmatmul.mubr.bf16.gmra.mrb[0].mxu0 %v3421
      %v4603 = vpop.f32.mrb[0].mxu0
      %v4604 = vadd.f32 %v1882, %v4603
      %v4605 = vpop.f32.mrb[0].mxu0
      %v4606 = vpop.f32.mrb[0].mxu0
      %v4607 = vadd.f32 %v1887, %v4606
      %v4608 = vpop.f32.mrb[0].mxu0
      %4609 = vdwg.mxu0
      %4610 = vmatprep.subr.bf16.mxu0 0
      %4611 = vmatpush1.bf16.msra.mxu0 %v337
      %4612 = vmatprep.subr.bf16.mxu0 0
      %4613 = vmatpush1.bf16.msra.mxu0 %v338
      %4614 = vmatprep.subr.bf16.mxu0 0
      %4615 = vmatpush1.bf16.msra.mxu0 %v339
      %4616 = vmatprep.subr.bf16.mxu0 0
      %4617 = vmatpush1.bf16.msra.mxu0 %v340
      %4618 = vmatprep.subr.bf16.mxu0 0
      %4619 = vmatpush1.bf16.msra.mxu0 %v341
      %4620 = vmatprep.subr.bf16.mxu0 0
      %4621 = vmatpush1.bf16.msra.mxu0 %v342
      %4622 = vmatprep.subr.bf16.mxu0 0
      %4623 = vmatpush1.bf16.msra.mxu0 %v343
      %4624 = vmatprep.subr.bf16.mxu0 0
      %4625 = vmatpush1.bf16.msra.mxu0 %v344
      %4626 = vmatprep.subr.bf16.mxu0 0
      %4627 = vmatpush1.bf16.msra.mxu0 %v345
      %4628 = vmatprep.subr.bf16.mxu0 0
      %4629 = vmatpush1.bf16.msra.mxu0 %v346
      %4630 = vmatprep.subr.bf16.mxu0 0
      %4631 = vmatpush1.bf16.msra.mxu0 %v347
      %4632 = vmatprep.subr.bf16.mxu0 0
      %4633 = vmatpush1.bf16.msra.mxu0 %v348
      %4634 = vmatprep.subr.bf16.mxu0 0
      %4635 = vmatpush1.bf16.msra.mxu0 %v349
      %4636 = vmatprep.subr.bf16.mxu0 0
      %4637 = vmatpush1.bf16.msra.mxu0 %v350
      %4638 = vmatprep.subr.bf16.mxu0 0
      %4639 = vmatpush1.bf16.msra.mxu0 %v351
      %4640 = vmatprep.subr.bf16.mxu0 0
      %4641 = vmatpush1.bf16.msra.mxu0 %v352
      %4642 = vmatprep.mubr.bf16.mxu0 %v3044
      %4643 = vmatmul.mubr.bf16.gmra.mrb[0].mxu0 %v3043
      %v4644 = vpop.f32.mrb[0].mxu0
      %v4645 = vadd.f32 %v3844, %v4644
      %v4646 = vpop.f32.mrb[0].mxu0
      %v4647 = vpop.f32.mrb[0].mxu0
      %v4648 = vadd.f32 %v3847, %v4647
      %v4649 = vpop.f32.mrb[0].mxu0
      %4650 = vmatprep.mubr.bf16.mxu0 %v3048
      %4651 = vmatmul.mubr.bf16.gmra.mrb[0].mxu0 %v3047
      %v4652 = vpop.f32.mrb[0].mxu0
      %v4653 = vadd.f32 %v3852, %v4652
      %v4654 = vpop.f32.mrb[0].mxu0
      %v4655 = vpop.f32.mrb[0].mxu0
      %v4656 = vadd.f32 %v3855, %v4655
      %v4657 = vpop.f32.mrb[0].mxu0
      %4658 = vmatprep.mubr.bf16.mxu0 %v3052
      %4659 = vmatmul.mubr.bf16.gmra.mrb[0].mxu0 %v3051
      %v4660 = vpop.f32.mrb[0].mxu0
      %v4661 = vadd.f32 %v3860, %v4660
      %v4662 = vpop.f32.mrb[0].mxu0
      %v4663 = vpop.f32.mrb[0].mxu0
      %v4664 = vadd.f32 %v3863, %v4663
      %v4665 = vpop.f32.mrb[0].mxu0
      %4666 = vmatprep.mubr.bf16.mxu0 %v3056
      %4667 = vmatmul.mubr.bf16.gmra.mrb[0].mxu0 %v3055
      %v4668 = vpop.f32.mrb[0].mxu0
      %v4669 = vadd.f32 %v3868, %v4668
      %v4670 = vpop.f32.mrb[0].mxu0
      %v4671 = vpop.f32.mrb[0].mxu0
      %v4672 = vadd.f32 %v3871, %v4671
      %v4673 = vpop.f32.mrb[0].mxu0
      %4674 = vmatprep.mubr.bf16.mxu0 %v3060
      %4675 = vmatmul.mubr.bf16.gmra.mrb[0].mxu0 %v3059
      %v4676 = vpop.f32.mrb[0].mxu0
      %v4677 = vadd.f32 %v3876, %v4676
      %v4678 = vpop.f32.mrb[0].mxu0
      %v4679 = vpop.f32.mrb[0].mxu0
      %v4680 = vadd.f32 %v3879, %v4679
      %v4681 = vpop.f32.mrb[0].mxu0
      %4682 = vmatprep.mubr.bf16.mxu0 %v3064
      %4683 = vmatmul.mubr.bf16.gmra.mrb[0].mxu0 %v3063
      %v4684 = vpop.f32.mrb[0].mxu0
      %v4685 = vadd.f32 %v3884, %v4684
      %v4686 = vpop.f32.mrb[0].mxu0
      %v4687 = vpop.f32.mrb[0].mxu0
      %v4688 = vadd.f32 %v3887, %v4687
      %v4689 = vpop.f32.mrb[0].mxu0
      %4690 = vmatprep.mubr.bf16.mxu0 %v3068
      %4691 = vmatmul.mubr.bf16.gmra.mrb[0].mxu0 %v3067
      %v4692 = vpop.f32.mrb[0].mxu0
      %v4693 = vadd.f32 %v3892, %v4692
      %v4694 = vpop.f32.mrb[0].mxu0
      %v4695 = vpop.f32.mrb[0].mxu0
      %v4696 = vadd.f32 %v3895, %v4695
      %v4697 = vpop.f32.mrb[0].mxu0
      %4698 = vmatprep.mubr.bf16.mxu0 %v3072
      %4699 = vmatmul.mubr.bf16.gmra.mrb[0].mxu0 %v3071
      %v4700 = vpop.f32.mrb[0].mxu0
      %v4701 = vadd.f32 %v3900, %v4700
      %v4702 = vpop.f32.mrb[0].mxu0
      %v4703 = vpop.f32.mrb[0].mxu0
      %v4704 = vadd.f32 %v3903, %v4703
      %v4705 = vpop.f32.mrb[0].mxu0
      %4706 = vmatprep.mubr.bf16.mxu0 %v3076
      %4707 = vmatmul.mubr.bf16.gmra.mrb[0].mxu0 %v3075
      %v4708 = vpop.f32.mrb[0].mxu0
      %v4709 = vadd.f32 %v3908, %v4708
      %v4710 = vpop.f32.mrb[0].mxu0
      %v4711 = vpop.f32.mrb[0].mxu0
      %v4712 = vadd.f32 %v3911, %v4711
      %v4713 = vpop.f32.mrb[0].mxu0
      %4714 = vmatprep.mubr.bf16.mxu0 %v3080
      %4715 = vmatmul.mubr.bf16.gmra.mrb[0].mxu0 %v3079
      %v4716 = vpop.f32.mrb[0].mxu0
      %v4717 = vadd.f32 %v3916, %v4716
      %v4718 = vpop.f32.mrb[0].mxu0
      %v4719 = vpop.f32.mrb[0].mxu0
      %v4720 = vadd.f32 %v3919, %v4719
      %v4721 = vpop.f32.mrb[0].mxu0
      %4722 = vmatprep.mubr.bf16.mxu0 %v3084
      %4723 = vmatmul.mubr.bf16.gmra.mrb[0].mxu0 %v3083
      %v4724 = vpop.f32.mrb[0].mxu0
      %v4725 = vadd.f32 %v3924, %v4724
      %v4726 = vpop.f32.mrb[0].mxu0
      %v4727 = vpop.f32.mrb[0].mxu0
      %v4728 = vadd.f32 %v3927, %v4727
      %v4729 = vpop.f32.mrb[0].mxu0
      %4730 = vmatprep.mubr.bf16.mxu0 %v3088
      %4731 = vmatmul.mubr.bf16.gmra.mrb[0].mxu0 %v3087
      %v4732 = vpop.f32.mrb[0].mxu0
      %v4733 = vadd.f32 %v3932, %v4732
      %v4734 = vpop.f32.mrb[0].mxu0
      %v4735 = vpop.f32.mrb[0].mxu0
      %v4736 = vadd.f32 %v3935, %v4735
      %v4737 = vpop.f32.mrb[0].mxu0
      %4738 = vmatprep.mubr.bf16.mxu0 %v3092
      %4739 = vmatmul.mubr.bf16.gmra.mrb[0].mxu0 %v3091
      %v4740 = vpop.f32.mrb[0].mxu0
      %v4741 = vadd.f32 %v3940, %v4740
      %v4742 = vpop.f32.mrb[0].mxu0
      %v4743 = vpop.f32.mrb[0].mxu0
      %v4744 = vadd.f32 %v3943, %v4743
      %v4745 = vpop.f32.mrb[0].mxu0
      %4746 = vmatprep.mubr.bf16.mxu0 %v3096
      %4747 = vmatmul.mubr.bf16.gmra.mrb[0].mxu0 %v3095
      %v4748 = vpop.f32.mrb[0].mxu0
      %v4749 = vadd.f32 %v3948, %v4748
      %v4750 = vpop.f32.mrb[0].mxu0
      %v4751 = vpop.f32.mrb[0].mxu0
      %v4752 = vadd.f32 %v3951, %v4751
      %v4753 = vpop.f32.mrb[0].mxu0
      %4754 = vmatprep.mubr.bf16.mxu0 %v3100
      %4755 = vmatmul.mubr.bf16.gmra.mrb[0].mxu0 %v3099
      %v4756 = vpop.f32.mrb[0].mxu0
      %v4757 = vadd.f32 %v3956, %v4756
      %v4758 = vpop.f32.mrb[0].mxu0
      %v4759 = vpop.f32.mrb[0].mxu0
      %v4760 = vadd.f32 %v3959, %v4759
      %v4761 = vpop.f32.mrb[0].mxu0
      %4762 = vmatprep.mubr.bf16.mxu0 %v3104
      %4763 = vmatmul.mubr.bf16.gmra.mrb[0].mxu0 %v3103
      %v4764 = vpop.f32.mrb[0].mxu0
      %v4765 = vadd.f32 %v3964, %v4764
      %v4766 = vpop.f32.mrb[0].mxu0
      %v4767 = vpop.f32.mrb[0].mxu0
      %v4768 = vadd.f32 %v3967, %v4767
      %v4769 = vpop.f32.mrb[0].mxu0
      %4770 = vmatprep.mubr.bf16.mxu0 %v3108
      %4771 = vmatmul.mubr.bf16.gmra.mrb[0].mxu0 %v3107
      %v4772 = vpop.f32.mrb[0].mxu0
      %v4773 = vadd.f32 %v3972, %v4772
      %v4774 = vpop.f32.mrb[0].mxu0
      %v4775 = vpop.f32.mrb[0].mxu0
      %v4776 = vadd.f32 %v3975, %v4775
      %v4777 = vpop.f32.mrb[0].mxu0
      %4778 = vmatprep.mubr.bf16.mxu0 %v3112
      %4779 = vmatmul.mubr.bf16.gmra.mrb[0].mxu0 %v3111
      %v4780 = vpop.f32.mrb[0].mxu0
      %v4781 = vadd.f32 %v3980, %v4780
      %v4782 = vpop.f32.mrb[0].mxu0
      %v4783 = vpop.f32.mrb[0].mxu0
      %v4784 = vadd.f32 %v3983, %v4783
      %v4785 = vpop.f32.mrb[0].mxu0
      %4786 = vmatprep.mubr.bf16.mxu0 %v3116
      %4787 = vmatmul.mubr.bf16.gmra.mrb[0].mxu0 %v3115
      %v4788 = vpop.f32.mrb[0].mxu0
      %v4789 = vadd.f32 %v3988, %v4788
      %v4790 = vpop.f32.mrb[0].mxu0
      %v4791 = vpop.f32.mrb[0].mxu0
      %v4792 = vadd.f32 %v3991, %v4791
      %v4793 = vpop.f32.mrb[0].mxu0
      %4794 = vmatprep.mubr.bf16.mxu0 %v3120
      %4795 = vmatmul.mubr.bf16.gmra.mrb[0].mxu0 %v3119
      %v4796 = vpop.f32.mrb[0].mxu0
      %v4797 = vadd.f32 %v3996, %v4796
      %v4798 = vpop.f32.mrb[0].mxu0
      %v4799 = vpop.f32.mrb[0].mxu0
      %v4800 = vadd.f32 %v3999, %v4799
      %v4801 = vpop.f32.mrb[0].mxu0
      %4802 = vmatprep.mubr.bf16.mxu0 %v3124
      %4803 = vmatmul.mubr.bf16.gmra.mrb[0].mxu0 %v3123
      %v4804 = vpop.f32.mrb[0].mxu0
      %v4805 = vadd.f32 %v4004, %v4804
      %v4806 = vpop.f32.mrb[0].mxu0
      %v4807 = vpop.f32.mrb[0].mxu0
      %v4808 = vadd.f32 %v4007, %v4807
      %v4809 = vpop.f32.mrb[0].mxu0
      %4810 = vmatprep.mubr.bf16.mxu0 %v3128
      %4811 = vmatmul.mubr.bf16.gmra.mrb[0].mxu0 %v3127
      %v4812 = vpop.f32.mrb[0].mxu0
      %v4813 = vadd.f32 %v4012, %v4812
      %v4814 = vpop.f32.mrb[0].mxu0
      %v4815 = vpop.f32.mrb[0].mxu0
      %v4816 = vadd.f32 %v4015, %v4815
      %v4817 = vpop.f32.mrb[0].mxu0
      %4818 = vmatprep.mubr.bf16.mxu0 %v3132
      %4819 = vmatmul.mubr.bf16.gmra.mrb[0].mxu0 %v3131
      %v4820 = vpop.f32.mrb[0].mxu0
      %v4821 = vadd.f32 %v4020, %v4820
      %v4822 = vpop.f32.mrb[0].mxu0
      %v4823 = vpop.f32.mrb[0].mxu0
      %v4824 = vadd.f32 %v4023, %v4823
      %v4825 = vpop.f32.mrb[0].mxu0
      %4826 = vmatprep.mubr.bf16.mxu0 %v3136
      %4827 = vmatmul.mubr.bf16.gmra.mrb[0].mxu0 %v3135
      %v4828 = vpop.f32.mrb[0].mxu0
      %v4829 = vadd.f32 %v4028, %v4828
      %v4830 = vpop.f32.mrb[0].mxu0
      %v4831 = vpop.f32.mrb[0].mxu0
      %v4832 = vadd.f32 %v4031, %v4831
      %v4833 = vpop.f32.mrb[0].mxu0
      %4834 = vmatprep.mubr.bf16.mxu0 %v3140
      %4835 = vmatmul.mubr.bf16.gmra.mrb[0].mxu0 %v3139
      %v4836 = vpop.f32.mrb[0].mxu0
      %v4837 = vadd.f32 %v4036, %v4836
      %v4838 = vpop.f32.mrb[0].mxu0
      %v4839 = vpop.f32.mrb[0].mxu0
      %v4840 = vadd.f32 %v4039, %v4839
      %v4841 = vpop.f32.mrb[0].mxu0
      %4842 = vmatprep.mubr.bf16.mxu0 %v3144
      %4843 = vmatmul.mubr.bf16.gmra.mrb[0].mxu0 %v3143
      %v4844 = vpop.f32.mrb[0].mxu0
      %v4845 = vadd.f32 %v4044, %v4844
      %v4846 = vpop.f32.mrb[0].mxu0
      %v4847 = vpop.f32.mrb[0].mxu0
      %v4848 = vadd.f32 %v4047, %v4847
      %v4849 = vpop.f32.mrb[0].mxu0
      %4850 = vmatprep.mubr.bf16.mxu0 %v3148
      %4851 = vmatmul.mubr.bf16.gmra.mrb[0].mxu0 %v3147
      %v4852 = vpop.f32.mrb[0].mxu0
      %v4853 = vadd.f32 %v4052, %v4852
      %v4854 = vpop.f32.mrb[0].mxu0
      %v4855 = vpop.f32.mrb[0].mxu0
      %v4856 = vadd.f32 %v4055, %v4855
      %v4857 = vpop.f32.mrb[0].mxu0
      %4858 = vmatprep.mubr.bf16.mxu0 %v3152
      %4859 = vmatmul.mubr.bf16.gmra.mrb[0].mxu0 %v3151
      %v4860 = vpop.f32.mrb[0].mxu0
      %v4861 = vadd.f32 %v4060, %v4860
      %v4862 = vpop.f32.mrb[0].mxu0
      %v4863 = vpop.f32.mrb[0].mxu0
      %v4864 = vadd.f32 %v4063, %v4863
      %v4865 = vpop.f32.mrb[0].mxu0
      %4866 = vmatprep.mubr.bf16.mxu0 %v3156
      %4867 = vmatmul.mubr.bf16.gmra.mrb[0].mxu0 %v3155
      %v4868 = vpop.f32.mrb[0].mxu0
      %v4869 = vadd.f32 %v4068, %v4868
      %v4870 = vpop.f32.mrb[0].mxu0
      %v4871 = vpop.f32.mrb[0].mxu0
      %v4872 = vadd.f32 %v4071, %v4871
      %v4873 = vpop.f32.mrb[0].mxu0
      %4874 = vmatprep.mubr.bf16.mxu0 %v3160
      %4875 = vmatmul.mubr.bf16.gmra.mrb[0].mxu0 %v3159
      %v4876 = vpop.f32.mrb[0].mxu0
      %v4877 = vadd.f32 %v4076, %v4876
      %v4878 = vpop.f32.mrb[0].mxu0
      %v4879 = vpop.f32.mrb[0].mxu0
      %v4880 = vadd.f32 %v4079, %v4879
      %v4881 = vpop.f32.mrb[0].mxu0
      %4882 = vmatprep.mubr.bf16.mxu0 %v3164
      %4883 = vmatmul.mubr.bf16.gmra.mrb[0].mxu0 %v3163
      %v4884 = vpop.f32.mrb[0].mxu0
      %v4885 = vadd.f32 %v4084, %v4884
      %v4886 = vpop.f32.mrb[0].mxu0
      %v4887 = vpop.f32.mrb[0].mxu0
      %v4888 = vadd.f32 %v4087, %v4887
      %v4889 = vpop.f32.mrb[0].mxu0
      %4890 = vmatprep.mubr.bf16.mxu0 %v3168
      %4891 = vmatmul.mubr.bf16.gmra.mrb[0].mxu0 %v3167
      %v4892 = vpop.f32.mrb[0].mxu0
      %v4893 = vadd.f32 %v4092, %v4892
      %v4894 = vpop.f32.mrb[0].mxu0
      %v4895 = vpop.f32.mrb[0].mxu0
      %v4896 = vadd.f32 %v4095, %v4895
      %v4897 = vpop.f32.mrb[0].mxu0
      %4898 = vmatprep.mubr.bf16.mxu0 %v3172
      %4899 = vmatmul.mubr.bf16.gmra.mrb[0].mxu0 %v3171
      %v4900 = vpop.f32.mrb[0].mxu0
      %v4901 = vadd.f32 %v4100, %v4900
      %v4902 = vpop.f32.mrb[0].mxu0
      %v4903 = vpop.f32.mrb[0].mxu0
      %v4904 = vadd.f32 %v4103, %v4903
      %v4905 = vpop.f32.mrb[0].mxu0
      %4906 = vmatprep.mubr.bf16.mxu0 %v3176
      %4907 = vmatmul.mubr.bf16.gmra.mrb[0].mxu0 %v3175
      %v4908 = vpop.f32.mrb[0].mxu0
      %v4909 = vadd.f32 %v4108, %v4908
      %v4910 = vpop.f32.mrb[0].mxu0
      %v4911 = vpop.f32.mrb[0].mxu0
      %v4912 = vadd.f32 %v4111, %v4911
      %v4913 = vpop.f32.mrb[0].mxu0
      %4914 = vmatprep.mubr.bf16.mxu0 %v3180
      %4915 = vmatmul.mubr.bf16.gmra.mrb[0].mxu0 %v3179
      %v4916 = vpop.f32.mrb[0].mxu0
      %v4917 = vadd.f32 %v4116, %v4916
      %v4918 = vpop.f32.mrb[0].mxu0
      %v4919 = vpop.f32.mrb[0].mxu0
      %v4920 = vadd.f32 %v4119, %v4919
      %v4921 = vpop.f32.mrb[0].mxu0
      %4922 = vmatprep.mubr.bf16.mxu0 %v3184
      %4923 = vmatmul.mubr.bf16.gmra.mrb[0].mxu0 %v3183
      %v4924 = vpop.f32.mrb[0].mxu0
      %v4925 = vadd.f32 %v4124, %v4924
      %v4926 = vpop.f32.mrb[0].mxu0
      %v4927 = vpop.f32.mrb[0].mxu0
      %v4928 = vadd.f32 %v4127, %v4927
      %v4929 = vpop.f32.mrb[0].mxu0
      %4930 = vmatprep.mubr.bf16.mxu0 %v3188
      %4931 = vmatmul.mubr.bf16.gmra.mrb[0].mxu0 %v3187
      %v4932 = vpop.f32.mrb[0].mxu0
      %v4933 = vadd.f32 %v4132, %v4932
      %v4934 = vpop.f32.mrb[0].mxu0
      %v4935 = vpop.f32.mrb[0].mxu0
      %v4936 = vadd.f32 %v4135, %v4935
      %v4937 = vpop.f32.mrb[0].mxu0
      %4938 = vmatprep.mubr.bf16.mxu0 %v3192
      %4939 = vmatmul.mubr.bf16.gmra.mrb[0].mxu0 %v3191
      %v4940 = vpop.f32.mrb[0].mxu0
      %v4941 = vadd.f32 %v4140, %v4940
      %v4942 = vpop.f32.mrb[0].mxu0
      %v4943 = vpop.f32.mrb[0].mxu0
      %v4944 = vadd.f32 %v4143, %v4943
      %v4945 = vpop.f32.mrb[0].mxu0
      %4946 = vmatprep.mubr.bf16.mxu0 %v3196
      %4947 = vmatmul.mubr.bf16.gmra.mrb[0].mxu0 %v3195
      %v4948 = vpop.f32.mrb[0].mxu0
      %v4949 = vadd.f32 %v4148, %v4948
      %v4950 = vpop.f32.mrb[0].mxu0
      %v4951 = vpop.f32.mrb[0].mxu0
      %v4952 = vadd.f32 %v4151, %v4951
      %v4953 = vpop.f32.mrb[0].mxu0
      %4954 = vmatprep.mubr.bf16.mxu0 %v3200
      %4955 = vmatmul.mubr.bf16.gmra.mrb[0].mxu0 %v3199
      %v4956 = vpop.f32.mrb[0].mxu0
      %v4957 = vadd.f32 %v4156, %v4956
      %v4958 = vpop.f32.mrb[0].mxu0
      %v4959 = vpop.f32.mrb[0].mxu0
      %v4960 = vadd.f32 %v4159, %v4959
      %v4961 = vpop.f32.mrb[0].mxu0
      %4962 = vmatprep.mubr.bf16.mxu0 %v3204
      %4963 = vmatmul.mubr.bf16.gmra.mrb[0].mxu0 %v3203
      %v4964 = vpop.f32.mrb[0].mxu0
      %v4965 = vadd.f32 %v4164, %v4964
      %v4966 = vpop.f32.mrb[0].mxu0
      %v4967 = vpop.f32.mrb[0].mxu0
      %v4968 = vadd.f32 %v4167, %v4967
      %v4969 = vpop.f32.mrb[0].mxu0
      %4970 = vmatprep.mubr.bf16.mxu0 %v3208
      %4971 = vmatmul.mubr.bf16.gmra.mrb[0].mxu0 %v3207
      %v4972 = vpop.f32.mrb[0].mxu0
      %v4973 = vadd.f32 %v4172, %v4972
      %v4974 = vpop.f32.mrb[0].mxu0
      %v4975 = vpop.f32.mrb[0].mxu0
      %v4976 = vadd.f32 %v4175, %v4975
      %v4977 = vpop.f32.mrb[0].mxu0
      %4978 = vmatprep.mubr.bf16.mxu0 %v3212
      %4979 = vmatmul.mubr.bf16.gmra.mrb[0].mxu0 %v3211
      %v4980 = vpop.f32.mrb[0].mxu0
      %v4981 = vadd.f32 %v4180, %v4980
      %v4982 = vpop.f32.mrb[0].mxu0
      %v4983 = vpop.f32.mrb[0].mxu0
      %v4984 = vadd.f32 %v4183, %v4983
      %v4985 = vpop.f32.mrb[0].mxu0
      %4986 = vmatprep.mubr.bf16.mxu0 %v3216
      %4987 = vmatmul.mubr.bf16.gmra.mrb[0].mxu0 %v3215
      %v4988 = vpop.f32.mrb[0].mxu0
      %v4989 = vadd.f32 %v4188, %v4988
      %v4990 = vpop.f32.mrb[0].mxu0
      %v4991 = vpop.f32.mrb[0].mxu0
      %v4992 = vadd.f32 %v4191, %v4991
      %v4993 = vpop.f32.mrb[0].mxu0
      %4994 = vmatprep.mubr.bf16.mxu0 %v3220
      %4995 = vmatmul.mubr.bf16.gmra.mrb[0].mxu0 %v3219
      %v4996 = vpop.f32.mrb[0].mxu0
      %v4997 = vadd.f32 %v4196, %v4996
      %v4998 = vpop.f32.mrb[0].mxu0
      %v4999 = vpop.f32.mrb[0].mxu0
      %v5000 = vadd.f32 %v4199, %v4999
      %v5001 = vpop.f32.mrb[0].mxu0
      %5002 = vmatprep.mubr.bf16.mxu0 %v3224
      %5003 = vmatmul.mubr.bf16.gmra.mrb[0].mxu0 %v3223
      %v5004 = vpop.f32.mrb[0].mxu0
      %v5005 = vadd.f32 %v4204, %v5004
      %v5006 = vpop.f32.mrb[0].mxu0
      %v5007 = vpop.f32.mrb[0].mxu0
      %v5008 = vadd.f32 %v4207, %v5007
      %v5009 = vpop.f32.mrb[0].mxu0
      %5010 = vmatprep.mubr.bf16.mxu0 %v3228
      %5011 = vmatmul.mubr.bf16.gmra.mrb[0].mxu0 %v3227
      %v5012 = vpop.f32.mrb[0].mxu0
      %v5013 = vadd.f32 %v4212, %v5012
      %v5014 = vpop.f32.mrb[0].mxu0
      %v5015 = vpop.f32.mrb[0].mxu0
      %v5016 = vadd.f32 %v4215, %v5015
      %v5017 = vpop.f32.mrb[0].mxu0
      %5018 = vmatprep.mubr.bf16.mxu0 %v3232
      %5019 = vmatmul.mubr.bf16.gmra.mrb[0].mxu0 %v3231
      %v5020 = vpop.f32.mrb[0].mxu0
      %v5021 = vadd.f32 %v4220, %v5020
      %v5022 = vpop.f32.mrb[0].mxu0
      %v5023 = vpop.f32.mrb[0].mxu0
      %v5024 = vadd.f32 %v4223, %v5023
      %v5025 = vpop.f32.mrb[0].mxu0
      %5026 = vmatprep.mubr.bf16.mxu0 %v3236
      %5027 = vmatmul.mubr.bf16.gmra.mrb[0].mxu0 %v3235
      %v5028 = vpop.f32.mrb[0].mxu0
      %v5029 = vadd.f32 %v4228, %v5028
      %v5030 = vpop.f32.mrb[0].mxu0
      %v5031 = vpop.f32.mrb[0].mxu0
      %v5032 = vadd.f32 %v4231, %v5031
      %v5033 = vpop.f32.mrb[0].mxu0
      %5034 = vmatprep.mubr.bf16.mxu0 %v3240
      %5035 = vmatmul.mubr.bf16.gmra.mrb[0].mxu0 %v3239
      %v5036 = vpop.f32.mrb[0].mxu0
      %v5037 = vadd.f32 %v4236, %v5036
      %v5038 = vpop.f32.mrb[0].mxu0
      %v5039 = vpop.f32.mrb[0].mxu0
      %v5040 = vadd.f32 %v4239, %v5039
      %v5041 = vpop.f32.mrb[0].mxu0
      %5042 = vmatprep.mubr.bf16.mxu0 %v3244
      %5043 = vmatmul.mubr.bf16.gmra.mrb[0].mxu0 %v3243
      %v5044 = vpop.f32.mrb[0].mxu0
      %v5045 = vadd.f32 %v4244, %v5044
      %v5046 = vpop.f32.mrb[0].mxu0
      %v5047 = vpop.f32.mrb[0].mxu0
      %v5048 = vadd.f32 %v4247, %v5047
      %v5049 = vpop.f32.mrb[0].mxu0
      %5050 = vmatprep.mubr.bf16.mxu0 %v3248
      %5051 = vmatmul.mubr.bf16.gmra.mrb[0].mxu0 %v3247
      %v5052 = vpop.f32.mrb[0].mxu0
      %v5053 = vadd.f32 %v4252, %v5052
      %v5054 = vpop.f32.mrb[0].mxu0
      %v5055 = vpop.f32.mrb[0].mxu0
      %v5056 = vadd.f32 %v4255, %v5055
      %v5057 = vpop.f32.mrb[0].mxu0
      %5058 = vmatprep.mubr.bf16.mxu0 %v3252
      %5059 = vmatmul.mubr.bf16.gmra.mrb[0].mxu0 %v3251
      %v5060 = vpop.f32.mrb[0].mxu0
      %v5061 = vadd.f32 %v4260, %v5060
      %v5062 = vpop.f32.mrb[0].mxu0
      %v5063 = vpop.f32.mrb[0].mxu0
      %v5064 = vadd.f32 %v4263, %v5063
      %v5065 = vpop.f32.mrb[0].mxu0
      %5066 = vmatprep.mubr.bf16.mxu0 %v3256
      %5067 = vmatmul.mubr.bf16.gmra.mrb[0].mxu0 %v3255
      %v5068 = vpop.f32.mrb[0].mxu0
      %v5069 = vadd.f32 %v4268, %v5068
      %v5070 = vpop.f32.mrb[0].mxu0
      %v5071 = vpop.f32.mrb[0].mxu0
      %v5072 = vadd.f32 %v4271, %v5071
      %v5073 = vpop.f32.mrb[0].mxu0
      %5074 = vmatprep.mubr.bf16.mxu0 %v3260
      %5075 = vmatmul.mubr.bf16.gmra.mrb[0].mxu0 %v3259
      %v5076 = vpop.f32.mrb[0].mxu0
      %v5077 = vadd.f32 %v4276, %v5076
      %v5078 = vpop.f32.mrb[0].mxu0
      %v5079 = vpop.f32.mrb[0].mxu0
      %v5080 = vadd.f32 %v4279, %v5079
      %v5081 = vpop.f32.mrb[0].mxu0
      %5082 = vmatprep.mubr.bf16.mxu0 %v3264
      %5083 = vmatmul.mubr.bf16.gmra.mrb[0].mxu0 %v3263
      %v5084 = vpop.f32.mrb[0].mxu0
      %v5085 = vadd.f32 %v4284, %v5084
      %v5086 = vpop.f32.mrb[0].mxu0
      %v5087 = vpop.f32.mrb[0].mxu0
      %v5088 = vadd.f32 %v4287, %v5087
      %v5089 = vpop.f32.mrb[0].mxu0
      %5090 = vmatprep.mubr.bf16.mxu0 %v3268
      %5091 = vmatmul.mubr.bf16.gmra.mrb[0].mxu0 %v3267
      %v5092 = vpop.f32.mrb[0].mxu0
      %v5093 = vadd.f32 %v4292, %v5092
      %v5094 = vpop.f32.mrb[0].mxu0
      %v5095 = vpop.f32.mrb[0].mxu0
      %v5096 = vadd.f32 %v4295, %v5095
      %v5097 = vpop.f32.mrb[0].mxu0
      %5098 = vmatprep.mubr.bf16.mxu0 %v3272
      %5099 = vmatmul.mubr.bf16.gmra.mrb[0].mxu0 %v3271
      %v5100 = vpop.f32.mrb[0].mxu0
      %v5101 = vadd.f32 %v4300, %v5100
      %v5102 = vpop.f32.mrb[0].mxu0
      %v5103 = vpop.f32.mrb[0].mxu0
      %v5104 = vadd.f32 %v4303, %v5103
      %v5105 = vpop.f32.mrb[0].mxu0
      %5106 = vmatprep.mubr.bf16.mxu0 %v3276
      %5107 = vmatmul.mubr.bf16.gmra.mrb[0].mxu0 %v3275
      %v5108 = vpop.f32.mrb[0].mxu0
      %v5109 = vadd.f32 %v4308, %v5108
      %v5110 = vpop.f32.mrb[0].mxu0
      %v5111 = vpop.f32.mrb[0].mxu0
      %v5112 = vadd.f32 %v4311, %v5111
      %v5113 = vpop.f32.mrb[0].mxu0
      %5114 = vmatprep.mubr.bf16.mxu0 %v3280
      %5115 = vmatmul.mubr.bf16.gmra.mrb[0].mxu0 %v3279
      %v5116 = vpop.f32.mrb[0].mxu0
      %v5117 = vadd.f32 %v4316, %v5116
      %v5118 = vpop.f32.mrb[0].mxu0
      %v5119 = vpop.f32.mrb[0].mxu0
      %v5120 = vadd.f32 %v4319, %v5119
      %v5121 = vpop.f32.mrb[0].mxu0
      %5122 = vmatprep.mubr.bf16.mxu0 %v3284
      %5123 = vmatmul.mubr.bf16.gmra.mrb[0].mxu0 %v3283
      %v5124 = vpop.f32.mrb[0].mxu0
      %v5125 = vadd.f32 %v4324, %v5124
      %v5126 = vpop.f32.mrb[0].mxu0
      %v5127 = vpop.f32.mrb[0].mxu0
      %v5128 = vadd.f32 %v4327, %v5127
      %v5129 = vpop.f32.mrb[0].mxu0
      %5130 = vmatprep.mubr.bf16.mxu0 %v3288
      %5131 = vmatmul.mubr.bf16.gmra.mrb[0].mxu0 %v3287
      %v5132 = vpop.f32.mrb[0].mxu0
      %v5133 = vadd.f32 %v4332, %v5132
      %v5134 = vpop.f32.mrb[0].mxu0
      %v5135 = vpop.f32.mrb[0].mxu0
      %v5136 = vadd.f32 %v4335, %v5135
      %v5137 = vpop.f32.mrb[0].mxu0
      %5138 = vmatprep.mubr.bf16.mxu0 %v3292
      %5139 = vmatmul.mubr.bf16.gmra.mrb[0].mxu0 %v3291
      %v5140 = vpop.f32.mrb[0].mxu0
      %v5141 = vadd.f32 %v4340, %v5140
      %v5142 = vpop.f32.mrb[0].mxu0
      %v5143 = vpop.f32.mrb[0].mxu0
      %v5144 = vadd.f32 %v4343, %v5143
      %v5145 = vpop.f32.mrb[0].mxu0
      %5146 = vmatprep.mubr.bf16.mxu0 %v3296
      %5147 = vmatmul.mubr.bf16.gmra.mrb[0].mxu0 %v3295
      %v5148 = vpop.f32.mrb[0].mxu0
      %v5149 = vadd.f32 %v4348, %v5148
      %v5150 = vpop.f32.mrb[0].mxu0
      %v5151 = vpop.f32.mrb[0].mxu0
      %v5152 = vadd.f32 %v4351, %v5151
      %v5153 = vpop.f32.mrb[0].mxu0
      %5154 = vmatprep.mubr.bf16.mxu0 %v3300
      %5155 = vmatmul.mubr.bf16.gmra.mrb[0].mxu0 %v3299
      %v5156 = vpop.f32.mrb[0].mxu0
      %v5157 = vadd.f32 %v4356, %v5156
      %v5158 = vpop.f32.mrb[0].mxu0
      %v5159 = vpop.f32.mrb[0].mxu0
      %v5160 = vadd.f32 %v4359, %v5159
      %v5161 = vpop.f32.mrb[0].mxu0
      %5162 = vmatprep.mubr.bf16.mxu0 %v3304
      %5163 = vmatmul.mubr.bf16.gmra.mrb[0].mxu0 %v3303
      %v5164 = vpop.f32.mrb[0].mxu0
      %v5165 = vadd.f32 %v4364, %v5164
      %v5166 = vpop.f32.mrb[0].mxu0
      %v5167 = vpop.f32.mrb[0].mxu0
      %v5168 = vadd.f32 %v4367, %v5167
      %v5169 = vpop.f32.mrb[0].mxu0
      %5170 = vmatprep.mubr.bf16.mxu0 %v3308
      %5171 = vmatmul.mubr.bf16.gmra.mrb[0].mxu0 %v3307
      %v5172 = vpop.f32.mrb[0].mxu0
      %v5173 = vadd.f32 %v4372, %v5172
      %v5174 = vpop.f32.mrb[0].mxu0
      %v5175 = vpop.f32.mrb[0].mxu0
      %v5176 = vadd.f32 %v4375, %v5175
      %v5177 = vpop.f32.mrb[0].mxu0
      %5178 = vmatprep.mubr.bf16.mxu0 %v3312
      %5179 = vmatmul.mubr.bf16.gmra.mrb[0].mxu0 %v3311
      %v5180 = vpop.f32.mrb[0].mxu0
      %v5181 = vadd.f32 %v4380, %v5180
      %v5182 = vpop.f32.mrb[0].mxu0
      %v5183 = vpop.f32.mrb[0].mxu0
      %v5184 = vadd.f32 %v4383, %v5183
      %v5185 = vpop.f32.mrb[0].mxu0
      %5186 = vmatprep.mubr.bf16.mxu0 %v3316
      %5187 = vmatmul.mubr.bf16.gmra.mrb[0].mxu0 %v3315
      %v5188 = vpop.f32.mrb[0].mxu0
      %v5189 = vadd.f32 %v4388, %v5188
      %v5190 = vpop.f32.mrb[0].mxu0
      %v5191 = vpop.f32.mrb[0].mxu0
      %v5192 = vadd.f32 %v4391, %v5191
      %v5193 = vpop.f32.mrb[0].mxu0
      %5194 = vmatprep.mubr.bf16.mxu0 %v3320
      %5195 = vmatmul.mubr.bf16.gmra.mrb[0].mxu0 %v3319
      %v5196 = vpop.f32.mrb[0].mxu0
      %v5197 = vadd.f32 %v4396, %v5196
      %v5198 = vpop.f32.mrb[0].mxu0
      %v5199 = vpop.f32.mrb[0].mxu0
      %v5200 = vadd.f32 %v4399, %v5199
      %v5201 = vpop.f32.mrb[0].mxu0
      %5202 = vmatprep.mubr.bf16.mxu0 %v3324
      %5203 = vmatmul.mubr.bf16.gmra.mrb[0].mxu0 %v3323
      %v5204 = vpop.f32.mrb[0].mxu0
      %v5205 = vadd.f32 %v4404, %v5204
      %v5206 = vpop.f32.mrb[0].mxu0
      %v5207 = vpop.f32.mrb[0].mxu0
      %v5208 = vadd.f32 %v4407, %v5207
      %v5209 = vpop.f32.mrb[0].mxu0
      %5210 = vmatprep.mubr.bf16.mxu0 %v3328
      %5211 = vmatmul.mubr.bf16.gmra.mrb[0].mxu0 %v3327
      %v5212 = vpop.f32.mrb[0].mxu0
      %v5213 = vadd.f32 %v4412, %v5212
      %v5214 = vpop.f32.mrb[0].mxu0
      %v5215 = vpop.f32.mrb[0].mxu0
      %v5216 = vadd.f32 %v4415, %v5215
      %v5217 = vpop.f32.mrb[0].mxu0
      %5218 = vmatprep.mubr.bf16.mxu0 %v3332
      %5219 = vmatmul.mubr.bf16.gmra.mrb[0].mxu0 %v3331
      %v5220 = vpop.f32.mrb[0].mxu0
      %v5221 = vadd.f32 %v4420, %v5220
      %v5222 = vpop.f32.mrb[0].mxu0
      %v5223 = vpop.f32.mrb[0].mxu0
      %v5224 = vadd.f32 %v4423, %v5223
      %v5225 = vpop.f32.mrb[0].mxu0
      %5226 = vmatprep.mubr.bf16.mxu0 %v3336
      %5227 = vmatmul.mubr.bf16.gmra.mrb[0].mxu0 %v3335
      %v5228 = vpop.f32.mrb[0].mxu0
      %v5229 = vadd.f32 %v4428, %v5228
      %v5230 = vpop.f32.mrb[0].mxu0
      %v5231 = vpop.f32.mrb[0].mxu0
      %v5232 = vadd.f32 %v4431, %v5231
      %v5233 = vpop.f32.mrb[0].mxu0
      %5234 = vmatprep.mubr.bf16.mxu0 %v3340
      %5235 = vmatmul.mubr.bf16.gmra.mrb[0].mxu0 %v3339
      %v5236 = vpop.f32.mrb[0].mxu0
      %v5237 = vadd.f32 %v4436, %v5236
      %v5238 = vpop.f32.mrb[0].mxu0
      %v5239 = vpop.f32.mrb[0].mxu0
      %v5240 = vadd.f32 %v4439, %v5239
      %v5241 = vpop.f32.mrb[0].mxu0
      %5242 = vmatprep.mubr.bf16.mxu0 %v3344
      %5243 = vmatmul.mubr.bf16.gmra.mrb[0].mxu0 %v3343
      %v5244 = vpop.f32.mrb[0].mxu0
      %v5245 = vadd.f32 %v4444, %v5244
      %v5246 = vpop.f32.mrb[0].mxu0
      %v5247 = vpop.f32.mrb[0].mxu0
      %v5248 = vadd.f32 %v4447, %v5247
      %v5249 = vpop.f32.mrb[0].mxu0
      %5250 = vmatprep.mubr.bf16.mxu0 %v3348
      %5251 = vmatmul.mubr.bf16.gmra.mrb[0].mxu0 %v3347
      %v5252 = vpop.f32.mrb[0].mxu0
      %v5253 = vadd.f32 %v4452, %v5252
      %v5254 = vpop.f32.mrb[0].mxu0
      %v5255 = vpop.f32.mrb[0].mxu0
      %v5256 = vadd.f32 %v4455, %v5255
      %v5257 = vpop.f32.mrb[0].mxu0
      %5258 = vmatprep.mubr.bf16.mxu0 %v3352
      %5259 = vmatmul.mubr.bf16.gmra.mrb[0].mxu0 %v3351
      %v5260 = vpop.f32.mrb[0].mxu0
      %v5261 = vadd.f32 %v4460, %v5260
      %v5262 = vpop.f32.mrb[0].mxu0
      %v5263 = vpop.f32.mrb[0].mxu0
      %v5264 = vadd.f32 %v4463, %v5263
      %v5265 = vpop.f32.mrb[0].mxu0
      %5266 = vmatprep.mubr.bf16.mxu0 %v3356
      %5267 = vmatmul.mubr.bf16.gmra.mrb[0].mxu0 %v3355
      %v5268 = vpop.f32.mrb[0].mxu0
      %v5269 = vadd.f32 %v4468, %v5268
      %v5270 = vpop.f32.mrb[0].mxu0
      %v5271 = vpop.f32.mrb[0].mxu0
      %v5272 = vadd.f32 %v4471, %v5271
      %v5273 = vpop.f32.mrb[0].mxu0
      %5274 = vmatprep.mubr.bf16.mxu0 %v3360
      %5275 = vmatmul.mubr.bf16.gmra.mrb[0].mxu0 %v3359
      %v5276 = vpop.f32.mrb[0].mxu0
      %v5277 = vadd.f32 %v4476, %v5276
      %v5278 = vpop.f32.mrb[0].mxu0
      %v5279 = vpop.f32.mrb[0].mxu0
      %v5280 = vadd.f32 %v4479, %v5279
      %v5281 = vpop.f32.mrb[0].mxu0
      %5282 = vmatprep.mubr.bf16.mxu0 %v3364
      %5283 = vmatmul.mubr.bf16.gmra.mrb[0].mxu0 %v3363
      %v5284 = vpop.f32.mrb[0].mxu0
      %v5285 = vadd.f32 %v4484, %v5284
      %v5286 = vpop.f32.mrb[0].mxu0
      %v5287 = vpop.f32.mrb[0].mxu0
      %v5288 = vadd.f32 %v4487, %v5287
      %v5289 = vpop.f32.mrb[0].mxu0
      %5290 = vmatprep.mubr.bf16.mxu0 %v3368
      %5291 = vmatmul.mubr.bf16.gmra.mrb[0].mxu0 %v3367
      %v5292 = vpop.f32.mrb[0].mxu0
      %v5293 = vadd.f32 %v4492, %v5292
      %v5294 = vpop.f32.mrb[0].mxu0
      %v5295 = vpop.f32.mrb[0].mxu0
      %v5296 = vadd.f32 %v4495, %v5295
      %v5297 = vpop.f32.mrb[0].mxu0
      %5298 = vmatprep.mubr.bf16.mxu0 %v3372
      %5299 = vmatmul.mubr.bf16.gmra.mrb[0].mxu0 %v3371
      %v5300 = vpop.f32.mrb[0].mxu0
      %v5301 = vadd.f32 %v4500, %v5300
      %v5302 = vpop.f32.mrb[0].mxu0
      %v5303 = vpop.f32.mrb[0].mxu0
      %v5304 = vadd.f32 %v4503, %v5303
      %v5305 = vpop.f32.mrb[0].mxu0
      %5306 = vmatprep.mubr.bf16.mxu0 %v3376
      %5307 = vmatmul.mubr.bf16.gmra.mrb[0].mxu0 %v3375
      %v5308 = vpop.f32.mrb[0].mxu0
      %v5309 = vadd.f32 %v4508, %v5308
      %v5310 = vpop.f32.mrb[0].mxu0
      %v5311 = vpop.f32.mrb[0].mxu0
      %v5312 = vadd.f32 %v4511, %v5311
      %v5313 = vpop.f32.mrb[0].mxu0
      %5314 = vmatprep.mubr.bf16.mxu0 %v3380
      %5315 = vmatmul.mubr.bf16.gmra.mrb[0].mxu0 %v3379
      %v5316 = vpop.f32.mrb[0].mxu0
      %v5317 = vadd.f32 %v4516, %v5316
      %v5318 = vpop.f32.mrb[0].mxu0
      %v5319 = vpop.f32.mrb[0].mxu0
      %v5320 = vadd.f32 %v4519, %v5319
      %v5321 = vpop.f32.mrb[0].mxu0
      %5322 = vmatprep.mubr.bf16.mxu0 %v3384
      %5323 = vmatmul.mubr.bf16.gmra.mrb[0].mxu0 %v3383
      %v5324 = vpop.f32.mrb[0].mxu0
      %v5325 = vadd.f32 %v4524, %v5324
      %v5326 = vpop.f32.mrb[0].mxu0
      %v5327 = vpop.f32.mrb[0].mxu0
      %v5328 = vadd.f32 %v4527, %v5327
      %v5329 = vpop.f32.mrb[0].mxu0
      %5330 = vmatprep.mubr.bf16.mxu0 %v3388
      %5331 = vmatmul.mubr.bf16.gmra.mrb[0].mxu0 %v3387
      %v5332 = vpop.f32.mrb[0].mxu0
      %v5333 = vadd.f32 %v4532, %v5332
      %v5334 = vpop.f32.mrb[0].mxu0
      %v5335 = vpop.f32.mrb[0].mxu0
      %v5336 = vadd.f32 %v4535, %v5335
      %v5337 = vpop.f32.mrb[0].mxu0
      %5338 = vmatprep.mubr.bf16.mxu0 %v3392
      %5339 = vmatmul.mubr.bf16.gmra.mrb[0].mxu0 %v3391
      %v5340 = vpop.f32.mrb[0].mxu0
      %v5341 = vadd.f32 %v4540, %v5340
      %v5342 = vpop.f32.mrb[0].mxu0
      %v5343 = vpop.f32.mrb[0].mxu0
      %v5344 = vadd.f32 %v4543, %v5343
      %v5345 = vpop.f32.mrb[0].mxu0
      %5346 = vmatprep.mubr.bf16.mxu0 %v3396
      %5347 = vmatmul.mubr.bf16.gmra.mrb[0].mxu0 %v3395
      %v5348 = vpop.f32.mrb[0].mxu0
      %v5349 = vadd.f32 %v4548, %v5348
      %v5350 = vpop.f32.mrb[0].mxu0
      %v5351 = vpop.f32.mrb[0].mxu0
      %v5352 = vadd.f32 %v4551, %v5351
      %v5353 = vpop.f32.mrb[0].mxu0
      %5354 = vmatprep.mubr.bf16.mxu0 %v3400
      %5355 = vmatmul.mubr.bf16.gmra.mrb[0].mxu0 %v3399
      %v5356 = vpop.f32.mrb[0].mxu0
      %v5357 = vadd.f32 %v4556, %v5356
      %v5358 = vpop.f32.mrb[0].mxu0
      %v5359 = vpop.f32.mrb[0].mxu0
      %v5360 = vadd.f32 %v4559, %v5359
      %v5361 = vpop.f32.mrb[0].mxu0
      %5362 = vmatprep.mubr.bf16.mxu0 %v3404
      %5363 = vmatmul.mubr.bf16.gmra.mrb[0].mxu0 %v3403
      %v5364 = vpop.f32.mrb[0].mxu0
      %v5365 = vadd.f32 %v4564, %v5364
      %v5366 = vpop.f32.mrb[0].mxu0
      %v5367 = vpop.f32.mrb[0].mxu0
      %v5368 = vadd.f32 %v4567, %v5367
      %v5369 = vpop.f32.mrb[0].mxu0
      %5370 = vmatprep.mubr.bf16.mxu0 %v3408
      %5371 = vmatmul.mubr.bf16.gmra.mrb[0].mxu0 %v3407
      %v5372 = vpop.f32.mrb[0].mxu0
      %v5373 = vadd.f32 %v4572, %v5372
      %v5374 = vpop.f32.mrb[0].mxu0
      %v5375 = vpop.f32.mrb[0].mxu0
      %v5376 = vadd.f32 %v4575, %v5375
      %v5377 = vpop.f32.mrb[0].mxu0
      %5378 = vmatprep.mubr.bf16.mxu0 %v3412
      %5379 = vmatmul.mubr.bf16.gmra.mrb[0].mxu0 %v3411
      %v5380 = vpop.f32.mrb[0].mxu0
      %v5381 = vadd.f32 %v4580, %v5380
      %v5382 = vpop.f32.mrb[0].mxu0
      %v5383 = vpop.f32.mrb[0].mxu0
      %v5384 = vadd.f32 %v4583, %v5383
      %v5385 = vpop.f32.mrb[0].mxu0
      %5386 = vmatprep.mubr.bf16.mxu0 %v3416
      %5387 = vmatmul.mubr.bf16.gmra.mrb[0].mxu0 %v3415
      %v5388 = vpop.f32.mrb[0].mxu0
      %v5389 = vadd.f32 %v4588, %v5388
      %v5390 = vpop.f32.mrb[0].mxu0
      %v5391 = vpop.f32.mrb[0].mxu0
      %v5392 = vadd.f32 %v4591, %v5391
      %v5393 = vpop.f32.mrb[0].mxu0
      %5394 = vmatprep.mubr.bf16.mxu0 %v3420
      %5395 = vmatmul.mubr.bf16.gmra.mrb[0].mxu0 %v3419
      %v5396 = vpop.f32.mrb[0].mxu0
      %v5397 = vadd.f32 %v4596, %v5396
      %v5398 = vpop.f32.mrb[0].mxu0
      %v5399 = vpop.f32.mrb[0].mxu0
      %v5400 = vadd.f32 %v4599, %v5399
      %v5401 = vpop.f32.mrb[0].mxu0
      %5402 = vmatprep.mubr.bf16.mxu0 %v3424
      %5403 = vmatmul.mubr.bf16.gmra.mrb[0].mxu0 %v3423
      %v5404 = vpop.f32.mrb[0].mxu0
      %v5405 = vadd.f32 %v4604, %v5404
      %v5406 = vpop.f32.mrb[0].mxu0
      %v5407 = vpop.f32.mrb[0].mxu0
      %v5408 = vadd.f32 %v4607, %v5407
      %v5409 = vpop.f32.mrb[0].mxu0
      %5410 = vdwg.mxu0
      %v5411 = vmax.f32 %v4901, 0.0
      %v5412 = vmax.f32 %v4904, 0.0
      %v5413 = vmax.f32 %v4909, 0.0
      %v5414 = vmax.f32 %v4912, 0.0
      %v5415 = vmax.f32 %v4917, 0.0
      %v5416 = vmax.f32 %v4920, 0.0
      %v5417 = vmax.f32 %v4925, 0.0
      %v5418 = vmax.f32 %v4928, 0.0
      %v5419 = vmax.f32 %v4933, 0.0
      %v5420 = vmax.f32 %v4936, 0.0
      %v5421 = vmax.f32 %v4941, 0.0
      %v5422 = vmax.f32 %v4944, 0.0
      %v5423 = vmax.f32 %v4949, 0.0
      %v5424 = vmax.f32 %v4952, 0.0
      %v5425 = vmax.f32 %v4957, 0.0
      %v5426 = vmax.f32 %v4960, 0.0
      %v5427 = vmax.f32 %v4965, 0.0
      %v5428 = vmax.f32 %v4968, 0.0
      %v5429 = vmax.f32 %v4973, 0.0
      %v5430 = vmax.f32 %v4976, 0.0
      %v5431 = vmax.f32 %v4981, 0.0
      %v5432 = vmax.f32 %v4984, 0.0
      %v5433 = vmax.f32 %v4989, 0.0
      %v5434 = vmax.f32 %v4992, 0.0
      %v5435 = vmax.f32 %v4997, 0.0
      %v5436 = vmax.f32 %v5000, 0.0
      %v5437 = vmax.f32 %v5005, 0.0
      %v5438 = vmax.f32 %v5008, 0.0
      %v5439 = vmax.f32 %v5013, 0.0
      %v5440 = vmax.f32 %v5016, 0.0
      %v5441 = vmax.f32 %v5021, 0.0
      %v5442 = vmax.f32 %v5024, 0.0
      %v5443 = vmax.f32 %v5029, 0.0
      %v5444 = vmax.f32 %v5032, 0.0
      %v5445 = vmax.f32 %v5037, 0.0
      %v5446 = vmax.f32 %v5040, 0.0
      %v5447 = vmax.f32 %v5045, 0.0
      %v5448 = vmax.f32 %v5048, 0.0
      %v5449 = vmax.f32 %v5053, 0.0
      %v5450 = vmax.f32 %v5056, 0.0
      %v5451 = vmax.f32 %v5061, 0.0
      %v5452 = vmax.f32 %v5064, 0.0
      %v5453 = vmax.f32 %v5069, 0.0
      %v5454 = vmax.f32 %v5072, 0.0
      %v5455 = vmax.f32 %v5077, 0.0
      %v5456 = vmax.f32 %v5080, 0.0
      %v5457 = vmax.f32 %v5085, 0.0
      %v5458 = vmax.f32 %v5088, 0.0
      %v5459 = vmax.f32 %v5093, 0.0
      %v5460 = vmax.f32 %v5096, 0.0
      %v5461 = vmax.f32 %v5101, 0.0
      %v5462 = vmax.f32 %v5104, 0.0
      %v5463 = vmax.f32 %v5109, 0.0
      %v5464 = vmax.f32 %v5112, 0.0
      %v5465 = vmax.f32 %v5117, 0.0
      %v5466 = vmax.f32 %v5120, 0.0
      %v5467 = vmax.f32 %v5125, 0.0
      %v5468 = vmax.f32 %v5128, 0.0
      %v5469 = vmax.f32 %v5133, 0.0
      %v5470 = vmax.f32 %v5136, 0.0
      %v5471 = vmax.f32 %v5141, 0.0
      %v5472 = vmax.f32 %v5144, 0.0
      %v5473 = vmax.f32 %v5149, 0.0
      %v5474 = vmax.f32 %v5152, 0.0
      %v5475 = vmax.f32 %v5157, 0.0
      %v5476 = vmax.f32 %v5160, 0.0
      %v5477 = vmax.f32 %v5165, 0.0
      %v5478 = vmax.f32 %v5168, 0.0
      %v5479 = vmax.f32 %v5173, 0.0
      %v5480 = vmax.f32 %v5176, 0.0
      %v5481 = vmax.f32 %v5181, 0.0
      %v5482 = vmax.f32 %v5184, 0.0
      %v5483 = vmax.f32 %v5189, 0.0
      %v5484 = vmax.f32 %v5192, 0.0
      %v5485 = vmax.f32 %v5197, 0.0
      %v5486 = vmax.f32 %v5200, 0.0
      %v5487 = vmax.f32 %v5205, 0.0
      %v5488 = vmax.f32 %v5208, 0.0
      %v5489 = vmax.f32 %v5213, 0.0
      %v5490 = vmax.f32 %v5216, 0.0
      %v5491 = vmax.f32 %v5221, 0.0
      %v5492 = vmax.f32 %v5224, 0.0
      %v5493 = vmax.f32 %v5229, 0.0
      %v5494 = vmax.f32 %v5232, 0.0
      %v5495 = vmax.f32 %v5237, 0.0
      %v5496 = vmax.f32 %v5240, 0.0
      %v5497 = vmax.f32 %v5245, 0.0
      %v5498 = vmax.f32 %v5248, 0.0
      %v5499 = vmax.f32 %v5253, 0.0
      %v5500 = vmax.f32 %v5256, 0.0
      %v5501 = vmax.f32 %v5261, 0.0
      %v5502 = vmax.f32 %v5264, 0.0
      %v5503 = vmax.f32 %v5269, 0.0
      %v5504 = vmax.f32 %v5272, 0.0
      %v5505 = vmax.f32 %v5277, 0.0
      %v5506 = vmax.f32 %v5280, 0.0
      %v5507 = vmax.f32 %v5285, 0.0
      %v5508 = vmax.f32 %v5288, 0.0
      %v5509 = vmax.f32 %v5293, 0.0
      %v5510 = vmax.f32 %v5296, 0.0
      %v5511 = vmax.f32 %v5301, 0.0
      %v5512 = vmax.f32 %v5304, 0.0
      %v5513 = vmax.f32 %v5309, 0.0
      %v5514 = vmax.f32 %v5312, 0.0
      %v5515 = vmax.f32 %v5317, 0.0
      %v5516 = vmax.f32 %v5320, 0.0
      %v5517 = vmax.f32 %v5325, 0.0
      %v5518 = vmax.f32 %v5328, 0.0
      %v5519 = vmax.f32 %v5333, 0.0
      %v5520 = vmax.f32 %v5336, 0.0
      %v5521 = vmax.f32 %v5341, 0.0
      %v5522 = vmax.f32 %v5344, 0.0
      %v5523 = vmax.f32 %v5349, 0.0
      %v5524 = vmax.f32 %v5352, 0.0
      %v5525 = vmax.f32 %v5357, 0.0
      %v5526 = vmax.f32 %v5360, 0.0
      %v5527 = vmax.f32 %v5365, 0.0
      %v5528 = vmax.f32 %v5368, 0.0
      %v5529 = vmax.f32 %v5373, 0.0
      %v5530 = vmax.f32 %v5376, 0.0
      %v5531 = vmax.f32 %v5381, 0.0
      %v5532 = vmax.f32 %v5384, 0.0
      %v5533 = vmax.f32 %v5389, 0.0
      %v5534 = vmax.f32 %v5392, 0.0
      %v5535 = vmax.f32 %v5397, 0.0
      %v5536 = vmax.f32 %v5400, 0.0
      %v5537 = vmax.f32 %v5405, 0.0
      %v5538 = vmax.f32 %v5408, 0.0
      %v5539 = vpack.c.bf16 %v5412, %v5411
      %v5540 = vpack.c.bf16 %v5414, %v5413
      %v5541 = vpack.c.bf16 %v5416, %v5415
      %v5542 = vpack.c.bf16 %v5418, %v5417
      %v5543 = vpack.c.bf16 %v5420, %v5419
      %v5544 = vpack.c.bf16 %v5422, %v5421
      %v5545 = vpack.c.bf16 %v5424, %v5423
      %v5546 = vpack.c.bf16 %v5426, %v5425
      %v5547 = vpack.c.bf16 %v5428, %v5427
      %v5548 = vpack.c.bf16 %v5430, %v5429
      %v5549 = vpack.c.bf16 %v5432, %v5431
      %v5550 = vpack.c.bf16 %v5434, %v5433
      %v5551 = vpack.c.bf16 %v5436, %v5435
      %v5552 = vpack.c.bf16 %v5438, %v5437
      %v5553 = vpack.c.bf16 %v5440, %v5439
      %v5554 = vpack.c.bf16 %v5442, %v5441
      %v5555 = vpack.c.bf16 %v5444, %v5443
      %v5556 = vpack.c.bf16 %v5446, %v5445
      %v5557 = vpack.c.bf16 %v5448, %v5447
      %v5558 = vpack.c.bf16 %v5450, %v5449
      %v5559 = vpack.c.bf16 %v5452, %v5451
      %v5560 = vpack.c.bf16 %v5454, %v5453
      %v5561 = vpack.c.bf16 %v5456, %v5455
      %v5562 = vpack.c.bf16 %v5458, %v5457
      %v5563 = vpack.c.bf16 %v5460, %v5459
      %v5564 = vpack.c.bf16 %v5462, %v5461
      %v5565 = vpack.c.bf16 %v5464, %v5463
      %v5566 = vpack.c.bf16 %v5466, %v5465
      %v5567 = vpack.c.bf16 %v5468, %v5467
      %v5568 = vpack.c.bf16 %v5470, %v5469
      %v5569 = vpack.c.bf16 %v5472, %v5471
      %v5570 = vpack.c.bf16 %v5474, %v5473
      %v5571 = vpack.c.bf16 %v5476, %v5475
      %v5572 = vpack.c.bf16 %v5478, %v5477
      %v5573 = vpack.c.bf16 %v5480, %v5479
      %v5574 = vpack.c.bf16 %v5482, %v5481
      %v5575 = vpack.c.bf16 %v5484, %v5483
      %v5576 = vpack.c.bf16 %v5486, %v5485
      %v5577 = vpack.c.bf16 %v5488, %v5487
      %v5578 = vpack.c.bf16 %v5490, %v5489
      %v5579 = vpack.c.bf16 %v5492, %v5491
      %v5580 = vpack.c.bf16 %v5494, %v5493
      %v5581 = vpack.c.bf16 %v5496, %v5495
      %v5582 = vpack.c.bf16 %v5498, %v5497
      %v5583 = vpack.c.bf16 %v5500, %v5499
      %v5584 = vpack.c.bf16 %v5502, %v5501
      %v5585 = vpack.c.bf16 %v5504, %v5503
      %v5586 = vpack.c.bf16 %v5506, %v5505
      %v5587 = vpack.c.bf16 %v5508, %v5507
      %v5588 = vpack.c.bf16 %v5510, %v5509
      %v5589 = vpack.c.bf16 %v5512, %v5511
      %v5590 = vpack.c.bf16 %v5514, %v5513
      %v5591 = vpack.c.bf16 %v5516, %v5515
      %v5592 = vpack.c.bf16 %v5518, %v5517
      %v5593 = vpack.c.bf16 %v5520, %v5519
      %v5594 = vpack.c.bf16 %v5522, %v5521
      %v5595 = vpack.c.bf16 %v5524, %v5523
      %v5596 = vpack.c.bf16 %v5526, %v5525
      %v5597 = vpack.c.bf16 %v5528, %v5527
      %v5598 = vpack.c.bf16 %v5530, %v5529
      %v5599 = vpack.c.bf16 %v5532, %v5531
      %v5600 = vpack.c.bf16 %v5534, %v5533
      %v5601 = vpack.c.bf16 %v5536, %v5535
      %v5602 = vpack.c.bf16 %v5538, %v5537
      %v5603 = vld [vmem:[%s3] sm:$0xff]
      %v5604 = vld [vmem:[%s3 + $0x8] sm:$0xff]
      %v5605 = vld [vmem:[%s3 + $0x10] sm:$0xff]
      %v5606 = vld [vmem:[%s3 + $0x18] sm:$0xff]
      %v5607 = vld [vmem:[%s3 + $0x20] sm:$0xff]
      %v5608 = vld [vmem:[%s3 + $0x28] sm:$0xff]
      %v5609 = vld [vmem:[%s3 + $0x30] sm:$0xff]
      %v5610 = vld [vmem:[%s3 + $0x38] sm:$0xff]
      %v5611 = vld [vmem:[%s3 + $0x40] sm:$0xff]
      %v5612 = vld [vmem:[%s3 + $0x48] sm:$0xff]
      %v5613 = vld [vmem:[%s3 + $0x50] sm:$0xff]
      %v5614 = vld [vmem:[%s3 + $0x58] sm:$0xff]
      %v5615 = vld [vmem:[%s3 + $0x60] sm:$0xff]
      %v5616 = vld [vmem:[%s3 + $0x68] sm:$0xff]
      %v5617 = vld [vmem:[%s3 + $0x70] sm:$0xff]
      %v5618 = vld [vmem:[%s3 + $0x78] sm:$0xff]
      %v5619 = vld [vmem:[%s3 + $0x80] sm:$0xff]
      %v5620 = vld [vmem:[%s3 + $0x88] sm:$0xff]
      %v5621 = vld [vmem:[%s3 + $0x90] sm:$0xff]
      %v5622 = vld [vmem:[%s3 + $0x98] sm:$0xff]
      %v5623 = vld [vmem:[%s3 + $0xa0] sm:$0xff]
      %v5624 = vld [vmem:[%s3 + $0xa8] sm:$0xff]
      %v5625 = vld [vmem:[%s3 + $0xb0] sm:$0xff]
      %v5626 = vld [vmem:[%s3 + $0xb8] sm:$0xff]
      %v5627 = vld [vmem:[%s3 + $0xc0] sm:$0xff]
      %v5628 = vld [vmem:[%s3 + $0xc8] sm:$0xff]
      %v5629 = vld [vmem:[%s3 + $0xd0] sm:$0xff]
      %v5630 = vld [vmem:[%s3 + $0xd8] sm:$0xff]
      %v5631 = vld [vmem:[%s3 + $0xe0] sm:$0xff]
      %v5632 = vld [vmem:[%s3 + $0xe8] sm:$0xff]
      %v5633 = vld [vmem:[%s3 + $0xf0] sm:$0xff]
      %v5634 = vld [vmem:[%s3 + $0xf8] sm:$0xff]
      %v5635 = vld [vmem:[%s3 + $0x100] sm:$0xff]
      %v5636 = vld [vmem:[%s3 + $0x108] sm:$0xff]
      %v5637 = vld [vmem:[%s3 + $0x110] sm:$0xff]
      %v5638 = vld [vmem:[%s3 + $0x118] sm:$0xff]
      %v5639 = vld [vmem:[%s3 + $0x120] sm:$0xff]
      %v5640 = vld [vmem:[%s3 + $0x128] sm:$0xff]
      %v5641 = vld [vmem:[%s3 + $0x130] sm:$0xff]
      %v5642 = vld [vmem:[%s3 + $0x138] sm:$0xff]
      %v5643 = vld [vmem:[%s3 + $0x140] sm:$0xff]
      %v5644 = vld [vmem:[%s3 + $0x148] sm:$0xff]
      %v5645 = vld [vmem:[%s3 + $0x150] sm:$0xff]
      %v5646 = vld [vmem:[%s3 + $0x158] sm:$0xff]
      %v5647 = vld [vmem:[%s3 + $0x160] sm:$0xff]
      %v5648 = vld [vmem:[%s3 + $0x168] sm:$0xff]
      %v5649 = vld [vmem:[%s3 + $0x170] sm:$0xff]
      %v5650 = vld [vmem:[%s3 + $0x178] sm:$0xff]
      %v5651 = vld [vmem:[%s3 + $0x180] sm:$0xff]
      %v5652 = vld [vmem:[%s3 + $0x188] sm:$0xff]
      %v5653 = vld [vmem:[%s3 + $0x190] sm:$0xff]
      %v5654 = vld [vmem:[%s3 + $0x198] sm:$0xff]
      %v5655 = vld [vmem:[%s3 + $0x1a0] sm:$0xff]
      %v5656 = vld [vmem:[%s3 + $0x1a8] sm:$0xff]
      %v5657 = vld [vmem:[%s3 + $0x1b0] sm:$0xff]
      %v5658 = vld [vmem:[%s3 + $0x1b8] sm:$0xff]
      %v5659 = vld [vmem:[%s3 + $0x1c0] sm:$0xff]
      %v5660 = vld [vmem:[%s3 + $0x1c8] sm:$0xff]
      %v5661 = vld [vmem:[%s3 + $0x1d0] sm:$0xff]
      %v5662 = vld [vmem:[%s3 + $0x1d8] sm:$0xff]
      %v5663 = vld [vmem:[%s3 + $0x1e0] sm:$0xff]
      %v5664 = vld [vmem:[%s3 + $0x1e8] sm:$0xff]
      %v5665 = vld [vmem:[%s3 + $0x1f0] sm:$0xff]
      %v5666 = vld [vmem:[%s3 + $0x1f8] sm:$0xff]
      %v5667 = vld [vmem:[%s3 + $0x200] sm:$0xff]
      %v5668 = vld [vmem:[%s3 + $0x208] sm:$0xff]
      %v5669 = vld [vmem:[%s3 + $0x210] sm:$0xff]
      %v5670 = vld [vmem:[%s3 + $0x218] sm:$0xff]
      %v5671 = vld [vmem:[%s3 + $0x220] sm:$0xff]
      %v5672 = vld [vmem:[%s3 + $0x228] sm:$0xff]
      %v5673 = vld [vmem:[%s3 + $0x230] sm:$0xff]
      %v5674 = vld [vmem:[%s3 + $0x238] sm:$0xff]
      %v5675 = vld [vmem:[%s3 + $0x240] sm:$0xff]
      %v5676 = vld [vmem:[%s3 + $0x248] sm:$0xff]
      %v5677 = vld [vmem:[%s3 + $0x250] sm:$0xff]
      %v5678 = vld [vmem:[%s3 + $0x258] sm:$0xff]
      %v5679 = vld [vmem:[%s3 + $0x260] sm:$0xff]
      %v5680 = vld [vmem:[%s3 + $0x268] sm:$0xff]
      %v5681 = vld [vmem:[%s3 + $0x270] sm:$0xff]
      %v5682 = vld [vmem:[%s3 + $0x278] sm:$0xff]
      %v5683 = vld [vmem:[%s3 + $0x280] sm:$0xff]
      %v5684 = vld [vmem:[%s3 + $0x288] sm:$0xff]
      %v5685 = vld [vmem:[%s3 + $0x290] sm:$0xff]
      %v5686 = vld [vmem:[%s3 + $0x298] sm:$0xff]
      %v5687 = vld [vmem:[%s3 + $0x2a0] sm:$0xff]
      %v5688 = vld [vmem:[%s3 + $0x2a8] sm:$0xff]
      %v5689 = vld [vmem:[%s3 + $0x2b0] sm:$0xff]
      %v5690 = vld [vmem:[%s3 + $0x2b8] sm:$0xff]
      %v5691 = vld [vmem:[%s3 + $0x2c0] sm:$0xff]
      %v5692 = vld [vmem:[%s3 + $0x2c8] sm:$0xff]
      %v5693 = vld [vmem:[%s3 + $0x2d0] sm:$0xff]
      %v5694 = vld [vmem:[%s3 + $0x2d8] sm:$0xff]
      %v5695 = vld [vmem:[%s3 + $0x2e0] sm:$0xff]
      %v5696 = vld [vmem:[%s3 + $0x2e8] sm:$0xff]
      %v5697 = vld [vmem:[%s3 + $0x2f0] sm:$0xff]
      %v5698 = vld [vmem:[%s3 + $0x2f8] sm:$0xff]
      %v5699 = vld [vmem:[%s3 + $0x300] sm:$0xff]
      %v5700 = vld [vmem:[%s3 + $0x308] sm:$0xff]
      %v5701 = vld [vmem:[%s3 + $0x310] sm:$0xff]
      %v5702 = vld [vmem:[%s3 + $0x318] sm:$0xff]
      %v5703 = vld [vmem:[%s3 + $0x320] sm:$0xff]
      %v5704 = vld [vmem:[%s3 + $0x328] sm:$0xff]
      %v5705 = vld [vmem:[%s3 + $0x330] sm:$0xff]
      %v5706 = vld [vmem:[%s3 + $0x338] sm:$0xff]
      %v5707 = vld [vmem:[%s3 + $0x340] sm:$0xff]
      %v5708 = vld [vmem:[%s3 + $0x348] sm:$0xff]
      %v5709 = vld [vmem:[%s3 + $0x350] sm:$0xff]
      %v5710 = vld [vmem:[%s3 + $0x358] sm:$0xff]
      %v5711 = vld [vmem:[%s3 + $0x360] sm:$0xff]
      %v5712 = vld [vmem:[%s3 + $0x368] sm:$0xff]
      %v5713 = vld [vmem:[%s3 + $0x370] sm:$0xff]
      %v5714 = vld [vmem:[%s3 + $0x378] sm:$0xff]
      %v5715 = vld [vmem:[%s3 + $0x380] sm:$0xff]
      %v5716 = vld [vmem:[%s3 + $0x388] sm:$0xff]
      %v5717 = vld [vmem:[%s3 + $0x390] sm:$0xff]
      %v5718 = vld [vmem:[%s3 + $0x398] sm:$0xff]
      %v5719 = vld [vmem:[%s3 + $0x3a0] sm:$0xff]
      %v5720 = vld [vmem:[%s3 + $0x3a8] sm:$0xff]
      %v5721 = vld [vmem:[%s3 + $0x3b0] sm:$0xff]
      %v5722 = vld [vmem:[%s3 + $0x3b8] sm:$0xff]
      %v5723 = vld [vmem:[%s3 + $0x3c0] sm:$0xff]
      %v5724 = vld [vmem:[%s3 + $0x3c8] sm:$0xff]
      %v5725 = vld [vmem:[%s3 + $0x3d0] sm:$0xff]
      %v5726 = vld [vmem:[%s3 + $0x3d8] sm:$0xff]
      %v5727 = vld [vmem:[%s3 + $0x3e0] sm:$0xff]
      %v5728 = vld [vmem:[%s3 + $0x3e8] sm:$0xff]
      %v5729 = vld [vmem:[%s3 + $0x3f0] sm:$0xff]
      %v5730 = vld [vmem:[%s3 + $0x3f8] sm:$0xff]
      %v5731 = vld [vmem:[%s3 + $0x400] sm:$0xff]
      %v5732 = vld [vmem:[%s3 + $0x408] sm:$0xff]
      %v5733 = vld [vmem:[%s3 + $0x410] sm:$0xff]
      %v5734 = vld [vmem:[%s3 + $0x418] sm:$0xff]
      %v5735 = vld [vmem:[%s3 + $0x420] sm:$0xff]
      %v5736 = vld [vmem:[%s3 + $0x428] sm:$0xff]
      %v5737 = vld [vmem:[%s3 + $0x430] sm:$0xff]
      %v5738 = vld [vmem:[%s3 + $0x438] sm:$0xff]
      %v5739 = vld [vmem:[%s3 + $0x440] sm:$0xff]
      %v5740 = vld [vmem:[%s3 + $0x448] sm:$0xff]
      %v5741 = vld [vmem:[%s3 + $0x450] sm:$0xff]
      %v5742 = vld [vmem:[%s3 + $0x458] sm:$0xff]
      %v5743 = vld [vmem:[%s3 + $0x460] sm:$0xff]
      %v5744 = vld [vmem:[%s3 + $0x468] sm:$0xff]
      %v5745 = vld [vmem:[%s3 + $0x470] sm:$0xff]
      %v5746 = vld [vmem:[%s3 + $0x478] sm:$0xff]
      %v5747 = vld [vmem:[%s3 + $0x480] sm:$0xff]
      %v5748 = vld [vmem:[%s3 + $0x488] sm:$0xff]
      %v5749 = vld [vmem:[%s3 + $0x490] sm:$0xff]
      %v5750 = vld [vmem:[%s3 + $0x498] sm:$0xff]
      %v5751 = vld [vmem:[%s3 + $0x4a0] sm:$0xff]
      %v5752 = vld [vmem:[%s3 + $0x4a8] sm:$0xff]
      %v5753 = vld [vmem:[%s3 + $0x4b0] sm:$0xff]
      %v5754 = vld [vmem:[%s3 + $0x4b8] sm:$0xff]
      %v5755 = vld [vmem:[%s3 + $0x4c0] sm:$0xff]
      %v5756 = vld [vmem:[%s3 + $0x4c8] sm:$0xff]
      %v5757 = vld [vmem:[%s3 + $0x4d0] sm:$0xff]
      %v5758 = vld [vmem:[%s3 + $0x4d8] sm:$0xff]
      %v5759 = vld [vmem:[%s3 + $0x4e0] sm:$0xff]
      %v5760 = vld [vmem:[%s3 + $0x4e8] sm:$0xff]
      %v5761 = vld [vmem:[%s3 + $0x4f0] sm:$0xff]
      %v5762 = vld [vmem:[%s3 + $0x4f8] sm:$0xff]
      %v5763 = vld [vmem:[%s3 + $0x500] sm:$0xff]
      %v5764 = vld [vmem:[%s3 + $0x508] sm:$0xff]
      %v5765 = vld [vmem:[%s3 + $0x510] sm:$0xff]
      %v5766 = vld [vmem:[%s3 + $0x518] sm:$0xff]
      %v5767 = vld [vmem:[%s3 + $0x520] sm:$0xff]
      %v5768 = vld [vmem:[%s3 + $0x528] sm:$0xff]
      %v5769 = vld [vmem:[%s3 + $0x530] sm:$0xff]
      %v5770 = vld [vmem:[%s3 + $0x538] sm:$0xff]
      %v5771 = vld [vmem:[%s3 + $0x540] sm:$0xff]
      %v5772 = vld [vmem:[%s3 + $0x548] sm:$0xff]
      %v5773 = vld [vmem:[%s3 + $0x550] sm:$0xff]
      %v5774 = vld [vmem:[%s3 + $0x558] sm:$0xff]
      %v5775 = vld [vmem:[%s3 + $0x560] sm:$0xff]
      %v5776 = vld [vmem:[%s3 + $0x568] sm:$0xff]
      %v5777 = vld [vmem:[%s3 + $0x570] sm:$0xff]
      %v5778 = vld [vmem:[%s3 + $0x578] sm:$0xff]
      %v5779 = vld [vmem:[%s3 + $0x580] sm:$0xff]
      %v5780 = vld [vmem:[%s3 + $0x588] sm:$0xff]
      %v5781 = vld [vmem:[%s3 + $0x590] sm:$0xff]
      %v5782 = vld [vmem:[%s3 + $0x598] sm:$0xff]
      %v5783 = vld [vmem:[%s3 + $0x5a0] sm:$0xff]
      %v5784 = vld [vmem:[%s3 + $0x5a8] sm:$0xff]
      %v5785 = vld [vmem:[%s3 + $0x5b0] sm:$0xff]
      %v5786 = vld [vmem:[%s3 + $0x5b8] sm:$0xff]
      %v5787 = vld [vmem:[%s3 + $0x5c0] sm:$0xff]
      %v5788 = vld [vmem:[%s3 + $0x5c8] sm:$0xff]
      %v5789 = vld [vmem:[%s3 + $0x5d0] sm:$0xff]
      %v5790 = vld [vmem:[%s3 + $0x5d8] sm:$0xff]
      %v5791 = vld [vmem:[%s3 + $0x5e0] sm:$0xff]
      %v5792 = vld [vmem:[%s3 + $0x5e8] sm:$0xff]
      %v5793 = vld [vmem:[%s3 + $0x5f0] sm:$0xff]
      %v5794 = vld [vmem:[%s3 + $0x5f8] sm:$0xff]
      %v5795 = vld [vmem:[%s3 + $0x600] sm:$0xff]
      %v5796 = vld [vmem:[%s3 + $0x608] sm:$0xff]
      %v5797 = vld [vmem:[%s3 + $0x610] sm:$0xff]
      %v5798 = vld [vmem:[%s3 + $0x618] sm:$0xff]
      %v5799 = vld [vmem:[%s3 + $0x620] sm:$0xff]
      %v5800 = vld [vmem:[%s3 + $0x628] sm:$0xff]
      %v5801 = vld [vmem:[%s3 + $0x630] sm:$0xff]
      %v5802 = vld [vmem:[%s3 + $0x638] sm:$0xff]
      %v5803 = vld [vmem:[%s3 + $0x640] sm:$0xff]
      %v5804 = vld [vmem:[%s3 + $0x648] sm:$0xff]
      %v5805 = vld [vmem:[%s3 + $0x650] sm:$0xff]
      %v5806 = vld [vmem:[%s3 + $0x658] sm:$0xff]
      %v5807 = vld [vmem:[%s3 + $0x660] sm:$0xff]
      %v5808 = vld [vmem:[%s3 + $0x668] sm:$0xff]
      %v5809 = vld [vmem:[%s3 + $0x670] sm:$0xff]
      %v5810 = vld [vmem:[%s3 + $0x678] sm:$0xff]
      %v5811 = vld [vmem:[%s3 + $0x680] sm:$0xff]
      %v5812 = vld [vmem:[%s3 + $0x688] sm:$0xff]
      %v5813 = vld [vmem:[%s3 + $0x690] sm:$0xff]
      %v5814 = vld [vmem:[%s3 + $0x698] sm:$0xff]
      %v5815 = vld [vmem:[%s3 + $0x6a0] sm:$0xff]
      %v5816 = vld [vmem:[%s3 + $0x6a8] sm:$0xff]
      %v5817 = vld [vmem:[%s3 + $0x6b0] sm:$0xff]
      %v5818 = vld [vmem:[%s3 + $0x6b8] sm:$0xff]
      %v5819 = vld [vmem:[%s3 + $0x6c0] sm:$0xff]
      %v5820 = vld [vmem:[%s3 + $0x6c8] sm:$0xff]
      %v5821 = vld [vmem:[%s3 + $0x6d0] sm:$0xff]
      %v5822 = vld [vmem:[%s3 + $0x6d8] sm:$0xff]
      %v5823 = vld [vmem:[%s3 + $0x6e0] sm:$0xff]
      %v5824 = vld [vmem:[%s3 + $0x6e8] sm:$0xff]
      %v5825 = vld [vmem:[%s3 + $0x6f0] sm:$0xff]
      %v5826 = vld [vmem:[%s3 + $0x6f8] sm:$0xff]
      %v5827 = vld [vmem:[%s3 + $0x700] sm:$0xff]
      %v5828 = vld [vmem:[%s3 + $0x708] sm:$0xff]
      %v5829 = vld [vmem:[%s3 + $0x710] sm:$0xff]
      %v5830 = vld [vmem:[%s3 + $0x718] sm:$0xff]
      %v5831 = vld [vmem:[%s3 + $0x720] sm:$0xff]
      %v5832 = vld [vmem:[%s3 + $0x728] sm:$0xff]
      %v5833 = vld [vmem:[%s3 + $0x730] sm:$0xff]
      %v5834 = vld [vmem:[%s3 + $0x738] sm:$0xff]
      %v5835 = vld [vmem:[%s3 + $0x740] sm:$0xff]
      %v5836 = vld [vmem:[%s3 + $0x748] sm:$0xff]
      %v5837 = vld [vmem:[%s3 + $0x750] sm:$0xff]
      %v5838 = vld [vmem:[%s3 + $0x758] sm:$0xff]
      %v5839 = vld [vmem:[%s3 + $0x760] sm:$0xff]
      %v5840 = vld [vmem:[%s3 + $0x768] sm:$0xff]
      %v5841 = vld [vmem:[%s3 + $0x770] sm:$0xff]
      %v5842 = vld [vmem:[%s3 + $0x778] sm:$0xff]
      %v5843 = vld [vmem:[%s3 + $0x780] sm:$0xff]
      %v5844 = vld [vmem:[%s3 + $0x788] sm:$0xff]
      %v5845 = vld [vmem:[%s3 + $0x790] sm:$0xff]
      %v5846 = vld [vmem:[%s3 + $0x798] sm:$0xff]
      %v5847 = vld [vmem:[%s3 + $0x7a0] sm:$0xff]
      %v5848 = vld [vmem:[%s3 + $0x7a8] sm:$0xff]
      %v5849 = vld [vmem:[%s3 + $0x7b0] sm:$0xff]
      %v5850 = vld [vmem:[%s3 + $0x7b8] sm:$0xff]
      %v5851 = vld [vmem:[%s3 + $0x7c0] sm:$0xff]
      %v5852 = vld [vmem:[%s3 + $0x7c8] sm:$0xff]
      %v5853 = vld [vmem:[%s3 + $0x7d0] sm:$0xff]
      %v5854 = vld [vmem:[%s3 + $0x7d8] sm:$0xff]
      %v5855 = vld [vmem:[%s3 + $0x7e0] sm:$0xff]
      %v5856 = vld [vmem:[%s3 + $0x7e8] sm:$0xff]
      %v5857 = vld [vmem:[%s3 + $0x7f0] sm:$0xff]
      %v5858 = vld [vmem:[%s3 + $0x7f8] sm:$0xff]
      %v5859 = vld [vmem:[%s4] sm:$0xff]
      %v5860 = vld [vmem:[%s4 + $0x8] sm:$0xff]
      %v5861 = vld [vmem:[%s4 + $0x10] sm:$0xff]
      %v5862 = vld [vmem:[%s4 + $0x18] sm:$0xff]
      %v5863 = vld [vmem:[%s4 + $0x20] sm:$0xff]
      %v5864 = vld [vmem:[%s4 + $0x28] sm:$0xff]
      %v5865 = vld [vmem:[%s4 + $0x30] sm:$0xff]
      %v5866 = vld [vmem:[%s4 + $0x38] sm:$0xff]
      %v5867 = vld [vmem:[%s4 + $0x40] sm:$0xff]
      %v5868 = vld [vmem:[%s4 + $0x48] sm:$0xff]
      %v5869 = vld [vmem:[%s4 + $0x50] sm:$0xff]
      %v5870 = vld [vmem:[%s4 + $0x58] sm:$0xff]
      %v5871 = vld [vmem:[%s4 + $0x60] sm:$0xff]
      %v5872 = vld [vmem:[%s4 + $0x68] sm:$0xff]
      %v5873 = vld [vmem:[%s4 + $0x70] sm:$0xff]
      %v5874 = vld [vmem:[%s4 + $0x78] sm:$0xff]
      %v5875 = vld [vmem:[%s4 + $0x80] sm:$0xff]
      %v5876 = vld [vmem:[%s4 + $0x88] sm:$0xff]
      %v5877 = vld [vmem:[%s4 + $0x90] sm:$0xff]
      %v5878 = vld [vmem:[%s4 + $0x98] sm:$0xff]
      %v5879 = vld [vmem:[%s4 + $0xa0] sm:$0xff]
      %v5880 = vld [vmem:[%s4 + $0xa8] sm:$0xff]
      %v5881 = vld [vmem:[%s4 + $0xb0] sm:$0xff]
      %v5882 = vld [vmem:[%s4 + $0xb8] sm:$0xff]
      %v5883 = vld [vmem:[%s4 + $0xc0] sm:$0xff]
      %v5884 = vld [vmem:[%s4 + $0xc8] sm:$0xff]
      %v5885 = vld [vmem:[%s4 + $0xd0] sm:$0xff]
      %v5886 = vld [vmem:[%s4 + $0xd8] sm:$0xff]
      %v5887 = vld [vmem:[%s4 + $0xe0] sm:$0xff]
      %v5888 = vld [vmem:[%s4 + $0xe8] sm:$0xff]
      %v5889 = vld [vmem:[%s4 + $0xf0] sm:$0xff]
      %v5890 = vld [vmem:[%s4 + $0xf8] sm:$0xff]
      %v5891 = vld [vmem:[%s4 + $0x100] sm:$0xff]
      %v5892 = vld [vmem:[%s4 + $0x108] sm:$0xff]
      %v5893 = vld [vmem:[%s4 + $0x110] sm:$0xff]
      %v5894 = vld [vmem:[%s4 + $0x118] sm:$0xff]
      %v5895 = vld [vmem:[%s4 + $0x120] sm:$0xff]
      %v5896 = vld [vmem:[%s4 + $0x128] sm:$0xff]
      %v5897 = vld [vmem:[%s4 + $0x130] sm:$0xff]
      %v5898 = vld [vmem:[%s4 + $0x138] sm:$0xff]
      %v5899 = vld [vmem:[%s4 + $0x140] sm:$0xff]
      %v5900 = vld [vmem:[%s4 + $0x148] sm:$0xff]
      %v5901 = vld [vmem:[%s4 + $0x150] sm:$0xff]
      %v5902 = vld [vmem:[%s4 + $0x158] sm:$0xff]
      %v5903 = vld [vmem:[%s4 + $0x160] sm:$0xff]
      %v5904 = vld [vmem:[%s4 + $0x168] sm:$0xff]
      %v5905 = vld [vmem:[%s4 + $0x170] sm:$0xff]
      %v5906 = vld [vmem:[%s4 + $0x178] sm:$0xff]
      %v5907 = vld [vmem:[%s4 + $0x180] sm:$0xff]
      %v5908 = vld [vmem:[%s4 + $0x188] sm:$0xff]
      %v5909 = vld [vmem:[%s4 + $0x190] sm:$0xff]
      %v5910 = vld [vmem:[%s4 + $0x198] sm:$0xff]
      %v5911 = vld [vmem:[%s4 + $0x1a0] sm:$0xff]
      %v5912 = vld [vmem:[%s4 + $0x1a8] sm:$0xff]
      %v5913 = vld [vmem:[%s4 + $0x1b0] sm:$0xff]
      %v5914 = vld [vmem:[%s4 + $0x1b8] sm:$0xff]
      %v5915 = vld [vmem:[%s4 + $0x1c0] sm:$0xff]
      %v5916 = vld [vmem:[%s4 + $0x1c8] sm:$0xff]
      %v5917 = vld [vmem:[%s4 + $0x1d0] sm:$0xff]
      %v5918 = vld [vmem:[%s4 + $0x1d8] sm:$0xff]
      %v5919 = vld [vmem:[%s4 + $0x1e0] sm:$0xff]
      %v5920 = vld [vmem:[%s4 + $0x1e8] sm:$0xff]
      %v5921 = vld [vmem:[%s4 + $0x1f0] sm:$0xff]
      %v5922 = vld [vmem:[%s4 + $0x1f8] sm:$0xff]
      %5924 = vset.pattern.permute.xlu0 0
      %5925 = vperm.xlu0 %5924, %v5859
      %v5926 = vpop.permute.xlu0 %5925
      %5929 = vset.pattern.permute.xlu0 0
      %5930 = vperm.xlu0 %5929, %v5860
      %v5931 = vpop.permute.xlu0 %5930
      %5934 = vset.pattern.permute.xlu0 0
      %5935 = vperm.xlu0 %5934, %v5861
      %v5936 = vpop.permute.xlu0 %5935
      %5939 = vset.pattern.permute.xlu0 0
      %5940 = vperm.xlu0 %5939, %v5862
      %v5941 = vpop.permute.xlu0 %5940
      %5944 = vset.pattern.permute.xlu0 0
      %5945 = vperm.xlu0 %5944, %v5863
      %v5946 = vpop.permute.xlu0 %5945
      %5949 = vset.pattern.permute.xlu0 0
      %5950 = vperm.xlu0 %5949, %v5864
      %v5951 = vpop.permute.xlu0 %5950
      %5954 = vset.pattern.permute.xlu0 0
      %5955 = vperm.xlu0 %5954, %v5865
      %v5956 = vpop.permute.xlu0 %5955
      %5959 = vset.pattern.permute.xlu0 0
      %5960 = vperm.xlu0 %5959, %v5866
      %v5961 = vpop.permute.xlu0 %5960
      %5964 = vset.pattern.permute.xlu0 0
      %5965 = vperm.xlu0 %5964, %v5867
      %v5966 = vpop.permute.xlu0 %5965
      %5969 = vset.pattern.permute.xlu0 0
      %5970 = vperm.xlu0 %5969, %v5868
      %v5971 = vpop.permute.xlu0 %5970
      %5974 = vset.pattern.permute.xlu0 0
      %5975 = vperm.xlu0 %5974, %v5869
      %v5976 = vpop.permute.xlu0 %5975
      %5979 = vset.pattern.permute.xlu0 0
      %5980 = vperm.xlu0 %5979, %v5870
      %v5981 = vpop.permute.xlu0 %5980
      %5984 = vset.pattern.permute.xlu0 0
      %5985 = vperm.xlu0 %5984, %v5871
      %v5986 = vpop.permute.xlu0 %5985
      %5989 = vset.pattern.permute.xlu0 0
      %5990 = vperm.xlu0 %5989, %v5872
      %v5991 = vpop.permute.xlu0 %5990
      %5994 = vset.pattern.permute.xlu0 0
      %5995 = vperm.xlu0 %5994, %v5873
      %v5996 = vpop.permute.xlu0 %5995
      %5999 = vset.pattern.permute.xlu0 0
      %6000 = vperm.xlu0 %5999, %v5874
      %v6001 = vpop.permute.xlu0 %6000
      %6004 = vset.pattern.permute.xlu0 0
      %6005 = vperm.xlu0 %6004, %v5875
      %v6006 = vpop.permute.xlu0 %6005
      %6009 = vset.pattern.permute.xlu0 0
      %6010 = vperm.xlu0 %6009, %v5876
      %v6011 = vpop.permute.xlu0 %6010
      %6014 = vset.pattern.permute.xlu0 0
      %6015 = vperm.xlu0 %6014, %v5877
      %v6016 = vpop.permute.xlu0 %6015
      %6019 = vset.pattern.permute.xlu0 0
      %6020 = vperm.xlu0 %6019, %v5878
      %v6021 = vpop.permute.xlu0 %6020
      %6024 = vset.pattern.permute.xlu0 0
      %6025 = vperm.xlu0 %6024, %v5879
      %v6026 = vpop.permute.xlu0 %6025
      %6029 = vset.pattern.permute.xlu0 0
      %6030 = vperm.xlu0 %6029, %v5880
      %v6031 = vpop.permute.xlu0 %6030
      %6034 = vset.pattern.permute.xlu0 0
      %6035 = vperm.xlu0 %6034, %v5881
      %v6036 = vpop.permute.xlu0 %6035
      %6039 = vset.pattern.permute.xlu0 0
      %6040 = vperm.xlu0 %6039, %v5882
      %v6041 = vpop.permute.xlu0 %6040
      %6044 = vset.pattern.permute.xlu0 0
      %6045 = vperm.xlu0 %6044, %v5883
      %v6046 = vpop.permute.xlu0 %6045
      %6049 = vset.pattern.permute.xlu0 0
      %6050 = vperm.xlu0 %6049, %v5884
      %v6051 = vpop.permute.xlu0 %6050
      %6054 = vset.pattern.permute.xlu0 0
      %6055 = vperm.xlu0 %6054, %v5885
      %v6056 = vpop.permute.xlu0 %6055
      %6059 = vset.pattern.permute.xlu0 0
      %6060 = vperm.xlu0 %6059, %v5886
      %v6061 = vpop.permute.xlu0 %6060
      %6064 = vset.pattern.permute.xlu0 0
      %6065 = vperm.xlu0 %6064, %v5887
      %v6066 = vpop.permute.xlu0 %6065
      %6069 = vset.pattern.permute.xlu0 0
      %6070 = vperm.xlu0 %6069, %v5888
      %v6071 = vpop.permute.xlu0 %6070
      %6074 = vset.pattern.permute.xlu0 0
      %6075 = vperm.xlu0 %6074, %v5889
      %v6076 = vpop.permute.xlu0 %6075
      %6079 = vset.pattern.permute.xlu0 0
      %6080 = vperm.xlu0 %6079, %v5890
      %v6081 = vpop.permute.xlu0 %6080
      %6084 = vset.pattern.permute.xlu0 0
      %6085 = vperm.xlu0 %6084, %v5891
      %v6086 = vpop.permute.xlu0 %6085
      %6089 = vset.pattern.permute.xlu0 0
      %6090 = vperm.xlu0 %6089, %v5892
      %v6091 = vpop.permute.xlu0 %6090
      %6094 = vset.pattern.permute.xlu0 0
      %6095 = vperm.xlu0 %6094, %v5893
      %v6096 = vpop.permute.xlu0 %6095
      %6099 = vset.pattern.permute.xlu0 0
      %6100 = vperm.xlu0 %6099, %v5894
      %v6101 = vpop.permute.xlu0 %6100
      %6104 = vset.pattern.permute.xlu0 0
      %6105 = vperm.xlu0 %6104, %v5895
      %v6106 = vpop.permute.xlu0 %6105
      %6109 = vset.pattern.permute.xlu0 0
      %6110 = vperm.xlu0 %6109, %v5896
      %v6111 = vpop.permute.xlu0 %6110
      %6114 = vset.pattern.permute.xlu0 0
      %6115 = vperm.xlu0 %6114, %v5897
      %v6116 = vpop.permute.xlu0 %6115
      %6119 = vset.pattern.permute.xlu0 0
      %6120 = vperm.xlu0 %6119, %v5898
      %v6121 = vpop.permute.xlu0 %6120
      %6124 = vset.pattern.permute.xlu0 0
      %6125 = vperm.xlu0 %6124, %v5899
      %v6126 = vpop.permute.xlu0 %6125
      %6129 = vset.pattern.permute.xlu0 0
      %6130 = vperm.xlu0 %6129, %v5900
      %v6131 = vpop.permute.xlu0 %6130
      %6134 = vset.pattern.permute.xlu0 0
      %6135 = vperm.xlu0 %6134, %v5901
      %v6136 = vpop.permute.xlu0 %6135
      %6139 = vset.pattern.permute.xlu0 0
      %6140 = vperm.xlu0 %6139, %v5902
      %v6141 = vpop.permute.xlu0 %6140
      %6144 = vset.pattern.permute.xlu0 0
      %6145 = vperm.xlu0 %6144, %v5903
      %v6146 = vpop.permute.xlu0 %6145
      %6149 = vset.pattern.permute.xlu0 0
      %6150 = vperm.xlu0 %6149, %v5904
      %v6151 = vpop.permute.xlu0 %6150
      %6154 = vset.pattern.permute.xlu0 0
      %6155 = vperm.xlu0 %6154, %v5905
      %v6156 = vpop.permute.xlu0 %6155
      %6159 = vset.pattern.permute.xlu0 0
      %6160 = vperm.xlu0 %6159, %v5906
      %v6161 = vpop.permute.xlu0 %6160
      %6164 = vset.pattern.permute.xlu0 0
      %6165 = vperm.xlu0 %6164, %v5907
      %v6166 = vpop.permute.xlu0 %6165
      %6169 = vset.pattern.permute.xlu0 0
      %6170 = vperm.xlu0 %6169, %v5908
      %v6171 = vpop.permute.xlu0 %6170
      %6174 = vset.pattern.permute.xlu0 0
      %6175 = vperm.xlu0 %6174, %v5909
      %v6176 = vpop.permute.xlu0 %6175
      %6179 = vset.pattern.permute.xlu0 0
      %6180 = vperm.xlu0 %6179, %v5910
      %v6181 = vpop.permute.xlu0 %6180
      %6184 = vset.pattern.permute.xlu0 0
      %6185 = vperm.xlu0 %6184, %v5911
      %v6186 = vpop.permute.xlu0 %6185
      %6189 = vset.pattern.permute.xlu0 0
      %6190 = vperm.xlu0 %6189, %v5912
      %v6191 = vpop.permute.xlu0 %6190
      %6194 = vset.pattern.permute.xlu0 0
      %6195 = vperm.xlu0 %6194, %v5913
      %v6196 = vpop.permute.xlu0 %6195
      %6199 = vset.pattern.permute.xlu0 0
      %6200 = vperm.xlu0 %6199, %v5914
      %v6201 = vpop.permute.xlu0 %6200
      %6204 = vset.pattern.permute.xlu0 0
      %6205 = vperm.xlu0 %6204, %v5915
      %v6206 = vpop.permute.xlu0 %6205
      %6209 = vset.pattern.permute.xlu0 0
      %6210 = vperm.xlu0 %6209, %v5916
      %v6211 = vpop.permute.xlu0 %6210
      %6214 = vset.pattern.permute.xlu0 0
      %6215 = vperm.xlu0 %6214, %v5917
      %v6216 = vpop.permute.xlu0 %6215
      %6219 = vset.pattern.permute.xlu0 0
      %6220 = vperm.xlu0 %6219, %v5918
      %v6221 = vpop.permute.xlu0 %6220
      %6224 = vset.pattern.permute.xlu0 0
      %6225 = vperm.xlu0 %6224, %v5919
      %v6226 = vpop.permute.xlu0 %6225
      %6229 = vset.pattern.permute.xlu0 0
      %6230 = vperm.xlu0 %6229, %v5920
      %v6231 = vpop.permute.xlu0 %6230
      %6234 = vset.pattern.permute.xlu0 0
      %6235 = vperm.xlu0 %6234, %v5921
      %v6236 = vpop.permute.xlu0 %6235
      %6239 = vset.pattern.permute.xlu0 0
      %6240 = vperm.xlu0 %6239, %v5922
      %v6241 = vpop.permute.xlu0 %6240
      %v6499 = vunpack.c.l.b16 %v5603
      %v6500 = vunpack.c.h.b16 %v5603
      %v6501 = vunpack.c.l.b16 %v5604
      %v6502 = vunpack.c.h.b16 %v5604
      %v6503 = vunpack.c.l.b16 %v5605
      %v6504 = vunpack.c.h.b16 %v5605
      %v6505 = vunpack.c.l.b16 %v5606
      %v6506 = vunpack.c.h.b16 %v5606
      %v6507 = vunpack.c.l.b16 %v5607
      %v6508 = vunpack.c.h.b16 %v5607
      %v6509 = vunpack.c.l.b16 %v5608
      %v6510 = vunpack.c.h.b16 %v5608
      %v6511 = vunpack.c.l.b16 %v5609
      %v6512 = vunpack.c.h.b16 %v5609
      %v6513 = vunpack.c.l.b16 %v5610
      %v6514 = vunpack.c.h.b16 %v5610
      %v6515 = vunpack.c.l.b16 %v5611
      %v6516 = vunpack.c.h.b16 %v5611
      %v6517 = vunpack.c.l.b16 %v5612
      %v6518 = vunpack.c.h.b16 %v5612
      %v6519 = vunpack.c.l.b16 %v5613
      %v6520 = vunpack.c.h.b16 %v5613
      %v6521 = vunpack.c.l.b16 %v5614
      %v6522 = vunpack.c.h.b16 %v5614
      %v6523 = vunpack.c.l.b16 %v5615
      %v6524 = vunpack.c.h.b16 %v5615
      %v6525 = vunpack.c.l.b16 %v5616
      %v6526 = vunpack.c.h.b16 %v5616
      %v6527 = vunpack.c.l.b16 %v5617
      %v6528 = vunpack.c.h.b16 %v5617
      %v6529 = vunpack.c.l.b16 %v5618
      %v6530 = vunpack.c.h.b16 %v5618
      %v6531 = vunpack.c.l.b16 %v5619
      %v6532 = vunpack.c.h.b16 %v5619
      %v6533 = vunpack.c.l.b16 %v5620
      %v6534 = vunpack.c.h.b16 %v5620
      %v6535 = vunpack.c.l.b16 %v5621
      %v6536 = vunpack.c.h.b16 %v5621
      %v6537 = vunpack.c.l.b16 %v5622
      %v6538 = vunpack.c.h.b16 %v5622
      %v6539 = vunpack.c.l.b16 %v5623
      %v6540 = vunpack.c.h.b16 %v5623
      %v6541 = vunpack.c.l.b16 %v5624
      %v6542 = vunpack.c.h.b16 %v5624
      %v6543 = vunpack.c.l.b16 %v5625
      %v6544 = vunpack.c.h.b16 %v5625
      %v6545 = vunpack.c.l.b16 %v5626
      %v6546 = vunpack.c.h.b16 %v5626
      %v6547 = vunpack.c.l.b16 %v5627
      %v6548 = vunpack.c.h.b16 %v5627
      %v6549 = vunpack.c.l.b16 %v5628
      %v6550 = vunpack.c.h.b16 %v5628
      %v6551 = vunpack.c.l.b16 %v5629
      %v6552 = vunpack.c.h.b16 %v5629
      %v6553 = vunpack.c.l.b16 %v5630
      %v6554 = vunpack.c.h.b16 %v5630
      %v6555 = vunpack.c.l.b16 %v5631
      %v6556 = vunpack.c.h.b16 %v5631
      %v6557 = vunpack.c.l.b16 %v5632
      %v6558 = vunpack.c.h.b16 %v5632
      %v6559 = vunpack.c.l.b16 %v5633
      %v6560 = vunpack.c.h.b16 %v5633
      %v6561 = vunpack.c.l.b16 %v5634
      %v6562 = vunpack.c.h.b16 %v5634
      %v6563 = vunpack.c.l.b16 %v5635
      %v6564 = vunpack.c.h.b16 %v5635
      %v6565 = vunpack.c.l.b16 %v5636
      %v6566 = vunpack.c.h.b16 %v5636
      %v6567 = vunpack.c.l.b16 %v5637
      %v6568 = vunpack.c.h.b16 %v5637
      %v6569 = vunpack.c.l.b16 %v5638
      %v6570 = vunpack.c.h.b16 %v5638
      %v6571 = vunpack.c.l.b16 %v5639
      %v6572 = vunpack.c.h.b16 %v5639
      %v6573 = vunpack.c.l.b16 %v5640
      %v6574 = vunpack.c.h.b16 %v5640
      %v6575 = vunpack.c.l.b16 %v5641
      %v6576 = vunpack.c.h.b16 %v5641
      %v6577 = vunpack.c.l.b16 %v5642
      %v6578 = vunpack.c.h.b16 %v5642
      %v6579 = vunpack.c.l.b16 %v5643
      %v6580 = vunpack.c.h.b16 %v5643
      %v6581 = vunpack.c.l.b16 %v5644
      %v6582 = vunpack.c.h.b16 %v5644
      %v6583 = vunpack.c.l.b16 %v5645
      %v6584 = vunpack.c.h.b16 %v5645
      %v6585 = vunpack.c.l.b16 %v5646
      %v6586 = vunpack.c.h.b16 %v5646
      %v6587 = vunpack.c.l.b16 %v5647
      %v6588 = vunpack.c.h.b16 %v5647
      %v6589 = vunpack.c.l.b16 %v5648
      %v6590 = vunpack.c.h.b16 %v5648
      %v6591 = vunpack.c.l.b16 %v5649
      %v6592 = vunpack.c.h.b16 %v5649
      %v6593 = vunpack.c.l.b16 %v5650
      %v6594 = vunpack.c.h.b16 %v5650
      %v6595 = vunpack.c.l.b16 %v5651
      %v6596 = vunpack.c.h.b16 %v5651
      %v6597 = vunpack.c.l.b16 %v5652
      %v6598 = vunpack.c.h.b16 %v5652
      %v6599 = vunpack.c.l.b16 %v5653
      %v6600 = vunpack.c.h.b16 %v5653
      %v6601 = vunpack.c.l.b16 %v5654
      %v6602 = vunpack.c.h.b16 %v5654
      %v6603 = vunpack.c.l.b16 %v5655
      %v6604 = vunpack.c.h.b16 %v5655
      %v6605 = vunpack.c.l.b16 %v5656
      %v6606 = vunpack.c.h.b16 %v5656
      %v6607 = vunpack.c.l.b16 %v5657
      %v6608 = vunpack.c.h.b16 %v5657
      %v6609 = vunpack.c.l.b16 %v5658
      %v6610 = vunpack.c.h.b16 %v5658
      %v6611 = vunpack.c.l.b16 %v5659
      %v6612 = vunpack.c.h.b16 %v5659
      %v6613 = vunpack.c.l.b16 %v5660
      %v6614 = vunpack.c.h.b16 %v5660
      %v6615 = vunpack.c.l.b16 %v5661
      %v6616 = vunpack.c.h.b16 %v5661
      %v6617 = vunpack.c.l.b16 %v5662
      %v6618 = vunpack.c.h.b16 %v5662
      %v6619 = vunpack.c.l.b16 %v5663
      %v6620 = vunpack.c.h.b16 %v5663
      %v6621 = vunpack.c.l.b16 %v5664
      %v6622 = vunpack.c.h.b16 %v5664
      %v6623 = vunpack.c.l.b16 %v5665
      %v6624 = vunpack.c.h.b16 %v5665
      %v6625 = vunpack.c.l.b16 %v5666
      %v6626 = vunpack.c.h.b16 %v5666
      %v6627 = vunpack.c.l.b16 %v5667
      %v6628 = vunpack.c.h.b16 %v5667
      %v6629 = vunpack.c.l.b16 %v5668
      %v6630 = vunpack.c.h.b16 %v5668
      %v6631 = vunpack.c.l.b16 %v5669
      %v6632 = vunpack.c.h.b16 %v5669
      %v6633 = vunpack.c.l.b16 %v5670
      %v6634 = vunpack.c.h.b16 %v5670
      %v6635 = vunpack.c.l.b16 %v5671
      %v6636 = vunpack.c.h.b16 %v5671
      %v6637 = vunpack.c.l.b16 %v5672
      %v6638 = vunpack.c.h.b16 %v5672
      %v6639 = vunpack.c.l.b16 %v5673
      %v6640 = vunpack.c.h.b16 %v5673
      %v6641 = vunpack.c.l.b16 %v5674
      %v6642 = vunpack.c.h.b16 %v5674
      %v6643 = vunpack.c.l.b16 %v5675
      %v6644 = vunpack.c.h.b16 %v5675
      %v6645 = vunpack.c.l.b16 %v5676
      %v6646 = vunpack.c.h.b16 %v5676
      %v6647 = vunpack.c.l.b16 %v5677
      %v6648 = vunpack.c.h.b16 %v5677
      %v6649 = vunpack.c.l.b16 %v5678
      %v6650 = vunpack.c.h.b16 %v5678
      %v6651 = vunpack.c.l.b16 %v5679
      %v6652 = vunpack.c.h.b16 %v5679
      %v6653 = vunpack.c.l.b16 %v5680
      %v6654 = vunpack.c.h.b16 %v5680
      %v6655 = vunpack.c.l.b16 %v5681
      %v6656 = vunpack.c.h.b16 %v5681
      %v6657 = vunpack.c.l.b16 %v5682
      %v6658 = vunpack.c.h.b16 %v5682
      %v6659 = vunpack.c.l.b16 %v5683
      %v6660 = vunpack.c.h.b16 %v5683
      %v6661 = vunpack.c.l.b16 %v5684
      %v6662 = vunpack.c.h.b16 %v5684
      %v6663 = vunpack.c.l.b16 %v5685
      %v6664 = vunpack.c.h.b16 %v5685
      %v6665 = vunpack.c.l.b16 %v5686
      %v6666 = vunpack.c.h.b16 %v5686
      %v6667 = vunpack.c.l.b16 %v5687
      %v6668 = vunpack.c.h.b16 %v5687
      %v6669 = vunpack.c.l.b16 %v5688
      %v6670 = vunpack.c.h.b16 %v5688
      %v6671 = vunpack.c.l.b16 %v5689
      %v6672 = vunpack.c.h.b16 %v5689
      %v6673 = vunpack.c.l.b16 %v5690
      %v6674 = vunpack.c.h.b16 %v5690
      %v6675 = vunpack.c.l.b16 %v5691
      %v6676 = vunpack.c.h.b16 %v5691
      %v6677 = vunpack.c.l.b16 %v5692
      %v6678 = vunpack.c.h.b16 %v5692
      %v6679 = vunpack.c.l.b16 %v5693
      %v6680 = vunpack.c.h.b16 %v5693
      %v6681 = vunpack.c.l.b16 %v5694
      %v6682 = vunpack.c.h.b16 %v5694
      %v6683 = vunpack.c.l.b16 %v5695
      %v6684 = vunpack.c.h.b16 %v5695
      %v6685 = vunpack.c.l.b16 %v5696
      %v6686 = vunpack.c.h.b16 %v5696
      %v6687 = vunpack.c.l.b16 %v5697
      %v6688 = vunpack.c.h.b16 %v5697
      %v6689 = vunpack.c.l.b16 %v5698
      %v6690 = vunpack.c.h.b16 %v5698
      %v6691 = vunpack.c.l.b16 %v5699
      %v6692 = vunpack.c.h.b16 %v5699
      %v6693 = vunpack.c.l.b16 %v5700
      %v6694 = vunpack.c.h.b16 %v5700
      %v6695 = vunpack.c.l.b16 %v5701
      %v6696 = vunpack.c.h.b16 %v5701
      %v6697 = vunpack.c.l.b16 %v5702
      %v6698 = vunpack.c.h.b16 %v5702
      %v6699 = vunpack.c.l.b16 %v5703
      %v6700 = vunpack.c.h.b16 %v5703
      %v6701 = vunpack.c.l.b16 %v5704
      %v6702 = vunpack.c.h.b16 %v5704
      %v6703 = vunpack.c.l.b16 %v5705
      %v6704 = vunpack.c.h.b16 %v5705
      %v6705 = vunpack.c.l.b16 %v5706
      %v6706 = vunpack.c.h.b16 %v5706
      %v6707 = vunpack.c.l.b16 %v5707
      %v6708 = vunpack.c.h.b16 %v5707
      %v6709 = vunpack.c.l.b16 %v5708
      %v6710 = vunpack.c.h.b16 %v5708
      %v6711 = vunpack.c.l.b16 %v5709
      %v6712 = vunpack.c.h.b16 %v5709
      %v6713 = vunpack.c.l.b16 %v5710
      %v6714 = vunpack.c.h.b16 %v5710
      %v6715 = vunpack.c.l.b16 %v5711
      %v6716 = vunpack.c.h.b16 %v5711
      %v6717 = vunpack.c.l.b16 %v5712
      %v6718 = vunpack.c.h.b16 %v5712
      %v6719 = vunpack.c.l.b16 %v5713
      %v6720 = vunpack.c.h.b16 %v5713
      %v6721 = vunpack.c.l.b16 %v5714
      %v6722 = vunpack.c.h.b16 %v5714
      %v6723 = vunpack.c.l.b16 %v5715
      %v6724 = vunpack.c.h.b16 %v5715
      %v6725 = vunpack.c.l.b16 %v5716
      %v6726 = vunpack.c.h.b16 %v5716
      %v6727 = vunpack.c.l.b16 %v5717
      %v6728 = vunpack.c.h.b16 %v5717
      %v6729 = vunpack.c.l.b16 %v5718
      %v6730 = vunpack.c.h.b16 %v5718
      %v6731 = vunpack.c.l.b16 %v5719
      %v6732 = vunpack.c.h.b16 %v5719
      %v6733 = vunpack.c.l.b16 %v5720
      %v6734 = vunpack.c.h.b16 %v5720
      %v6735 = vunpack.c.l.b16 %v5721
      %v6736 = vunpack.c.h.b16 %v5721
      %v6737 = vunpack.c.l.b16 %v5722
      %v6738 = vunpack.c.h.b16 %v5722
      %v6739 = vunpack.c.l.b16 %v5723
      %v6740 = vunpack.c.h.b16 %v5723
      %v6741 = vunpack.c.l.b16 %v5724
      %v6742 = vunpack.c.h.b16 %v5724
      %v6743 = vunpack.c.l.b16 %v5725
      %v6744 = vunpack.c.h.b16 %v5725
      %v6745 = vunpack.c.l.b16 %v5726
      %v6746 = vunpack.c.h.b16 %v5726
      %v6747 = vunpack.c.l.b16 %v5727
      %v6748 = vunpack.c.h.b16 %v5727
      %v6749 = vunpack.c.l.b16 %v5728
      %v6750 = vunpack.c.h.b16 %v5728
      %v6751 = vunpack.c.l.b16 %v5729
      %v6752 = vunpack.c.h.b16 %v5729
      %v6753 = vunpack.c.l.b16 %v5730
      %v6754 = vunpack.c.h.b16 %v5730
      %v6755 = vunpack.c.l.b16 %v5731
      %v6756 = vunpack.c.h.b16 %v5731
      %v6757 = vunpack.c.l.b16 %v5732
      %v6758 = vunpack.c.h.b16 %v5732
      %v6759 = vunpack.c.l.b16 %v5733
      %v6760 = vunpack.c.h.b16 %v5733
      %v6761 = vunpack.c.l.b16 %v5734
      %v6762 = vunpack.c.h.b16 %v5734
      %v6763 = vunpack.c.l.b16 %v5735
      %v6764 = vunpack.c.h.b16 %v5735
      %v6765 = vunpack.c.l.b16 %v5736
      %v6766 = vunpack.c.h.b16 %v5736
      %v6767 = vunpack.c.l.b16 %v5737
      %v6768 = vunpack.c.h.b16 %v5737
      %v6769 = vunpack.c.l.b16 %v5738
      %v6770 = vunpack.c.h.b16 %v5738
      %v6771 = vunpack.c.l.b16 %v5739
      %v6772 = vunpack.c.h.b16 %v5739
      %v6773 = vunpack.c.l.b16 %v5740
      %v6774 = vunpack.c.h.b16 %v5740
      %v6775 = vunpack.c.l.b16 %v5741
      %v6776 = vunpack.c.h.b16 %v5741
      %v6777 = vunpack.c.l.b16 %v5742
      %v6778 = vunpack.c.h.b16 %v5742
      %v6779 = vunpack.c.l.b16 %v5743
      %v6780 = vunpack.c.h.b16 %v5743
      %v6781 = vunpack.c.l.b16 %v5744
      %v6782 = vunpack.c.h.b16 %v5744
      %v6783 = vunpack.c.l.b16 %v5745
      %v6784 = vunpack.c.h.b16 %v5745
      %v6785 = vunpack.c.l.b16 %v5746
      %v6786 = vunpack.c.h.b16 %v5746
      %v6787 = vunpack.c.l.b16 %v5747
      %v6788 = vunpack.c.h.b16 %v5747
      %v6789 = vunpack.c.l.b16 %v5748
      %v6790 = vunpack.c.h.b16 %v5748
      %v6791 = vunpack.c.l.b16 %v5749
      %v6792 = vunpack.c.h.b16 %v5749
      %v6793 = vunpack.c.l.b16 %v5750
      %v6794 = vunpack.c.h.b16 %v5750
      %v6795 = vunpack.c.l.b16 %v5751
      %v6796 = vunpack.c.h.b16 %v5751
      %v6797 = vunpack.c.l.b16 %v5752
      %v6798 = vunpack.c.h.b16 %v5752
      %v6799 = vunpack.c.l.b16 %v5753
      %v6800 = vunpack.c.h.b16 %v5753
      %v6801 = vunpack.c.l.b16 %v5754
      %v6802 = vunpack.c.h.b16 %v5754
      %v6803 = vunpack.c.l.b16 %v5755
      %v6804 = vunpack.c.h.b16 %v5755
      %v6805 = vunpack.c.l.b16 %v5756
      %v6806 = vunpack.c.h.b16 %v5756
      %v6807 = vunpack.c.l.b16 %v5757
      %v6808 = vunpack.c.h.b16 %v5757
      %v6809 = vunpack.c.l.b16 %v5758
      %v6810 = vunpack.c.h.b16 %v5758
      %v6811 = vunpack.c.l.b16 %v5759
      %v6812 = vunpack.c.h.b16 %v5759
      %v6813 = vunpack.c.l.b16 %v5760
      %v6814 = vunpack.c.h.b16 %v5760
      %v6815 = vunpack.c.l.b16 %v5761
      %v6816 = vunpack.c.h.b16 %v5761
      %v6817 = vunpack.c.l.b16 %v5762
      %v6818 = vunpack.c.h.b16 %v5762
      %v6819 = vunpack.c.l.b16 %v5763
      %v6820 = vunpack.c.h.b16 %v5763
      %v6821 = vunpack.c.l.b16 %v5764
      %v6822 = vunpack.c.h.b16 %v5764
      %v6823 = vunpack.c.l.b16 %v5765
      %v6824 = vunpack.c.h.b16 %v5765
      %v6825 = vunpack.c.l.b16 %v5766
      %v6826 = vunpack.c.h.b16 %v5766
      %v6827 = vunpack.c.l.b16 %v5767
      %v6828 = vunpack.c.h.b16 %v5767
      %v6829 = vunpack.c.l.b16 %v5768
      %v6830 = vunpack.c.h.b16 %v5768
      %v6831 = vunpack.c.l.b16 %v5769
      %v6832 = vunpack.c.h.b16 %v5769
      %v6833 = vunpack.c.l.b16 %v5770
      %v6834 = vunpack.c.h.b16 %v5770
      %v6835 = vunpack.c.l.b16 %v5771
      %v6836 = vunpack.c.h.b16 %v5771
      %v6837 = vunpack.c.l.b16 %v5772
      %v6838 = vunpack.c.h.b16 %v5772
      %v6839 = vunpack.c.l.b16 %v5773
      %v6840 = vunpack.c.h.b16 %v5773
      %v6841 = vunpack.c.l.b16 %v5774
      %v6842 = vunpack.c.h.b16 %v5774
      %v6843 = vunpack.c.l.b16 %v5775
      %v6844 = vunpack.c.h.b16 %v5775
      %v6845 = vunpack.c.l.b16 %v5776
      %v6846 = vunpack.c.h.b16 %v5776
      %v6847 = vunpack.c.l.b16 %v5777
      %v6848 = vunpack.c.h.b16 %v5777
      %v6849 = vunpack.c.l.b16 %v5778
      %v6850 = vunpack.c.h.b16 %v5778
      %v6851 = vunpack.c.l.b16 %v5779
      %v6852 = vunpack.c.h.b16 %v5779
      %v6853 = vunpack.c.l.b16 %v5780
      %v6854 = vunpack.c.h.b16 %v5780
      %v6855 = vunpack.c.l.b16 %v5781
      %v6856 = vunpack.c.h.b16 %v5781
      %v6857 = vunpack.c.l.b16 %v5782
      %v6858 = vunpack.c.h.b16 %v5782
      %v6859 = vunpack.c.l.b16 %v5783
      %v6860 = vunpack.c.h.b16 %v5783
      %v6861 = vunpack.c.l.b16 %v5784
      %v6862 = vunpack.c.h.b16 %v5784
      %v6863 = vunpack.c.l.b16 %v5785
      %v6864 = vunpack.c.h.b16 %v5785
      %v6865 = vunpack.c.l.b16 %v5786
      %v6866 = vunpack.c.h.b16 %v5786
      %v6867 = vunpack.c.l.b16 %v5787
      %v6868 = vunpack.c.h.b16 %v5787
      %v6869 = vunpack.c.l.b16 %v5788
      %v6870 = vunpack.c.h.b16 %v5788
      %v6871 = vunpack.c.l.b16 %v5789
      %v6872 = vunpack.c.h.b16 %v5789
      %v6873 = vunpack.c.l.b16 %v5790
      %v6874 = vunpack.c.h.b16 %v5790
      %v6875 = vunpack.c.l.b16 %v5791
      %v6876 = vunpack.c.h.b16 %v5791
      %v6877 = vunpack.c.l.b16 %v5792
      %v6878 = vunpack.c.h.b16 %v5792
      %v6879 = vunpack.c.l.b16 %v5793
      %v6880 = vunpack.c.h.b16 %v5793
      %v6881 = vunpack.c.l.b16 %v5794
      %v6882 = vunpack.c.h.b16 %v5794
      %v6883 = vunpack.c.l.b16 %v5795
      %v6884 = vunpack.c.h.b16 %v5795
      %v6885 = vunpack.c.l.b16 %v5796
      %v6886 = vunpack.c.h.b16 %v5796
      %v6887 = vunpack.c.l.b16 %v5797
      %v6888 = vunpack.c.h.b16 %v5797
      %v6889 = vunpack.c.l.b16 %v5798
      %v6890 = vunpack.c.h.b16 %v5798
      %v6891 = vunpack.c.l.b16 %v5799
      %v6892 = vunpack.c.h.b16 %v5799
      %v6893 = vunpack.c.l.b16 %v5800
      %v6894 = vunpack.c.h.b16 %v5800
      %v6895 = vunpack.c.l.b16 %v5801
      %v6896 = vunpack.c.h.b16 %v5801
      %v6897 = vunpack.c.l.b16 %v5802
      %v6898 = vunpack.c.h.b16 %v5802
      %v6899 = vunpack.c.l.b16 %v5803
      %v6900 = vunpack.c.h.b16 %v5803
      %v6901 = vunpack.c.l.b16 %v5804
      %v6902 = vunpack.c.h.b16 %v5804
      %v6903 = vunpack.c.l.b16 %v5805
      %v6904 = vunpack.c.h.b16 %v5805
      %v6905 = vunpack.c.l.b16 %v5806
      %v6906 = vunpack.c.h.b16 %v5806
      %v6907 = vunpack.c.l.b16 %v5807
      %v6908 = vunpack.c.h.b16 %v5807
      %v6909 = vunpack.c.l.b16 %v5808
      %v6910 = vunpack.c.h.b16 %v5808
      %v6911 = vunpack.c.l.b16 %v5809
      %v6912 = vunpack.c.h.b16 %v5809
      %v6913 = vunpack.c.l.b16 %v5810
      %v6914 = vunpack.c.h.b16 %v5810
      %v6915 = vunpack.c.l.b16 %v5811
      %v6916 = vunpack.c.h.b16 %v5811
      %v6917 = vunpack.c.l.b16 %v5812
      %v6918 = vunpack.c.h.b16 %v5812
      %v6919 = vunpack.c.l.b16 %v5813
      %v6920 = vunpack.c.h.b16 %v5813
      %v6921 = vunpack.c.l.b16 %v5814
      %v6922 = vunpack.c.h.b16 %v5814
      %v6923 = vunpack.c.l.b16 %v5815
      %v6924 = vunpack.c.h.b16 %v5815
      %v6925 = vunpack.c.l.b16 %v5816
      %v6926 = vunpack.c.h.b16 %v5816
      %v6927 = vunpack.c.l.b16 %v5817
      %v6928 = vunpack.c.h.b16 %v5817
      %v6929 = vunpack.c.l.b16 %v5818
      %v6930 = vunpack.c.h.b16 %v5818
      %v6931 = vunpack.c.l.b16 %v5819
      %v6932 = vunpack.c.h.b16 %v5819
      %v6933 = vunpack.c.l.b16 %v5820
      %v6934 = vunpack.c.h.b16 %v5820
      %v6935 = vunpack.c.l.b16 %v5821
      %v6936 = vunpack.c.h.b16 %v5821
      %v6937 = vunpack.c.l.b16 %v5822
      %v6938 = vunpack.c.h.b16 %v5822
      %v6939 = vunpack.c.l.b16 %v5823
      %v6940 = vunpack.c.h.b16 %v5823
      %v6941 = vunpack.c.l.b16 %v5824
      %v6942 = vunpack.c.h.b16 %v5824
      %v6943 = vunpack.c.l.b16 %v5825
      %v6944 = vunpack.c.h.b16 %v5825
      %v6945 = vunpack.c.l.b16 %v5826
      %v6946 = vunpack.c.h.b16 %v5826
      %v6947 = vunpack.c.l.b16 %v5827
      %v6948 = vunpack.c.h.b16 %v5827
      %v6949 = vunpack.c.l.b16 %v5828
      %v6950 = vunpack.c.h.b16 %v5828
      %v6951 = vunpack.c.l.b16 %v5829
      %v6952 = vunpack.c.h.b16 %v5829
      %v6953 = vunpack.c.l.b16 %v5830
      %v6954 = vunpack.c.h.b16 %v5830
      %v6955 = vunpack.c.l.b16 %v5831
      %v6956 = vunpack.c.h.b16 %v5831
      %v6957 = vunpack.c.l.b16 %v5832
      %v6958 = vunpack.c.h.b16 %v5832
      %v6959 = vunpack.c.l.b16 %v5833
      %v6960 = vunpack.c.h.b16 %v5833
      %v6961 = vunpack.c.l.b16 %v5834
      %v6962 = vunpack.c.h.b16 %v5834
      %v6963 = vunpack.c.l.b16 %v5835
      %v6964 = vunpack.c.h.b16 %v5835
      %v6965 = vunpack.c.l.b16 %v5836
      %v6966 = vunpack.c.h.b16 %v5836
      %v6967 = vunpack.c.l.b16 %v5837
      %v6968 = vunpack.c.h.b16 %v5837
      %v6969 = vunpack.c.l.b16 %v5838
      %v6970 = vunpack.c.h.b16 %v5838
      %v6971 = vunpack.c.l.b16 %v5839
      %v6972 = vunpack.c.h.b16 %v5839
      %v6973 = vunpack.c.l.b16 %v5840
      %v6974 = vunpack.c.h.b16 %v5840
      %v6975 = vunpack.c.l.b16 %v5841
      %v6976 = vunpack.c.h.b16 %v5841
      %v6977 = vunpack.c.l.b16 %v5842
      %v6978 = vunpack.c.h.b16 %v5842
      %v6979 = vunpack.c.l.b16 %v5843
      %v6980 = vunpack.c.h.b16 %v5843
      %v6981 = vunpack.c.l.b16 %v5844
      %v6982 = vunpack.c.h.b16 %v5844
      %v6983 = vunpack.c.l.b16 %v5845
      %v6984 = vunpack.c.h.b16 %v5845
      %v6985 = vunpack.c.l.b16 %v5846
      %v6986 = vunpack.c.h.b16 %v5846
      %v6987 = vunpack.c.l.b16 %v5847
      %v6988 = vunpack.c.h.b16 %v5847
      %v6989 = vunpack.c.l.b16 %v5848
      %v6990 = vunpack.c.h.b16 %v5848
      %v6991 = vunpack.c.l.b16 %v5849
      %v6992 = vunpack.c.h.b16 %v5849
      %v6993 = vunpack.c.l.b16 %v5850
      %v6994 = vunpack.c.h.b16 %v5850
      %v6995 = vunpack.c.l.b16 %v5851
      %v6996 = vunpack.c.h.b16 %v5851
      %v6997 = vunpack.c.l.b16 %v5852
      %v6998 = vunpack.c.h.b16 %v5852
      %v6999 = vunpack.c.l.b16 %v5853
      %v7000 = vunpack.c.h.b16 %v5853
      %v7001 = vunpack.c.l.b16 %v5854
      %v7002 = vunpack.c.h.b16 %v5854
      %v7003 = vunpack.c.l.b16 %v5855
      %v7004 = vunpack.c.h.b16 %v5855
      %v7005 = vunpack.c.l.b16 %v5856
      %v7006 = vunpack.c.h.b16 %v5856
      %v7007 = vunpack.c.l.b16 %v5857
      %v7008 = vunpack.c.h.b16 %v5857
      %v7009 = vunpack.c.l.b16 %v5858
      %v7010 = vunpack.c.h.b16 %v5858
      %v7011 = vpack.c.b16 %v6507, %v6499
      %v7012 = vpack.c.b16 %v6508, %v6500
      %v7013 = vpack.c.b16 %v6509, %v6501
      %v7014 = vpack.c.b16 %v6510, %v6502
      %v7015 = vpack.c.b16 %v6511, %v6503
      %v7016 = vpack.c.b16 %v6512, %v6504
      %v7017 = vpack.c.b16 %v6513, %v6505
      %v7018 = vpack.c.b16 %v6514, %v6506
      %v7019 = vpack.c.b16 %v6523, %v6515
      %v7020 = vpack.c.b16 %v6524, %v6516
      %v7021 = vpack.c.b16 %v6525, %v6517
      %v7022 = vpack.c.b16 %v6526, %v6518
      %v7023 = vpack.c.b16 %v6527, %v6519
      %v7024 = vpack.c.b16 %v6528, %v6520
      %v7025 = vpack.c.b16 %v6529, %v6521
      %v7026 = vpack.c.b16 %v6530, %v6522
      %v7027 = vpack.c.b16 %v6539, %v6531
      %v7028 = vpack.c.b16 %v6540, %v6532
      %v7029 = vpack.c.b16 %v6541, %v6533
      %v7030 = vpack.c.b16 %v6542, %v6534
      %v7031 = vpack.c.b16 %v6543, %v6535
      %v7032 = vpack.c.b16 %v6544, %v6536
      %v7033 = vpack.c.b16 %v6545, %v6537
      %v7034 = vpack.c.b16 %v6546, %v6538
      %v7035 = vpack.c.b16 %v6555, %v6547
      %v7036 = vpack.c.b16 %v6556, %v6548
      %v7037 = vpack.c.b16 %v6557, %v6549
      %v7038 = vpack.c.b16 %v6558, %v6550
      %v7039 = vpack.c.b16 %v6559, %v6551
      %v7040 = vpack.c.b16 %v6560, %v6552
      %v7041 = vpack.c.b16 %v6561, %v6553
      %v7042 = vpack.c.b16 %v6562, %v6554
      %v7043 = vpack.c.b16 %v6571, %v6563
      %v7044 = vpack.c.b16 %v6572, %v6564
      %v7045 = vpack.c.b16 %v6573, %v6565
      %v7046 = vpack.c.b16 %v6574, %v6566
      %v7047 = vpack.c.b16 %v6575, %v6567
      %v7048 = vpack.c.b16 %v6576, %v6568
      %v7049 = vpack.c.b16 %v6577, %v6569
      %v7050 = vpack.c.b16 %v6578, %v6570
      %v7051 = vpack.c.b16 %v6587, %v6579
      %v7052 = vpack.c.b16 %v6588, %v6580
      %v7053 = vpack.c.b16 %v6589, %v6581
      %v7054 = vpack.c.b16 %v6590, %v6582
      %v7055 = vpack.c.b16 %v6591, %v6583
      %v7056 = vpack.c.b16 %v6592, %v6584
      %v7057 = vpack.c.b16 %v6593, %v6585
      %v7058 = vpack.c.b16 %v6594, %v6586
      %v7059 = vpack.c.b16 %v6603, %v6595
      %v7060 = vpack.c.b16 %v6604, %v6596
      %v7061 = vpack.c.b16 %v6605, %v6597
      %v7062 = vpack.c.b16 %v6606, %v6598
      %v7063 = vpack.c.b16 %v6607, %v6599
      %v7064 = vpack.c.b16 %v6608, %v6600
      %v7065 = vpack.c.b16 %v6609, %v6601
      %v7066 = vpack.c.b16 %v6610, %v6602
      %v7067 = vpack.c.b16 %v6619, %v6611
      %v7068 = vpack.c.b16 %v6620, %v6612
      %v7069 = vpack.c.b16 %v6621, %v6613
      %v7070 = vpack.c.b16 %v6622, %v6614
      %v7071 = vpack.c.b16 %v6623, %v6615
      %v7072 = vpack.c.b16 %v6624, %v6616
      %v7073 = vpack.c.b16 %v6625, %v6617
      %v7074 = vpack.c.b16 %v6626, %v6618
      %v7075 = vpack.c.b16 %v6635, %v6627
      %v7076 = vpack.c.b16 %v6636, %v6628
      %v7077 = vpack.c.b16 %v6637, %v6629
      %v7078 = vpack.c.b16 %v6638, %v6630
      %v7079 = vpack.c.b16 %v6639, %v6631
      %v7080 = vpack.c.b16 %v6640, %v6632
      %v7081 = vpack.c.b16 %v6641, %v6633
      %v7082 = vpack.c.b16 %v6642, %v6634
      %v7083 = vpack.c.b16 %v6651, %v6643
      %v7084 = vpack.c.b16 %v6652, %v6644
      %v7085 = vpack.c.b16 %v6653, %v6645
      %v7086 = vpack.c.b16 %v6654, %v6646
      %v7087 = vpack.c.b16 %v6655, %v6647
      %v7088 = vpack.c.b16 %v6656, %v6648
      %v7089 = vpack.c.b16 %v6657, %v6649
      %v7090 = vpack.c.b16 %v6658, %v6650
      %v7091 = vpack.c.b16 %v6667, %v6659
      %v7092 = vpack.c.b16 %v6668, %v6660
      %v7093 = vpack.c.b16 %v6669, %v6661
      %v7094 = vpack.c.b16 %v6670, %v6662
      %v7095 = vpack.c.b16 %v6671, %v6663
      %v7096 = vpack.c.b16 %v6672, %v6664
      %v7097 = vpack.c.b16 %v6673, %v6665
      %v7098 = vpack.c.b16 %v6674, %v6666
      %v7099 = vpack.c.b16 %v6683, %v6675
      %v7100 = vpack.c.b16 %v6684, %v6676
      %v7101 = vpack.c.b16 %v6685, %v6677
      %v7102 = vpack.c.b16 %v6686, %v6678
      %v7103 = vpack.c.b16 %v6687, %v6679
      %v7104 = vpack.c.b16 %v6688, %v6680
      %v7105 = vpack.c.b16 %v6689, %v6681
      %v7106 = vpack.c.b16 %v6690, %v6682
      %v7107 = vpack.c.b16 %v6699, %v6691
      %v7108 = vpack.c.b16 %v6700, %v6692
      %v7109 = vpack.c.b16 %v6701, %v6693
      %v7110 = vpack.c.b16 %v6702, %v6694
      %v7111 = vpack.c.b16 %v6703, %v6695
      %v7112 = vpack.c.b16 %v6704, %v6696
      %v7113 = vpack.c.b16 %v6705, %v6697
      %v7114 = vpack.c.b16 %v6706, %v6698
      %v7115 = vpack.c.b16 %v6715, %v6707
      %v7116 = vpack.c.b16 %v6716, %v6708
      %v7117 = vpack.c.b16 %v6717, %v6709
      %v7118 = vpack.c.b16 %v6718, %v6710
      %v7119 = vpack.c.b16 %v6719, %v6711
      %v7120 = vpack.c.b16 %v6720, %v6712
      %v7121 = vpack.c.b16 %v6721, %v6713
      %v7122 = vpack.c.b16 %v6722, %v6714
      %v7123 = vpack.c.b16 %v6731, %v6723
      %v7124 = vpack.c.b16 %v6732, %v6724
      %v7125 = vpack.c.b16 %v6733, %v6725
      %v7126 = vpack.c.b16 %v6734, %v6726
      %v7127 = vpack.c.b16 %v6735, %v6727
      %v7128 = vpack.c.b16 %v6736, %v6728
      %v7129 = vpack.c.b16 %v6737, %v6729
      %v7130 = vpack.c.b16 %v6738, %v6730
      %v7131 = vpack.c.b16 %v6747, %v6739
      %v7132 = vpack.c.b16 %v6748, %v6740
      %v7133 = vpack.c.b16 %v6749, %v6741
      %v7134 = vpack.c.b16 %v6750, %v6742
      %v7135 = vpack.c.b16 %v6751, %v6743
      %v7136 = vpack.c.b16 %v6752, %v6744
      %v7137 = vpack.c.b16 %v6753, %v6745
      %v7138 = vpack.c.b16 %v6754, %v6746
      %v7139 = vpack.c.b16 %v6763, %v6755
      %v7140 = vpack.c.b16 %v6764, %v6756
      %v7141 = vpack.c.b16 %v6765, %v6757
      %v7142 = vpack.c.b16 %v6766, %v6758
      %v7143 = vpack.c.b16 %v6767, %v6759
      %v7144 = vpack.c.b16 %v6768, %v6760
      %v7145 = vpack.c.b16 %v6769, %v6761
      %v7146 = vpack.c.b16 %v6770, %v6762
      %v7147 = vpack.c.b16 %v6779, %v6771
      %v7148 = vpack.c.b16 %v6780, %v6772
      %v7149 = vpack.c.b16 %v6781, %v6773
      %v7150 = vpack.c.b16 %v6782, %v6774
      %v7151 = vpack.c.b16 %v6783, %v6775
      %v7152 = vpack.c.b16 %v6784, %v6776
      %v7153 = vpack.c.b16 %v6785, %v6777
      %v7154 = vpack.c.b16 %v6786, %v6778
      %v7155 = vpack.c.b16 %v6795, %v6787
      %v7156 = vpack.c.b16 %v6796, %v6788
      %v7157 = vpack.c.b16 %v6797, %v6789
      %v7158 = vpack.c.b16 %v6798, %v6790
      %v7159 = vpack.c.b16 %v6799, %v6791
      %v7160 = vpack.c.b16 %v6800, %v6792
      %v7161 = vpack.c.b16 %v6801, %v6793
      %v7162 = vpack.c.b16 %v6802, %v6794
      %v7163 = vpack.c.b16 %v6811, %v6803
      %v7164 = vpack.c.b16 %v6812, %v6804
      %v7165 = vpack.c.b16 %v6813, %v6805
      %v7166 = vpack.c.b16 %v6814, %v6806
      %v7167 = vpack.c.b16 %v6815, %v6807
      %v7168 = vpack.c.b16 %v6816, %v6808
      %v7169 = vpack.c.b16 %v6817, %v6809
      %v7170 = vpack.c.b16 %v6818, %v6810
      %v7171 = vpack.c.b16 %v6827, %v6819
      %v7172 = vpack.c.b16 %v6828, %v6820
      %v7173 = vpack.c.b16 %v6829, %v6821
      %v7174 = vpack.c.b16 %v6830, %v6822
      %v7175 = vpack.c.b16 %v6831, %v6823
      %v7176 = vpack.c.b16 %v6832, %v6824
      %v7177 = vpack.c.b16 %v6833, %v6825
      %v7178 = vpack.c.b16 %v6834, %v6826
      %v7179 = vpack.c.b16 %v6843, %v6835
      %v7180 = vpack.c.b16 %v6844, %v6836
      %v7181 = vpack.c.b16 %v6845, %v6837
      %v7182 = vpack.c.b16 %v6846, %v6838
      %v7183 = vpack.c.b16 %v6847, %v6839
      %v7184 = vpack.c.b16 %v6848, %v6840
      %v7185 = vpack.c.b16 %v6849, %v6841
      %v7186 = vpack.c.b16 %v6850, %v6842
      %v7187 = vpack.c.b16 %v6859, %v6851
      %v7188 = vpack.c.b16 %v6860, %v6852
      %v7189 = vpack.c.b16 %v6861, %v6853
      %v7190 = vpack.c.b16 %v6862, %v6854
      %v7191 = vpack.c.b16 %v6863, %v6855
      %v7192 = vpack.c.b16 %v6864, %v6856
      %v7193 = vpack.c.b16 %v6865, %v6857
      %v7194 = vpack.c.b16 %v6866, %v6858
      %v7195 = vpack.c.b16 %v6875, %v6867
      %v7196 = vpack.c.b16 %v6876, %v6868
      %v7197 = vpack.c.b16 %v6877, %v6869
      %v7198 = vpack.c.b16 %v6878, %v6870
      %v7199 = vpack.c.b16 %v6879, %v6871
      %v7200 = vpack.c.b16 %v6880, %v6872
      %v7201 = vpack.c.b16 %v6881, %v6873
      %v7202 = vpack.c.b16 %v6882, %v6874
      %v7203 = vpack.c.b16 %v6891, %v6883
      %v7204 = vpack.c.b16 %v6892, %v6884
      %v7205 = vpack.c.b16 %v6893, %v6885
      %v7206 = vpack.c.b16 %v6894, %v6886
      %v7207 = vpack.c.b16 %v6895, %v6887
      %v7208 = vpack.c.b16 %v6896, %v6888
      %v7209 = vpack.c.b16 %v6897, %v6889
      %v7210 = vpack.c.b16 %v6898, %v6890
      %v7211 = vpack.c.b16 %v6907, %v6899
      %v7212 = vpack.c.b16 %v6908, %v6900
      %v7213 = vpack.c.b16 %v6909, %v6901
      %v7214 = vpack.c.b16 %v6910, %v6902
      %v7215 = vpack.c.b16 %v6911, %v6903
      %v7216 = vpack.c.b16 %v6912, %v6904
      %v7217 = vpack.c.b16 %v6913, %v6905
      %v7218 = vpack.c.b16 %v6914, %v6906
      %v7219 = vpack.c.b16 %v6923, %v6915
      %v7220 = vpack.c.b16 %v6924, %v6916
      %v7221 = vpack.c.b16 %v6925, %v6917
      %v7222 = vpack.c.b16 %v6926, %v6918
      %v7223 = vpack.c.b16 %v6927, %v6919
      %v7224 = vpack.c.b16 %v6928, %v6920
      %v7225 = vpack.c.b16 %v6929, %v6921
      %v7226 = vpack.c.b16 %v6930, %v6922
      %v7227 = vpack.c.b16 %v6939, %v6931
      %v7228 = vpack.c.b16 %v6940, %v6932
      %v7229 = vpack.c.b16 %v6941, %v6933
      %v7230 = vpack.c.b16 %v6942, %v6934
      %v7231 = vpack.c.b16 %v6943, %v6935
      %v7232 = vpack.c.b16 %v6944, %v6936
      %v7233 = vpack.c.b16 %v6945, %v6937
      %v7234 = vpack.c.b16 %v6946, %v6938
      %v7235 = vpack.c.b16 %v6955, %v6947
      %v7236 = vpack.c.b16 %v6956, %v6948
      %v7237 = vpack.c.b16 %v6957, %v6949
      %v7238 = vpack.c.b16 %v6958, %v6950
      %v7239 = vpack.c.b16 %v6959, %v6951
      %v7240 = vpack.c.b16 %v6960, %v6952
      %v7241 = vpack.c.b16 %v6961, %v6953
      %v7242 = vpack.c.b16 %v6962, %v6954
      %v7243 = vpack.c.b16 %v6971, %v6963
      %v7244 = vpack.c.b16 %v6972, %v6964
      %v7245 = vpack.c.b16 %v6973, %v6965
      %v7246 = vpack.c.b16 %v6974, %v6966
      %v7247 = vpack.c.b16 %v6975, %v6967
      %v7248 = vpack.c.b16 %v6976, %v6968
      %v7249 = vpack.c.b16 %v6977, %v6969
      %v7250 = vpack.c.b16 %v6978, %v6970
      %v7251 = vpack.c.b16 %v6987, %v6979
      %v7252 = vpack.c.b16 %v6988, %v6980
      %v7253 = vpack.c.b16 %v6989, %v6981
      %v7254 = vpack.c.b16 %v6990, %v6982
      %v7255 = vpack.c.b16 %v6991, %v6983
      %v7256 = vpack.c.b16 %v6992, %v6984
      %v7257 = vpack.c.b16 %v6993, %v6985
      %v7258 = vpack.c.b16 %v6994, %v6986
      %v7259 = vpack.c.b16 %v7003, %v6995
      %v7260 = vpack.c.b16 %v7004, %v6996
      %v7261 = vpack.c.b16 %v7005, %v6997
      %v7262 = vpack.c.b16 %v7006, %v6998
      %v7263 = vpack.c.b16 %v7007, %v6999
      %v7264 = vpack.c.b16 %v7008, %v7000
      %v7265 = vpack.c.b16 %v7009, %v7001
      %v7266 = vpack.c.b16 %v7010, %v7002
      %7523 = vmatprep.subr.bf16.mxu0 0
      %7524 = vmatpush1.bf16.msra.mxu0 %v5539
      %7525 = vmatprep.subr.bf16.mxu0 0
      %7526 = vmatpush1.bf16.msra.mxu0 %v5540
      %7527 = vmatprep.subr.bf16.mxu0 0
      %7528 = vmatpush1.bf16.msra.mxu0 %v5541
      %7529 = vmatprep.subr.bf16.mxu0 0
      %7530 = vmatpush1.bf16.msra.mxu0 %v5542
      %7531 = vmatprep.subr.bf16.mxu0 0
      %7532 = vmatpush1.bf16.msra.mxu0 %v5543
      %7533 = vmatprep.subr.bf16.mxu0 0
      %7534 = vmatpush1.bf16.msra.mxu0 %v5544
      %7535 = vmatprep.subr.bf16.mxu0 0
      %7536 = vmatpush1.bf16.msra.mxu0 %v5545
      %7537 = vmatprep.subr.bf16.mxu0 0
      %7538 = vmatpush1.bf16.msra.mxu0 %v5546
      %7539 = vmatprep.subr.bf16.mxu0 0
      %7540 = vmatpush1.bf16.msra.mxu0 %v5547
      %7541 = vmatprep.subr.bf16.mxu0 0
      %7542 = vmatpush1.bf16.msra.mxu0 %v5548
      %7543 = vmatprep.subr.bf16.mxu0 0
      %7544 = vmatpush1.bf16.msra.mxu0 %v5549
      %7545 = vmatprep.subr.bf16.mxu0 0
      %7546 = vmatpush1.bf16.msra.mxu0 %v5550
      %7547 = vmatprep.subr.bf16.mxu0 0
      %7548 = vmatpush1.bf16.msra.mxu0 %v5551
      %7549 = vmatprep.subr.bf16.mxu0 0
      %7550 = vmatpush1.bf16.msra.mxu0 %v5552
      %7551 = vmatprep.subr.bf16.mxu0 0
      %7552 = vmatpush1.bf16.msra.mxu0 %v5553
      %7553 = vmatprep.subr.bf16.mxu0 0
      %7554 = vmatpush1.bf16.msra.mxu0 %v5554
      %7555 = vmatprep.mubr.bf16.mxu0 %v7012
      %7556 = vmatmul.mubr.bf16.gmra.mrb[0].mxu0 %v7011
      %v7557 = vpop.f32.mrb[0].mxu0
      %v7558 = vadd.f32 %v5926, %v7557
      %v7559 = vpop.f32.mrb[0].mxu0
      %v7560 = vpop.f32.mrb[0].mxu0
      %v7561 = vadd.f32 %v5931, %v7560
      %v7562 = vpop.f32.mrb[0].mxu0
      %7563 = vmatprep.mubr.bf16.mxu0 %v7020
      %7564 = vmatmul.mubr.bf16.gmra.mrb[0].mxu0 %v7019
      %v7565 = vpop.f32.mrb[0].mxu0
      %v7566 = vadd.f32 %v5936, %v7565
      %v7567 = vpop.f32.mrb[0].mxu0
      %v7568 = vpop.f32.mrb[0].mxu0
      %v7569 = vadd.f32 %v5941, %v7568
      %v7570 = vpop.f32.mrb[0].mxu0
      %7571 = vmatprep.mubr.bf16.mxu0 %v7028
      %7572 = vmatmul.mubr.bf16.gmra.mrb[0].mxu0 %v7027
      %v7573 = vpop.f32.mrb[0].mxu0
      %v7574 = vadd.f32 %v5946, %v7573
      %v7575 = vpop.f32.mrb[0].mxu0
      %v7576 = vpop.f32.mrb[0].mxu0
      %v7577 = vadd.f32 %v5951, %v7576
      %v7578 = vpop.f32.mrb[0].mxu0
      %7579 = vmatprep.mubr.bf16.mxu0 %v7036
      %7580 = vmatmul.mubr.bf16.gmra.mrb[0].mxu0 %v7035
      %v7581 = vpop.f32.mrb[0].mxu0
      %v7582 = vadd.f32 %v5956, %v7581
      %v7583 = vpop.f32.mrb[0].mxu0
      %v7584 = vpop.f32.mrb[0].mxu0
      %v7585 = vadd.f32 %v5961, %v7584
      %v7586 = vpop.f32.mrb[0].mxu0
      %7587 = vmatprep.mubr.bf16.mxu0 %v7044
      %7588 = vmatmul.mubr.bf16.gmra.mrb[0].mxu0 %v7043
      %v7589 = vpop.f32.mrb[0].mxu0
      %v7590 = vadd.f32 %v5966, %v7589
      %v7591 = vpop.f32.mrb[0].mxu0
      %v7592 = vpop.f32.mrb[0].mxu0
      %v7593 = vadd.f32 %v5971, %v7592
      %v7594 = vpop.f32.mrb[0].mxu0
      %7595 = vmatprep.mubr.bf16.mxu0 %v7052
      %7596 = vmatmul.mubr.bf16.gmra.mrb[0].mxu0 %v7051
      %v7597 = vpop.f32.mrb[0].mxu0
      %v7598 = vadd.f32 %v5976, %v7597
      %v7599 = vpop.f32.mrb[0].mxu0
      %v7600 = vpop.f32.mrb[0].mxu0
      %v7601 = vadd.f32 %v5981, %v7600
      %v7602 = vpop.f32.mrb[0].mxu0
      %7603 = vmatprep.mubr.bf16.mxu0 %v7060
      %7604 = vmatmul.mubr.bf16.gmra.mrb[0].mxu0 %v7059
      %v7605 = vpop.f32.mrb[0].mxu0
      %v7606 = vadd.f32 %v5986, %v7605
      %v7607 = vpop.f32.mrb[0].mxu0
      %v7608 = vpop.f32.mrb[0].mxu0
      %v7609 = vadd.f32 %v5991, %v7608
      %v7610 = vpop.f32.mrb[0].mxu0
      %7611 = vmatprep.mubr.bf16.mxu0 %v7068
      %7612 = vmatmul.mubr.bf16.gmra.mrb[0].mxu0 %v7067
      %v7613 = vpop.f32.mrb[0].mxu0
      %v7614 = vadd.f32 %v5996, %v7613
      %v7615 = vpop.f32.mrb[0].mxu0
      %v7616 = vpop.f32.mrb[0].mxu0
      %v7617 = vadd.f32 %v6001, %v7616
      %v7618 = vpop.f32.mrb[0].mxu0
      %7619 = vmatprep.mubr.bf16.mxu0 %v7076
      %7620 = vmatmul.mubr.bf16.gmra.mrb[0].mxu0 %v7075
      %v7621 = vpop.f32.mrb[0].mxu0
      %v7622 = vadd.f32 %v6006, %v7621
      %v7623 = vpop.f32.mrb[0].mxu0
      %v7624 = vpop.f32.mrb[0].mxu0
      %v7625 = vadd.f32 %v6011, %v7624
      %v7626 = vpop.f32.mrb[0].mxu0
      %7627 = vmatprep.mubr.bf16.mxu0 %v7084
      %7628 = vmatmul.mubr.bf16.gmra.mrb[0].mxu0 %v7083
      %v7629 = vpop.f32.mrb[0].mxu0
      %v7630 = vadd.f32 %v6016, %v7629
      %v7631 = vpop.f32.mrb[0].mxu0
      %v7632 = vpop.f32.mrb[0].mxu0
      %v7633 = vadd.f32 %v6021, %v7632
      %v7634 = vpop.f32.mrb[0].mxu0
      %7635 = vmatprep.mubr.bf16.mxu0 %v7092
      %7636 = vmatmul.mubr.bf16.gmra.mrb[0].mxu0 %v7091
      %v7637 = vpop.f32.mrb[0].mxu0
      %v7638 = vadd.f32 %v6026, %v7637
      %v7639 = vpop.f32.mrb[0].mxu0
      %v7640 = vpop.f32.mrb[0].mxu0
      %v7641 = vadd.f32 %v6031, %v7640
      %v7642 = vpop.f32.mrb[0].mxu0
      %7643 = vmatprep.mubr.bf16.mxu0 %v7100
      %7644 = vmatmul.mubr.bf16.gmra.mrb[0].mxu0 %v7099
      %v7645 = vpop.f32.mrb[0].mxu0
      %v7646 = vadd.f32 %v6036, %v7645
      %v7647 = vpop.f32.mrb[0].mxu0
      %v7648 = vpop.f32.mrb[0].mxu0
      %v7649 = vadd.f32 %v6041, %v7648
      %v7650 = vpop.f32.mrb[0].mxu0
      %7651 = vmatprep.mubr.bf16.mxu0 %v7108
      %7652 = vmatmul.mubr.bf16.gmra.mrb[0].mxu0 %v7107
      %v7653 = vpop.f32.mrb[0].mxu0
      %v7654 = vadd.f32 %v6046, %v7653
      %v7655 = vpop.f32.mrb[0].mxu0
      %v7656 = vpop.f32.mrb[0].mxu0
      %v7657 = vadd.f32 %v6051, %v7656
      %v7658 = vpop.f32.mrb[0].mxu0
      %7659 = vmatprep.mubr.bf16.mxu0 %v7116
      %7660 = vmatmul.mubr.bf16.gmra.mrb[0].mxu0 %v7115
      %v7661 = vpop.f32.mrb[0].mxu0
      %v7662 = vadd.f32 %v6056, %v7661
      %v7663 = vpop.f32.mrb[0].mxu0
      %v7664 = vpop.f32.mrb[0].mxu0
      %v7665 = vadd.f32 %v6061, %v7664
      %v7666 = vpop.f32.mrb[0].mxu0
      %7667 = vmatprep.mubr.bf16.mxu0 %v7124
      %7668 = vmatmul.mubr.bf16.gmra.mrb[0].mxu0 %v7123
      %v7669 = vpop.f32.mrb[0].mxu0
      %v7670 = vadd.f32 %v6066, %v7669
      %v7671 = vpop.f32.mrb[0].mxu0
      %v7672 = vpop.f32.mrb[0].mxu0
      %v7673 = vadd.f32 %v6071, %v7672
      %v7674 = vpop.f32.mrb[0].mxu0
      %7675 = vmatprep.mubr.bf16.mxu0 %v7132
      %7676 = vmatmul.mubr.bf16.gmra.mrb[0].mxu0 %v7131
      %v7677 = vpop.f32.mrb[0].mxu0
      %v7678 = vadd.f32 %v6076, %v7677
      %v7679 = vpop.f32.mrb[0].mxu0
      %v7680 = vpop.f32.mrb[0].mxu0
      %v7681 = vadd.f32 %v6081, %v7680
      %v7682 = vpop.f32.mrb[0].mxu0
      %7683 = vmatprep.mubr.bf16.mxu0 %v7140
      %7684 = vmatmul.mubr.bf16.gmra.mrb[0].mxu0 %v7139
      %v7685 = vpop.f32.mrb[0].mxu0
      %v7686 = vadd.f32 %v6086, %v7685
      %v7687 = vpop.f32.mrb[0].mxu0
      %v7688 = vpop.f32.mrb[0].mxu0
      %v7689 = vadd.f32 %v6091, %v7688
      %v7690 = vpop.f32.mrb[0].mxu0
      %7691 = vmatprep.mubr.bf16.mxu0 %v7148
      %7692 = vmatmul.mubr.bf16.gmra.mrb[0].mxu0 %v7147
      %v7693 = vpop.f32.mrb[0].mxu0
      %v7694 = vadd.f32 %v6096, %v7693
      %v7695 = vpop.f32.mrb[0].mxu0
      %v7696 = vpop.f32.mrb[0].mxu0
      %v7697 = vadd.f32 %v6101, %v7696
      %v7698 = vpop.f32.mrb[0].mxu0
      %7699 = vmatprep.mubr.bf16.mxu0 %v7156
      %7700 = vmatmul.mubr.bf16.gmra.mrb[0].mxu0 %v7155
      %v7701 = vpop.f32.mrb[0].mxu0
      %v7702 = vadd.f32 %v6106, %v7701
      %v7703 = vpop.f32.mrb[0].mxu0
      %v7704 = vpop.f32.mrb[0].mxu0
      %v7705 = vadd.f32 %v6111, %v7704
      %v7706 = vpop.f32.mrb[0].mxu0
      %7707 = vmatprep.mubr.bf16.mxu0 %v7164
      %7708 = vmatmul.mubr.bf16.gmra.mrb[0].mxu0 %v7163
      %v7709 = vpop.f32.mrb[0].mxu0
      %v7710 = vadd.f32 %v6116, %v7709
      %v7711 = vpop.f32.mrb[0].mxu0
      %v7712 = vpop.f32.mrb[0].mxu0
      %v7713 = vadd.f32 %v6121, %v7712
      %v7714 = vpop.f32.mrb[0].mxu0
      %7715 = vmatprep.mubr.bf16.mxu0 %v7172
      %7716 = vmatmul.mubr.bf16.gmra.mrb[0].mxu0 %v7171
      %v7717 = vpop.f32.mrb[0].mxu0
      %v7718 = vadd.f32 %v6126, %v7717
      %v7719 = vpop.f32.mrb[0].mxu0
      %v7720 = vpop.f32.mrb[0].mxu0
      %v7721 = vadd.f32 %v6131, %v7720
      %v7722 = vpop.f32.mrb[0].mxu0
      %7723 = vmatprep.mubr.bf16.mxu0 %v7180
      %7724 = vmatmul.mubr.bf16.gmra.mrb[0].mxu0 %v7179
      %v7725 = vpop.f32.mrb[0].mxu0
      %v7726 = vadd.f32 %v6136, %v7725
      %v7727 = vpop.f32.mrb[0].mxu0
      %v7728 = vpop.f32.mrb[0].mxu0
      %v7729 = vadd.f32 %v6141, %v7728
      %v7730 = vpop.f32.mrb[0].mxu0
      %7731 = vmatprep.mubr.bf16.mxu0 %v7188
      %7732 = vmatmul.mubr.bf16.gmra.mrb[0].mxu0 %v7187
      %v7733 = vpop.f32.mrb[0].mxu0
      %v7734 = vadd.f32 %v6146, %v7733
      %v7735 = vpop.f32.mrb[0].mxu0
      %v7736 = vpop.f32.mrb[0].mxu0
      %v7737 = vadd.f32 %v6151, %v7736
      %v7738 = vpop.f32.mrb[0].mxu0
      %7739 = vmatprep.mubr.bf16.mxu0 %v7196
      %7740 = vmatmul.mubr.bf16.gmra.mrb[0].mxu0 %v7195
      %v7741 = vpop.f32.mrb[0].mxu0
      %v7742 = vadd.f32 %v6156, %v7741
      %v7743 = vpop.f32.mrb[0].mxu0
      %v7744 = vpop.f32.mrb[0].mxu0
      %v7745 = vadd.f32 %v6161, %v7744
      %v7746 = vpop.f32.mrb[0].mxu0
      %7747 = vmatprep.mubr.bf16.mxu0 %v7204
      %7748 = vmatmul.mubr.bf16.gmra.mrb[0].mxu0 %v7203
      %v7749 = vpop.f32.mrb[0].mxu0
      %v7750 = vadd.f32 %v6166, %v7749
      %v7751 = vpop.f32.mrb[0].mxu0
      %v7752 = vpop.f32.mrb[0].mxu0
      %v7753 = vadd.f32 %v6171, %v7752
      %v7754 = vpop.f32.mrb[0].mxu0
      %7755 = vmatprep.mubr.bf16.mxu0 %v7212
      %7756 = vmatmul.mubr.bf16.gmra.mrb[0].mxu0 %v7211
      %v7757 = vpop.f32.mrb[0].mxu0
      %v7758 = vadd.f32 %v6176, %v7757
      %v7759 = vpop.f32.mrb[0].mxu0
      %v7760 = vpop.f32.mrb[0].mxu0
      %v7761 = vadd.f32 %v6181, %v7760
      %v7762 = vpop.f32.mrb[0].mxu0
      %7763 = vmatprep.mubr.bf16.mxu0 %v7220
      %7764 = vmatmul.mubr.bf16.gmra.mrb[0].mxu0 %v7219
      %v7765 = vpop.f32.mrb[0].mxu0
      %v7766 = vadd.f32 %v6186, %v7765
      %v7767 = vpop.f32.mrb[0].mxu0
      %v7768 = vpop.f32.mrb[0].mxu0
      %v7769 = vadd.f32 %v6191, %v7768
      %v7770 = vpop.f32.mrb[0].mxu0
      %7771 = vmatprep.mubr.bf16.mxu0 %v7228
      %7772 = vmatmul.mubr.bf16.gmra.mrb[0].mxu0 %v7227
      %v7773 = vpop.f32.mrb[0].mxu0
      %v7774 = vadd.f32 %v6196, %v7773
      %v7775 = vpop.f32.mrb[0].mxu0
      %v7776 = vpop.f32.mrb[0].mxu0
      %v7777 = vadd.f32 %v6201, %v7776
      %v7778 = vpop.f32.mrb[0].mxu0
      %7779 = vmatprep.mubr.bf16.mxu0 %v7236
      %7780 = vmatmul.mubr.bf16.gmra.mrb[0].mxu0 %v7235
      %v7781 = vpop.f32.mrb[0].mxu0
      %v7782 = vadd.f32 %v6206, %v7781
      %v7783 = vpop.f32.mrb[0].mxu0
      %v7784 = vpop.f32.mrb[0].mxu0
      %v7785 = vadd.f32 %v6211, %v7784
      %v7786 = vpop.f32.mrb[0].mxu0
      %7787 = vmatprep.mubr.bf16.mxu0 %v7244
      %7788 = vmatmul.mubr.bf16.gmra.mrb[0].mxu0 %v7243
      %v7789 = vpop.f32.mrb[0].mxu0
      %v7790 = vadd.f32 %v6216, %v7789
      %v7791 = vpop.f32.mrb[0].mxu0
      %v7792 = vpop.f32.mrb[0].mxu0
      %v7793 = vadd.f32 %v6221, %v7792
      %v7794 = vpop.f32.mrb[0].mxu0
      %7795 = vmatprep.mubr.bf16.mxu0 %v7252
      %7796 = vmatmul.mubr.bf16.gmra.mrb[0].mxu0 %v7251
      %v7797 = vpop.f32.mrb[0].mxu0
      %v7798 = vadd.f32 %v6226, %v7797
      %v7799 = vpop.f32.mrb[0].mxu0
      %v7800 = vpop.f32.mrb[0].mxu0
      %v7801 = vadd.f32 %v6231, %v7800
      %v7802 = vpop.f32.mrb[0].mxu0
      %7803 = vmatprep.mubr.bf16.mxu0 %v7260
      %7804 = vmatmul.mubr.bf16.gmra.mrb[0].mxu0 %v7259
      %v7805 = vpop.f32.mrb[0].mxu0
      %v7806 = vadd.f32 %v6236, %v7805
      %v7807 = vpop.f32.mrb[0].mxu0
      %v7808 = vpop.f32.mrb[0].mxu0
      %v7809 = vadd.f32 %v6241, %v7808
      %v7810 = vpop.f32.mrb[0].mxu0
      %7811 = vdwg.mxu0
      %7812 = vmatprep.subr.bf16.mxu0 0
      %7813 = vmatpush1.bf16.msra.mxu0 %v5555
      %7814 = vmatprep.subr.bf16.mxu0 0
      %7815 = vmatpush1.bf16.msra.mxu0 %v5556
      %7816 = vmatprep.subr.bf16.mxu0 0
      %7817 = vmatpush1.bf16.msra.mxu0 %v5557
      %7818 = vmatprep.subr.bf16.mxu0 0
      %7819 = vmatpush1.bf16.msra.mxu0 %v5558
      %7820 = vmatprep.subr.bf16.mxu0 0
      %7821 = vmatpush1.bf16.msra.mxu0 %v5559
      %7822 = vmatprep.subr.bf16.mxu0 0
      %7823 = vmatpush1.bf16.msra.mxu0 %v5560
      %7824 = vmatprep.subr.bf16.mxu0 0
      %7825 = vmatpush1.bf16.msra.mxu0 %v5561
      %7826 = vmatprep.subr.bf16.mxu0 0
      %7827 = vmatpush1.bf16.msra.mxu0 %v5562
      %7828 = vmatprep.subr.bf16.mxu0 0
      %7829 = vmatpush1.bf16.msra.mxu0 %v5563
      %7830 = vmatprep.subr.bf16.mxu0 0
      %7831 = vmatpush1.bf16.msra.mxu0 %v5564
      %7832 = vmatprep.subr.bf16.mxu0 0
      %7833 = vmatpush1.bf16.msra.mxu0 %v5565
      %7834 = vmatprep.subr.bf16.mxu0 0
      %7835 = vmatpush1.bf16.msra.mxu0 %v5566
      %7836 = vmatprep.subr.bf16.mxu0 0
      %7837 = vmatpush1.bf16.msra.mxu0 %v5567
      %7838 = vmatprep.subr.bf16.mxu0 0
      %7839 = vmatpush1.bf16.msra.mxu0 %v5568
      %7840 = vmatprep.subr.bf16.mxu0 0
      %7841 = vmatpush1.bf16.msra.mxu0 %v5569
      %7842 = vmatprep.subr.bf16.mxu0 0
      %7843 = vmatpush1.bf16.msra.mxu0 %v5570
      %7844 = vmatprep.mubr.bf16.mxu0 %v7014
      %7845 = vmatmul.mubr.bf16.gmra.mrb[0].mxu0 %v7013
      %v7846 = vpop.f32.mrb[0].mxu0
      %v7847 = vadd.f32 %v7558, %v7846
      %v7848 = vpop.f32.mrb[0].mxu0
      %v7849 = vpop.f32.mrb[0].mxu0
      %v7850 = vadd.f32 %v7561, %v7849
      %v7851 = vpop.f32.mrb[0].mxu0
      %7852 = vmatprep.mubr.bf16.mxu0 %v7022
      %7853 = vmatmul.mubr.bf16.gmra.mrb[0].mxu0 %v7021
      %v7854 = vpop.f32.mrb[0].mxu0
      %v7855 = vadd.f32 %v7566, %v7854
      %v7856 = vpop.f32.mrb[0].mxu0
      %v7857 = vpop.f32.mrb[0].mxu0
      %v7858 = vadd.f32 %v7569, %v7857
      %v7859 = vpop.f32.mrb[0].mxu0
      %7860 = vmatprep.mubr.bf16.mxu0 %v7030
      %7861 = vmatmul.mubr.bf16.gmra.mrb[0].mxu0 %v7029
      %v7862 = vpop.f32.mrb[0].mxu0
      %v7863 = vadd.f32 %v7574, %v7862
      %v7864 = vpop.f32.mrb[0].mxu0
      %v7865 = vpop.f32.mrb[0].mxu0
      %v7866 = vadd.f32 %v7577, %v7865
      %v7867 = vpop.f32.mrb[0].mxu0
      %7868 = vmatprep.mubr.bf16.mxu0 %v7038
      %7869 = vmatmul.mubr.bf16.gmra.mrb[0].mxu0 %v7037
      %v7870 = vpop.f32.mrb[0].mxu0
      %v7871 = vadd.f32 %v7582, %v7870
      %v7872 = vpop.f32.mrb[0].mxu0
      %v7873 = vpop.f32.mrb[0].mxu0
      %v7874 = vadd.f32 %v7585, %v7873
      %v7875 = vpop.f32.mrb[0].mxu0
      %7876 = vmatprep.mubr.bf16.mxu0 %v7046
      %7877 = vmatmul.mubr.bf16.gmra.mrb[0].mxu0 %v7045
      %v7878 = vpop.f32.mrb[0].mxu0
      %v7879 = vadd.f32 %v7590, %v7878
      %v7880 = vpop.f32.mrb[0].mxu0
      %v7881 = vpop.f32.mrb[0].mxu0
      %v7882 = vadd.f32 %v7593, %v7881
      %v7883 = vpop.f32.mrb[0].mxu0
      %7884 = vmatprep.mubr.bf16.mxu0 %v7054
      %7885 = vmatmul.mubr.bf16.gmra.mrb[0].mxu0 %v7053
      %v7886 = vpop.f32.mrb[0].mxu0
      %v7887 = vadd.f32 %v7598, %v7886
      %v7888 = vpop.f32.mrb[0].mxu0
      %v7889 = vpop.f32.mrb[0].mxu0
      %v7890 = vadd.f32 %v7601, %v7889
      %v7891 = vpop.f32.mrb[0].mxu0
      %7892 = vmatprep.mubr.bf16.mxu0 %v7062
      %7893 = vmatmul.mubr.bf16.gmra.mrb[0].mxu0 %v7061
      %v7894 = vpop.f32.mrb[0].mxu0
      %v7895 = vadd.f32 %v7606, %v7894
      %v7896 = vpop.f32.mrb[0].mxu0
      %v7897 = vpop.f32.mrb[0].mxu0
      %v7898 = vadd.f32 %v7609, %v7897
      %v7899 = vpop.f32.mrb[0].mxu0
      %7900 = vmatprep.mubr.bf16.mxu0 %v7070
      %7901 = vmatmul.mubr.bf16.gmra.mrb[0].mxu0 %v7069
      %v7902 = vpop.f32.mrb[0].mxu0
      %v7903 = vadd.f32 %v7614, %v7902
      %v7904 = vpop.f32.mrb[0].mxu0
      %v7905 = vpop.f32.mrb[0].mxu0
      %v7906 = vadd.f32 %v7617, %v7905
      %v7907 = vpop.f32.mrb[0].mxu0
      %7908 = vmatprep.mubr.bf16.mxu0 %v7078
      %7909 = vmatmul.mubr.bf16.gmra.mrb[0].mxu0 %v7077
      %v7910 = vpop.f32.mrb[0].mxu0
      %v7911 = vadd.f32 %v7622, %v7910
      %v7912 = vpop.f32.mrb[0].mxu0
      %v7913 = vpop.f32.mrb[0].mxu0
      %v7914 = vadd.f32 %v7625, %v7913
      %v7915 = vpop.f32.mrb[0].mxu0
      %7916 = vmatprep.mubr.bf16.mxu0 %v7086
      %7917 = vmatmul.mubr.bf16.gmra.mrb[0].mxu0 %v7085
      %v7918 = vpop.f32.mrb[0].mxu0
      %v7919 = vadd.f32 %v7630, %v7918
      %v7920 = vpop.f32.mrb[0].mxu0
      %v7921 = vpop.f32.mrb[0].mxu0
      %v7922 = vadd.f32 %v7633, %v7921
      %v7923 = vpop.f32.mrb[0].mxu0
      %7924 = vmatprep.mubr.bf16.mxu0 %v7094
      %7925 = vmatmul.mubr.bf16.gmra.mrb[0].mxu0 %v7093
      %v7926 = vpop.f32.mrb[0].mxu0
      %v7927 = vadd.f32 %v7638, %v7926
      %v7928 = vpop.f32.mrb[0].mxu0
      %v7929 = vpop.f32.mrb[0].mxu0
      %v7930 = vadd.f32 %v7641, %v7929
      %v7931 = vpop.f32.mrb[0].mxu0
      %7932 = vmatprep.mubr.bf16.mxu0 %v7102
      %7933 = vmatmul.mubr.bf16.gmra.mrb[0].mxu0 %v7101
      %v7934 = vpop.f32.mrb[0].mxu0
      %v7935 = vadd.f32 %v7646, %v7934
      %v7936 = vpop.f32.mrb[0].mxu0
      %v7937 = vpop.f32.mrb[0].mxu0
      %v7938 = vadd.f32 %v7649, %v7937
      %v7939 = vpop.f32.mrb[0].mxu0
      %7940 = vmatprep.mubr.bf16.mxu0 %v7110
      %7941 = vmatmul.mubr.bf16.gmra.mrb[0].mxu0 %v7109
      %v7942 = vpop.f32.mrb[0].mxu0
      %v7943 = vadd.f32 %v7654, %v7942
      %v7944 = vpop.f32.mrb[0].mxu0
      %v7945 = vpop.f32.mrb[0].mxu0
      %v7946 = vadd.f32 %v7657, %v7945
      %v7947 = vpop.f32.mrb[0].mxu0
      %7948 = vmatprep.mubr.bf16.mxu0 %v7118
      %7949 = vmatmul.mubr.bf16.gmra.mrb[0].mxu0 %v7117
      %v7950 = vpop.f32.mrb[0].mxu0
      %v7951 = vadd.f32 %v7662, %v7950
      %v7952 = vpop.f32.mrb[0].mxu0
      %v7953 = vpop.f32.mrb[0].mxu0
      %v7954 = vadd.f32 %v7665, %v7953
      %v7955 = vpop.f32.mrb[0].mxu0
      %7956 = vmatprep.mubr.bf16.mxu0 %v7126
      %7957 = vmatmul.mubr.bf16.gmra.mrb[0].mxu0 %v7125
      %v7958 = vpop.f32.mrb[0].mxu0
      %v7959 = vadd.f32 %v7670, %v7958
      %v7960 = vpop.f32.mrb[0].mxu0
      %v7961 = vpop.f32.mrb[0].mxu0
      %v7962 = vadd.f32 %v7673, %v7961
      %v7963 = vpop.f32.mrb[0].mxu0
      %7964 = vmatprep.mubr.bf16.mxu0 %v7134
      %7965 = vmatmul.mubr.bf16.gmra.mrb[0].mxu0 %v7133
      %v7966 = vpop.f32.mrb[0].mxu0
      %v7967 = vadd.f32 %v7678, %v7966
      %v7968 = vpop.f32.mrb[0].mxu0
      %v7969 = vpop.f32.mrb[0].mxu0
      %v7970 = vadd.f32 %v7681, %v7969
      %v7971 = vpop.f32.mrb[0].mxu0
      %7972 = vmatprep.mubr.bf16.mxu0 %v7142
      %7973 = vmatmul.mubr.bf16.gmra.mrb[0].mxu0 %v7141
      %v7974 = vpop.f32.mrb[0].mxu0
      %v7975 = vadd.f32 %v7686, %v7974
      %v7976 = vpop.f32.mrb[0].mxu0
      %v7977 = vpop.f32.mrb[0].mxu0
      %v7978 = vadd.f32 %v7689, %v7977
      %v7979 = vpop.f32.mrb[0].mxu0
      %7980 = vmatprep.mubr.bf16.mxu0 %v7150
      %7981 = vmatmul.mubr.bf16.gmra.mrb[0].mxu0 %v7149
      %v7982 = vpop.f32.mrb[0].mxu0
      %v7983 = vadd.f32 %v7694, %v7982
      %v7984 = vpop.f32.mrb[0].mxu0
      %v7985 = vpop.f32.mrb[0].mxu0
      %v7986 = vadd.f32 %v7697, %v7985
      %v7987 = vpop.f32.mrb[0].mxu0
      %7988 = vmatprep.mubr.bf16.mxu0 %v7158
      %7989 = vmatmul.mubr.bf16.gmra.mrb[0].mxu0 %v7157
      %v7990 = vpop.f32.mrb[0].mxu0
      %v7991 = vadd.f32 %v7702, %v7990
      %v7992 = vpop.f32.mrb[0].mxu0
      %v7993 = vpop.f32.mrb[0].mxu0
      %v7994 = vadd.f32 %v7705, %v7993
      %v7995 = vpop.f32.mrb[0].mxu0
      %7996 = vmatprep.mubr.bf16.mxu0 %v7166
      %7997 = vmatmul.mubr.bf16.gmra.mrb[0].mxu0 %v7165
      %v7998 = vpop.f32.mrb[0].mxu0
      %v7999 = vadd.f32 %v7710, %v7998
      %v8000 = vpop.f32.mrb[0].mxu0
      %v8001 = vpop.f32.mrb[0].mxu0
      %v8002 = vadd.f32 %v7713, %v8001
      %v8003 = vpop.f32.mrb[0].mxu0
      %8004 = vmatprep.mubr.bf16.mxu0 %v7174
      %8005 = vmatmul.mubr.bf16.gmra.mrb[0].mxu0 %v7173
      %v8006 = vpop.f32.mrb[0].mxu0
      %v8007 = vadd.f32 %v7718, %v8006
      %v8008 = vpop.f32.mrb[0].mxu0
      %v8009 = vpop.f32.mrb[0].mxu0
      %v8010 = vadd.f32 %v7721, %v8009
      %v8011 = vpop.f32.mrb[0].mxu0
      %8012 = vmatprep.mubr.bf16.mxu0 %v7182
      %8013 = vmatmul.mubr.bf16.gmra.mrb[0].mxu0 %v7181
      %v8014 = vpop.f32.mrb[0].mxu0
      %v8015 = vadd.f32 %v7726, %v8014
      %v8016 = vpop.f32.mrb[0].mxu0
      %v8017 = vpop.f32.mrb[0].mxu0
      %v8018 = vadd.f32 %v7729, %v8017
      %v8019 = vpop.f32.mrb[0].mxu0
      %8020 = vmatprep.mubr.bf16.mxu0 %v7190
      %8021 = vmatmul.mubr.bf16.gmra.mrb[0].mxu0 %v7189
      %v8022 = vpop.f32.mrb[0].mxu0
      %v8023 = vadd.f32 %v7734, %v8022
      %v8024 = vpop.f32.mrb[0].mxu0
      %v8025 = vpop.f32.mrb[0].mxu0
      %v8026 = vadd.f32 %v7737, %v8025
      %v8027 = vpop.f32.mrb[0].mxu0
      %8028 = vmatprep.mubr.bf16.mxu0 %v7198
      %8029 = vmatmul.mubr.bf16.gmra.mrb[0].mxu0 %v7197
      %v8030 = vpop.f32.mrb[0].mxu0
      %v8031 = vadd.f32 %v7742, %v8030
      %v8032 = vpop.f32.mrb[0].mxu0
      %v8033 = vpop.f32.mrb[0].mxu0
      %v8034 = vadd.f32 %v7745, %v8033
      %v8035 = vpop.f32.mrb[0].mxu0
      %8036 = vmatprep.mubr.bf16.mxu0 %v7206
      %8037 = vmatmul.mubr.bf16.gmra.mrb[0].mxu0 %v7205
      %v8038 = vpop.f32.mrb[0].mxu0
      %v8039 = vadd.f32 %v7750, %v8038
      %v8040 = vpop.f32.mrb[0].mxu0
      %v8041 = vpop.f32.mrb[0].mxu0
      %v8042 = vadd.f32 %v7753, %v8041
      %v8043 = vpop.f32.mrb[0].mxu0
      %8044 = vmatprep.mubr.bf16.mxu0 %v7214
      %8045 = vmatmul.mubr.bf16.gmra.mrb[0].mxu0 %v7213
      %v8046 = vpop.f32.mrb[0].mxu0
      %v8047 = vadd.f32 %v7758, %v8046
      %v8048 = vpop.f32.mrb[0].mxu0
      %v8049 = vpop.f32.mrb[0].mxu0
      %v8050 = vadd.f32 %v7761, %v8049
      %v8051 = vpop.f32.mrb[0].mxu0
      %8052 = vmatprep.mubr.bf16.mxu0 %v7222
      %8053 = vmatmul.mubr.bf16.gmra.mrb[0].mxu0 %v7221
      %v8054 = vpop.f32.mrb[0].mxu0
      %v8055 = vadd.f32 %v7766, %v8054
      %v8056 = vpop.f32.mrb[0].mxu0
      %v8057 = vpop.f32.mrb[0].mxu0
      %v8058 = vadd.f32 %v7769, %v8057
      %v8059 = vpop.f32.mrb[0].mxu0
      %8060 = vmatprep.mubr.bf16.mxu0 %v7230
      %8061 = vmatmul.mubr.bf16.gmra.mrb[0].mxu0 %v7229
      %v8062 = vpop.f32.mrb[0].mxu0
      %v8063 = vadd.f32 %v7774, %v8062
      %v8064 = vpop.f32.mrb[0].mxu0
      %v8065 = vpop.f32.mrb[0].mxu0
      %v8066 = vadd.f32 %v7777, %v8065
      %v8067 = vpop.f32.mrb[0].mxu0
      %8068 = vmatprep.mubr.bf16.mxu0 %v7238
      %8069 = vmatmul.mubr.bf16.gmra.mrb[0].mxu0 %v7237
      %v8070 = vpop.f32.mrb[0].mxu0
      %v8071 = vadd.f32 %v7782, %v8070
      %v8072 = vpop.f32.mrb[0].mxu0
      %v8073 = vpop.f32.mrb[0].mxu0
      %v8074 = vadd.f32 %v7785, %v8073
      %v8075 = vpop.f32.mrb[0].mxu0
      %8076 = vmatprep.mubr.bf16.mxu0 %v7246
      %8077 = vmatmul.mubr.bf16.gmra.mrb[0].mxu0 %v7245
      %v8078 = vpop.f32.mrb[0].mxu0
      %v8079 = vadd.f32 %v7790, %v8078
      %v8080 = vpop.f32.mrb[0].mxu0
      %v8081 = vpop.f32.mrb[0].mxu0
      %v8082 = vadd.f32 %v7793, %v8081
      %v8083 = vpop.f32.mrb[0].mxu0
      %8084 = vmatprep.mubr.bf16.mxu0 %v7254
      %8085 = vmatmul.mubr.bf16.gmra.mrb[0].mxu0 %v7253
      %v8086 = vpop.f32.mrb[0].mxu0
      %v8087 = vadd.f32 %v7798, %v8086
      %v8088 = vpop.f32.mrb[0].mxu0
      %v8089 = vpop.f32.mrb[0].mxu0
      %v8090 = vadd.f32 %v7801, %v8089
      %v8091 = vpop.f32.mrb[0].mxu0
      %8092 = vmatprep.mubr.bf16.mxu0 %v7262
      %8093 = vmatmul.mubr.bf16.gmra.mrb[0].mxu0 %v7261
      %v8094 = vpop.f32.mrb[0].mxu0
      %v8095 = vadd.f32 %v7806, %v8094
      %v8096 = vpop.f32.mrb[0].mxu0
      %v8097 = vpop.f32.mrb[0].mxu0
      %v8098 = vadd.f32 %v7809, %v8097
      %v8099 = vpop.f32.mrb[0].mxu0
      %8100 = vdwg.mxu0
      %8101 = vmatprep.subr.bf16.mxu0 0
      %8102 = vmatpush1.bf16.msra.mxu0 %v5571
      %8103 = vmatprep.subr.bf16.mxu0 0
      %8104 = vmatpush1.bf16.msra.mxu0 %v5572
      %8105 = vmatprep.subr.bf16.mxu0 0
      %8106 = vmatpush1.bf16.msra.mxu0 %v5573
      %8107 = vmatprep.subr.bf16.mxu0 0
      %8108 = vmatpush1.bf16.msra.mxu0 %v5574
      %8109 = vmatprep.subr.bf16.mxu0 0
      %8110 = vmatpush1.bf16.msra.mxu0 %v5575
      %8111 = vmatprep.subr.bf16.mxu0 0
      %8112 = vmatpush1.bf16.msra.mxu0 %v5576
      %8113 = vmatprep.subr.bf16.mxu0 0
      %8114 = vmatpush1.bf16.msra.mxu0 %v5577
      %8115 = vmatprep.subr.bf16.mxu0 0
      %8116 = vmatpush1.bf16.msra.mxu0 %v5578
      %8117 = vmatprep.subr.bf16.mxu0 0
      %8118 = vmatpush1.bf16.msra.mxu0 %v5579
      %8119 = vmatprep.subr.bf16.mxu0 0
      %8120 = vmatpush1.bf16.msra.mxu0 %v5580
      %8121 = vmatprep.subr.bf16.mxu0 0
      %8122 = vmatpush1.bf16.msra.mxu0 %v5581
      %8123 = vmatprep.subr.bf16.mxu0 0
      %8124 = vmatpush1.bf16.msra.mxu0 %v5582
      %8125 = vmatprep.subr.bf16.mxu0 0
      %8126 = vmatpush1.bf16.msra.mxu0 %v5583
      %8127 = vmatprep.subr.bf16.mxu0 0
      %8128 = vmatpush1.bf16.msra.mxu0 %v5584
      %8129 = vmatprep.subr.bf16.mxu0 0
      %8130 = vmatpush1.bf16.msra.mxu0 %v5585
      %8131 = vmatprep.subr.bf16.mxu0 0
      %8132 = vmatpush1.bf16.msra.mxu0 %v5586
      %8133 = vmatprep.mubr.bf16.mxu0 %v7016
      %8134 = vmatmul.mubr.bf16.gmra.mrb[0].mxu0 %v7015
      %v8135 = vpop.f32.mrb[0].mxu0
      %v8136 = vadd.f32 %v7847, %v8135
      %v8137 = vpop.f32.mrb[0].mxu0
      %v8138 = vpop.f32.mrb[0].mxu0
      %v8139 = vadd.f32 %v7850, %v8138
      %v8140 = vpop.f32.mrb[0].mxu0
      %8141 = vmatprep.mubr.bf16.mxu0 %v7024
      %8142 = vmatmul.mubr.bf16.gmra.mrb[0].mxu0 %v7023
      %v8143 = vpop.f32.mrb[0].mxu0
      %v8144 = vadd.f32 %v7855, %v8143
      %v8145 = vpop.f32.mrb[0].mxu0
      %v8146 = vpop.f32.mrb[0].mxu0
      %v8147 = vadd.f32 %v7858, %v8146
      %v8148 = vpop.f32.mrb[0].mxu0
      %8149 = vmatprep.mubr.bf16.mxu0 %v7032
      %8150 = vmatmul.mubr.bf16.gmra.mrb[0].mxu0 %v7031
      %v8151 = vpop.f32.mrb[0].mxu0
      %v8152 = vadd.f32 %v7863, %v8151
      %v8153 = vpop.f32.mrb[0].mxu0
      %v8154 = vpop.f32.mrb[0].mxu0
      %v8155 = vadd.f32 %v7866, %v8154
      %v8156 = vpop.f32.mrb[0].mxu0
      %8157 = vmatprep.mubr.bf16.mxu0 %v7040
      %8158 = vmatmul.mubr.bf16.gmra.mrb[0].mxu0 %v7039
      %v8159 = vpop.f32.mrb[0].mxu0
      %v8160 = vadd.f32 %v7871, %v8159
      %v8161 = vpop.f32.mrb[0].mxu0
      %v8162 = vpop.f32.mrb[0].mxu0
      %v8163 = vadd.f32 %v7874, %v8162
      %v8164 = vpop.f32.mrb[0].mxu0
      %8165 = vmatprep.mubr.bf16.mxu0 %v7048
      %8166 = vmatmul.mubr.bf16.gmra.mrb[0].mxu0 %v7047
      %v8167 = vpop.f32.mrb[0].mxu0
      %v8168 = vadd.f32 %v7879, %v8167
      %v8169 = vpop.f32.mrb[0].mxu0
      %v8170 = vpop.f32.mrb[0].mxu0
      %v8171 = vadd.f32 %v7882, %v8170
      %v8172 = vpop.f32.mrb[0].mxu0
      %8173 = vmatprep.mubr.bf16.mxu0 %v7056
      %8174 = vmatmul.mubr.bf16.gmra.mrb[0].mxu0 %v7055
      %v8175 = vpop.f32.mrb[0].mxu0
      %v8176 = vadd.f32 %v7887, %v8175
      %v8177 = vpop.f32.mrb[0].mxu0
      %v8178 = vpop.f32.mrb[0].mxu0
      %v8179 = vadd.f32 %v7890, %v8178
      %v8180 = vpop.f32.mrb[0].mxu0
      %8181 = vmatprep.mubr.bf16.mxu0 %v7064
      %8182 = vmatmul.mubr.bf16.gmra.mrb[0].mxu0 %v7063
      %v8183 = vpop.f32.mrb[0].mxu0
      %v8184 = vadd.f32 %v7895, %v8183
      %v8185 = vpop.f32.mrb[0].mxu0
      %v8186 = vpop.f32.mrb[0].mxu0
      %v8187 = vadd.f32 %v7898, %v8186
      %v8188 = vpop.f32.mrb[0].mxu0
      %8189 = vmatprep.mubr.bf16.mxu0 %v7072
      %8190 = vmatmul.mubr.bf16.gmra.mrb[0].mxu0 %v7071
      %v8191 = vpop.f32.mrb[0].mxu0
      %v8192 = vadd.f32 %v7903, %v8191
      %v8193 = vpop.f32.mrb[0].mxu0
      %v8194 = vpop.f32.mrb[0].mxu0
      %v8195 = vadd.f32 %v7906, %v8194
      %v8196 = vpop.f32.mrb[0].mxu0
      %8197 = vmatprep.mubr.bf16.mxu0 %v7080
      %8198 = vmatmul.mubr.bf16.gmra.mrb[0].mxu0 %v7079
      %v8199 = vpop.f32.mrb[0].mxu0
      %v8200 = vadd.f32 %v7911, %v8199
      %v8201 = vpop.f32.mrb[0].mxu0
      %v8202 = vpop.f32.mrb[0].mxu0
      %v8203 = vadd.f32 %v7914, %v8202
      %v8204 = vpop.f32.mrb[0].mxu0
      %8205 = vmatprep.mubr.bf16.mxu0 %v7088
      %8206 = vmatmul.mubr.bf16.gmra.mrb[0].mxu0 %v7087
      %v8207 = vpop.f32.mrb[0].mxu0
      %v8208 = vadd.f32 %v7919, %v8207
      %v8209 = vpop.f32.mrb[0].mxu0
      %v8210 = vpop.f32.mrb[0].mxu0
      %v8211 = vadd.f32 %v7922, %v8210
      %v8212 = vpop.f32.mrb[0].mxu0
      %8213 = vmatprep.mubr.bf16.mxu0 %v7096
      %8214 = vmatmul.mubr.bf16.gmra.mrb[0].mxu0 %v7095
      %v8215 = vpop.f32.mrb[0].mxu0
      %v8216 = vadd.f32 %v7927, %v8215
      %v8217 = vpop.f32.mrb[0].mxu0
      %v8218 = vpop.f32.mrb[0].mxu0
      %v8219 = vadd.f32 %v7930, %v8218
      %v8220 = vpop.f32.mrb[0].mxu0
      %8221 = vmatprep.mubr.bf16.mxu0 %v7104
      %8222 = vmatmul.mubr.bf16.gmra.mrb[0].mxu0 %v7103
      %v8223 = vpop.f32.mrb[0].mxu0
      %v8224 = vadd.f32 %v7935, %v8223
      %v8225 = vpop.f32.mrb[0].mxu0
      %v8226 = vpop.f32.mrb[0].mxu0
      %v8227 = vadd.f32 %v7938, %v8226
      %v8228 = vpop.f32.mrb[0].mxu0
      %8229 = vmatprep.mubr.bf16.mxu0 %v7112
      %8230 = vmatmul.mubr.bf16.gmra.mrb[0].mxu0 %v7111
      %v8231 = vpop.f32.mrb[0].mxu0
      %v8232 = vadd.f32 %v7943, %v8231
      %v8233 = vpop.f32.mrb[0].mxu0
      %v8234 = vpop.f32.mrb[0].mxu0
      %v8235 = vadd.f32 %v7946, %v8234
      %v8236 = vpop.f32.mrb[0].mxu0
      %8237 = vmatprep.mubr.bf16.mxu0 %v7120
      %8238 = vmatmul.mubr.bf16.gmra.mrb[0].mxu0 %v7119
      %v8239 = vpop.f32.mrb[0].mxu0
      %v8240 = vadd.f32 %v7951, %v8239
      %v8241 = vpop.f32.mrb[0].mxu0
      %v8242 = vpop.f32.mrb[0].mxu0
      %v8243 = vadd.f32 %v7954, %v8242
      %v8244 = vpop.f32.mrb[0].mxu0
      %8245 = vmatprep.mubr.bf16.mxu0 %v7128
      %8246 = vmatmul.mubr.bf16.gmra.mrb[0].mxu0 %v7127
      %v8247 = vpop.f32.mrb[0].mxu0
      %v8248 = vadd.f32 %v7959, %v8247
      %v8249 = vpop.f32.mrb[0].mxu0
      %v8250 = vpop.f32.mrb[0].mxu0
      %v8251 = vadd.f32 %v7962, %v8250
      %v8252 = vpop.f32.mrb[0].mxu0
      %8253 = vmatprep.mubr.bf16.mxu0 %v7136
      %8254 = vmatmul.mubr.bf16.gmra.mrb[0].mxu0 %v7135
      %v8255 = vpop.f32.mrb[0].mxu0
      %v8256 = vadd.f32 %v7967, %v8255
      %v8257 = vpop.f32.mrb[0].mxu0
      %v8258 = vpop.f32.mrb[0].mxu0
      %v8259 = vadd.f32 %v7970, %v8258
      %v8260 = vpop.f32.mrb[0].mxu0
      %8261 = vmatprep.mubr.bf16.mxu0 %v7144
      %8262 = vmatmul.mubr.bf16.gmra.mrb[0].mxu0 %v7143
      %v8263 = vpop.f32.mrb[0].mxu0
      %v8264 = vadd.f32 %v7975, %v8263
      %v8265 = vpop.f32.mrb[0].mxu0
      %v8266 = vpop.f32.mrb[0].mxu0
      %v8267 = vadd.f32 %v7978, %v8266
      %v8268 = vpop.f32.mrb[0].mxu0
      %8269 = vmatprep.mubr.bf16.mxu0 %v7152
      %8270 = vmatmul.mubr.bf16.gmra.mrb[0].mxu0 %v7151
      %v8271 = vpop.f32.mrb[0].mxu0
      %v8272 = vadd.f32 %v7983, %v8271
      %v8273 = vpop.f32.mrb[0].mxu0
      %v8274 = vpop.f32.mrb[0].mxu0
      %v8275 = vadd.f32 %v7986, %v8274
      %v8276 = vpop.f32.mrb[0].mxu0
      %8277 = vmatprep.mubr.bf16.mxu0 %v7160
      %8278 = vmatmul.mubr.bf16.gmra.mrb[0].mxu0 %v7159
      %v8279 = vpop.f32.mrb[0].mxu0
      %v8280 = vadd.f32 %v7991, %v8279
      %v8281 = vpop.f32.mrb[0].mxu0
      %v8282 = vpop.f32.mrb[0].mxu0
      %v8283 = vadd.f32 %v7994, %v8282
      %v8284 = vpop.f32.mrb[0].mxu0
      %8285 = vmatprep.mubr.bf16.mxu0 %v7168
      %8286 = vmatmul.mubr.bf16.gmra.mrb[0].mxu0 %v7167
      %v8287 = vpop.f32.mrb[0].mxu0
      %v8288 = vadd.f32 %v7999, %v8287
      %v8289 = vpop.f32.mrb[0].mxu0
      %v8290 = vpop.f32.mrb[0].mxu0
      %v8291 = vadd.f32 %v8002, %v8290
      %v8292 = vpop.f32.mrb[0].mxu0
      %8293 = vmatprep.mubr.bf16.mxu0 %v7176
      %8294 = vmatmul.mubr.bf16.gmra.mrb[0].mxu0 %v7175
      %v8295 = vpop.f32.mrb[0].mxu0
      %v8296 = vadd.f32 %v8007, %v8295
      %v8297 = vpop.f32.mrb[0].mxu0
      %v8298 = vpop.f32.mrb[0].mxu0
      %v8299 = vadd.f32 %v8010, %v8298
      %v8300 = vpop.f32.mrb[0].mxu0
      %8301 = vmatprep.mubr.bf16.mxu0 %v7184
      %8302 = vmatmul.mubr.bf16.gmra.mrb[0].mxu0 %v7183
      %v8303 = vpop.f32.mrb[0].mxu0
      %v8304 = vadd.f32 %v8015, %v8303
      %v8305 = vpop.f32.mrb[0].mxu0
      %v8306 = vpop.f32.mrb[0].mxu0
      %v8307 = vadd.f32 %v8018, %v8306
      %v8308 = vpop.f32.mrb[0].mxu0
      %8309 = vmatprep.mubr.bf16.mxu0 %v7192
      %8310 = vmatmul.mubr.bf16.gmra.mrb[0].mxu0 %v7191
      %v8311 = vpop.f32.mrb[0].mxu0
      %v8312 = vadd.f32 %v8023, %v8311
      %v8313 = vpop.f32.mrb[0].mxu0
      %v8314 = vpop.f32.mrb[0].mxu0
      %v8315 = vadd.f32 %v8026, %v8314
      %v8316 = vpop.f32.mrb[0].mxu0
      %8317 = vmatprep.mubr.bf16.mxu0 %v7200
      %8318 = vmatmul.mubr.bf16.gmra.mrb[0].mxu0 %v7199
      %v8319 = vpop.f32.mrb[0].mxu0
      %v8320 = vadd.f32 %v8031, %v8319
      %v8321 = vpop.f32.mrb[0].mxu0
      %v8322 = vpop.f32.mrb[0].mxu0
      %v8323 = vadd.f32 %v8034, %v8322
      %v8324 = vpop.f32.mrb[0].mxu0
      %8325 = vmatprep.mubr.bf16.mxu0 %v7208
      %8326 = vmatmul.mubr.bf16.gmra.mrb[0].mxu0 %v7207
      %v8327 = vpop.f32.mrb[0].mxu0
      %v8328 = vadd.f32 %v8039, %v8327
      %v8329 = vpop.f32.mrb[0].mxu0
      %v8330 = vpop.f32.mrb[0].mxu0
      %v8331 = vadd.f32 %v8042, %v8330
      %v8332 = vpop.f32.mrb[0].mxu0
      %8333 = vmatprep.mubr.bf16.mxu0 %v7216
      %8334 = vmatmul.mubr.bf16.gmra.mrb[0].mxu0 %v7215
      %v8335 = vpop.f32.mrb[0].mxu0
      %v8336 = vadd.f32 %v8047, %v8335
      %v8337 = vpop.f32.mrb[0].mxu0
      %v8338 = vpop.f32.mrb[0].mxu0
      %v8339 = vadd.f32 %v8050, %v8338
      %v8340 = vpop.f32.mrb[0].mxu0
      %8341 = vmatprep.mubr.bf16.mxu0 %v7224
      %8342 = vmatmul.mubr.bf16.gmra.mrb[0].mxu0 %v7223
      %v8343 = vpop.f32.mrb[0].mxu0
      %v8344 = vadd.f32 %v8055, %v8343
      %v8345 = vpop.f32.mrb[0].mxu0
      %v8346 = vpop.f32.mrb[0].mxu0
      %v8347 = vadd.f32 %v8058, %v8346
      %v8348 = vpop.f32.mrb[0].mxu0
      %8349 = vmatprep.mubr.bf16.mxu0 %v7232
      %8350 = vmatmul.mubr.bf16.gmra.mrb[0].mxu0 %v7231
      %v8351 = vpop.f32.mrb[0].mxu0
      %v8352 = vadd.f32 %v8063, %v8351
      %v8353 = vpop.f32.mrb[0].mxu0
      %v8354 = vpop.f32.mrb[0].mxu0
      %v8355 = vadd.f32 %v8066, %v8354
      %v8356 = vpop.f32.mrb[0].mxu0
      %8357 = vmatprep.mubr.bf16.mxu0 %v7240
      %8358 = vmatmul.mubr.bf16.gmra.mrb[0].mxu0 %v7239
      %v8359 = vpop.f32.mrb[0].mxu0
      %v8360 = vadd.f32 %v8071, %v8359
      %v8361 = vpop.f32.mrb[0].mxu0
      %v8362 = vpop.f32.mrb[0].mxu0
      %v8363 = vadd.f32 %v8074, %v8362
      %v8364 = vpop.f32.mrb[0].mxu0
      %8365 = vmatprep.mubr.bf16.mxu0 %v7248
      %8366 = vmatmul.mubr.bf16.gmra.mrb[0].mxu0 %v7247
      %v8367 = vpop.f32.mrb[0].mxu0
      %v8368 = vadd.f32 %v8079, %v8367
      %v8369 = vpop.f32.mrb[0].mxu0
      %v8370 = vpop.f32.mrb[0].mxu0
      %v8371 = vadd.f32 %v8082, %v8370
      %v8372 = vpop.f32.mrb[0].mxu0
      %8373 = vmatprep.mubr.bf16.mxu0 %v7256
      %8374 = vmatmul.mubr.bf16.gmra.mrb[0].mxu0 %v7255
      %v8375 = vpop.f32.mrb[0].mxu0
      %v8376 = vadd.f32 %v8087, %v8375
      %v8377 = vpop.f32.mrb[0].mxu0
      %v8378 = vpop.f32.mrb[0].mxu0
      %v8379 = vadd.f32 %v8090, %v8378
      %v8380 = vpop.f32.mrb[0].mxu0
      %8381 = vmatprep.mubr.bf16.mxu0 %v7264
      %8382 = vmatmul.mubr.bf16.gmra.mrb[0].mxu0 %v7263
      %v8383 = vpop.f32.mrb[0].mxu0
      %v8384 = vadd.f32 %v8095, %v8383
      %v8385 = vpop.f32.mrb[0].mxu0
      %v8386 = vpop.f32.mrb[0].mxu0
      %v8387 = vadd.f32 %v8098, %v8386
      %v8388 = vpop.f32.mrb[0].mxu0
      %8389 = vdwg.mxu0
      %8390 = vmatprep.subr.bf16.mxu0 0
      %8391 = vmatpush1.bf16.msra.mxu0 %v5587
      %8392 = vmatprep.subr.bf16.mxu0 0
      %8393 = vmatpush1.bf16.msra.mxu0 %v5588
      %8394 = vmatprep.subr.bf16.mxu0 0
      %8395 = vmatpush1.bf16.msra.mxu0 %v5589
      %8396 = vmatprep.subr.bf16.mxu0 0
      %8397 = vmatpush1.bf16.msra.mxu0 %v5590
      %8398 = vmatprep.subr.bf16.mxu0 0
      %8399 = vmatpush1.bf16.msra.mxu0 %v5591
      %8400 = vmatprep.subr.bf16.mxu0 0
      %8401 = vmatpush1.bf16.msra.mxu0 %v5592
      %8402 = vmatprep.subr.bf16.mxu0 0
      %8403 = vmatpush1.bf16.msra.mxu0 %v5593
      %8404 = vmatprep.subr.bf16.mxu0 0
      %8405 = vmatpush1.bf16.msra.mxu0 %v5594
      %8406 = vmatprep.subr.bf16.mxu0 0
      %8407 = vmatpush1.bf16.msra.mxu0 %v5595
      %8408 = vmatprep.subr.bf16.mxu0 0
      %8409 = vmatpush1.bf16.msra.mxu0 %v5596
      %8410 = vmatprep.subr.bf16.mxu0 0
      %8411 = vmatpush1.bf16.msra.mxu0 %v5597
      %8412 = vmatprep.subr.bf16.mxu0 0
      %8413 = vmatpush1.bf16.msra.mxu0 %v5598
      %8414 = vmatprep.subr.bf16.mxu0 0
      %8415 = vmatpush1.bf16.msra.mxu0 %v5599
      %8416 = vmatprep.subr.bf16.mxu0 0
      %8417 = vmatpush1.bf16.msra.mxu0 %v5600
      %8418 = vmatprep.subr.bf16.mxu0 0
      %8419 = vmatpush1.bf16.msra.mxu0 %v5601
      %8420 = vmatprep.subr.bf16.mxu0 0
      %8421 = vmatpush1.bf16.msra.mxu0 %v5602
      %8422 = vmatprep.mubr.bf16.mxu0 %v7018
      %8423 = vmatmul.mubr.bf16.gmra.mrb[0].mxu0 %v7017
      %v8424 = vpop.f32.mrb[0].mxu0
      %v8425 = vadd.f32 %v8136, %v8424
      %v8426 = vpop.f32.mrb[0].mxu0
      %v8427 = vpop.f32.mrb[0].mxu0
      %v8428 = vadd.f32 %v8139, %v8427
      %v8429 = vpop.f32.mrb[0].mxu0
      %8430 = vmatprep.mubr.bf16.mxu0 %v7026
      %8431 = vmatmul.mubr.bf16.gmra.mrb[0].mxu0 %v7025
      %v8432 = vpop.f32.mrb[0].mxu0
      %v8433 = vadd.f32 %v8144, %v8432
      %v8434 = vpop.f32.mrb[0].mxu0
      %v8435 = vpop.f32.mrb[0].mxu0
      %v8436 = vadd.f32 %v8147, %v8435
      %v8437 = vpop.f32.mrb[0].mxu0
      %8438 = vmatprep.mubr.bf16.mxu0 %v7034
      %8439 = vmatmul.mubr.bf16.gmra.mrb[0].mxu0 %v7033
      %v8440 = vpop.f32.mrb[0].mxu0
      %v8441 = vadd.f32 %v8152, %v8440
      %v8442 = vpop.f32.mrb[0].mxu0
      %v8443 = vpop.f32.mrb[0].mxu0
      %v8444 = vadd.f32 %v8155, %v8443
      %v8445 = vpop.f32.mrb[0].mxu0
      %8446 = vmatprep.mubr.bf16.mxu0 %v7042
      %8447 = vmatmul.mubr.bf16.gmra.mrb[0].mxu0 %v7041
      %v8448 = vpop.f32.mrb[0].mxu0
      %v8449 = vadd.f32 %v8160, %v8448
      %v8450 = vpop.f32.mrb[0].mxu0
      %v8451 = vpop.f32.mrb[0].mxu0
      %v8452 = vadd.f32 %v8163, %v8451
      %v8453 = vpop.f32.mrb[0].mxu0
      %8454 = vmatprep.mubr.bf16.mxu0 %v7050
      %8455 = vmatmul.mubr.bf16.gmra.mrb[0].mxu0 %v7049
      %v8456 = vpop.f32.mrb[0].mxu0
      %v8457 = vadd.f32 %v8168, %v8456
      %v8458 = vpop.f32.mrb[0].mxu0
      %v8459 = vpop.f32.mrb[0].mxu0
      %v8460 = vadd.f32 %v8171, %v8459
      %v8461 = vpop.f32.mrb[0].mxu0
      %8462 = vmatprep.mubr.bf16.mxu0 %v7058
      %8463 = vmatmul.mubr.bf16.gmra.mrb[0].mxu0 %v7057
      %v8464 = vpop.f32.mrb[0].mxu0
      %v8465 = vadd.f32 %v8176, %v8464
      %v8466 = vpop.f32.mrb[0].mxu0
      %v8467 = vpop.f32.mrb[0].mxu0
      %v8468 = vadd.f32 %v8179, %v8467
      %v8469 = vpop.f32.mrb[0].mxu0
      %8470 = vmatprep.mubr.bf16.mxu0 %v7066
      %8471 = vmatmul.mubr.bf16.gmra.mrb[0].mxu0 %v7065
      %v8472 = vpop.f32.mrb[0].mxu0
      %v8473 = vadd.f32 %v8184, %v8472
      %v8474 = vpop.f32.mrb[0].mxu0
      %v8475 = vpop.f32.mrb[0].mxu0
      %v8476 = vadd.f32 %v8187, %v8475
      %v8477 = vpop.f32.mrb[0].mxu0
      %8478 = vmatprep.mubr.bf16.mxu0 %v7074
      %8479 = vmatmul.mubr.bf16.gmra.mrb[0].mxu0 %v7073
      %v8480 = vpop.f32.mrb[0].mxu0
      %v8481 = vadd.f32 %v8192, %v8480
      %v8482 = vpop.f32.mrb[0].mxu0
      %v8483 = vpop.f32.mrb[0].mxu0
      %v8484 = vadd.f32 %v8195, %v8483
      %v8485 = vpop.f32.mrb[0].mxu0
      %8486 = vmatprep.mubr.bf16.mxu0 %v7082
      %8487 = vmatmul.mubr.bf16.gmra.mrb[0].mxu0 %v7081
      %v8488 = vpop.f32.mrb[0].mxu0
      %v8489 = vadd.f32 %v8200, %v8488
      %v8490 = vpop.f32.mrb[0].mxu0
      %v8491 = vpop.f32.mrb[0].mxu0
      %v8492 = vadd.f32 %v8203, %v8491
      %v8493 = vpop.f32.mrb[0].mxu0
      %8494 = vmatprep.mubr.bf16.mxu0 %v7090
      %8495 = vmatmul.mubr.bf16.gmra.mrb[0].mxu0 %v7089
      %v8496 = vpop.f32.mrb[0].mxu0
      %v8497 = vadd.f32 %v8208, %v8496
      %v8498 = vpop.f32.mrb[0].mxu0
      %v8499 = vpop.f32.mrb[0].mxu0
      %v8500 = vadd.f32 %v8211, %v8499
      %v8501 = vpop.f32.mrb[0].mxu0
      %8502 = vmatprep.mubr.bf16.mxu0 %v7098
      %8503 = vmatmul.mubr.bf16.gmra.mrb[0].mxu0 %v7097
      %v8504 = vpop.f32.mrb[0].mxu0
      %v8505 = vadd.f32 %v8216, %v8504
      %v8506 = vpop.f32.mrb[0].mxu0
      %v8507 = vpop.f32.mrb[0].mxu0
      %v8508 = vadd.f32 %v8219, %v8507
      %v8509 = vpop.f32.mrb[0].mxu0
      %8510 = vmatprep.mubr.bf16.mxu0 %v7106
      %8511 = vmatmul.mubr.bf16.gmra.mrb[0].mxu0 %v7105
      %v8512 = vpop.f32.mrb[0].mxu0
      %v8513 = vadd.f32 %v8224, %v8512
      %v8514 = vpop.f32.mrb[0].mxu0
      %v8515 = vpop.f32.mrb[0].mxu0
      %v8516 = vadd.f32 %v8227, %v8515
      %v8517 = vpop.f32.mrb[0].mxu0
      %8518 = vmatprep.mubr.bf16.mxu0 %v7114
      %8519 = vmatmul.mubr.bf16.gmra.mrb[0].mxu0 %v7113
      %v8520 = vpop.f32.mrb[0].mxu0
      %v8521 = vadd.f32 %v8232, %v8520
      %v8522 = vpop.f32.mrb[0].mxu0
      %v8523 = vpop.f32.mrb[0].mxu0
      %v8524 = vadd.f32 %v8235, %v8523
      %v8525 = vpop.f32.mrb[0].mxu0
      %8526 = vmatprep.mubr.bf16.mxu0 %v7122
      %8527 = vmatmul.mubr.bf16.gmra.mrb[0].mxu0 %v7121
      %v8528 = vpop.f32.mrb[0].mxu0
      %v8529 = vadd.f32 %v8240, %v8528
      %v8530 = vpop.f32.mrb[0].mxu0
      %v8531 = vpop.f32.mrb[0].mxu0
      %v8532 = vadd.f32 %v8243, %v8531
      %v8533 = vpop.f32.mrb[0].mxu0
      %8534 = vmatprep.mubr.bf16.mxu0 %v7130
      %8535 = vmatmul.mubr.bf16.gmra.mrb[0].mxu0 %v7129
      %v8536 = vpop.f32.mrb[0].mxu0
      %v8537 = vadd.f32 %v8248, %v8536
      %v8538 = vpop.f32.mrb[0].mxu0
      %v8539 = vpop.f32.mrb[0].mxu0
      %v8540 = vadd.f32 %v8251, %v8539
      %v8541 = vpop.f32.mrb[0].mxu0
      %8542 = vmatprep.mubr.bf16.mxu0 %v7138
      %8543 = vmatmul.mubr.bf16.gmra.mrb[0].mxu0 %v7137
      %v8544 = vpop.f32.mrb[0].mxu0
      %v8545 = vadd.f32 %v8256, %v8544
      %v8546 = vpop.f32.mrb[0].mxu0
      %v8547 = vpop.f32.mrb[0].mxu0
      %v8548 = vadd.f32 %v8259, %v8547
      %v8549 = vpop.f32.mrb[0].mxu0
      %8550 = vmatprep.mubr.bf16.mxu0 %v7146
      %8551 = vmatmul.mubr.bf16.gmra.mrb[0].mxu0 %v7145
      %v8552 = vpop.f32.mrb[0].mxu0
      %v8553 = vadd.f32 %v8264, %v8552
      %v8554 = vpop.f32.mrb[0].mxu0
      %v8555 = vpop.f32.mrb[0].mxu0
      %v8556 = vadd.f32 %v8267, %v8555
      %v8557 = vpop.f32.mrb[0].mxu0
      %8558 = vmatprep.mubr.bf16.mxu0 %v7154
      %8559 = vmatmul.mubr.bf16.gmra.mrb[0].mxu0 %v7153
      %v8560 = vpop.f32.mrb[0].mxu0
      %v8561 = vadd.f32 %v8272, %v8560
      %v8562 = vpop.f32.mrb[0].mxu0
      %v8563 = vpop.f32.mrb[0].mxu0
      %v8564 = vadd.f32 %v8275, %v8563
      %v8565 = vpop.f32.mrb[0].mxu0
      %8566 = vmatprep.mubr.bf16.mxu0 %v7162
      %8567 = vmatmul.mubr.bf16.gmra.mrb[0].mxu0 %v7161
      %v8568 = vpop.f32.mrb[0].mxu0
      %v8569 = vadd.f32 %v8280, %v8568
      %v8570 = vpop.f32.mrb[0].mxu0
      %v8571 = vpop.f32.mrb[0].mxu0
      %v8572 = vadd.f32 %v8283, %v8571
      %v8573 = vpop.f32.mrb[0].mxu0
      %8574 = vmatprep.mubr.bf16.mxu0 %v7170
      %8575 = vmatmul.mubr.bf16.gmra.mrb[0].mxu0 %v7169
      %v8576 = vpop.f32.mrb[0].mxu0
      %v8577 = vadd.f32 %v8288, %v8576
      %v8578 = vpop.f32.mrb[0].mxu0
      %v8579 = vpop.f32.mrb[0].mxu0
      %v8580 = vadd.f32 %v8291, %v8579
      %v8581 = vpop.f32.mrb[0].mxu0
      %8582 = vmatprep.mubr.bf16.mxu0 %v7178
      %8583 = vmatmul.mubr.bf16.gmra.mrb[0].mxu0 %v7177
      %v8584 = vpop.f32.mrb[0].mxu0
      %v8585 = vadd.f32 %v8296, %v8584
      %v8586 = vpop.f32.mrb[0].mxu0
      %v8587 = vpop.f32.mrb[0].mxu0
      %v8588 = vadd.f32 %v8299, %v8587
      %v8589 = vpop.f32.mrb[0].mxu0
      %8590 = vmatprep.mubr.bf16.mxu0 %v7186
      %8591 = vmatmul.mubr.bf16.gmra.mrb[0].mxu0 %v7185
      %v8592 = vpop.f32.mrb[0].mxu0
      %v8593 = vadd.f32 %v8304, %v8592
      %v8594 = vpop.f32.mrb[0].mxu0
      %v8595 = vpop.f32.mrb[0].mxu0
      %v8596 = vadd.f32 %v8307, %v8595
      %v8597 = vpop.f32.mrb[0].mxu0
      %8598 = vmatprep.mubr.bf16.mxu0 %v7194
      %8599 = vmatmul.mubr.bf16.gmra.mrb[0].mxu0 %v7193
      %v8600 = vpop.f32.mrb[0].mxu0
      %v8601 = vadd.f32 %v8312, %v8600
      %v8602 = vpop.f32.mrb[0].mxu0
      %v8603 = vpop.f32.mrb[0].mxu0
      %v8604 = vadd.f32 %v8315, %v8603
      %v8605 = vpop.f32.mrb[0].mxu0
      %8606 = vmatprep.mubr.bf16.mxu0 %v7202
      %8607 = vmatmul.mubr.bf16.gmra.mrb[0].mxu0 %v7201
      %v8608 = vpop.f32.mrb[0].mxu0
      %v8609 = vadd.f32 %v8320, %v8608
      %v8610 = vpop.f32.mrb[0].mxu0
      %v8611 = vpop.f32.mrb[0].mxu0
      %v8612 = vadd.f32 %v8323, %v8611
      %v8613 = vpop.f32.mrb[0].mxu0
      %8614 = vmatprep.mubr.bf16.mxu0 %v7210
      %8615 = vmatmul.mubr.bf16.gmra.mrb[0].mxu0 %v7209
      %v8616 = vpop.f32.mrb[0].mxu0
      %v8617 = vadd.f32 %v8328, %v8616
      %v8618 = vpop.f32.mrb[0].mxu0
      %v8619 = vpop.f32.mrb[0].mxu0
      %v8620 = vadd.f32 %v8331, %v8619
      %v8621 = vpop.f32.mrb[0].mxu0
      %8622 = vmatprep.mubr.bf16.mxu0 %v7218
      %8623 = vmatmul.mubr.bf16.gmra.mrb[0].mxu0 %v7217
      %v8624 = vpop.f32.mrb[0].mxu0
      %v8625 = vadd.f32 %v8336, %v8624
      %v8626 = vpop.f32.mrb[0].mxu0
      %v8627 = vpop.f32.mrb[0].mxu0
      %v8628 = vadd.f32 %v8339, %v8627
      %v8629 = vpop.f32.mrb[0].mxu0
      %8630 = vmatprep.mubr.bf16.mxu0 %v7226
      %8631 = vmatmul.mubr.bf16.gmra.mrb[0].mxu0 %v7225
      %v8632 = vpop.f32.mrb[0].mxu0
      %v8633 = vadd.f32 %v8344, %v8632
      %v8634 = vpop.f32.mrb[0].mxu0
      %v8635 = vpop.f32.mrb[0].mxu0
      %v8636 = vadd.f32 %v8347, %v8635
      %v8637 = vpop.f32.mrb[0].mxu0
      %8638 = vmatprep.mubr.bf16.mxu0 %v7234
      %8639 = vmatmul.mubr.bf16.gmra.mrb[0].mxu0 %v7233
      %v8640 = vpop.f32.mrb[0].mxu0
      %v8641 = vadd.f32 %v8352, %v8640
      %v8642 = vpop.f32.mrb[0].mxu0
      %v8643 = vpop.f32.mrb[0].mxu0
      %v8644 = vadd.f32 %v8355, %v8643
      %v8645 = vpop.f32.mrb[0].mxu0
      %8646 = vmatprep.mubr.bf16.mxu0 %v7242
      %8647 = vmatmul.mubr.bf16.gmra.mrb[0].mxu0 %v7241
      %v8648 = vpop.f32.mrb[0].mxu0
      %v8649 = vadd.f32 %v8360, %v8648
      %v8650 = vpop.f32.mrb[0].mxu0
      %v8651 = vpop.f32.mrb[0].mxu0
      %v8652 = vadd.f32 %v8363, %v8651
      %v8653 = vpop.f32.mrb[0].mxu0
      %8654 = vmatprep.mubr.bf16.mxu0 %v7250
      %8655 = vmatmul.mubr.bf16.gmra.mrb[0].mxu0 %v7249
      %v8656 = vpop.f32.mrb[0].mxu0
      %v8657 = vadd.f32 %v8368, %v8656
      %v8658 = vpop.f32.mrb[0].mxu0
      %v8659 = vpop.f32.mrb[0].mxu0
      %v8660 = vadd.f32 %v8371, %v8659
      %v8661 = vpop.f32.mrb[0].mxu0
      %8662 = vmatprep.mubr.bf16.mxu0 %v7258
      %8663 = vmatmul.mubr.bf16.gmra.mrb[0].mxu0 %v7257
      %v8664 = vpop.f32.mrb[0].mxu0
      %v8665 = vadd.f32 %v8376, %v8664
      %v8666 = vpop.f32.mrb[0].mxu0
      %v8667 = vpop.f32.mrb[0].mxu0
      %v8668 = vadd.f32 %v8379, %v8667
      %v8669 = vpop.f32.mrb[0].mxu0
      %8670 = vmatprep.mubr.bf16.mxu0 %v7266
      %8671 = vmatmul.mubr.bf16.gmra.mrb[0].mxu0 %v7265
      %v8672 = vpop.f32.mrb[0].mxu0
      %v8673 = vadd.f32 %v8384, %v8672
      %v8674 = vpop.f32.mrb[0].mxu0
      %v8675 = vpop.f32.mrb[0].mxu0
      %v8676 = vadd.f32 %v8387, %v8675
      %v8677 = vpop.f32.mrb[0].mxu0
      %8678 = vdwg.mxu0
      %v8679 = vmul.f32 %v8425, 0.5
      %v8680 = vmul.f32 %v8428, 0.5
      %v8681 = vmul.f32 %v8433, 0.5
      %v8682 = vmul.f32 %v8436, 0.5
      %v8683 = vmul.f32 %v8441, 0.5
      %v8684 = vmul.f32 %v8444, 0.5
      %v8685 = vmul.f32 %v8449, 0.5
      %v8686 = vmul.f32 %v8452, 0.5
      %v8687 = vmul.f32 %v8457, 0.5
      %v8688 = vmul.f32 %v8460, 0.5
      %v8689 = vmul.f32 %v8465, 0.5
      %v8690 = vmul.f32 %v8468, 0.5
      %v8691 = vmul.f32 %v8473, 0.5
      %v8692 = vmul.f32 %v8476, 0.5
      %v8693 = vmul.f32 %v8481, 0.5
      %v8694 = vmul.f32 %v8484, 0.5
      %v8695 = vmul.f32 %v8489, 0.5
      %v8696 = vmul.f32 %v8492, 0.5
      %v8697 = vmul.f32 %v8497, 0.5
      %v8698 = vmul.f32 %v8500, 0.5
      %v8699 = vmul.f32 %v8505, 0.5
      %v8700 = vmul.f32 %v8508, 0.5
      %v8701 = vmul.f32 %v8513, 0.5
      %v8702 = vmul.f32 %v8516, 0.5
      %v8703 = vmul.f32 %v8521, 0.5
      %v8704 = vmul.f32 %v8524, 0.5
      %v8705 = vmul.f32 %v8529, 0.5
      %v8706 = vmul.f32 %v8532, 0.5
      %v8707 = vmul.f32 %v8537, 0.5
      %v8708 = vmul.f32 %v8540, 0.5
      %v8709 = vmul.f32 %v8545, 0.5
      %v8710 = vmul.f32 %v8548, 0.5
      %v8711 = vmul.f32 %v8553, 0.5
      %v8712 = vmul.f32 %v8556, 0.5
      %v8713 = vmul.f32 %v8561, 0.5
      %v8714 = vmul.f32 %v8564, 0.5
      %v8715 = vmul.f32 %v8569, 0.5
      %v8716 = vmul.f32 %v8572, 0.5
      %v8717 = vmul.f32 %v8577, 0.5
      %v8718 = vmul.f32 %v8580, 0.5
      %v8719 = vmul.f32 %v8585, 0.5
      %v8720 = vmul.f32 %v8588, 0.5
      %v8721 = vmul.f32 %v8593, 0.5
      %v8722 = vmul.f32 %v8596, 0.5
      %v8723 = vmul.f32 %v8601, 0.5
      %v8724 = vmul.f32 %v8604, 0.5
      %v8725 = vmul.f32 %v8609, 0.5
      %v8726 = vmul.f32 %v8612, 0.5
      %v8727 = vmul.f32 %v8617, 0.5
      %v8728 = vmul.f32 %v8620, 0.5
      %v8729 = vmul.f32 %v8625, 0.5
      %v8730 = vmul.f32 %v8628, 0.5
      %v8731 = vmul.f32 %v8633, 0.5
      %v8732 = vmul.f32 %v8636, 0.5
      %v8733 = vmul.f32 %v8641, 0.5
      %v8734 = vmul.f32 %v8644, 0.5
      %v8735 = vmul.f32 %v8649, 0.5
      %v8736 = vmul.f32 %v8652, 0.5
      %v8737 = vmul.f32 %v8657, 0.5
      %v8738 = vmul.f32 %v8660, 0.5
      %v8739 = vmul.f32 %v8665, 0.5
      %v8740 = vmul.f32 %v8668, 0.5
      %v8741 = vmul.f32 %v8673, 0.5
      %v8742 = vmul.f32 %v8676, 0.5
      %v8743 = vtanh.pop %v8679
      %v8744 = vtanh.pop %v8680
      %v8745 = vtanh.pop %v8681
      %v8746 = vtanh.pop %v8682
      %v8747 = vtanh.pop %v8683
      %v8748 = vtanh.pop %v8684
      %v8749 = vtanh.pop %v8685
      %v8750 = vtanh.pop %v8686
      %v8751 = vtanh.pop %v8687
      %v8752 = vtanh.pop %v8688
      %v8753 = vtanh.pop %v8689
      %v8754 = vtanh.pop %v8690
      %v8755 = vtanh.pop %v8691
      %v8756 = vtanh.pop %v8692
      %v8757 = vtanh.pop %v8693
      %v8758 = vtanh.pop %v8694
      %v8759 = vtanh.pop %v8695
      %v8760 = vtanh.pop %v8696
      %v8761 = vtanh.pop %v8697
      %v8762 = vtanh.pop %v8698
      %v8763 = vtanh.pop %v8699
      %v8764 = vtanh.pop %v8700
      %v8765 = vtanh.pop %v8701
      %v8766 = vtanh.pop %v8702
      %v8767 = vtanh.pop %v8703
      %v8768 = vtanh.pop %v8704
      %v8769 = vtanh.pop %v8705
      %v8770 = vtanh.pop %v8706
      %v8771 = vtanh.pop %v8707
      %v8772 = vtanh.pop %v8708
      %v8773 = vtanh.pop %v8709
      %v8774 = vtanh.pop %v8710
      %v8775 = vtanh.pop %v8711
      %v8776 = vtanh.pop %v8712
      %v8777 = vtanh.pop %v8713
      %v8778 = vtanh.pop %v8714
      %v8779 = vtanh.pop %v8715
      %v8780 = vtanh.pop %v8716
      %v8781 = vtanh.pop %v8717
      %v8782 = vtanh.pop %v8718
      %v8783 = vtanh.pop %v8719
      %v8784 = vtanh.pop %v8720
      %v8785 = vtanh.pop %v8721
      %v8786 = vtanh.pop %v8722
      %v8787 = vtanh.pop %v8723
      %v8788 = vtanh.pop %v8724
      %v8789 = vtanh.pop %v8725
      %v8790 = vtanh.pop %v8726
      %v8791 = vtanh.pop %v8727
      %v8792 = vtanh.pop %v8728
      %v8793 = vtanh.pop %v8729
      %v8794 = vtanh.pop %v8730
      %v8795 = vtanh.pop %v8731
      %v8796 = vtanh.pop %v8732
      %v8797 = vtanh.pop %v8733
      %v8798 = vtanh.pop %v8734
      %v8799 = vtanh.pop %v8735
      %v8800 = vtanh.pop %v8736
      %v8801 = vtanh.pop %v8737
      %v8802 = vtanh.pop %v8738
      %v8803 = vtanh.pop %v8739
      %v8804 = vtanh.pop %v8740
      %v8805 = vtanh.pop %v8741
      %v8806 = vtanh.pop %v8742
      %v8807 = vadd.f32 %v8743, 1.0
      %v8808 = vadd.f32 %v8744, 1.0
      %v8809 = vadd.f32 %v8745, 1.0
      %v8810 = vadd.f32 %v8746, 1.0
      %v8811 = vadd.f32 %v8747, 1.0
      %v8812 = vadd.f32 %v8748, 1.0
      %v8813 = vadd.f32 %v8749, 1.0
      %v8814 = vadd.f32 %v8750, 1.0
      %v8815 = vadd.f32 %v8751, 1.0
      %v8816 = vadd.f32 %v8752, 1.0
      %v8817 = vadd.f32 %v8753, 1.0
      %v8818 = vadd.f32 %v8754, 1.0
      %v8819 = vadd.f32 %v8755, 1.0
      %v8820 = vadd.f32 %v8756, 1.0
      %v8821 = vadd.f32 %v8757, 1.0
      %v8822 = vadd.f32 %v8758, 1.0
      %v8823 = vadd.f32 %v8759, 1.0
      %v8824 = vadd.f32 %v8760, 1.0
      %v8825 = vadd.f32 %v8761, 1.0
      %v8826 = vadd.f32 %v8762, 1.0
      %v8827 = vadd.f32 %v8763, 1.0
      %v8828 = vadd.f32 %v8764, 1.0
      %v8829 = vadd.f32 %v8765, 1.0
      %v8830 = vadd.f32 %v8766, 1.0
      %v8831 = vadd.f32 %v8767, 1.0
      %v8832 = vadd.f32 %v8768, 1.0
      %v8833 = vadd.f32 %v8769, 1.0
      %v8834 = vadd.f32 %v8770, 1.0
      %v8835 = vadd.f32 %v8771, 1.0
      %v8836 = vadd.f32 %v8772, 1.0
      %v8837 = vadd.f32 %v8773, 1.0
      %v8838 = vadd.f32 %v8774, 1.0
      %v8839 = vadd.f32 %v8775, 1.0
      %v8840 = vadd.f32 %v8776, 1.0
      %v8841 = vadd.f32 %v8777, 1.0
      %v8842 = vadd.f32 %v8778, 1.0
      %v8843 = vadd.f32 %v8779, 1.0
      %v8844 = vadd.f32 %v8780, 1.0
      %v8845 = vadd.f32 %v8781, 1.0
      %v8846 = vadd.f32 %v8782, 1.0
      %v8847 = vadd.f32 %v8783, 1.0
      %v8848 = vadd.f32 %v8784, 1.0
      %v8849 = vadd.f32 %v8785, 1.0
      %v8850 = vadd.f32 %v8786, 1.0
      %v8851 = vadd.f32 %v8787, 1.0
      %v8852 = vadd.f32 %v8788, 1.0
      %v8853 = vadd.f32 %v8789, 1.0
      %v8854 = vadd.f32 %v8790, 1.0
      %v8855 = vadd.f32 %v8791, 1.0
      %v8856 = vadd.f32 %v8792, 1.0
      %v8857 = vadd.f32 %v8793, 1.0
      %v8858 = vadd.f32 %v8794, 1.0
      %v8859 = vadd.f32 %v8795, 1.0
      %v8860 = vadd.f32 %v8796, 1.0
      %v8861 = vadd.f32 %v8797, 1.0
      %v8862 = vadd.f32 %v8798, 1.0
      %v8863 = vadd.f32 %v8799, 1.0
      %v8864 = vadd.f32 %v8800, 1.0
      %v8865 = vadd.f32 %v8801, 1.0
      %v8866 = vadd.f32 %v8802, 1.0
      %v8867 = vadd.f32 %v8803, 1.0
      %v8868 = vadd.f32 %v8804, 1.0
      %v8869 = vadd.f32 %v8805, 1.0
      %v8870 = vadd.f32 %v8806, 1.0
      %v8871 = vmul.f32 %v8807, 0.5
      %v8872 = vmul.f32 %v8808, 0.5
      %v8873 = vmul.f32 %v8809, 0.5
      %v8874 = vmul.f32 %v8810, 0.5
      %v8875 = vmul.f32 %v8811, 0.5
      %v8876 = vmul.f32 %v8812, 0.5
      %v8877 = vmul.f32 %v8813, 0.5
      %v8878 = vmul.f32 %v8814, 0.5
      %v8879 = vmul.f32 %v8815, 0.5
      %v8880 = vmul.f32 %v8816, 0.5
      %v8881 = vmul.f32 %v8817, 0.5
      %v8882 = vmul.f32 %v8818, 0.5
      %v8883 = vmul.f32 %v8819, 0.5
      %v8884 = vmul.f32 %v8820, 0.5
      %v8885 = vmul.f32 %v8821, 0.5
      %v8886 = vmul.f32 %v8822, 0.5
      %v8887 = vmul.f32 %v8823, 0.5
      %v8888 = vmul.f32 %v8824, 0.5
      %v8889 = vmul.f32 %v8825, 0.5
      %v8890 = vmul.f32 %v8826, 0.5
      %v8891 = vmul.f32 %v8827, 0.5
      %v8892 = vmul.f32 %v8828, 0.5
      %v8893 = vmul.f32 %v8829, 0.5
      %v8894 = vmul.f32 %v8830, 0.5
      %v8895 = vmul.f32 %v8831, 0.5
      %v8896 = vmul.f32 %v8832, 0.5
      %v8897 = vmul.f32 %v8833, 0.5
      %v8898 = vmul.f32 %v8834, 0.5
      %v8899 = vmul.f32 %v8835, 0.5
      %v8900 = vmul.f32 %v8836, 0.5
      %v8901 = vmul.f32 %v8837, 0.5
      %v8902 = vmul.f32 %v8838, 0.5
      %v8903 = vmul.f32 %v8839, 0.5
      %v8904 = vmul.f32 %v8840, 0.5
      %v8905 = vmul.f32 %v8841, 0.5
      %v8906 = vmul.f32 %v8842, 0.5
      %v8907 = vmul.f32 %v8843, 0.5
      %v8908 = vmul.f32 %v8844, 0.5
      %v8909 = vmul.f32 %v8845, 0.5
      %v8910 = vmul.f32 %v8846, 0.5
      %v8911 = vmul.f32 %v8847, 0.5
      %v8912 = vmul.f32 %v8848, 0.5
      %v8913 = vmul.f32 %v8849, 0.5
      %v8914 = vmul.f32 %v8850, 0.5
      %v8915 = vmul.f32 %v8851, 0.5
      %v8916 = vmul.f32 %v8852, 0.5
      %v8917 = vmul.f32 %v8853, 0.5
      %v8918 = vmul.f32 %v8854, 0.5
      %v8919 = vmul.f32 %v8855, 0.5
      %v8920 = vmul.f32 %v8856, 0.5
      %v8921 = vmul.f32 %v8857, 0.5
      %v8922 = vmul.f32 %v8858, 0.5
      %v8923 = vmul.f32 %v8859, 0.5
      %v8924 = vmul.f32 %v8860, 0.5
      %v8925 = vmul.f32 %v8861, 0.5
      %v8926 = vmul.f32 %v8862, 0.5
      %v8927 = vmul.f32 %v8863, 0.5
      %v8928 = vmul.f32 %v8864, 0.5
      %v8929 = vmul.f32 %v8865, 0.5
      %v8930 = vmul.f32 %v8866, 0.5
      %v8931 = vmul.f32 %v8867, 0.5
      %v8932 = vmul.f32 %v8868, 0.5
      %v8933 = vmul.f32 %v8869, 0.5
      %v8934 = vmul.f32 %v8870, 0.5
      %v8935 = vadd.f32 %v4645, %v8871
      %v8936 = vadd.f32 %v4648, %v8872
      %v8937 = vadd.f32 %v4653, %v8873
      %v8938 = vadd.f32 %v4656, %v8874
      %v8939 = vadd.f32 %v4661, %v8875
      %v8940 = vadd.f32 %v4664, %v8876
      %v8941 = vadd.f32 %v4669, %v8877
      %v8942 = vadd.f32 %v4672, %v8878
      %v8943 = vadd.f32 %v4677, %v8879
      %v8944 = vadd.f32 %v4680, %v8880
      %v8945 = vadd.f32 %v4685, %v8881
      %v8946 = vadd.f32 %v4688, %v8882
      %v8947 = vadd.f32 %v4693, %v8883
      %v8948 = vadd.f32 %v4696, %v8884
      %v8949 = vadd.f32 %v4701, %v8885
      %v8950 = vadd.f32 %v4704, %v8886
      %v8951 = vadd.f32 %v4709, %v8887
      %v8952 = vadd.f32 %v4712, %v8888
      %v8953 = vadd.f32 %v4717, %v8889
      %v8954 = vadd.f32 %v4720, %v8890
      %v8955 = vadd.f32 %v4725, %v8891
      %v8956 = vadd.f32 %v4728, %v8892
      %v8957 = vadd.f32 %v4733, %v8893
      %v8958 = vadd.f32 %v4736, %v8894
      %v8959 = vadd.f32 %v4741, %v8895
      %v8960 = vadd.f32 %v4744, %v8896
      %v8961 = vadd.f32 %v4749, %v8897
      %v8962 = vadd.f32 %v4752, %v8898
      %v8963 = vadd.f32 %v4757, %v8899
      %v8964 = vadd.f32 %v4760, %v8900
      %v8965 = vadd.f32 %v4765, %v8901
      %v8966 = vadd.f32 %v4768, %v8902
      %v8967 = vadd.f32 %v4773, %v8903
      %v8968 = vadd.f32 %v4776, %v8904
      %v8969 = vadd.f32 %v4781, %v8905
      %v8970 = vadd.f32 %v4784, %v8906
      %v8971 = vadd.f32 %v4789, %v8907
      %v8972 = vadd.f32 %v4792, %v8908
      %v8973 = vadd.f32 %v4797, %v8909
      %v8974 = vadd.f32 %v4800, %v8910
      %v8975 = vadd.f32 %v4805, %v8911
      %v8976 = vadd.f32 %v4808, %v8912
      %v8977 = vadd.f32 %v4813, %v8913
      %v8978 = vadd.f32 %v4816, %v8914
      %v8979 = vadd.f32 %v4821, %v8915
      %v8980 = vadd.f32 %v4824, %v8916
      %v8981 = vadd.f32 %v4829, %v8917
      %v8982 = vadd.f32 %v4832, %v8918
      %v8983 = vadd.f32 %v4837, %v8919
      %v8984 = vadd.f32 %v4840, %v8920
      %v8985 = vadd.f32 %v4845, %v8921
      %v8986 = vadd.f32 %v4848, %v8922
      %v8987 = vadd.f32 %v4853, %v8923
      %v8988 = vadd.f32 %v4856, %v8924
      %v8989 = vadd.f32 %v4861, %v8925
      %v8990 = vadd.f32 %v4864, %v8926
      %v8991 = vadd.f32 %v4869, %v8927
      %v8992 = vadd.f32 %v4872, %v8928
      %v8993 = vadd.f32 %v4877, %v8929
      %v8994 = vadd.f32 %v4880, %v8930
      %v8995 = vadd.f32 %v4885, %v8931
      %v8996 = vadd.f32 %v4888, %v8932
      %v8997 = vadd.f32 %v4893, %v8933
      %v8998 = vadd.f32 %v4896, %v8934
      %v8999 = vmul.f32 %v8935, %v257
      %v9000 = vmul.f32 %v8936, %v258
      %v9001 = vmul.f32 %v8937, %v259
      %v9002 = vmul.f32 %v8938, %v260
      %v9003 = vmul.f32 %v8939, %v261
      %v9004 = vmul.f32 %v8940, %v262
      %v9005 = vmul.f32 %v8941, %v263
      %v9006 = vmul.f32 %v8942, %v264
      %v9007 = vmul.f32 %v8943, %v265
      %v9008 = vmul.f32 %v8944, %v266
      %v9009 = vmul.f32 %v8945, %v267
      %v9010 = vmul.f32 %v8946, %v268
      %v9011 = vmul.f32 %v8947, %v269
      %v9012 = vmul.f32 %v8948, %v270
      %v9013 = vmul.f32 %v8949, %v271
      %v9014 = vmul.f32 %v8950, %v272
      %v9015 = vmul.f32 %v8951, %v273
      %v9016 = vmul.f32 %v8952, %v274
      %v9017 = vmul.f32 %v8953, %v275
      %v9018 = vmul.f32 %v8954, %v276
      %v9019 = vmul.f32 %v8955, %v277
      %v9020 = vmul.f32 %v8956, %v278
      %v9021 = vmul.f32 %v8957, %v279
      %v9022 = vmul.f32 %v8958, %v280
      %v9023 = vmul.f32 %v8959, %v281
      %v9024 = vmul.f32 %v8960, %v282
      %v9025 = vmul.f32 %v8961, %v283
      %v9026 = vmul.f32 %v8962, %v284
      %v9027 = vmul.f32 %v8963, %v285
      %v9028 = vmul.f32 %v8964, %v286
      %v9029 = vmul.f32 %v8965, %v287
      %v9030 = vmul.f32 %v8966, %v288
      %v9031 = vmul.f32 %v8967, %v289
      %v9032 = vmul.f32 %v8968, %v290
      %v9033 = vmul.f32 %v8969, %v291
      %v9034 = vmul.f32 %v8970, %v292
      %v9035 = vmul.f32 %v8971, %v293
      %v9036 = vmul.f32 %v8972, %v294
      %v9037 = vmul.f32 %v8973, %v295
      %v9038 = vmul.f32 %v8974, %v296
      %v9039 = vmul.f32 %v8975, %v297
      %v9040 = vmul.f32 %v8976, %v298
      %v9041 = vmul.f32 %v8977, %v299
      %v9042 = vmul.f32 %v8978, %v300
      %v9043 = vmul.f32 %v8979, %v301
      %v9044 = vmul.f32 %v8980, %v302
      %v9045 = vmul.f32 %v8981, %v303
      %v9046 = vmul.f32 %v8982, %v304
      %v9047 = vmul.f32 %v8983, %v305
      %v9048 = vmul.f32 %v8984, %v306
      %v9049 = vmul.f32 %v8985, %v307
      %v9050 = vmul.f32 %v8986, %v308
      %v9051 = vmul.f32 %v8987, %v309
      %v9052 = vmul.f32 %v8988, %v310
      %v9053 = vmul.f32 %v8989, %v311
      %v9054 = vmul.f32 %v8990, %v312
      %v9055 = vmul.f32 %v8991, %v313
      %v9056 = vmul.f32 %v8992, %v314
      %v9057 = vmul.f32 %v8993, %v315
      %v9058 = vmul.f32 %v8994, %v316
      %v9059 = vmul.f32 %v8995, %v317
      %v9060 = vmul.f32 %v8996, %v318
      %v9061 = vmul.f32 %v8997, %v319
      %v9062 = vmul.f32 %v8998, %v320
      %9063 = vst [vmem:[%s255] sm:$0xff] %v8999
      %9064 = vst [vmem:[%s255 + $0x8] sm:$0xff] %v9000
      %9065 = vst [vmem:[%s255 + $0x10] sm:$0xff] %v9001
      %9066 = vst [vmem:[%s255 + $0x18] sm:$0xff] %v9002
      %9067 = vst [vmem:[%s255 + $0x20] sm:$0xff] %v9003
      %9068 = vst [vmem:[%s255 + $0x28] sm:$0xff] %v9004
      %9069 = vst [vmem:[%s255 + $0x30] sm:$0xff] %v9005
      %9070 = vst [vmem:[%s255 + $0x38] sm:$0xff] %v9006
      %9071 = vst [vmem:[%s255 + $0x40] sm:$0xff] %v9007
      %9072 = vst [vmem:[%s255 + $0x48] sm:$0xff] %v9008
      %9073 = vst [vmem:[%s255 + $0x50] sm:$0xff] %v9009
      %9074 = vst [vmem:[%s255 + $0x58] sm:$0xff] %v9010
      %9075 = vst [vmem:[%s255 + $0x60] sm:$0xff] %v9011
      %9076 = vst [vmem:[%s255 + $0x68] sm:$0xff] %v9012
      %9077 = vst [vmem:[%s255 + $0x70] sm:$0xff] %v9013
      %9078 = vst [vmem:[%s255 + $0x78] sm:$0xff] %v9014
      %9079 = vst [vmem:[%s255 + $0x80] sm:$0xff] %v9015
      %9080 = vst [vmem:[%s255 + $0x88] sm:$0xff] %v9016
      %9081 = vst [vmem:[%s255 + $0x90] sm:$0xff] %v9017
      %9082 = vst [vmem:[%s255 + $0x98] sm:$0xff] %v9018
      %9083 = vst [vmem:[%s255 + $0xa0] sm:$0xff] %v9019
      %9084 = vst [vmem:[%s255 + $0xa8] sm:$0xff] %v9020
      %9085 = vst [vmem:[%s255 + $0xb0] sm:$0xff] %v9021
      %9086 = vst [vmem:[%s255 + $0xb8] sm:$0xff] %v9022
      %9087 = vst [vmem:[%s255 + $0xc0] sm:$0xff] %v9023
      %9088 = vst [vmem:[%s255 + $0xc8] sm:$0xff] %v9024
      %9089 = vst [vmem:[%s255 + $0xd0] sm:$0xff] %v9025
      %9090 = vst [vmem:[%s255 + $0xd8] sm:$0xff] %v9026
      %9091 = vst [vmem:[%s255 + $0xe0] sm:$0xff] %v9027
      %9092 = vst [vmem:[%s255 + $0xe8] sm:$0xff] %v9028
      %9093 = vst [vmem:[%s255 + $0xf0] sm:$0xff] %v9029
      %9094 = vst [vmem:[%s255 + $0xf8] sm:$0xff] %v9030
      %9095 = vst [vmem:[%s255 + $0x100] sm:$0xff] %v9031
      %9096 = vst [vmem:[%s255 + $0x108] sm:$0xff] %v9032
      %9097 = vst [vmem:[%s255 + $0x110] sm:$0xff] %v9033
      %9098 = vst [vmem:[%s255 + $0x118] sm:$0xff] %v9034
      %9099 = vst [vmem:[%s255 + $0x120] sm:$0xff] %v9035
      %9100 = vst [vmem:[%s255 + $0x128] sm:$0xff] %v9036
      %9101 = vst [vmem:[%s255 + $0x130] sm:$0xff] %v9037
      %9102 = vst [vmem:[%s255 + $0x138] sm:$0xff] %v9038
      %9103 = vst [vmem:[%s255 + $0x140] sm:$0xff] %v9039
      %9104 = vst [vmem:[%s255 + $0x148] sm:$0xff] %v9040
      %9105 = vst [vmem:[%s255 + $0x150] sm:$0xff] %v9041
      %9106 = vst [vmem:[%s255 + $0x158] sm:$0xff] %v9042
      %9107 = vst [vmem:[%s255 + $0x160] sm:$0xff] %v9043
      %9108 = vst [vmem:[%s255 + $0x168] sm:$0xff] %v9044
      %9109 = vst [vmem:[%s255 + $0x170] sm:$0xff] %v9045
      %9110 = vst [vmem:[%s255 + $0x178] sm:$0xff] %v9046
      %9111 = vst [vmem:[%s255 + $0x180] sm:$0xff] %v9047
      %9112 = vst [vmem:[%s255 + $0x188] sm:$0xff] %v9048
      %9113 = vst [vmem:[%s255 + $0x190] sm:$0xff] %v9049
      %9114 = vst [vmem:[%s255 + $0x198] sm:$0xff] %v9050
      %9115 = vst [vmem:[%s255 + $0x1a0] sm:$0xff] %v9051
      %9116 = vst [vmem:[%s255 + $0x1a8] sm:$0xff] %v9052
      %9117 = vst [vmem:[%s255 + $0x1b0] sm:$0xff] %v9053
      %9118 = vst [vmem:[%s255 + $0x1b8] sm:$0xff] %v9054
      %9119 = vst [vmem:[%s255 + $0x1c0] sm:$0xff] %v9055
      %9120 = vst [vmem:[%s255 + $0x1c8] sm:$0xff] %v9056
      %9121 = vst [vmem:[%s255 + $0x1d0] sm:$0xff] %v9057
      %9122 = vst [vmem:[%s255 + $0x1d8] sm:$0xff] %v9058
      %9123 = vst [vmem:[%s255 + $0x1e0] sm:$0xff] %v9059
      %9124 = vst [vmem:[%s255 + $0x1e8] sm:$0xff] %v9060
      %9125 = vst [vmem:[%s255 + $0x1f0] sm:$0xff] %v9061
      %9126 = vst [vmem:[%s255 + $0x1f8] sm:$0xff] %v9062
      %p9127 = scmp.lt.s32.totalorder %s20, 1
      %s9128 = scalar_select %p9127, %s20, 1
      %p9129 = scmp.lt.s32.totalorder %s21, 0
      %s9130 = scalar_select %p9129, %s21, 0
      %s9131 = smul.addr %s9128, 64
      %s9132 = sadd.s32 %s9130, %s9131
      %s9133 = smul.addr %s9132, 8
      %s9134 = scalar_lea.vmem %s5, %s9133
      // Predicated region
      $region41: #{bio_cs_attention.1} parent=39 // pred_check
        %p9135 = pneg %p160
      $region42: #{bio_cs_attention.1} parent=39 // pred_check_branch
        %9137 = sbr.rel (%p9135) target = $region44
      $region43: #{bio_cs_attention.1} parent=39 // pred_region
        _
      $region44: #{bio_cs_attention.1} parent=39 // pred_fallthru
        _
    $region40: #{bio_cs_attention.1} parent=5 // pred_fallthru
      _
    %p9138 = scmp.le.s32.totalorder 2, %s11
    // Predicated region
    $region45: #{bio_cs_attention.1} parent=5 // pred_check
      %p9139 = pneg %p9138
    $region46: #{bio_cs_attention.1} parent=5 // pred_check_branch
      %9141 = sbr.rel (%p9139) target = $region48
    $region47: #{bio_cs_attention.1} parent=5 // pred_region
      %s9142 = ssub.s32 %s11, 2
      // Predicated region
      $region49: #{bio_cs_attention.1} parent=47 // pred_check
        %p9143 = pneg %p166
      $region50: #{bio_cs_attention.1} parent=47 // pred_check_branch
        %9145 = sbr.rel (%p9143) target = $region52
      $region51: #{bio_cs_attention.1} parent=47 // pred_region
        %p9146 = scmp.lt.s32.totalorder %s22, 1
        %s9147 = scalar_select %p9146, %s22, 1
        %p9148 = scmp.lt.s32.totalorder %s23, 0
        %s9149 = scalar_select %p9148, %s23, 0
        %s9150 = smul.addr %s9147, 64
        %s9151 = sadd.s32 %s9149, %s9150
        %s9152 = smul.addr %s9151, 8
        %s9153 = scalar_lea.vmem %s5, %s9152
      $region52: #{bio_cs_attention.1} parent=47 // pred_fallthru
        _
    $region48: #{bio_cs_attention.1} parent=5 // pred_fallthru
      _
  $region6: #{bio_cs_attention.1} parent=0 // loop_footer
    %s15 = sadd.s32 1, %s11
  $region7: #{bio_cs_attention.1} parent=0 // loop_footer_branch
    %10 = sbr.rel target = $region3
  $region8: #{bio_cs_attention.1} parent=0 // loop_exit
    _

</llo_original>
